<compile_context>
chip_gen: v7x
topology: tpu7x:2x2x1
jax: 0.10.0
libtpu: 0.0.40
codegen_flags: <defaults>
</compile_context>

<pallas_src>
import functools

import jax
import jax.numpy as jnp
from jax.experimental import pallas as pl
from jax.experimental.pallas import tpu as pltpu

# Above v5e's 16 MiB default scoped VMEM, comfortably below v7x's 64 MiB physical.
_VMEM_LIMIT = 48 * 1024 * 1024


# ----------------------------- helpers -----------------------------

def _round_up(x, m):
    return ((x + m - 1) // m) * m


def _pad2(a, rows, cols):
    pr, pc = rows - a.shape[0], cols - a.shape[1]
    if pr or pc:
        a = jnp.pad(a, ((0, pr), (0, pc)))
    return a


def _pick_tile(n, align, cap):
    """Largest multiple of `align` <= cap that divides round_up(n, align).

    Avoids padded column/contraction tiles (e.g. QKV N=384 stays 384, not 512)."""
    p = _round_up(n, align)
    t = min(p, (cap // align) * align)
    while p % t:
        t -= align
    return t, p


# ----------------------------- tiled matmul (+bias, +act, +residual) -----------------------------

def _matmul_kernel(*refs, activation, has_residual):
    if has_residual:
        x_ref, w_ref, b_ref, r_ref, o_ref, acc_ref = refs
    else:
        x_ref, w_ref, b_ref, o_ref, acc_ref = refs
        r_ref = None
    k = pl.program_id(2)

    @pl.when(k == 0)
    def _init():
        if has_residual:
            # Fold residual into the accumulator init: spreads the fp32 add across
            # k steps (hidden under MXU time) instead of serializing it in finalize.
            acc_ref[...] = r_ref[...].astype(jnp.float32)
        else:
            acc_ref[...] = jnp.zeros_like(acc_ref)

    # Inputs arrive bf16 -> no per-tile cast; MXU accumulates fp32.
    acc_ref[...] += jnp.dot(x_ref[...], w_ref[...],
                            preferred_element_type=jnp.float32)

    @pl.when(k == pl.num_programs(2) - 1)
    def _finish():
        y = acc_ref[...] + b_ref[...]
        if activation == "gelu":
            y = jax.nn.gelu(y, approximate=True)
        o_ref[...] = y.astype(o_ref.dtype)


def linear(x, w, b, activation=None, residual=None, out_dtype=jnp.bfloat16):
    """act((..., K) @ (K, N) + b) (+ residual), tiled over (M, N, K)."""
    assert not (activation and residual is not None), "residual fold assumes no activation"
    lead = x.shape[:-1]
    K = x.shape[-1]
    N = w.shape[1]
    x2 = x.reshape(-1, K)
    M = x2.shape[0]

    tm = min(_round_up(M, 8), 256)
    tn, Np = _pick_tile(N, 128, 512)
    tk, Kp = _pick_tile(K, 128, 512)
    Mp = _round_up(M, tm)

    # NOTE: pads/casts below are no-ops for 128-aligned bf16 weights (as built in
    # init_params).  TODO(synk): add a one-time prepare_params step for ragged vocab.
    xp = _pad2(x2.astype(jnp.bfloat16), Mp, Kp)
    wp = _pad2(w.astype(jnp.bfloat16), Kp, Np)
    bp = _pad2(b.reshape(1, -1).astype(jnp.float32), 1, Np)

    args = [xp, wp, bp]
    in_specs = [
        pl.BlockSpec((tm, tk), lambda i, j, k: (i, k)),
        pl.BlockSpec((tk, tn), lambda i, j, k: (k, j)),
        pl.BlockSpec((1, tn), lambda i, j, k: (0, j)),
    ]
    if residual is not None:
        rp = _pad2(residual.reshape(-1, N).astype(jnp.bfloat16), Mp, Np)
        args.append(rp)
        in_specs.append(pl.BlockSpec((tm, tn), lambda i, j, k: (i, j)))

    out = pl.pallas_call(
        functools.partial(_matmul_kernel, activation=activation,
                          has_residual=residual is not None),
        out_shape=jax.ShapeDtypeStruct((Mp, Np), out_dtype),
        grid=(Mp // tm, Np // tn, Kp // tk),
        in_specs=in_specs,
        out_specs=pl.BlockSpec((tm, tn), lambda i, j, k: (i, j)),
        scratch_shapes=[pltpu.VMEM((tm, tn), jnp.float32)],
        compiler_params=pltpu.CompilerParams(
            dimension_semantics=("parallel", "parallel", "arbitrary"),
            vmem_limit_bytes=_VMEM_LIMIT),
    )(*args)
    return out[:M, :N].reshape(*lead, N)


# ----------------------------- standalone LayerNorm (optional fused residual) -----------------------------

def _layernorm_kernel(*refs, eps, k_valid, k_padded, has_residual):
    if has_residual:
        x_ref, g_ref, b_ref, r_ref, o_ref = refs
    else:
        x_ref, g_ref, b_ref, o_ref = refs
        r_ref = None
    x = x_ref[...].astype(jnp.float32)
    mean = jnp.sum(x, axis=-1, keepdims=True) * (1.0 / k_valid)
    centered = x - mean
    if k_padded:
        col = jax.lax.broadcasted_iota(jnp.int32, x.shape, 1)
        sq = jnp.where(col < k_valid, centered * centered, 0.0)
    else:
        sq = centered * centered
    var = jnp.sum(sq, axis=-1, keepdims=True) * (1.0 / k_valid)
    y = centered * jax.lax.rsqrt(var + eps) * g_ref[...] + b_ref[...]
    if has_residual:
        y = y + r_ref[...].astype(jnp.float32)
    o_ref[...] = y.astype(o_ref.dtype)


def layernorm(x, g, b, residual=None, eps=1e-5, out_dtype=jnp.bfloat16):
    lead = x.shape[:-1]
    K = x.shape[-1]
    x2 = x.reshape(-1, K)
    M = x2.shape[0]
    tm = min(_round_up(M, 8), 512)
    Kp = _round_up(K, 128)
    Mp = _round_up(M, tm)

    xp = _pad2(x2.astype(jnp.bfloat16), Mp, Kp)
    gp = _pad2(g.reshape(1, -1).astype(jnp.float32), 1, Kp)
    bp = _pad2(b.reshape(1, -1).astype(jnp.float32), 1, Kp)
    args = [xp, gp, bp]
    in_specs = [pl.BlockSpec((tm, Kp), lambda i: (i, 0)),
                pl.BlockSpec((1, Kp), lambda i: (0, 0)),
                pl.BlockSpec((1, Kp), lambda i: (0, 0))]
    if residual is not None:
        rp = _pad2(residual.reshape(-1, K).astype(jnp.bfloat16), Mp, Kp)
        args.append(rp)
        in_specs.append(pl.BlockSpec((tm, Kp), lambda i: (i, 0)))

    out = pl.pallas_call(
        functools.partial(_layernorm_kernel, eps=eps, k_valid=K,
                          k_padded=(Kp != K), has_residual=residual is not None),
        out_shape=jax.ShapeDtypeStruct((Mp, Kp), out_dtype),
        grid=(Mp // tm,),
        in_specs=in_specs,
        out_specs=pl.BlockSpec((tm, Kp), lambda i: (i, 0)),
        compiler_params=pltpu.CompilerParams(
            dimension_semantics=("parallel",),
            vmem_limit_bytes=_VMEM_LIMIT),
    )(*args)
    return out[:M, :K].reshape(*lead, K)


# ----------------------------- fused LayerNorm + matmul -----------------------------

def _ln_matmul_kernel(x_ref, g_ref, bln_ref, w_ref, b_ref, o_ref, h_ref, *,
                      eps, activation, k_valid, k_padded):
    # LN prologue computed ONCE per row block (j == 0) into a bf16 VMEM scratch and
    # reused for every output-column tile j (no redundant VPU work, no lm_head fallback).
    @pl.when(pl.program_id(1) == 0)
    def _ln():
        x = x_ref[...].astype(jnp.float32)
        mean = jnp.sum(x, axis=-1, keepdims=True) * (1.0 / k_valid)
        centered = x - mean
        if k_padded:
            col = jax.lax.broadcasted_iota(jnp.int32, x.shape, 1)
            sq = jnp.where(col < k_valid, centered * centered, 0.0)
        else:
            sq = centered * centered
        var = jnp.sum(sq, axis=-1, keepdims=True) * (1.0 / k_valid)
        h = centered * jax.lax.rsqrt(var + eps) * g_ref[...] + bln_ref[...]
        h_ref[...] = h.astype(h_ref.dtype)

    y = jnp.dot(h_ref[...], w_ref[...],
                preferred_element_type=jnp.float32) + b_ref[...]
    if activation == "gelu":
        y = jax.nn.gelu(y, approximate=True)
    o_ref[...] = y.astype(o_ref.dtype)


def ln_linear(x, g, bln, w, b, activation=None, eps=1e-5, out_dtype=jnp.bfloat16):
    """act(LayerNorm(x) @ w + b) in one kernel (K kept whole per row block)."""
    lead = x.shape[:-1]
    K = x.shape[-1]
    N = w.shape[1]
    x2 = x.reshape(-1, K)
    M = x2.shape[0]
    tm = min(_round_up(M, 8), 256)
    tn, Np = _pick_tile(N, 128, 512)
    Kp = _round_up(K, 128)
    Mp = _round_up(M, tm)

    xp = _pad2(x2.astype(jnp.bfloat16), Mp, Kp)
    gp = _pad2(g.reshape(1, -1).astype(jnp.float32), 1, Kp)
    blnp = _pad2(bln.reshape(1, -1).astype(jnp.float32), 1, Kp)
    wp = _pad2(w.astype(jnp.bfloat16), Kp, Np)
    bp = _pad2(b.reshape(1, -1).astype(jnp.float32), 1, Np)

    out = pl.pallas_call(
        functools.partial(_ln_matmul_kernel, eps=eps, activation=activation,
                          k_valid=K, k_padded=(Kp != K)),
        out_shape=jax.ShapeDtypeStruct((Mp, Np), out_dtype),
        grid=(Mp // tm, Np // tn),
        in_specs=[pl.BlockSpec((tm, Kp), lambda i, j: (i, 0)),
                  pl.BlockSpec((1, Kp), lambda i, j: (0, 0)),
                  pl.BlockSpec((1, Kp), lambda i, j: (0, 0)),
                  pl.BlockSpec((Kp, tn), lambda i, j: (0, j)),
                  pl.BlockSpec((1, tn), lambda i, j: (0, j))],
        out_specs=pl.BlockSpec((tm, tn), lambda i, j: (i, j)),
        scratch_shapes=[pltpu.VMEM((tm, Kp), jnp.bfloat16)],
        compiler_params=pltpu.CompilerParams(
            # j must stay on one core and sequential: the LN scratch is filled at j == 0.
            dimension_semantics=("parallel", "arbitrary"),
            vmem_limit_bytes=_VMEM_LIMIT),
    )(xp, gp, blnp, wp, bp)
    return out[:M, :N].reshape(*lead, N)


# ----------------------------- fused attention (split + RoPE + softmax + merge) -----------------------------

def _attention_kernel(qkv_ref, cos_ref, sin_ref, o_ref, o_acc, *,
                      nhead, scale, causal, prefix_len):
    S = qkv_ref.shape[1]
    D = qkv_ref.shape[2] // 3
    Dh = D // nhead
    half = Dh // 2

    qkv = qkv_ref[0]                               # (S, 3D) bf16 -- no full-slab fp32 upcast
    cos = cos_ref[...]                             # (S, Dh) f32
    sin = sin_ref[...]                             # (S, Dh) f32, rotate-half sign pre-folded

    if causal:
        row = jax.lax.broadcasted_iota(jnp.int32, (S, S), 0)
        col = jax.lax.broadcasted_iota(jnp.int32, (S, S), 1)
        allow = jnp.logical_or(col <= row, col < prefix_len)
    else:
        allow = None

    # TODO(synk): flash-tile over q/kv blocks (online softmax) for long S on v7x (64 MiB VMEM).
    for h in range(nhead):                         # static unroll over heads
        q = qkv[:, h * Dh:(h + 1) * Dh].astype(jnp.float32)
        k = qkv[:, D + h * Dh:D + (h + 1) * Dh].astype(jnp.float32)
        v = qkv[:, 2 * D + h * Dh:2 * D + (h + 1) * Dh]          # stays bf16 for the MXU
        # RoPE: sign folded into `sin`, so the shuffle is a pure half swap.
        # TODO(synk): use pltpu.roll (XLU slot) once Dh is a full lane multiple (>=128).
        q = q * cos + jnp.concatenate([q[:, half:], q[:, :half]], axis=-1) * sin
        k = k * cos + jnp.concatenate([k[:, half:], k[:, :half]], axis=-1) * sin
        s = jax.lax.dot_general(q.astype(jnp.bfloat16), k.astype(jnp.bfloat16),
                                (((1,), (1,)), ((), ())),
                                preferred_element_type=jnp.float32) * scale
        if causal:
            s = jnp.where(allow, s, -1e9)
        m = jnp.max(s, axis=-1, keepdims=True)
        p = jnp.exp(s - m)
        denom = jnp.sum(p, axis=-1, keepdims=True)
        o = jnp.dot(p.astype(jnp.bfloat16), v, preferred_element_type=jnp.float32)
        o = o * pl.reciprocal(denom, approx=True)
        # Per-head result into the (S, D) scratch slice (keeps vreg pressure low, no concat).
        o_acc[:, h * Dh:(h + 1) * Dh] = o.astype(o_acc.dtype)

    # Single lane-dense (S, D) HBM store.
    o_ref[0] = o_acc[...]


def _rope_tables(S, Dh):
    half = Dh // 2
    pos = jnp.arange(S, dtype=jnp.float32)[:, None]
    inv_freq = 1.0 / (10000.0 ** (jnp.arange(half, dtype=jnp.float32) / half))
    ang = pos * inv_freq[None, :]
    cos = jnp.concatenate([jnp.cos(ang), jnp.cos(ang)], axis=-1)
    # rotate_half(x) * [sin, sin] == swap_halves(x) * [-sin, sin]: fold the sign here.
    sin = jnp.concatenate([-jnp.sin(ang), jnp.sin(ang)], axis=-1)
    return cos, sin


def attention(qkv, nhead, causal, prefix_len):
    """qkv: (B, S, 3D) fused projection output (bf16). One batch element per grid step."""
    B, S, D3 = qkv.shape
    D = D3 // 3
    Dh = D // nhead
    cos, sin = _rope_tables(S, Dh)
    return pl.pallas_call(
        functools.partial(_attention_kernel, nhead=nhead, scale=1.0 / (Dh ** 0.5),
                          causal=causal, prefix_len=prefix_len),
        out_shape=jax.ShapeDtypeStruct((B, S, D), jnp.bfloat16),
        grid=(B,),
        in_specs=[pl.BlockSpec((1, S, D3), lambda b: (b, 0, 0)),
                  pl.BlockSpec((S, Dh), lambda b: (0, 0)),
                  pl.BlockSpec((S, Dh), lambda b: (0, 0))],
        out_specs=pl.BlockSpec((1, S, D), lambda b: (b, 0, 0)),
        scratch_shapes=[pltpu.VMEM((S, D), jnp.bfloat16)],
        compiler_params=pltpu.CompilerParams(
            dimension_semantics=("parallel",),
            vmem_limit_bytes=_VMEM_LIMIT),
    )(qkv.astype(jnp.bfloat16), cos, sin)


# ----------------------------- model glue -----------------------------

def block_forward(p, x, *, nhead, causal, prefix_len):
    qkv = ln_linear(x, p["ln1_g"], p["ln1_b"], p["qkv_w"], p["qkv_b"])       # LN + QKV fused
    attn = attention(qkv, nhead, causal, prefix_len)                          # split+RoPE+attn fused
    x = linear(attn, p["proj_w"], p["proj_b"], residual=x)                    # proj + residual fused
    h = ln_linear(x, p["ln2_g"], p["ln2_b"], p["fc1_w"], p["fc1_b"],
                  activation="gelu")                                          # LN + FC1 + GELU fused
    x = linear(h, p["fc2_w"], p["fc2_b"], residual=x)                         # FC2 + residual fused
    return x


def ccot_forward(params, input_ids, answer_ids, *, num_loops,
                 num_contemplation_tokens, nhead):
    # ---- encode ----
    x = jnp.take(params["encoder_embed"], input_ids, axis=0).astype(jnp.bfloat16)
    B, S_in, D = x.shape
    x = jnp.concatenate(
        [x, jnp.zeros((B, num_contemplation_tokens, D), x.dtype)], axis=1)
    residual = x
    for _ in range(num_loops):
        h = x
        for layer in params["encoder_layers"]:
            h = block_forward(layer, h, nhead=nhead, causal=False, prefix_len=0)
        # encoder final LN fused with the "+ residual"
        x = layernorm(h, params["enc_ln_f_g"], params["enc_ln_f_b"], residual=residual)
    # norm + intermediate projection fused
    x = ln_linear(x, params["norm_g"], params["norm_b"],
                  params["intermediate_w"], params["intermediate_b"])

    # ---- decode ----
    thoughts_len = x.shape[1]
    ans_emb = jnp.take(params["decoder_embed"], answer_ids, axis=0).astype(jnp.bfloat16)
    h = jnp.concatenate([x, ans_emb], axis=1)
    for layer in params["decoder_layers"]:
        # causal mask with the thought prefix fully visible, built in-kernel
        h = block_forward(layer, h, nhead=nhead, causal=True, prefix_len=thoughts_len)
    # decoder final LN fused with lm_head; logits kept fp32
    logits = ln_linear(h, params["dec_ln_f_g"], params["dec_ln_f_b"],
                       params["lm_head_w"], params["lm_head_b"],
                       out_dtype=jnp.float32)
    return logits


# ----------------------------- parameter init -----------------------------

def _w(key, shape, s=0.02):
    # Weights created pre-cast to bf16 (no per-forward cast/copy on the hot path).
    return (jax.random.normal(key, shape, jnp.float32) * s).astype(jnp.bfloat16)


def init_block(key, d_model, mlp_mult=4):
    ks = jax.random.split(key, 4)
    return {
        "ln1_g": jnp.ones((d_model,), jnp.float32),
        "ln1_b": jnp.zeros((d_model,), jnp.float32),
        "qkv_w": _w(ks[0], (d_model, 3 * d_model)),
        "qkv_b": jnp.zeros((3 * d_model,), jnp.float32),
        "proj_w": _w(ks[1], (d_model, d_model)),
        "proj_b": jnp.zeros((d_model,), jnp.float32),
        "ln2_g": jnp.ones((d_model,), jnp.float32),
        "ln2_b": jnp.zeros((d_model,), jnp.float32),
        "fc1_w": _w(ks[2], (d_model, mlp_mult * d_model)),
        "fc1_b": jnp.zeros((mlp_mult * d_model,), jnp.float32),
        "fc2_w": _w(ks[3], (mlp_mult * d_model, d_model)),
        "fc2_b": jnp.zeros((d_model,), jnp.float32),
    }


def init_params(key, *, vocab, d_enc, d_dec, n_enc_layers, n_dec_layers):
    ks = jax.random.split(key, 4 + n_enc_layers + n_dec_layers)
    s = 0.02
    return {
        "encoder_embed": jax.random.normal(ks[0], (vocab, d_enc), jnp.float32) * s,
        "decoder_embed": jax.random.normal(ks[1], (vocab, d_dec), jnp.float32) * s,
        "norm_g": jnp.ones((d_enc,), jnp.float32),
        "norm_b": jnp.zeros((d_enc,), jnp.float32),
        "intermediate_w": _w(ks[2], (d_enc, d_dec)),
        "intermediate_b": jnp.zeros((d_dec,), jnp.float32),
        "lm_head_w": _w(ks[3], (d_dec, vocab)),
        "lm_head_b": jnp.zeros((vocab,), jnp.float32),
        "enc_ln_f_g": jnp.ones((d_enc,), jnp.float32),
        "enc_ln_f_b": jnp.zeros((d_enc,), jnp.float32),
        "dec_ln_f_g": jnp.ones((d_dec,), jnp.float32),
        "dec_ln_f_b": jnp.zeros((d_dec,), jnp.float32),
        "encoder_layers": [init_block(jax.random.fold_in(key, 100 + i), d_enc)
                           for i in range(n_enc_layers)],
        "decoder_layers": [init_block(jax.random.fold_in(key, 200 + i), d_dec)
                           for i in range(n_dec_layers)],
    }


# ----------------------------- main -----------------------------

if __name__ == "__main__":
    VOCAB = 128
    D_ENC = 128
    D_DEC = 128
    NHEAD = 4
    N_ENC_LAYERS = 2
    N_DEC_LAYERS = 1
    B = 2
    S_IN = 8
    S_ANS = 8
    NUM_LOOPS = 1
    NUM_CONTEMPLATION = 4

    key = jax.random.PRNGKey(0)
    k_param, k_in, k_ans = jax.random.split(key, 3)

    params = init_params(k_param, vocab=VOCAB, d_enc=D_ENC, d_dec=D_DEC,
                         n_enc_layers=N_ENC_LAYERS, n_dec_layers=N_DEC_LAYERS)

    input_ids = jax.random.randint(k_in, (B, S_IN), 0, VOCAB, dtype=jnp.int32)
    answer_ids = jax.random.randint(k_ans, (B, S_ANS), 0, VOCAB, dtype=jnp.int32)

    fwd = jax.jit(functools.partial(ccot_forward,
                                    num_loops=NUM_LOOPS,
                                    num_contemplation_tokens=NUM_CONTEMPLATION,
                                    nhead=NHEAD))
    logits = fwd(params, input_ids, answer_ids)
    jax.block_until_ready(logits)

    expected_seq = S_IN + NUM_CONTEMPLATION + S_ANS
    assert logits.shape == (B, expected_seq, VOCAB), logits.shape
    assert bool(jnp.all(jnp.isfinite(logits)))
    print("KERNEL_OK")
</pallas_src>

<mosaic_0001>
module attributes {stable_mosaic.version = 11 : i64} {
  func.func @_ln_matmul_kernel(%arg0: i32, %arg1: i32, %arg2: memref<24x128xbf16, #tpu.memory_space<vmem>>, %arg3: memref<1x128xf32, #tpu.memory_space<vmem>>, %arg4: memref<1x128xf32, #tpu.memory_space<vmem>>, %arg5: memref<128x384xbf16, #tpu.memory_space<vmem>>, %arg6: memref<1x384xf32, #tpu.memory_space<vmem>>, %arg7: memref<24x384xbf16, #tpu.memory_space<vmem>>, %arg8: memref<24x128xbf16, #tpu.memory_space<vmem>>) attributes {dimension_semantics = [#tpu.dimension_semantics<parallel>, #tpu.dimension_semantics<arbitrary>], iteration_bounds = array<i64: 1, 1>, scalar_prefetch = 0 : i64, scratch_operands = 1 : i64, tpu.core_type = #tpu.core_type<tc>, window_params = [{transform_indices = @transform_0, window_bounds = array<i64: 24, 128>}, {pipeline_mode = #tpu.pipeline_mode<synchronous>, transform_indices = @transform_1, window_bounds = array<i64: 1, 128>}, {pipeline_mode = #tpu.pipeline_mode<synchronous>, transform_indices = @transform_2, window_bounds = array<i64: 1, 128>}, {transform_indices = @transform_3, window_bounds = array<i64: 128, 384>}, {transform_indices = @transform_4, window_bounds = array<i64: 1, 384>}, {transform_indices = @transform_5, window_bounds = array<i64: 24, 384>}]} {
    %c0_i32 = arith.constant 0 : i32
    %0 = arith.cmpi eq, %arg1, %c0_i32 : i32
    %1 = arith.extui %0 : i1 to i32
    %c0_i32_0 = arith.constant 0 : i32
    %2 = arith.cmpi ne, %1, %c0_i32_0 : i32
    scf.if %2 {
      %c0_8 = arith.constant 0 : index
      %c0_9 = arith.constant 0 : index
      %11 = vector.load %arg2[%c0_8, %c0_9] : memref<24x128xbf16, #tpu.memory_space<vmem>>, vector<24x128xbf16>
      %12 = arith.extf %11 : vector<24x128xbf16> to vector<24x128xf32>
      %cst_10 = arith.constant dense<0.000000e+00> : vector<24xf32>
      %13 = vector.multi_reduction <add>, %12, %cst_10 [1] : vector<24x128xf32> to vector<24xf32>
      %14 = vector.shape_cast %13 : vector<24xf32> to vector<24x1xf32>
      %cst_11 = arith.constant 7.812500e-03 : f32
      %15 = vector.broadcast %cst_11 : f32 to vector<24x1xf32>
      %16 = arith.mulf %14, %15 : vector<24x1xf32>
      %17 = vector.broadcast %16 : vector<24x1xf32> to vector<24x128xf32>
      %18 = arith.subf %12, %17 : vector<24x128xf32>
      %19 = arith.mulf %18, %18 : vector<24x128xf32>
      %cst_12 = arith.constant dense<0.000000e+00> : vector<24xf32>
      %20 = vector.multi_reduction <add>, %19, %cst_12 [1] : vector<24x128xf32> to vector<24xf32>
      %21 = vector.shape_cast %20 : vector<24xf32> to vector<24x1xf32>
      %cst_13 = arith.constant 7.812500e-03 : f32
      %22 = vector.broadcast %cst_13 : f32 to vector<24x1xf32>
      %23 = arith.mulf %21, %22 : vector<24x1xf32>
      %cst_14 = arith.constant 9.99999974E-6 : f32
      %24 = vector.broadcast %cst_14 : f32 to vector<24x1xf32>
      %25 = arith.addf %23, %24 : vector<24x1xf32>
      %26 = math.rsqrt %25 : vector<24x1xf32>
      %27 = vector.broadcast %26 : vector<24x1xf32> to vector<24x128xf32>
      %28 = arith.mulf %18, %27 : vector<24x128xf32>
      %c0_15 = arith.constant 0 : index
      %c0_16 = arith.constant 0 : index
      %29 = vector.load %arg3[%c0_15, %c0_16] : memref<1x128xf32, #tpu.memory_space<vmem>>, vector<1x128xf32>
      %30 = vector.broadcast %29 : vector<1x128xf32> to vector<24x128xf32>
      %31 = arith.mulf %28, %30 : vector<24x128xf32>
      %c0_17 = arith.constant 0 : index
      %c0_18 = arith.constant 0 : index
      %32 = vector.load %arg4[%c0_17, %c0_18] : memref<1x128xf32, #tpu.memory_space<vmem>>, vector<1x128xf32>
      %33 = vector.broadcast %32 : vector<1x128xf32> to vector<24x128xf32>
      %34 = arith.addf %31, %33 : vector<24x128xf32>
      %35 = arith.truncf %34 : vector<24x128xf32> to vector<24x128xbf16>
      %c0_19 = arith.constant 0 : index
      %c0_20 = arith.constant 0 : index
      %36 = vector.load %arg8[%c0_19, %c0_20] : memref<24x128xbf16, #tpu.memory_space<vmem>>, vector<24x128xbf16>
      tpu.vector_store %arg8[%c0_19, %c0_20], %35 {strides = array<i32>} : memref<24x128xbf16, #tpu.memory_space<vmem>>, vector<24x128xbf16>,
    } else {
    }
    %c0 = arith.constant 0 : index
    %c0_1 = arith.constant 0 : index
    %3 = vector.load %arg8[%c0, %c0_1] : memref<24x128xbf16, #tpu.memory_space<vmem>>, vector<24x128xbf16>
    %c0_2 = arith.constant 0 : index
    %c0_3 = arith.constant 0 : index
    %4 = vector.load %arg5[%c0_2, %c0_3] : memref<128x384xbf16, #tpu.memory_space<vmem>>, vector<128x384xbf16>
    %cst = arith.constant dense<0.000000e+00> : vector<24x384xf32>
    %5 = tpu.matmul %3, %4, %cst {dimension_numbers = #tpu.dot_dimension_numbers<[1], [0], [0], [1], [0, 0, 1, 1], [], []>} : vector<24x128xbf16>, vector<128x384xbf16>, vector<24x384xf32> -> vector<24x384xf32>
    %c0_4 = arith.constant 0 : index
    %c0_5 = arith.constant 0 : index
    %6 = vector.load %arg6[%c0_4, %c0_5] : memref<1x384xf32, #tpu.memory_space<vmem>>, vector<1x384xf32>
    %7 = vector.broadcast %6 : vector<1x384xf32> to vector<24x384xf32>
    %8 = arith.addf %5, %7 : vector<24x384xf32>
    %9 = arith.truncf %8 : vector<24x384xf32> to vector<24x384xbf16>
    %c0_6 = arith.constant 0 : index
    %c0_7 = arith.constant 0 : index
    %10 = vector.load %arg7[%c0_6, %c0_7] : memref<24x384xbf16, #tpu.memory_space<vmem>>, vector<24x384xbf16>
    tpu.vector_store %arg7[%c0_6, %c0_7], %9 {strides = array<i32>} : memref<24x384xbf16, #tpu.memory_space<vmem>>, vector<24x384xbf16>,
    return
  }
  func.func @transform_0(%arg0: i32, %arg1: i32) -> (i32, i32) {
    %c0_i32 = arith.constant 0 : i32
    %c0_i32_0 = arith.constant 0 : i32
    return %arg0, %c0_i32 : i32, i32
  }
  func.func @transform_1(%arg0: i32, %arg1: i32) -> (i32, i32) {
    %c0_i32 = arith.constant 0 : i32
    %c0_i32_0 = arith.constant 0 : i32
    %c0_i32_1 = arith.constant 0 : i32
    return %c0_i32, %c0_i32_0 : i32, i32
  }
  func.func @transform_2(%arg0: i32, %arg1: i32) -> (i32, i32) {
    %c0_i32 = arith.constant 0 : i32
    %c0_i32_0 = arith.constant 0 : i32
    %c0_i32_1 = arith.constant 0 : i32
    return %c0_i32, %c0_i32_0 : i32, i32
  }
  func.func @transform_3(%arg0: i32, %arg1: i32) -> (i32, i32) {
    %c0_i32 = arith.constant 0 : i32
    %c0_i32_0 = arith.constant 0 : i32
    return %c0_i32, %arg1 : i32, i32
  }
  func.func @transform_4(%arg0: i32, %arg1: i32) -> (i32, i32) {
    %c0_i32 = arith.constant 0 : i32
    %c0_i32_0 = arith.constant 0 : i32
    return %c0_i32, %arg1 : i32, i32
  }
  func.func @transform_5(%arg0: i32, %arg1: i32) -> (i32, i32) {
    %c0_i32 = arith.constant 0 : i32
    return %arg0, %arg1 : i32, i32
  }
}

module attributes {stable_mosaic.version = 11 : i64} {
  func.func @_matmul_kernel(%arg0: i32, %arg1: i32, %arg2: i32, %arg3: memref<24x128xbf16, #tpu.memory_space<vmem>>, %arg4: memref<128x128xbf16, #tpu.memory_space<vmem>>, %arg5: memref<1x128xf32, #tpu.memory_space<vmem>>, %arg6: memref<24x128xbf16, #tpu.memory_space<vmem>>, %arg7: memref<24x128xbf16, #tpu.memory_space<vmem>>, %arg8: memref<24x128xf32, #tpu.memory_space<vmem>>) attributes {dimension_semantics = [#tpu.dimension_semantics<parallel>, #tpu.dimension_semantics<parallel>, #tpu.dimension_semantics<arbitrary>], iteration_bounds = array<i64: 1, 1, 1>, scalar_prefetch = 0 : i64, scratch_operands = 1 : i64, tpu.core_type = #tpu.core_type<tc>, window_params = [{transform_indices = @transform_0, window_bounds = array<i64: 24, 128>}, {transform_indices = @transform_1, window_bounds = array<i64: 128, 128>}, {transform_indices = @transform_2, window_bounds = array<i64: 1, 128>}, {transform_indices = @transform_3, window_bounds = array<i64: 24, 128>}, {transform_indices = @transform_4, window_bounds = array<i64: 24, 128>}]} {
    %c0_i32 = arith.constant 0 : i32
    %0 = arith.cmpi eq, %arg2, %c0_i32 : i32
    %1 = arith.extui %0 : i1 to i32
    %c0_i32_0 = arith.constant 0 : i32
    %2 = arith.cmpi ne, %1, %c0_i32_0 : i32
    scf.if %2 {
      %c0_10 = arith.constant 0 : index
      %c0_11 = arith.constant 0 : index
      %12 = vector.load %arg6[%c0_10, %c0_11] : memref<24x128xbf16, #tpu.memory_space<vmem>>, vector<24x128xbf16>
      %13 = arith.extf %12 : vector<24x128xbf16> to vector<24x128xf32>
      %c0_12 = arith.constant 0 : index
      %c0_13 = arith.constant 0 : index
      %14 = vector.load %arg8[%c0_12, %c0_13] : memref<24x128xf32, #tpu.memory_space<vmem>>, vector<24x128xf32>
      tpu.vector_store %arg8[%c0_12, %c0_13], %13 {strides = array<i32>} : memref<24x128xf32, #tpu.memory_space<vmem>>, vector<24x128xf32>,
    } else {
    }
    %c0 = arith.constant 0 : index
    %c0_1 = arith.constant 0 : index
    %3 = vector.load %arg8[%c0, %c0_1] : memref<24x128xf32, #tpu.memory_space<vmem>>, vector<24x128xf32>
    %c0_2 = arith.constant 0 : index
    %c0_3 = arith.constant 0 : index
    %4 = vector.load %arg3[%c0_2, %c0_3] : memref<24x128xbf16, #tpu.memory_space<vmem>>, vector<24x128xbf16>
    %c0_4 = arith.constant 0 : index
    %c0_5 = arith.constant 0 : index
    %5 = vector.load %arg4[%c0_4, %c0_5] : memref<128x128xbf16, #tpu.memory_space<vmem>>, vector<128x128xbf16>
    %cst = arith.constant dense<0.000000e+00> : vector<24x128xf32>
    %6 = tpu.matmul %4, %5, %cst {dimension_numbers = #tpu.dot_dimension_numbers<[1], [0], [0], [1], [0, 0, 1, 1], [], []>} : vector<24x128xbf16>, vector<128x128xbf16>, vector<24x128xf32> -> vector<24x128xf32>
    %7 = arith.addf %3, %6 : vector<24x128xf32>
    %c0_6 = arith.constant 0 : index
    %c0_7 = arith.constant 0 : index
    %8 = vector.load %arg8[%c0_6, %c0_7] : memref<24x128xf32, #tpu.memory_space<vmem>>, vector<24x128xf32>
    tpu.vector_store %arg8[%c0_6, %c0_7], %7 {strides = array<i32>} : memref<24x128xf32, #tpu.memory_space<vmem>>, vector<24x128xf32>,
    %c0_i32_8 = arith.constant 0 : i32
    %9 = arith.cmpi eq, %arg2, %c0_i32_8 : i32
    %10 = arith.extui %9 : i1 to i32
    %c0_i32_9 = arith.constant 0 : i32
    %11 = arith.cmpi ne, %10, %c0_i32_9 : i32
    scf.if %11 {
      %c0_10 = arith.constant 0 : index
      %c0_11 = arith.constant 0 : index
      %12 = vector.load %arg8[%c0_10, %c0_11] : memref<24x128xf32, #tpu.memory_space<vmem>>, vector<24x128xf32>
      %c0_12 = arith.constant 0 : index
      %c0_13 = arith.constant 0 : index
      %13 = vector.load %arg5[%c0_12, %c0_13] : memref<1x128xf32, #tpu.memory_space<vmem>>, vector<1x128xf32>
      %14 = vector.broadcast %13 : vector<1x128xf32> to vector<24x128xf32>
      %15 = arith.addf %12, %14 : vector<24x128xf32>
      %16 = arith.truncf %15 : vector<24x128xf32> to vector<24x128xbf16>
      %c0_14 = arith.constant 0 : index
      %c0_15 = arith.constant 0 : index
      %17 = vector.load %arg7[%c0_14, %c0_15] : memref<24x128xbf16, #tpu.memory_space<vmem>>, vector<24x128xbf16>
      tpu.vector_store %arg7[%c0_14, %c0_15], %16 {strides = array<i32>} : memref<24x128xbf16, #tpu.memory_space<vmem>>, vector<24x128xbf16>,
    } else {
    }
    return
  }
  func.func @transform_0(%arg0: i32, %arg1: i32, %arg2: i32) -> (i32, i32) {
    %c0_i32 = arith.constant 0 : i32
    return %arg0, %arg2 : i32, i32
  }
  func.func @transform_1(%arg0: i32, %arg1: i32, %arg2: i32) -> (i32, i32) {
    %c0_i32 = arith.constant 0 : i32
    return %arg2, %arg1 : i32, i32
  }
  func.func @transform_2(%arg0: i32, %arg1: i32, %arg2: i32) -> (i32, i32) {
    %c0_i32 = arith.constant 0 : i32
    %c0_i32_0 = arith.constant 0 : i32
    return %c0_i32, %arg1 : i32, i32
  }
  func.func @transform_3(%arg0: i32, %arg1: i32, %arg2: i32) -> (i32, i32) {
    %c0_i32 = arith.constant 0 : i32
    return %arg0, %arg1 : i32, i32
  }
  func.func @transform_4(%arg0: i32, %arg1: i32, %arg2: i32) -> (i32, i32) {
    %c0_i32 = arith.constant 0 : i32
    return %arg0, %arg1 : i32, i32
  }
}

module attributes {stable_mosaic.version = 11 : i64} {
  func.func @_attention_kernel(%arg0: i32, %arg1: memref<1x12x384xbf16, #tpu.memory_space<vmem>>, %arg2: memref<12x32xf32, #tpu.memory_space<vmem>>, %arg3: memref<12x32xf32, #tpu.memory_space<vmem>>, %arg4: memref<1x12x128xbf16, #tpu.memory_space<vmem>>, %arg5: memref<12x128xbf16, #tpu.memory_space<vmem>>) attributes {dimension_semantics = [#tpu.dimension_semantics<parallel>], iteration_bounds = array<i64: 2>, scalar_prefetch = 0 : i64, scratch_operands = 1 : i64, tpu.core_type = #tpu.core_type<tc>, window_params = [{transform_indices = @transform_0, window_bounds = array<i64: 1, 12, 384>}, {pipeline_mode = #tpu.pipeline_mode<synchronous>, transform_indices = @transform_1, window_bounds = array<i64: 12, 32>}, {pipeline_mode = #tpu.pipeline_mode<synchronous>, transform_indices = @transform_2, window_bounds = array<i64: 12, 32>}, {transform_indices = @transform_3, window_bounds = array<i64: 1, 12, 128>}]} {
    %c0 = arith.constant 0 : index
    %c0_0 = arith.constant 0 : index
    %c0_1 = arith.constant 0 : index
    %0 = vector.load %arg1[%c0, %c0_0, %c0_1] : memref<1x12x384xbf16, #tpu.memory_space<vmem>>, vector<1x12x384xbf16>
    %1 = vector.shape_cast %0 : vector<1x12x384xbf16> to vector<12x384xbf16>
    %c0_2 = arith.constant 0 : index
    %c0_3 = arith.constant 0 : index
    %2 = vector.load %arg2[%c0_2, %c0_3] : memref<12x32xf32, #tpu.memory_space<vmem>>, vector<12x32xf32>
    %c0_4 = arith.constant 0 : index
    %c0_5 = arith.constant 0 : index
    %3 = vector.load %arg3[%c0_4, %c0_5] : memref<12x32xf32, #tpu.memory_space<vmem>>, vector<12x32xf32>
    %4 = vector.extract_strided_slice %1 {offsets = [0, 0], sizes = [12, 32], strides = [1, 1]} : vector<12x384xbf16> to vector<12x32xbf16>
    %5 = arith.extf %4 : vector<12x32xbf16> to vector<12x32xf32>
    %6 = vector.extract_strided_slice %1 {offsets = [0, 128], sizes = [12, 32], strides = [1, 1]} : vector<12x384xbf16> to vector<12x32xbf16>
    %7 = arith.extf %6 : vector<12x32xbf16> to vector<12x32xf32>
    %8 = vector.extract_strided_slice %1 {offsets = [0, 256], sizes = [12, 32], strides = [1, 1]} : vector<12x384xbf16> to vector<12x32xbf16>
    %9 = arith.mulf %5, %2 : vector<12x32xf32>
    %10 = vector.extract_strided_slice %5 {offsets = [0, 16], sizes = [12, 16], strides = [1, 1]} : vector<12x32xf32> to vector<12x16xf32>
    %11 = vector.extract_strided_slice %5 {offsets = [0, 0], sizes = [12, 16], strides = [1, 1]} : vector<12x32xf32> to vector<12x16xf32>
    %12 = tpu.concatenate %10, %11 in 1 : vector<12x16xf32>, vector<12x16xf32> -> vector<12x32xf32>
    %13 = arith.mulf %12, %3 : vector<12x32xf32>
    %14 = arith.addf %9, %13 : vector<12x32xf32>
    %15 = arith.mulf %7, %2 : vector<12x32xf32>
    %16 = vector.extract_strided_slice %7 {offsets = [0, 16], sizes = [12, 16], strides = [1, 1]} : vector<12x32xf32> to vector<12x16xf32>
    %17 = vector.extract_strided_slice %7 {offsets = [0, 0], sizes = [12, 16], strides = [1, 1]} : vector<12x32xf32> to vector<12x16xf32>
    %18 = tpu.concatenate %16, %17 in 1 : vector<12x16xf32>, vector<12x16xf32> -> vector<12x32xf32>
    %19 = arith.mulf %18, %3 : vector<12x32xf32>
    %20 = arith.addf %15, %19 : vector<12x32xf32>
    %21 = arith.truncf %14 : vector<12x32xf32> to vector<12x32xbf16>
    %22 = arith.truncf %20 : vector<12x32xf32> to vector<12x32xbf16>
    %cst = arith.constant dense<0.000000e+00> : vector<12x12xf32>
    %23 = tpu.matmul %21, %22, %cst {dimension_numbers = #tpu.dot_dimension_numbers<[1], [1], [0], [0], [0, 0, 1, 0], [], []>} : vector<12x32xbf16>, vector<12x32xbf16>, vector<12x12xf32> -> vector<12x12xf32>
    %cst_6 = arith.constant 0.176776692 : f32
    %24 = vector.broadcast %cst_6 : f32 to vector<12x12xf32>
    %25 = arith.mulf %23, %24 : vector<12x12xf32>
    %cst_7 = arith.constant dense<0xFF800000> : vector<12xf32>
    %26 = vector.multi_reduction <maximumf>, %25, %cst_7 [1] : vector<12x12xf32> to vector<12xf32>
    %27 = vector.shape_cast %26 : vector<12xf32> to vector<12x1xf32>
    %28 = vector.broadcast %27 : vector<12x1xf32> to vector<12x12xf32>
    %29 = arith.subf %25, %28 : vector<12x12xf32>
    %30 = math.exp %29 : vector<12x12xf32>
    %cst_8 = arith.constant dense<0.000000e+00> : vector<12xf32>
    %31 = vector.multi_reduction <add>, %30, %cst_8 [1] : vector<12x12xf32> to vector<12xf32>
    %32 = vector.shape_cast %31 : vector<12xf32> to vector<12x1xf32>
    %33 = arith.truncf %30 : vector<12x12xf32> to vector<12x12xbf16>
    %cst_9 = arith.constant dense<0.000000e+00> : vector<12x32xf32>
    %34 = tpu.matmul %33, %8, %cst_9 {dimension_numbers = #tpu.dot_dimension_numbers<[1], [0], [0], [1], [0, 0, 1, 1], [], []>} : vector<12x12xbf16>, vector<12x32xbf16>, vector<12x32xf32> -> vector<12x32xf32>
    %35 = tpu.reciprocal %32 {approx = true} : vector<12x1xf32> -> vector<12x1xf32>
    %36 = vector.broadcast %35 : vector<12x1xf32> to vector<12x32xf32>
    %37 = arith.mulf %34, %36 : vector<12x32xf32>
    %38 = arith.truncf %37 : vector<12x32xf32> to vector<12x32xbf16>
    %c0_10 = arith.constant 0 : index
    %c0_11 = arith.constant 0 : index
    %39 = vector.load %arg5[%c0_10, %c0_11] : memref<12x128xbf16, #tpu.memory_space<vmem>>, vector<12x32xbf16>
    tpu.vector_store %arg5[%c0_10, %c0_11], %38 {strides = array<i32>} : memref<12x128xbf16, #tpu.memory_space<vmem>>, vector<12x32xbf16>,
    %40 = vector.extract_strided_slice %1 {offsets = [0, 32], sizes = [12, 32], strides = [1, 1]} : vector<12x384xbf16> to vector<12x32xbf16>
    %41 = arith.extf %40 : vector<12x32xbf16> to vector<12x32xf32>
    %42 = vector.extract_strided_slice %1 {offsets = [0, 160], sizes = [12, 32], strides = [1, 1]} : vector<12x384xbf16> to vector<12x32xbf16>
    %43 = arith.extf %42 : vector<12x32xbf16> to vector<12x32xf32>
    %44 = vector.extract_strided_slice %1 {offsets = [0, 288], sizes = [12, 32], strides = [1, 1]} : vector<12x384xbf16> to vector<12x32xbf16>
    %45 = arith.mulf %41, %2 : vector<12x32xf32>
    %46 = vector.extract_strided_slice %41 {offsets = [0, 16], sizes = [12, 16], strides = [1, 1]} : vector<12x32xf32> to vector<12x16xf32>
    %47 = vector.extract_strided_slice %41 {offsets = [0, 0], sizes = [12, 16], strides = [1, 1]} : vector<12x32xf32> to vector<12x16xf32>
    %48 = tpu.concatenate %46, %47 in 1 : vector<12x16xf32>, vector<12x16xf32> -> vector<12x32xf32>
    %49 = arith.mulf %48, %3 : vector<12x32xf32>
    %50 = arith.addf %45, %49 : vector<12x32xf32>
    %51 = arith.mulf %43, %2 : vector<12x32xf32>
    %52 = vector.extract_strided_slice %43 {offsets = [0, 16], sizes = [12, 16], strides = [1, 1]} : vector<12x32xf32> to vector<12x16xf32>
    %53 = vector.extract_strided_slice %43 {offsets = [0, 0], sizes = [12, 16], strides = [1, 1]} : vector<12x32xf32> to vector<12x16xf32>
    %54 = tpu.concatenate %52, %53 in 1 : vector<12x16xf32>, vector<12x16xf32> -> vector<12x32xf32>
    %55 = arith.mulf %54, %3 : vector<12x32xf32>
    %56 = arith.addf %51, %55 : vector<12x32xf32>
    %57 = arith.truncf %50 : vector<12x32xf32> to vector<12x32xbf16>
    %58 = arith.truncf %56 : vector<12x32xf32> to vector<12x32xbf16>
    %cst_12 = arith.constant dense<0.000000e+00> : vector<12x12xf32>
    %59 = tpu.matmul %57, %58, %cst_12 {dimension_numbers = #tpu.dot_dimension_numbers<[1], [1], [0], [0], [0, 0, 1, 0], [], []>} : vector<12x32xbf16>, vector<12x32xbf16>, vector<12x12xf32> -> vector<12x12xf32>
    %cst_13 = arith.constant 0.176776692 : f32
    %60 = vector.broadcast %cst_13 : f32 to vector<12x12xf32>
    %61 = arith.mulf %59, %60 : vector<12x12xf32>
    %cst_14 = arith.constant dense<0xFF800000> : vector<12xf32>
    %62 = vector.multi_reduction <maximumf>, %61, %cst_14 [1] : vector<12x12xf32> to vector<12xf32>
    %63 = vector.shape_cast %62 : vector<12xf32> to vector<12x1xf32>
    %64 = vector.broadcast %63 : vector<12x1xf32> to vector<12x12xf32>
    %65 = arith.subf %61, %64 : vector<12x12xf32>
    %66 = math.exp %65 : vector<12x12xf32>
    %cst_15 = arith.constant dense<0.000000e+00> : vector<12xf32>
    %67 = vector.multi_reduction <add>, %66, %cst_15 [1] : vector<12x12xf32> to vector<12xf32>
    %68 = vector.shape_cast %67 : vector<12xf32> to vector<12x1xf32>
    %69 = arith.truncf %66 : vector<12x12xf32> to vector<12x12xbf16>
    %cst_16 = arith.constant dense<0.000000e+00> : vector<12x32xf32>
    %70 = tpu.matmul %69, %44, %cst_16 {dimension_numbers = #tpu.dot_dimension_numbers<[1], [0], [0], [1], [0, 0, 1, 1], [], []>} : vector<12x12xbf16>, vector<12x32xbf16>, vector<12x32xf32> -> vector<12x32xf32>
    %71 = tpu.reciprocal %68 {approx = true} : vector<12x1xf32> -> vector<12x1xf32>
    %72 = vector.broadcast %71 : vector<12x1xf32> to vector<12x32xf32>
    %73 = arith.mulf %70, %72 : vector<12x32xf32>
    %74 = arith.truncf %73 : vector<12x32xf32> to vector<12x32xbf16>
    %c0_17 = arith.constant 0 : index
    %c32 = arith.constant 32 : index
    %75 = vector.load %arg5[%c0_17, %c32] : memref<12x128xbf16, #tpu.memory_space<vmem>>, vector<12x32xbf16>
    tpu.vector_store %arg5[%c0_17, %c32], %74 {strides = array<i32>} : memref<12x128xbf16, #tpu.memory_space<vmem>>, vector<12x32xbf16>,
    %76 = vector.extract_strided_slice %1 {offsets = [0, 64], sizes = [12, 32], strides = [1, 1]} : vector<12x384xbf16> to vector<12x32xbf16>
    %77 = arith.extf %76 : vector<12x32xbf16> to vector<12x32xf32>
    %78 = vector.extract_strided_slice %1 {offsets = [0, 192], sizes = [12, 32], strides = [1, 1]} : vector<12x384xbf16> to vector<12x32xbf16>
    %79 = arith.extf %78 : vector<12x32xbf16> to vector<12x32xf32>
    %80 = vector.extract_strided_slice %1 {offsets = [0, 320], sizes = [12, 32], strides = [1, 1]} : vector<12x384xbf16> to vector<12x32xbf16>
    %81 = arith.mulf %77, %2 : vector<12x32xf32>
    %82 = vector.extract_strided_slice %77 {offsets = [0, 16], sizes = [12, 16], strides = [1, 1]} : vector<12x32xf32> to vector<12x16xf32>
    %83 = vector.extract_strided_slice %77 {offsets = [0, 0], sizes = [12, 16], strides = [1, 1]} : vector<12x32xf32> to vector<12x16xf32>
    %84 = tpu.concatenate %82, %83 in 1 : vector<12x16xf32>, vector<12x16xf32> -> vector<12x32xf32>
    %85 = arith.mulf %84, %3 : vector<12x32xf32>
    %86 = arith.addf %81, %85 : vector<12x32xf32>
    %87 = arith.mulf %79, %2 : vector<12x32xf32>
    %88 = vector.extract_strided_slice %79 {offsets = [0, 16], sizes = [12, 16], strides = [1, 1]} : vector<12x32xf32> to vector<12x16xf32>
    %89 = vector.extract_strided_slice %79 {offsets = [0, 0], sizes = [12, 16], strides = [1, 1]} : vector<12x32xf32> to vector<12x16xf32>
    %90 = tpu.concatenate %88, %89 in 1 : vector<12x16xf32>, vector<12x16xf32> -> vector<12x32xf32>
    %91 = arith.mulf %90, %3 : vector<12x32xf32>
    %92 = arith.addf %87, %91 : vector<12x32xf32>
    %93 = arith.truncf %86 : vector<12x32xf32> to vector<12x32xbf16>
    %94 = arith.truncf %92 : vector<12x32xf32> to vector<12x32xbf16>
    %cst_18 = arith.constant dense<0.000000e+00> : vector<12x12xf32>
    %95 = tpu.matmul %93, %94, %cst_18 {dimension_numbers = #tpu.dot_dimension_numbers<[1], [1], [0], [0], [0, 0, 1, 0], [], []>} : vector<12x32xbf16>, vector<12x32xbf16>, vector<12x12xf32> -> vector<12x12xf32>
    %cst_19 = arith.constant 0.176776692 : f32
    %96 = vector.broadcast %cst_19 : f32 to vector<12x12xf32>
    %97 = arith.mulf %95, %96 : vector<12x12xf32>
    %cst_20 = arith.constant dense<0xFF800000> : vector<12xf32>
    %98 = vector.multi_reduction <maximumf>, %97, %cst_20 [1] : vector<12x12xf32> to vector<12xf32>
    %99 = vector.shape_cast %98 : vector<12xf32> to vector<12x1xf32>
    %100 = vector.broadcast %99 : vector<12x1xf32> to vector<12x12xf32>
    %101 = arith.subf %97, %100 : vector<12x12xf32>
    %102 = math.exp %101 : vector<12x12xf32>
    %cst_21 = arith.constant dense<0.000000e+00> : vector<12xf32>
    %103 = vector.multi_reduction <add>, %102, %cst_21 [1] : vector<12x12xf32> to vector<12xf32>
    %104 = vector.shape_cast %103 : vector<12xf32> to vector<12x1xf32>
    %105 = arith.truncf %102 : vector<12x12xf32> to vector<12x12xbf16>
    %cst_22 = arith.constant dense<0.000000e+00> : vector<12x32xf32>
    %106 = tpu.matmul %105, %80, %cst_22 {dimension_numbers = #tpu.dot_dimension_numbers<[1], [0], [0], [1], [0, 0, 1, 1], [], []>} : vector<12x12xbf16>, vector<12x32xbf16>, vector<12x32xf32> -> vector<12x32xf32>
    %107 = tpu.reciprocal %104 {approx = true} : vector<12x1xf32> -> vector<12x1xf32>
    %108 = vector.broadcast %107 : vector<12x1xf32> to vector<12x32xf32>
    %109 = arith.mulf %106, %108 : vector<12x32xf32>
    %110 = arith.truncf %109 : vector<12x32xf32> to vector<12x32xbf16>
    %c0_23 = arith.constant 0 : index
    %c64 = arith.constant 64 : index
    %111 = vector.load %arg5[%c0_23, %c64] : memref<12x128xbf16, #tpu.memory_space<vmem>>, vector<12x32xbf16>
    tpu.vector_store %arg5[%c0_23, %c64], %110 {strides = array<i32>} : memref<12x128xbf16, #tpu.memory_space<vmem>>, vector<12x32xbf16>,
    %112 = vector.extract_strided_slice %1 {offsets = [0, 96], sizes = [12, 32], strides = [1, 1]} : vector<12x384xbf16> to vector<12x32xbf16>
    %113 = arith.extf %112 : vector<12x32xbf16> to vector<12x32xf32>
    %114 = vector.extract_strided_slice %1 {offsets = [0, 224], sizes = [12, 32], strides = [1, 1]} : vector<12x384xbf16> to vector<12x32xbf16>
    %115 = arith.extf %114 : vector<12x32xbf16> to vector<12x32xf32>
    %116 = vector.extract_strided_slice %1 {offsets = [0, 352], sizes = [12, 32], strides = [1, 1]} : vector<12x384xbf16> to vector<12x32xbf16>
    %117 = arith.mulf %113, %2 : vector<12x32xf32>
    %118 = vector.extract_strided_slice %113 {offsets = [0, 16], sizes = [12, 16], strides = [1, 1]} : vector<12x32xf32> to vector<12x16xf32>
    %119 = vector.extract_strided_slice %113 {offsets = [0, 0], sizes = [12, 16], strides = [1, 1]} : vector<12x32xf32> to vector<12x16xf32>
    %120 = tpu.concatenate %118, %119 in 1 : vector<12x16xf32>, vector<12x16xf32> -> vector<12x32xf32>
    %121 = arith.mulf %120, %3 : vector<12x32xf32>
    %122 = arith.addf %117, %121 : vector<12x32xf32>
    %123 = arith.mulf %115, %2 : vector<12x32xf32>
    %124 = vector.extract_strided_slice %115 {offsets = [0, 16], sizes = [12, 16], strides = [1, 1]} : vector<12x32xf32> to vector<12x16xf32>
    %125 = vector.extract_strided_slice %115 {offsets = [0, 0], sizes = [12, 16], strides = [1, 1]} : vector<12x32xf32> to vector<12x16xf32>
    %126 = tpu.concatenate %124, %125 in 1 : vector<12x16xf32>, vector<12x16xf32> -> vector<12x32xf32>
    %127 = arith.mulf %126, %3 : vector<12x32xf32>
    %128 = arith.addf %123, %127 : vector<12x32xf32>
    %129 = arith.truncf %122 : vector<12x32xf32> to vector<12x32xbf16>
    %130 = arith.truncf %128 : vector<12x32xf32> to vector<12x32xbf16>
    %cst_24 = arith.constant dense<0.000000e+00> : vector<12x12xf32>
    %131 = tpu.matmul %129, %130, %cst_24 {dimension_numbers = #tpu.dot_dimension_numbers<[1], [1], [0], [0], [0, 0, 1, 0], [], []>} : vector<12x32xbf16>, vector<12x32xbf16>, vector<12x12xf32> -> vector<12x12xf32>
    %cst_25 = arith.constant 0.176776692 : f32
    %132 = vector.broadcast %cst_25 : f32 to vector<12x12xf32>
    %133 = arith.mulf %131, %132 : vector<12x12xf32>
    %cst_26 = arith.constant dense<0xFF800000> : vector<12xf32>
    %134 = vector.multi_reduction <maximumf>, %133, %cst_26 [1] : vector<12x12xf32> to vector<12xf32>
    %135 = vector.shape_cast %134 : vector<12xf32> to vector<12x1xf32>
    %136 = vector.broadcast %135 : vector<12x1xf32> to vector<12x12xf32>
    %137 = arith.subf %133, %136 : vector<12x12xf32>
    %138 = math.exp %137 : vector<12x12xf32>
    %cst_27 = arith.constant dense<0.000000e+00> : vector<12xf32>
    %139 = vector.multi_reduction <add>, %138, %cst_27 [1] : vector<12x12xf32> to vector<12xf32>
    %140 = vector.shape_cast %139 : vector<12xf32> to vector<12x1xf32>
    %141 = arith.truncf %138 : vector<12x12xf32> to vector<12x12xbf16>
    %cst_28 = arith.constant dense<0.000000e+00> : vector<12x32xf32>
    %142 = tpu.matmul %141, %116, %cst_28 {dimension_numbers = #tpu.dot_dimension_numbers<[1], [0], [0], [1], [0, 0, 1, 1], [], []>} : vector<12x12xbf16>, vector<12x32xbf16>, vector<12x32xf32> -> vector<12x32xf32>
    %143 = tpu.reciprocal %140 {approx = true} : vector<12x1xf32> -> vector<12x1xf32>
    %144 = vector.broadcast %143 : vector<12x1xf32> to vector<12x32xf32>
    %145 = arith.mulf %142, %144 : vector<12x32xf32>
    %146 = arith.truncf %145 : vector<12x32xf32> to vector<12x32xbf16>
    %c0_29 = arith.constant 0 : index
    %c96 = arith.constant 96 : index
    %147 = vector.load %arg5[%c0_29, %c96] : memref<12x128xbf16, #tpu.memory_space<vmem>>, vector<12x32xbf16>
    tpu.vector_store %arg5[%c0_29, %c96], %146 {strides = array<i32>} : memref<12x128xbf16, #tpu.memory_space<vmem>>, vector<12x32xbf16>,
    %c0_30 = arith.constant 0 : index
    %c0_31 = arith.constant 0 : index
    %148 = vector.load %arg5[%c0_30, %c0_31] : memref<12x128xbf16, #tpu.memory_space<vmem>>, vector<12x128xbf16>
    %c0_32 = arith.constant 0 : index
    %c0_33 = arith.constant 0 : index
    %c0_34 = arith.constant 0 : index
    %149 = vector.load %arg4[%c0_32, %c0_33, %c0_34] : memref<1x12x128xbf16, #tpu.memory_space<vmem>>, vector<1x12x128xbf16>
    %150 = vector.shape_cast %149 : vector<1x12x128xbf16> to vector<12x128xbf16>
    %151 = vector.shape_cast %148 : vector<12x128xbf16> to vector<1x12x128xbf16>
    tpu.vector_store %arg4[%c0_32, %c0_33, %c0_34], %151 {strides = array<i32>} : memref<1x12x128xbf16, #tpu.memory_space<vmem>>, vector<1x12x128xbf16>,
    return
  }
  func.func @transform_0(%arg0: i32) -> (i32, i32, i32) {
    %c0_i32 = arith.constant 0 : i32
    %c0_i32_0 = arith.constant 0 : i32
    %c0_i32_1 = arith.constant 0 : i32
    return %arg0, %c0_i32, %c0_i32_0 : i32, i32, i32
  }
  func.func @transform_1(%arg0: i32) -> (i32, i32) {
    %c0_i32 = arith.constant 0 : i32
    %c0_i32_0 = arith.constant 0 : i32
    %c0_i32_1 = arith.constant 0 : i32
    return %c0_i32, %c0_i32_0 : i32, i32
  }
  func.func @transform_2(%arg0: i32) -> (i32, i32) {
    %c0_i32 = arith.constant 0 : i32
    %c0_i32_0 = arith.constant 0 : i32
    %c0_i32_1 = arith.constant 0 : i32
    return %c0_i32, %c0_i32_0 : i32, i32
  }
  func.func @transform_3(%arg0: i32) -> (i32, i32, i32) {
    %c0_i32 = arith.constant 0 : i32
    %c0_i32_0 = arith.constant 0 : i32
    %c0_i32_1 = arith.constant 0 : i32
    return %arg0, %c0_i32, %c0_i32_0 : i32, i32, i32
  }
}

module attributes {stable_mosaic.version = 11 : i64} {
  func.func @_ln_matmul_kernel(%arg0: i32, %arg1: i32, %arg2: memref<24x128xbf16, #tpu.memory_space<vmem>>, %arg3: memref<1x128xf32, #tpu.memory_space<vmem>>, %arg4: memref<1x128xf32, #tpu.memory_space<vmem>>, %arg5: memref<128x512xbf16, #tpu.memory_space<vmem>>, %arg6: memref<1x512xf32, #tpu.memory_space<vmem>>, %arg7: memref<24x512xbf16, #tpu.memory_space<vmem>>, %arg8: memref<24x128xbf16, #tpu.memory_space<vmem>>) attributes {dimension_semantics = [#tpu.dimension_semantics<parallel>, #tpu.dimension_semantics<arbitrary>], iteration_bounds = array<i64: 1, 1>, scalar_prefetch = 0 : i64, scratch_operands = 1 : i64, tpu.core_type = #tpu.core_type<tc>, window_params = [{transform_indices = @transform_0, window_bounds = array<i64: 24, 128>}, {pipeline_mode = #tpu.pipeline_mode<synchronous>, transform_indices = @transform_1, window_bounds = array<i64: 1, 128>}, {pipeline_mode = #tpu.pipeline_mode<synchronous>, transform_indices = @transform_2, window_bounds = array<i64: 1, 128>}, {transform_indices = @transform_3, window_bounds = array<i64: 128, 512>}, {transform_indices = @transform_4, window_bounds = array<i64: 1, 512>}, {transform_indices = @transform_5, window_bounds = array<i64: 24, 512>}]} {
    %c0_i32 = arith.constant 0 : i32
    %0 = arith.cmpi eq, %arg1, %c0_i32 : i32
    %1 = arith.extui %0 : i1 to i32
    %c0_i32_0 = arith.constant 0 : i32
    %2 = arith.cmpi ne, %1, %c0_i32_0 : i32
    scf.if %2 {
      %c0_12 = arith.constant 0 : index
      %c0_13 = arith.constant 0 : index
      %24 = vector.load %arg2[%c0_12, %c0_13] : memref<24x128xbf16, #tpu.memory_space<vmem>>, vector<24x128xbf16>
      %25 = arith.extf %24 : vector<24x128xbf16> to vector<24x128xf32>
      %cst_14 = arith.constant dense<0.000000e+00> : vector<24xf32>
      %26 = vector.multi_reduction <add>, %25, %cst_14 [1] : vector<24x128xf32> to vector<24xf32>
      %27 = vector.shape_cast %26 : vector<24xf32> to vector<24x1xf32>
      %cst_15 = arith.constant 7.812500e-03 : f32
      %28 = vector.broadcast %cst_15 : f32 to vector<24x1xf32>
      %29 = arith.mulf %27, %28 : vector<24x1xf32>
      %30 = vector.broadcast %29 : vector<24x1xf32> to vector<24x128xf32>
      %31 = arith.subf %25, %30 : vector<24x128xf32>
      %32 = arith.mulf %31, %31 : vector<24x128xf32>
      %cst_16 = arith.constant dense<0.000000e+00> : vector<24xf32>
      %33 = vector.multi_reduction <add>, %32, %cst_16 [1] : vector<24x128xf32> to vector<24xf32>
      %34 = vector.shape_cast %33 : vector<24xf32> to vector<24x1xf32>
      %cst_17 = arith.constant 7.812500e-03 : f32
      %35 = vector.broadcast %cst_17 : f32 to vector<24x1xf32>
      %36 = arith.mulf %34, %35 : vector<24x1xf32>
      %cst_18 = arith.constant 9.99999974E-6 : f32
      %37 = vector.broadcast %cst_18 : f32 to vector<24x1xf32>
      %38 = arith.addf %36, %37 : vector<24x1xf32>
      %39 = math.rsqrt %38 : vector<24x1xf32>
      %40 = vector.broadcast %39 : vector<24x1xf32> to vector<24x128xf32>
      %41 = arith.mulf %31, %40 : vector<24x128xf32>
      %c0_19 = arith.constant 0 : index
      %c0_20 = arith.constant 0 : index
      %42 = vector.load %arg3[%c0_19, %c0_20] : memref<1x128xf32, #tpu.memory_space<vmem>>, vector<1x128xf32>
      %43 = vector.broadcast %42 : vector<1x128xf32> to vector<24x128xf32>
      %44 = arith.mulf %41, %43 : vector<24x128xf32>
      %c0_21 = arith.constant 0 : index
      %c0_22 = arith.constant 0 : index
      %45 = vector.load %arg4[%c0_21, %c0_22] : memref<1x128xf32, #tpu.memory_space<vmem>>, vector<1x128xf32>
      %46 = vector.broadcast %45 : vector<1x128xf32> to vector<24x128xf32>
      %47 = arith.addf %44, %46 : vector<24x128xf32>
      %48 = arith.truncf %47 : vector<24x128xf32> to vector<24x128xbf16>
      %c0_23 = arith.constant 0 : index
      %c0_24 = arith.constant 0 : index
      %49 = vector.load %arg8[%c0_23, %c0_24] : memref<24x128xbf16, #tpu.memory_space<vmem>>, vector<24x128xbf16>
      tpu.vector_store %arg8[%c0_23, %c0_24], %48 {strides = array<i32>} : memref<24x128xbf16, #tpu.memory_space<vmem>>, vector<24x128xbf16>,
    } else {
    }
    %c0 = arith.constant 0 : index
    %c0_1 = arith.constant 0 : index
    %3 = vector.load %arg8[%c0, %c0_1] : memref<24x128xbf16, #tpu.memory_space<vmem>>, vector<24x128xbf16>
    %c0_2 = arith.constant 0 : index
    %c0_3 = arith.constant 0 : index
    %4 = vector.load %arg5[%c0_2, %c0_3] : memref<128x512xbf16, #tpu.memory_space<vmem>>, vector<128x512xbf16>
    %cst = arith.constant dense<0.000000e+00> : vector<24x512xf32>
    %5 = tpu.matmul %3, %4, %cst {dimension_numbers = #tpu.dot_dimension_numbers<[1], [0], [0], [1], [0, 0, 1, 1], [], []>} : vector<24x128xbf16>, vector<128x512xbf16>, vector<24x512xf32> -> vector<24x512xf32>
    %c0_4 = arith.constant 0 : index
    %c0_5 = arith.constant 0 : index
    %6 = vector.load %arg6[%c0_4, %c0_5] : memref<1x512xf32, #tpu.memory_space<vmem>>, vector<1x512xf32>
    %7 = vector.broadcast %6 : vector<1x512xf32> to vector<24x512xf32>
    %8 = arith.addf %5, %7 : vector<24x512xf32>
    %9 = arith.mulf %8, %8 : vector<24x512xf32>
    %10 = arith.mulf %8, %9 : vector<24x512xf32>
    %cst_6 = arith.constant 4.471500e-02 : f32
    %11 = vector.broadcast %cst_6 : f32 to vector<24x512xf32>
    %12 = arith.mulf %11, %10 : vector<24x512xf32>
    %13 = arith.addf %8, %12 : vector<24x512xf32>
    %cst_7 = arith.constant 0.797884583 : f32
    %14 = vector.broadcast %cst_7 : f32 to vector<24x512xf32>
    %15 = arith.mulf %14, %13 : vector<24x512xf32>
    %16 = math.tanh %15 : vector<24x512xf32>
    %cst_8 = arith.constant 1.000000e+00 : f32
    %17 = vector.broadcast %cst_8 : f32 to vector<24x512xf32>
    %18 = arith.addf %17, %16 : vector<24x512xf32>
    %cst_9 = arith.constant 5.000000e-01 : f32
    %19 = vector.broadcast %cst_9 : f32 to vector<24x512xf32>
    %20 = arith.mulf %19, %18 : vector<24x512xf32>
    %21 = arith.mulf %8, %20 : vector<24x512xf32>
    %22 = arith.truncf %21 : vector<24x512xf32> to vector<24x512xbf16>
    %c0_10 = arith.constant 0 : index
    %c0_11 = arith.constant 0 : index
    %23 = vector.load %arg7[%c0_10, %c0_11] : memref<24x512xbf16, #tpu.memory_space<vmem>>, vector<24x512xbf16>
    tpu.vector_store %arg7[%c0_10, %c0_11], %22 {strides = array<i32>} : memref<24x512xbf16, #tpu.memory_space<vmem>>, vector<24x512xbf16>,
    return
  }
  func.func @transform_0(%arg0: i32, %arg1: i32) -> (i32, i32) {
    %c0_i32 = arith.constant 0 : i32
    %c0_i32_0 = arith.constant 0 : i32
    return %arg0, %c0_i32 : i32, i32
  }
  func.func @transform_1(%arg0: i32, %arg1: i32) -> (i32, i32) {
    %c0_i32 = arith.constant 0 : i32
    %c0_i32_0 = arith.constant 0 : i32
    %c0_i32_1 = arith.constant 0 : i32
    return %c0_i32, %c0_i32_0 : i32, i32
  }
  func.func @transform_2(%arg0: i32, %arg1: i32) -> (i32, i32) {
    %c0_i32 = arith.constant 0 : i32
    %c0_i32_0 = arith.constant 0 : i32
    %c0_i32_1 = arith.constant 0 : i32
    return %c0_i32, %c0_i32_0 : i32, i32
  }
  func.func @transform_3(%arg0: i32, %arg1: i32) -> (i32, i32) {
    %c0_i32 = arith.constant 0 : i32
    %c0_i32_0 = arith.constant 0 : i32
    return %c0_i32, %arg1 : i32, i32
  }
  func.func @transform_4(%arg0: i32, %arg1: i32) -> (i32, i32) {
    %c0_i32 = arith.constant 0 : i32
    %c0_i32_0 = arith.constant 0 : i32
    return %c0_i32, %arg1 : i32, i32
  }
  func.func @transform_5(%arg0: i32, %arg1: i32) -> (i32, i32) {
    %c0_i32 = arith.constant 0 : i32
    return %arg0, %arg1 : i32, i32
  }
}

module attributes {stable_mosaic.version = 11 : i64} {
  func.func @_layernorm_kernel(%arg0: i32, %arg1: memref<24x128xbf16, #tpu.memory_space<vmem>>, %arg2: memref<1x128xf32, #tpu.memory_space<vmem>>, %arg3: memref<1x128xf32, #tpu.memory_space<vmem>>, %arg4: memref<24x128xbf16, #tpu.memory_space<vmem>>, %arg5: memref<24x128xbf16, #tpu.memory_space<vmem>>) attributes {dimension_semantics = [#tpu.dimension_semantics<parallel>], iteration_bounds = array<i64: 1>, scalar_prefetch = 0 : i64, scratch_operands = 0 : i64, tpu.core_type = #tpu.core_type<tc>, window_params = [{transform_indices = @transform_0, window_bounds = array<i64: 24, 128>}, {pipeline_mode = #tpu.pipeline_mode<synchronous>, transform_indices = @transform_1, window_bounds = array<i64: 1, 128>}, {pipeline_mode = #tpu.pipeline_mode<synchronous>, transform_indices = @transform_2, window_bounds = array<i64: 1, 128>}, {transform_indices = @transform_3, window_bounds = array<i64: 24, 128>}, {transform_indices = @transform_4, window_bounds = array<i64: 24, 128>}]} {
    %c0 = arith.constant 0 : index
    %c0_0 = arith.constant 0 : index
    %0 = vector.load %arg1[%c0, %c0_0] : memref<24x128xbf16, #tpu.memory_space<vmem>>, vector<24x128xbf16>
    %1 = arith.extf %0 : vector<24x128xbf16> to vector<24x128xf32>
    %cst = arith.constant dense<0.000000e+00> : vector<24xf32>
    %2 = vector.multi_reduction <add>, %1, %cst [1] : vector<24x128xf32> to vector<24xf32>
    %3 = vector.shape_cast %2 : vector<24xf32> to vector<24x1xf32>
    %cst_1 = arith.constant 7.812500e-03 : f32
    %4 = vector.broadcast %cst_1 : f32 to vector<24x1xf32>
    %5 = arith.mulf %3, %4 : vector<24x1xf32>
    %6 = vector.broadcast %5 : vector<24x1xf32> to vector<24x128xf32>
    %7 = arith.subf %1, %6 : vector<24x128xf32>
    %8 = arith.mulf %7, %7 : vector<24x128xf32>
    %cst_2 = arith.constant dense<0.000000e+00> : vector<24xf32>
    %9 = vector.multi_reduction <add>, %8, %cst_2 [1] : vector<24x128xf32> to vector<24xf32>
    %10 = vector.shape_cast %9 : vector<24xf32> to vector<24x1xf32>
    %cst_3 = arith.constant 7.812500e-03 : f32
    %11 = vector.broadcast %cst_3 : f32 to vector<24x1xf32>
    %12 = arith.mulf %10, %11 : vector<24x1xf32>
    %cst_4 = arith.constant 9.99999974E-6 : f32
    %13 = vector.broadcast %cst_4 : f32 to vector<24x1xf32>
    %14 = arith.addf %12, %13 : vector<24x1xf32>
    %15 = math.rsqrt %14 : vector<24x1xf32>
    %16 = vector.broadcast %15 : vector<24x1xf32> to vector<24x128xf32>
    %17 = arith.mulf %7, %16 : vector<24x128xf32>
    %c0_5 = arith.constant 0 : index
    %c0_6 = arith.constant 0 : index
    %18 = vector.load %arg2[%c0_5, %c0_6] : memref<1x128xf32, #tpu.memory_space<vmem>>, vector<1x128xf32>
    %19 = vector.broadcast %18 : vector<1x128xf32> to vector<24x128xf32>
    %20 = arith.mulf %17, %19 : vector<24x128xf32>
    %c0_7 = arith.constant 0 : index
    %c0_8 = arith.constant 0 : index
    %21 = vector.load %arg3[%c0_7, %c0_8] : memref<1x128xf32, #tpu.memory_space<vmem>>, vector<1x128xf32>
    %22 = vector.broadcast %21 : vector<1x128xf32> to vector<24x128xf32>
    %23 = arith.addf %20, %22 : vector<24x128xf32>
    %c0_9 = arith.constant 0 : index
    %c0_10 = arith.constant 0 : index
    %24 = vector.load %arg4[%c0_9, %c0_10] : memref<24x128xbf16, #tpu.memory_space<vmem>>, vector<24x128xbf16>
    %25 = arith.extf %24 : vector<24x128xbf16> to vector<24x128xf32>
    %26 = arith.addf %23, %25 : vector<24x128xf32>
    %27 = arith.truncf %26 : vector<24x128xf32> to vector<24x128xbf16>
    %c0_11 = arith.constant 0 : index
    %c0_12 = arith.constant 0 : index
    %28 = vector.load %arg5[%c0_11, %c0_12] : memref<24x128xbf16, #tpu.memory_space<vmem>>, vector<24x128xbf16>
    tpu.vector_store %arg5[%c0_11, %c0_12], %27 {strides = array<i32>} : memref<24x128xbf16, #tpu.memory_space<vmem>>, vector<24x128xbf16>,
    return
  }
  func.func @transform_0(%arg0: i32) -> (i32, i32) {
    %c0_i32 = arith.constant 0 : i32
    %c0_i32_0 = arith.constant 0 : i32
    return %arg0, %c0_i32 : i32, i32
  }
  func.func @transform_1(%arg0: i32) -> (i32, i32) {
    %c0_i32 = arith.constant 0 : i32
    %c0_i32_0 = arith.constant 0 : i32
    %c0_i32_1 = arith.constant 0 : i32
    return %c0_i32, %c0_i32_0 : i32, i32
  }
  func.func @transform_2(%arg0: i32) -> (i32, i32) {
    %c0_i32 = arith.constant 0 : i32
    %c0_i32_0 = arith.constant 0 : i32
    %c0_i32_1 = arith.constant 0 : i32
    return %c0_i32, %c0_i32_0 : i32, i32
  }
  func.func @transform_3(%arg0: i32) -> (i32, i32) {
    %c0_i32 = arith.constant 0 : i32
    %c0_i32_0 = arith.constant 0 : i32
    return %arg0, %c0_i32 : i32, i32
  }
  func.func @transform_4(%arg0: i32) -> (i32, i32) {
    %c0_i32 = arith.constant 0 : i32
    %c0_i32_0 = arith.constant 0 : i32
    return %arg0, %c0_i32 : i32, i32
  }
}

module attributes {stable_mosaic.version = 11 : i64} {
  func.func @_matmul_kernel(%arg0: i32, %arg1: i32, %arg2: i32, %arg3: memref<24x512xbf16, #tpu.memory_space<vmem>>, %arg4: memref<512x128xbf16, #tpu.memory_space<vmem>>, %arg5: memref<1x128xf32, #tpu.memory_space<vmem>>, %arg6: memref<24x128xbf16, #tpu.memory_space<vmem>>, %arg7: memref<24x128xbf16, #tpu.memory_space<vmem>>, %arg8: memref<24x128xf32, #tpu.memory_space<vmem>>) attributes {dimension_semantics = [#tpu.dimension_semantics<parallel>, #tpu.dimension_semantics<parallel>, #tpu.dimension_semantics<arbitrary>], iteration_bounds = array<i64: 1, 1, 1>, scalar_prefetch = 0 : i64, scratch_operands = 1 : i64, tpu.core_type = #tpu.core_type<tc>, window_params = [{transform_indices = @transform_0, window_bounds = array<i64: 24, 512>}, {transform_indices = @transform_1, window_bounds = array<i64: 512, 128>}, {transform_indices = @transform_2, window_bounds = array<i64: 1, 128>}, {transform_indices = @transform_3, window_bounds = array<i64: 24, 128>}, {transform_indices = @transform_4, window_bounds = array<i64: 24, 128>}]} {
    %c0_i32 = arith.constant 0 : i32
    %0 = arith.cmpi eq, %arg2, %c0_i32 : i32
    %1 = arith.extui %0 : i1 to i32
    %c0_i32_0 = arith.constant 0 : i32
    %2 = arith.cmpi ne, %1, %c0_i32_0 : i32
    scf.if %2 {
      %c0_10 = arith.constant 0 : index
      %c0_11 = arith.constant 0 : index
      %12 = vector.load %arg6[%c0_10, %c0_11] : memref<24x128xbf16, #tpu.memory_space<vmem>>, vector<24x128xbf16>
      %13 = arith.extf %12 : vector<24x128xbf16> to vector<24x128xf32>
      %c0_12 = arith.constant 0 : index
      %c0_13 = arith.constant 0 : index
      %14 = vector.load %arg8[%c0_12, %c0_13] : memref<24x128xf32, #tpu.memory_space<vmem>>, vector<24x128xf32>
      tpu.vector_store %arg8[%c0_12, %c0_13], %13 {strides = array<i32>} : memref<24x128xf32, #tpu.memory_space<vmem>>, vector<24x128xf32>,
    } else {
    }
    %c0 = arith.constant 0 : index
    %c0_1 = arith.constant 0 : index
    %3 = vector.load %arg8[%c0, %c0_1] : memref<24x128xf32, #tpu.memory_space<vmem>>, vector<24x128xf32>
    %c0_2 = arith.constant 0 : index
    %c0_3 = arith.constant 0 : index
    %4 = vector.load %arg3[%c0_2, %c0_3] : memref<24x512xbf16, #tpu.memory_space<vmem>>, vector<24x512xbf16>
    %c0_4 = arith.constant 0 : index
    %c0_5 = arith.constant 0 : index
    %5 = vector.load %arg4[%c0_4, %c0_5] : memref<512x128xbf16, #tpu.memory_space<vmem>>, vector<512x128xbf16>
    %cst = arith.constant dense<0.000000e+00> : vector<24x128xf32>
    %6 = tpu.matmul %4, %5, %cst {dimension_numbers = #tpu.dot_dimension_numbers<[1], [0], [0], [1], [0, 0, 1, 1], [], []>} : vector<24x512xbf16>, vector<512x128xbf16>, vector<24x128xf32> -> vector<24x128xf32>
    %7 = arith.addf %3, %6 : vector<24x128xf32>
    %c0_6 = arith.constant 0 : index
    %c0_7 = arith.constant 0 : index
    %8 = vector.load %arg8[%c0_6, %c0_7] : memref<24x128xf32, #tpu.memory_space<vmem>>, vector<24x128xf32>
    tpu.vector_store %arg8[%c0_6, %c0_7], %7 {strides = array<i32>} : memref<24x128xf32, #tpu.memory_space<vmem>>, vector<24x128xf32>,
    %c0_i32_8 = arith.constant 0 : i32
    %9 = arith.cmpi eq, %arg2, %c0_i32_8 : i32
    %10 = arith.extui %9 : i1 to i32
    %c0_i32_9 = arith.constant 0 : i32
    %11 = arith.cmpi ne, %10, %c0_i32_9 : i32
    scf.if %11 {
      %c0_10 = arith.constant 0 : index
      %c0_11 = arith.constant 0 : index
      %12 = vector.load %arg8[%c0_10, %c0_11] : memref<24x128xf32, #tpu.memory_space<vmem>>, vector<24x128xf32>
      %c0_12 = arith.constant 0 : index
      %c0_13 = arith.constant 0 : index
      %13 = vector.load %arg5[%c0_12, %c0_13] : memref<1x128xf32, #tpu.memory_space<vmem>>, vector<1x128xf32>
      %14 = vector.broadcast %13 : vector<1x128xf32> to vector<24x128xf32>
      %15 = arith.addf %12, %14 : vector<24x128xf32>
      %16 = arith.truncf %15 : vector<24x128xf32> to vector<24x128xbf16>
      %c0_14 = arith.constant 0 : index
      %c0_15 = arith.constant 0 : index
      %17 = vector.load %arg7[%c0_14, %c0_15] : memref<24x128xbf16, #tpu.memory_space<vmem>>, vector<24x128xbf16>
      tpu.vector_store %arg7[%c0_14, %c0_15], %16 {strides = array<i32>} : memref<24x128xbf16, #tpu.memory_space<vmem>>, vector<24x128xbf16>,
    } else {
    }
    return
  }
  func.func @transform_0(%arg0: i32, %arg1: i32, %arg2: i32) -> (i32, i32) {
    %c0_i32 = arith.constant 0 : i32
    return %arg0, %arg2 : i32, i32
  }
  func.func @transform_1(%arg0: i32, %arg1: i32, %arg2: i32) -> (i32, i32) {
    %c0_i32 = arith.constant 0 : i32
    return %arg2, %arg1 : i32, i32
  }
  func.func @transform_2(%arg0: i32, %arg1: i32, %arg2: i32) -> (i32, i32) {
    %c0_i32 = arith.constant 0 : i32
    %c0_i32_0 = arith.constant 0 : i32
    return %c0_i32, %arg1 : i32, i32
  }
  func.func @transform_3(%arg0: i32, %arg1: i32, %arg2: i32) -> (i32, i32) {
    %c0_i32 = arith.constant 0 : i32
    return %arg0, %arg1 : i32, i32
  }
  func.func @transform_4(%arg0: i32, %arg1: i32, %arg2: i32) -> (i32, i32) {
    %c0_i32 = arith.constant 0 : i32
    return %arg0, %arg1 : i32, i32
  }
}

module attributes {stable_mosaic.version = 11 : i64} {
  func.func @_ln_matmul_kernel(%arg0: i32, %arg1: i32, %arg2: memref<24x128xbf16, #tpu.memory_space<vmem>>, %arg3: memref<1x128xf32, #tpu.memory_space<vmem>>, %arg4: memref<1x128xf32, #tpu.memory_space<vmem>>, %arg5: memref<128x128xbf16, #tpu.memory_space<vmem>>, %arg6: memref<1x128xf32, #tpu.memory_space<vmem>>, %arg7: memref<24x128xbf16, #tpu.memory_space<vmem>>, %arg8: memref<24x128xbf16, #tpu.memory_space<vmem>>) attributes {dimension_semantics = [#tpu.dimension_semantics<parallel>, #tpu.dimension_semantics<arbitrary>], iteration_bounds = array<i64: 1, 1>, scalar_prefetch = 0 : i64, scratch_operands = 1 : i64, tpu.core_type = #tpu.core_type<tc>, window_params = [{transform_indices = @transform_0, window_bounds = array<i64: 24, 128>}, {pipeline_mode = #tpu.pipeline_mode<synchronous>, transform_indices = @transform_1, window_bounds = array<i64: 1, 128>}, {pipeline_mode = #tpu.pipeline_mode<synchronous>, transform_indices = @transform_2, window_bounds = array<i64: 1, 128>}, {transform_indices = @transform_3, window_bounds = array<i64: 128, 128>}, {transform_indices = @transform_4, window_bounds = array<i64: 1, 128>}, {transform_indices = @transform_5, window_bounds = array<i64: 24, 128>}]} {
    %c0_i32 = arith.constant 0 : i32
    %0 = arith.cmpi eq, %arg1, %c0_i32 : i32
    %1 = arith.extui %0 : i1 to i32
    %c0_i32_0 = arith.constant 0 : i32
    %2 = arith.cmpi ne, %1, %c0_i32_0 : i32
    scf.if %2 {
      %c0_8 = arith.constant 0 : index
      %c0_9 = arith.constant 0 : index
      %11 = vector.load %arg2[%c0_8, %c0_9] : memref<24x128xbf16, #tpu.memory_space<vmem>>, vector<24x128xbf16>
      %12 = arith.extf %11 : vector<24x128xbf16> to vector<24x128xf32>
      %cst_10 = arith.constant dense<0.000000e+00> : vector<24xf32>
      %13 = vector.multi_reduction <add>, %12, %cst_10 [1] : vector<24x128xf32> to vector<24xf32>
      %14 = vector.shape_cast %13 : vector<24xf32> to vector<24x1xf32>
      %cst_11 = arith.constant 7.812500e-03 : f32
      %15 = vector.broadcast %cst_11 : f32 to vector<24x1xf32>
      %16 = arith.mulf %14, %15 : vector<24x1xf32>
      %17 = vector.broadcast %16 : vector<24x1xf32> to vector<24x128xf32>
      %18 = arith.subf %12, %17 : vector<24x128xf32>
      %19 = arith.mulf %18, %18 : vector<24x128xf32>
      %cst_12 = arith.constant dense<0.000000e+00> : vector<24xf32>
      %20 = vector.multi_reduction <add>, %19, %cst_12 [1] : vector<24x128xf32> to vector<24xf32>
      %21 = vector.shape_cast %20 : vector<24xf32> to vector<24x1xf32>
      %cst_13 = arith.constant 7.812500e-03 : f32
      %22 = vector.broadcast %cst_13 : f32 to vector<24x1xf32>
      %23 = arith.mulf %21, %22 : vector<24x1xf32>
      %cst_14 = arith.constant 9.99999974E-6 : f32
      %24 = vector.broadcast %cst_14 : f32 to vector<24x1xf32>
      %25 = arith.addf %23, %24 : vector<24x1xf32>
      %26 = math.rsqrt %25 : vector<24x1xf32>
      %27 = vector.broadcast %26 : vector<24x1xf32> to vector<24x128xf32>
      %28 = arith.mulf %18, %27 : vector<24x128xf32>
      %c0_15 = arith.constant 0 : index
      %c0_16 = arith.constant 0 : index
      %29 = vector.load %arg3[%c0_15, %c0_16] : memref<1x128xf32, #tpu.memory_space<vmem>>, vector<1x128xf32>
      %30 = vector.broadcast %29 : vector<1x128xf32> to vector<24x128xf32>
      %31 = arith.mulf %28, %30 : vector<24x128xf32>
      %c0_17 = arith.constant 0 : index
      %c0_18 = arith.constant 0 : index
      %32 = vector.load %arg4[%c0_17, %c0_18] : memref<1x128xf32, #tpu.memory_space<vmem>>, vector<1x128xf32>
      %33 = vector.broadcast %32 : vector<1x128xf32> to vector<24x128xf32>
      %34 = arith.addf %31, %33 : vector<24x128xf32>
      %35 = arith.truncf %34 : vector<24x128xf32> to vector<24x128xbf16>
      %c0_19 = arith.constant 0 : index
      %c0_20 = arith.constant 0 : index
      %36 = vector.load %arg8[%c0_19, %c0_20] : memref<24x128xbf16, #tpu.memory_space<vmem>>, vector<24x128xbf16>
      tpu.vector_store %arg8[%c0_19, %c0_20], %35 {strides = array<i32>} : memref<24x128xbf16, #tpu.memory_space<vmem>>, vector<24x128xbf16>,
    } else {
    }
    %c0 = arith.constant 0 : index
    %c0_1 = arith.constant 0 : index
    %3 = vector.load %arg8[%c0, %c0_1] : memref<24x128xbf16, #tpu.memory_space<vmem>>, vector<24x128xbf16>
    %c0_2 = arith.constant 0 : index
    %c0_3 = arith.constant 0 : index
    %4 = vector.load %arg5[%c0_2, %c0_3] : memref<128x128xbf16, #tpu.memory_space<vmem>>, vector<128x128xbf16>
    %cst = arith.constant dense<0.000000e+00> : vector<24x128xf32>
    %5 = tpu.matmul %3, %4, %cst {dimension_numbers = #tpu.dot_dimension_numbers<[1], [0], [0], [1], [0, 0, 1, 1], [], []>} : vector<24x128xbf16>, vector<128x128xbf16>, vector<24x128xf32> -> vector<24x128xf32>
    %c0_4 = arith.constant 0 : index
    %c0_5 = arith.constant 0 : index
    %6 = vector.load %arg6[%c0_4, %c0_5] : memref<1x128xf32, #tpu.memory_space<vmem>>, vector<1x128xf32>
    %7 = vector.broadcast %6 : vector<1x128xf32> to vector<24x128xf32>
    %8 = arith.addf %5, %7 : vector<24x128xf32>
    %9 = arith.truncf %8 : vector<24x128xf32> to vector<24x128xbf16>
    %c0_6 = arith.constant 0 : index
    %c0_7 = arith.constant 0 : index
    %10 = vector.load %arg7[%c0_6, %c0_7] : memref<24x128xbf16, #tpu.memory_space<vmem>>, vector<24x128xbf16>
    tpu.vector_store %arg7[%c0_6, %c0_7], %9 {strides = array<i32>} : memref<24x128xbf16, #tpu.memory_space<vmem>>, vector<24x128xbf16>,
    return
  }
  func.func @transform_0(%arg0: i32, %arg1: i32) -> (i32, i32) {
    %c0_i32 = arith.constant 0 : i32
    %c0_i32_0 = arith.constant 0 : i32
    return %arg0, %c0_i32 : i32, i32
  }
  func.func @transform_1(%arg0: i32, %arg1: i32) -> (i32, i32) {
    %c0_i32 = arith.constant 0 : i32
    %c0_i32_0 = arith.constant 0 : i32
    %c0_i32_1 = arith.constant 0 : i32
    return %c0_i32, %c0_i32_0 : i32, i32
  }
  func.func @transform_2(%arg0: i32, %arg1: i32) -> (i32, i32) {
    %c0_i32 = arith.constant 0 : i32
    %c0_i32_0 = arith.constant 0 : i32
    %c0_i32_1 = arith.constant 0 : i32
    return %c0_i32, %c0_i32_0 : i32, i32
  }
  func.func @transform_3(%arg0: i32, %arg1: i32) -> (i32, i32) {
    %c0_i32 = arith.constant 0 : i32
    %c0_i32_0 = arith.constant 0 : i32
    return %c0_i32, %arg1 : i32, i32
  }
  func.func @transform_4(%arg0: i32, %arg1: i32) -> (i32, i32) {
    %c0_i32 = arith.constant 0 : i32
    %c0_i32_0 = arith.constant 0 : i32
    return %c0_i32, %arg1 : i32, i32
  }
  func.func @transform_5(%arg0: i32, %arg1: i32) -> (i32, i32) {
    %c0_i32 = arith.constant 0 : i32
    return %arg0, %arg1 : i32, i32
  }
}

module attributes {stable_mosaic.version = 11 : i64} {
  func.func @_ln_matmul_kernel(%arg0: i32, %arg1: i32, %arg2: memref<40x128xbf16, #tpu.memory_space<vmem>>, %arg3: memref<1x128xf32, #tpu.memory_space<vmem>>, %arg4: memref<1x128xf32, #tpu.memory_space<vmem>>, %arg5: memref<128x384xbf16, #tpu.memory_space<vmem>>, %arg6: memref<1x384xf32, #tpu.memory_space<vmem>>, %arg7: memref<40x384xbf16, #tpu.memory_space<vmem>>, %arg8: memref<40x128xbf16, #tpu.memory_space<vmem>>) attributes {dimension_semantics = [#tpu.dimension_semantics<parallel>, #tpu.dimension_semantics<arbitrary>], iteration_bounds = array<i64: 1, 1>, scalar_prefetch = 0 : i64, scratch_operands = 1 : i64, tpu.core_type = #tpu.core_type<tc>, window_params = [{transform_indices = @transform_0, window_bounds = array<i64: 40, 128>}, {pipeline_mode = #tpu.pipeline_mode<synchronous>, transform_indices = @transform_1, window_bounds = array<i64: 1, 128>}, {pipeline_mode = #tpu.pipeline_mode<synchronous>, transform_indices = @transform_2, window_bounds = array<i64: 1, 128>}, {transform_indices = @transform_3, window_bounds = array<i64: 128, 384>}, {transform_indices = @transform_4, window_bounds = array<i64: 1, 384>}, {transform_indices = @transform_5, window_bounds = array<i64: 40, 384>}]} {
    %c0_i32 = arith.constant 0 : i32
    %0 = arith.cmpi eq, %arg1, %c0_i32 : i32
    %1 = arith.extui %0 : i1 to i32
    %c0_i32_0 = arith.constant 0 : i32
    %2 = arith.cmpi ne, %1, %c0_i32_0 : i32
    scf.if %2 {
      %c0_8 = arith.constant 0 : index
      %c0_9 = arith.constant 0 : index
      %11 = vector.load %arg2[%c0_8, %c0_9] : memref<40x128xbf16, #tpu.memory_space<vmem>>, vector<40x128xbf16>
      %12 = arith.extf %11 : vector<40x128xbf16> to vector<40x128xf32>
      %cst_10 = arith.constant dense<0.000000e+00> : vector<40xf32>
      %13 = vector.multi_reduction <add>, %12, %cst_10 [1] : vector<40x128xf32> to vector<40xf32>
      %14 = vector.shape_cast %13 : vector<40xf32> to vector<40x1xf32>
      %cst_11 = arith.constant 7.812500e-03 : f32
      %15 = vector.broadcast %cst_11 : f32 to vector<40x1xf32>
      %16 = arith.mulf %14, %15 : vector<40x1xf32>
      %17 = vector.broadcast %16 : vector<40x1xf32> to vector<40x128xf32>
      %18 = arith.subf %12, %17 : vector<40x128xf32>
      %19 = arith.mulf %18, %18 : vector<40x128xf32>
      %cst_12 = arith.constant dense<0.000000e+00> : vector<40xf32>
      %20 = vector.multi_reduction <add>, %19, %cst_12 [1] : vector<40x128xf32> to vector<40xf32>
      %21 = vector.shape_cast %20 : vector<40xf32> to vector<40x1xf32>
      %cst_13 = arith.constant 7.812500e-03 : f32
      %22 = vector.broadcast %cst_13 : f32 to vector<40x1xf32>
      %23 = arith.mulf %21, %22 : vector<40x1xf32>
      %cst_14 = arith.constant 9.99999974E-6 : f32
      %24 = vector.broadcast %cst_14 : f32 to vector<40x1xf32>
      %25 = arith.addf %23, %24 : vector<40x1xf32>
      %26 = math.rsqrt %25 : vector<40x1xf32>
      %27 = vector.broadcast %26 : vector<40x1xf32> to vector<40x128xf32>
      %28 = arith.mulf %18, %27 : vector<40x128xf32>
      %c0_15 = arith.constant 0 : index
      %c0_16 = arith.constant 0 : index
      %29 = vector.load %arg3[%c0_15, %c0_16] : memref<1x128xf32, #tpu.memory_space<vmem>>, vector<1x128xf32>
      %30 = vector.broadcast %29 : vector<1x128xf32> to vector<40x128xf32>
      %31 = arith.mulf %28, %30 : vector<40x128xf32>
      %c0_17 = arith.constant 0 : index
      %c0_18 = arith.constant 0 : index
      %32 = vector.load %arg4[%c0_17, %c0_18] : memref<1x128xf32, #tpu.memory_space<vmem>>, vector<1x128xf32>
      %33 = vector.broadcast %32 : vector<1x128xf32> to vector<40x128xf32>
      %34 = arith.addf %31, %33 : vector<40x128xf32>
      %35 = arith.truncf %34 : vector<40x128xf32> to vector<40x128xbf16>
      %c0_19 = arith.constant 0 : index
      %c0_20 = arith.constant 0 : index
      %36 = vector.load %arg8[%c0_19, %c0_20] : memref<40x128xbf16, #tpu.memory_space<vmem>>, vector<40x128xbf16>
      tpu.vector_store %arg8[%c0_19, %c0_20], %35 {strides = array<i32>} : memref<40x128xbf16, #tpu.memory_space<vmem>>, vector<40x128xbf16>,
    } else {
    }
    %c0 = arith.constant 0 : index
    %c0_1 = arith.constant 0 : index
    %3 = vector.load %arg8[%c0, %c0_1] : memref<40x128xbf16, #tpu.memory_space<vmem>>, vector<40x128xbf16>
    %c0_2 = arith.constant 0 : index
    %c0_3 = arith.constant 0 : index
    %4 = vector.load %arg5[%c0_2, %c0_3] : memref<128x384xbf16, #tpu.memory_space<vmem>>, vector<128x384xbf16>
    %cst = arith.constant dense<0.000000e+00> : vector<40x384xf32>
    %5 = tpu.matmul %3, %4, %cst {dimension_numbers = #tpu.dot_dimension_numbers<[1], [0], [0], [1], [0, 0, 1, 1], [], []>} : vector<40x128xbf16>, vector<128x384xbf16>, vector<40x384xf32> -> vector<40x384xf32>
    %c0_4 = arith.constant 0 : index
    %c0_5 = arith.constant 0 : index
    %6 = vector.load %arg6[%c0_4, %c0_5] : memref<1x384xf32, #tpu.memory_space<vmem>>, vector<1x384xf32>
    %7 = vector.broadcast %6 : vector<1x384xf32> to vector<40x384xf32>
    %8 = arith.addf %5, %7 : vector<40x384xf32>
    %9 = arith.truncf %8 : vector<40x384xf32> to vector<40x384xbf16>
    %c0_6 = arith.constant 0 : index
    %c0_7 = arith.constant 0 : index
    %10 = vector.load %arg7[%c0_6, %c0_7] : memref<40x384xbf16, #tpu.memory_space<vmem>>, vector<40x384xbf16>
    tpu.vector_store %arg7[%c0_6, %c0_7], %9 {strides = array<i32>} : memref<40x384xbf16, #tpu.memory_space<vmem>>, vector<40x384xbf16>,
    return
  }
  func.func @transform_0(%arg0: i32, %arg1: i32) -> (i32, i32) {
    %c0_i32 = arith.constant 0 : i32
    %c0_i32_0 = arith.constant 0 : i32
    return %arg0, %c0_i32 : i32, i32
  }
  func.func @transform_1(%arg0: i32, %arg1: i32) -> (i32, i32) {
    %c0_i32 = arith.constant 0 : i32
    %c0_i32_0 = arith.constant 0 : i32
    %c0_i32_1 = arith.constant 0 : i32
    return %c0_i32, %c0_i32_0 : i32, i32
  }
  func.func @transform_2(%arg0: i32, %arg1: i32) -> (i32, i32) {
    %c0_i32 = arith.constant 0 : i32
    %c0_i32_0 = arith.constant 0 : i32
    %c0_i32_1 = arith.constant 0 : i32
    return %c0_i32, %c0_i32_0 : i32, i32
  }
  func.func @transform_3(%arg0: i32, %arg1: i32) -> (i32, i32) {
    %c0_i32 = arith.constant 0 : i32
    %c0_i32_0 = arith.constant 0 : i32
    return %c0_i32, %arg1 : i32, i32
  }
  func.func @transform_4(%arg0: i32, %arg1: i32) -> (i32, i32) {
    %c0_i32 = arith.constant 0 : i32
    %c0_i32_0 = arith.constant 0 : i32
    return %c0_i32, %arg1 : i32, i32
  }
  func.func @transform_5(%arg0: i32, %arg1: i32) -> (i32, i32) {
    %c0_i32 = arith.constant 0 : i32
    return %arg0, %arg1 : i32, i32
  }
}

module attributes {stable_mosaic.version = 11 : i64} {
  func.func @_attention_kernel(%arg0: i32, %arg1: memref<1x20x384xbf16, #tpu.memory_space<vmem>>, %arg2: memref<20x32xf32, #tpu.memory_space<vmem>>, %arg3: memref<20x32xf32, #tpu.memory_space<vmem>>, %arg4: memref<1x20x128xbf16, #tpu.memory_space<vmem>>, %arg5: memref<20x128xbf16, #tpu.memory_space<vmem>>) attributes {dimension_semantics = [#tpu.dimension_semantics<parallel>], iteration_bounds = array<i64: 2>, scalar_prefetch = 0 : i64, scratch_operands = 1 : i64, tpu.core_type = #tpu.core_type<tc>, window_params = [{transform_indices = @transform_0, window_bounds = array<i64: 1, 20, 384>}, {pipeline_mode = #tpu.pipeline_mode<synchronous>, transform_indices = @transform_1, window_bounds = array<i64: 20, 32>}, {pipeline_mode = #tpu.pipeline_mode<synchronous>, transform_indices = @transform_2, window_bounds = array<i64: 20, 32>}, {transform_indices = @transform_3, window_bounds = array<i64: 1, 20, 128>}]} {
    %c0 = arith.constant 0 : index
    %c0_0 = arith.constant 0 : index
    %c0_1 = arith.constant 0 : index
    %0 = vector.load %arg1[%c0, %c0_0, %c0_1] : memref<1x20x384xbf16, #tpu.memory_space<vmem>>, vector<1x20x384xbf16>
    %1 = vector.shape_cast %0 : vector<1x20x384xbf16> to vector<20x384xbf16>
    %c0_2 = arith.constant 0 : index
    %c0_3 = arith.constant 0 : index
    %2 = vector.load %arg2[%c0_2, %c0_3] : memref<20x32xf32, #tpu.memory_space<vmem>>, vector<20x32xf32>
    %c0_4 = arith.constant 0 : index
    %c0_5 = arith.constant 0 : index
    %3 = vector.load %arg3[%c0_4, %c0_5] : memref<20x32xf32, #tpu.memory_space<vmem>>, vector<20x32xf32>
    %4 = tpu.iota {dimensions = array<i32: 0>} : vector<20x20xi32>
    %5 = tpu.iota {dimensions = array<i32: 1>} : vector<20x20xi32>
    %6 = arith.cmpi sle, %5, %4 : vector<20x20xi32>
    %c12_i32 = arith.constant 12 : i32
    %7 = vector.broadcast %c12_i32 : i32 to vector<20x20xi32>
    %8 = arith.cmpi slt, %5, %7 : vector<20x20xi32>
    %9 = arith.ori %6, %8 : vector<20x20xi1>
    %10 = vector.extract_strided_slice %1 {offsets = [0, 0], sizes = [20, 32], strides = [1, 1]} : vector<20x384xbf16> to vector<20x32xbf16>
    %11 = arith.extf %10 : vector<20x32xbf16> to vector<20x32xf32>
    %12 = vector.extract_strided_slice %1 {offsets = [0, 128], sizes = [20, 32], strides = [1, 1]} : vector<20x384xbf16> to vector<20x32xbf16>
    %13 = arith.extf %12 : vector<20x32xbf16> to vector<20x32xf32>
    %14 = vector.extract_strided_slice %1 {offsets = [0, 256], sizes = [20, 32], strides = [1, 1]} : vector<20x384xbf16> to vector<20x32xbf16>
    %15 = arith.mulf %11, %2 : vector<20x32xf32>
    %16 = vector.extract_strided_slice %11 {offsets = [0, 16], sizes = [20, 16], strides = [1, 1]} : vector<20x32xf32> to vector<20x16xf32>
    %17 = vector.extract_strided_slice %11 {offsets = [0, 0], sizes = [20, 16], strides = [1, 1]} : vector<20x32xf32> to vector<20x16xf32>
    %18 = tpu.concatenate %16, %17 in 1 : vector<20x16xf32>, vector<20x16xf32> -> vector<20x32xf32>
    %19 = arith.mulf %18, %3 : vector<20x32xf32>
    %20 = arith.addf %15, %19 : vector<20x32xf32>
    %21 = arith.mulf %13, %2 : vector<20x32xf32>
    %22 = vector.extract_strided_slice %13 {offsets = [0, 16], sizes = [20, 16], strides = [1, 1]} : vector<20x32xf32> to vector<20x16xf32>
    %23 = vector.extract_strided_slice %13 {offsets = [0, 0], sizes = [20, 16], strides = [1, 1]} : vector<20x32xf32> to vector<20x16xf32>
    %24 = tpu.concatenate %22, %23 in 1 : vector<20x16xf32>, vector<20x16xf32> -> vector<20x32xf32>
    %25 = arith.mulf %24, %3 : vector<20x32xf32>
    %26 = arith.addf %21, %25 : vector<20x32xf32>
    %27 = arith.truncf %20 : vector<20x32xf32> to vector<20x32xbf16>
    %28 = arith.truncf %26 : vector<20x32xf32> to vector<20x32xbf16>
    %cst = arith.constant dense<0.000000e+00> : vector<20x20xf32>
    %29 = tpu.matmul %27, %28, %cst {dimension_numbers = #tpu.dot_dimension_numbers<[1], [1], [0], [0], [0, 0, 1, 0], [], []>} : vector<20x32xbf16>, vector<20x32xbf16>, vector<20x20xf32> -> vector<20x20xf32>
    %cst_6 = arith.constant 0.176776692 : f32
    %30 = vector.broadcast %cst_6 : f32 to vector<20x20xf32>
    %31 = arith.mulf %29, %30 : vector<20x20xf32>
    %cst_7 = arith.constant -1.000000e+09 : f32
    %32 = vector.broadcast %cst_7 : f32 to vector<20x20xf32>
    %33 = arith.select %9, %31, %32 : vector<20x20xi1>, vector<20x20xf32>
    %cst_8 = arith.constant dense<0xFF800000> : vector<20xf32>
    %34 = vector.multi_reduction <maximumf>, %33, %cst_8 [1] : vector<20x20xf32> to vector<20xf32>
    %35 = vector.shape_cast %34 : vector<20xf32> to vector<20x1xf32>
    %36 = vector.broadcast %35 : vector<20x1xf32> to vector<20x20xf32>
    %37 = arith.subf %33, %36 : vector<20x20xf32>
    %38 = math.exp %37 : vector<20x20xf32>
    %cst_9 = arith.constant dense<0.000000e+00> : vector<20xf32>
    %39 = vector.multi_reduction <add>, %38, %cst_9 [1] : vector<20x20xf32> to vector<20xf32>
    %40 = vector.shape_cast %39 : vector<20xf32> to vector<20x1xf32>
    %41 = arith.truncf %38 : vector<20x20xf32> to vector<20x20xbf16>
    %cst_10 = arith.constant dense<0.000000e+00> : vector<20x32xf32>
    %42 = tpu.matmul %41, %14, %cst_10 {dimension_numbers = #tpu.dot_dimension_numbers<[1], [0], [0], [1], [0, 0, 1, 1], [], []>} : vector<20x20xbf16>, vector<20x32xbf16>, vector<20x32xf32> -> vector<20x32xf32>
    %43 = tpu.reciprocal %40 {approx = true} : vector<20x1xf32> -> vector<20x1xf32>
    %44 = vector.broadcast %43 : vector<20x1xf32> to vector<20x32xf32>
    %45 = arith.mulf %42, %44 : vector<20x32xf32>
    %46 = arith.truncf %45 : vector<20x32xf32> to vector<20x32xbf16>
    %c0_11 = arith.constant 0 : index
    %c0_12 = arith.constant 0 : index
    %47 = vector.load %arg5[%c0_11, %c0_12] : memref<20x128xbf16, #tpu.memory_space<vmem>>, vector<20x32xbf16>
    tpu.vector_store %arg5[%c0_11, %c0_12], %46 {strides = array<i32>} : memref<20x128xbf16, #tpu.memory_space<vmem>>, vector<20x32xbf16>,
    %48 = vector.extract_strided_slice %1 {offsets = [0, 32], sizes = [20, 32], strides = [1, 1]} : vector<20x384xbf16> to vector<20x32xbf16>
    %49 = arith.extf %48 : vector<20x32xbf16> to vector<20x32xf32>
    %50 = vector.extract_strided_slice %1 {offsets = [0, 160], sizes = [20, 32], strides = [1, 1]} : vector<20x384xbf16> to vector<20x32xbf16>
    %51 = arith.extf %50 : vector<20x32xbf16> to vector<20x32xf32>
    %52 = vector.extract_strided_slice %1 {offsets = [0, 288], sizes = [20, 32], strides = [1, 1]} : vector<20x384xbf16> to vector<20x32xbf16>
    %53 = arith.mulf %49, %2 : vector<20x32xf32>
    %54 = vector.extract_strided_slice %49 {offsets = [0, 16], sizes = [20, 16], strides = [1, 1]} : vector<20x32xf32> to vector<20x16xf32>
    %55 = vector.extract_strided_slice %49 {offsets = [0, 0], sizes = [20, 16], strides = [1, 1]} : vector<20x32xf32> to vector<20x16xf32>
    %56 = tpu.concatenate %54, %55 in 1 : vector<20x16xf32>, vector<20x16xf32> -> vector<20x32xf32>
    %57 = arith.mulf %56, %3 : vector<20x32xf32>
    %58 = arith.addf %53, %57 : vector<20x32xf32>
    %59 = arith.mulf %51, %2 : vector<20x32xf32>
    %60 = vector.extract_strided_slice %51 {offsets = [0, 16], sizes = [20, 16], strides = [1, 1]} : vector<20x32xf32> to vector<20x16xf32>
    %61 = vector.extract_strided_slice %51 {offsets = [0, 0], sizes = [20, 16], strides = [1, 1]} : vector<20x32xf32> to vector<20x16xf32>
    %62 = tpu.concatenate %60, %61 in 1 : vector<20x16xf32>, vector<20x16xf32> -> vector<20x32xf32>
    %63 = arith.mulf %62, %3 : vector<20x32xf32>
    %64 = arith.addf %59, %63 : vector<20x32xf32>
    %65 = arith.truncf %58 : vector<20x32xf32> to vector<20x32xbf16>
    %66 = arith.truncf %64 : vector<20x32xf32> to vector<20x32xbf16>
    %cst_13 = arith.constant dense<0.000000e+00> : vector<20x20xf32>
    %67 = tpu.matmul %65, %66, %cst_13 {dimension_numbers = #tpu.dot_dimension_numbers<[1], [1], [0], [0], [0, 0, 1, 0], [], []>} : vector<20x32xbf16>, vector<20x32xbf16>, vector<20x20xf32> -> vector<20x20xf32>
    %cst_14 = arith.constant 0.176776692 : f32
    %68 = vector.broadcast %cst_14 : f32 to vector<20x20xf32>
    %69 = arith.mulf %67, %68 : vector<20x20xf32>
    %cst_15 = arith.constant -1.000000e+09 : f32
    %70 = vector.broadcast %cst_15 : f32 to vector<20x20xf32>
    %71 = arith.select %9, %69, %70 : vector<20x20xi1>, vector<20x20xf32>
    %cst_16 = arith.constant dense<0xFF800000> : vector<20xf32>
    %72 = vector.multi_reduction <maximumf>, %71, %cst_16 [1] : vector<20x20xf32> to vector<20xf32>
    %73 = vector.shape_cast %72 : vector<20xf32> to vector<20x1xf32>
    %74 = vector.broadcast %73 : vector<20x1xf32> to vector<20x20xf32>
    %75 = arith.subf %71, %74 : vector<20x20xf32>
    %76 = math.exp %75 : vector<20x20xf32>
    %cst_17 = arith.constant dense<0.000000e+00> : vector<20xf32>
    %77 = vector.multi_reduction <add>, %76, %cst_17 [1] : vector<20x20xf32> to vector<20xf32>
    %78 = vector.shape_cast %77 : vector<20xf32> to vector<20x1xf32>
    %79 = arith.truncf %76 : vector<20x20xf32> to vector<20x20xbf16>
    %cst_18 = arith.constant dense<0.000000e+00> : vector<20x32xf32>
    %80 = tpu.matmul %79, %52, %cst_18 {dimension_numbers = #tpu.dot_dimension_numbers<[1], [0], [0], [1], [0, 0, 1, 1], [], []>} : vector<20x20xbf16>, vector<20x32xbf16>, vector<20x32xf32> -> vector<20x32xf32>
    %81 = tpu.reciprocal %78 {approx = true} : vector<20x1xf32> -> vector<20x1xf32>
    %82 = vector.broadcast %81 : vector<20x1xf32> to vector<20x32xf32>
    %83 = arith.mulf %80, %82 : vector<20x32xf32>
    %84 = arith.truncf %83 : vector<20x32xf32> to vector<20x32xbf16>
    %c0_19 = arith.constant 0 : index
    %c32 = arith.constant 32 : index
    %85 = vector.load %arg5[%c0_19, %c32] : memref<20x128xbf16, #tpu.memory_space<vmem>>, vector<20x32xbf16>
    tpu.vector_store %arg5[%c0_19, %c32], %84 {strides = array<i32>} : memref<20x128xbf16, #tpu.memory_space<vmem>>, vector<20x32xbf16>,
    %86 = vector.extract_strided_slice %1 {offsets = [0, 64], sizes = [20, 32], strides = [1, 1]} : vector<20x384xbf16> to vector<20x32xbf16>
    %87 = arith.extf %86 : vector<20x32xbf16> to vector<20x32xf32>
    %88 = vector.extract_strided_slice %1 {offsets = [0, 192], sizes = [20, 32], strides = [1, 1]} : vector<20x384xbf16> to vector<20x32xbf16>
    %89 = arith.extf %88 : vector<20x32xbf16> to vector<20x32xf32>
    %90 = vector.extract_strided_slice %1 {offsets = [0, 320], sizes = [20, 32], strides = [1, 1]} : vector<20x384xbf16> to vector<20x32xbf16>
    %91 = arith.mulf %87, %2 : vector<20x32xf32>
    %92 = vector.extract_strided_slice %87 {offsets = [0, 16], sizes = [20, 16], strides = [1, 1]} : vector<20x32xf32> to vector<20x16xf32>
    %93 = vector.extract_strided_slice %87 {offsets = [0, 0], sizes = [20, 16], strides = [1, 1]} : vector<20x32xf32> to vector<20x16xf32>
    %94 = tpu.concatenate %92, %93 in 1 : vector<20x16xf32>, vector<20x16xf32> -> vector<20x32xf32>
    %95 = arith.mulf %94, %3 : vector<20x32xf32>
    %96 = arith.addf %91, %95 : vector<20x32xf32>
    %97 = arith.mulf %89, %2 : vector<20x32xf32>
    %98 = vector.extract_strided_slice %89 {offsets = [0, 16], sizes = [20, 16], strides = [1, 1]} : vector<20x32xf32> to vector<20x16xf32>
    %99 = vector.extract_strided_slice %89 {offsets = [0, 0], sizes = [20, 16], strides = [1, 1]} : vector<20x32xf32> to vector<20x16xf32>
    %100 = tpu.concatenate %98, %99 in 1 : vector<20x16xf32>, vector<20x16xf32> -> vector<20x32xf32>
    %101 = arith.mulf %100, %3 : vector<20x32xf32>
    %102 = arith.addf %97, %101 : vector<20x32xf32>
    %103 = arith.truncf %96 : vector<20x32xf32> to vector<20x32xbf16>
    %104 = arith.truncf %102 : vector<20x32xf32> to vector<20x32xbf16>
    %cst_20 = arith.constant dense<0.000000e+00> : vector<20x20xf32>
    %105 = tpu.matmul %103, %104, %cst_20 {dimension_numbers = #tpu.dot_dimension_numbers<[1], [1], [0], [0], [0, 0, 1, 0], [], []>} : vector<20x32xbf16>, vector<20x32xbf16>, vector<20x20xf32> -> vector<20x20xf32>
    %cst_21 = arith.constant 0.176776692 : f32
    %106 = vector.broadcast %cst_21 : f32 to vector<20x20xf32>
    %107 = arith.mulf %105, %106 : vector<20x20xf32>
    %cst_22 = arith.constant -1.000000e+09 : f32
    %108 = vector.broadcast %cst_22 : f32 to vector<20x20xf32>
    %109 = arith.select %9, %107, %108 : vector<20x20xi1>, vector<20x20xf32>
    %cst_23 = arith.constant dense<0xFF800000> : vector<20xf32>
    %110 = vector.multi_reduction <maximumf>, %109, %cst_23 [1] : vector<20x20xf32> to vector<20xf32>
    %111 = vector.shape_cast %110 : vector<20xf32> to vector<20x1xf32>
    %112 = vector.broadcast %111 : vector<20x1xf32> to vector<20x20xf32>
    %113 = arith.subf %109, %112 : vector<20x20xf32>
    %114 = math.exp %113 : vector<20x20xf32>
    %cst_24 = arith.constant dense<0.000000e+00> : vector<20xf32>
    %115 = vector.multi_reduction <add>, %114, %cst_24 [1] : vector<20x20xf32> to vector<20xf32>
    %116 = vector.shape_cast %115 : vector<20xf32> to vector<20x1xf32>
    %117 = arith.truncf %114 : vector<20x20xf32> to vector<20x20xbf16>
    %cst_25 = arith.constant dense<0.000000e+00> : vector<20x32xf32>
    %118 = tpu.matmul %117, %90, %cst_25 {dimension_numbers = #tpu.dot_dimension_numbers<[1], [0], [0], [1], [0, 0, 1, 1], [], []>} : vector<20x20xbf16>, vector<20x32xbf16>, vector<20x32xf32> -> vector<20x32xf32>
    %119 = tpu.reciprocal %116 {approx = true} : vector<20x1xf32> -> vector<20x1xf32>
    %120 = vector.broadcast %119 : vector<20x1xf32> to vector<20x32xf32>
    %121 = arith.mulf %118, %120 : vector<20x32xf32>
    %122 = arith.truncf %121 : vector<20x32xf32> to vector<20x32xbf16>
    %c0_26 = arith.constant 0 : index
    %c64 = arith.constant 64 : index
    %123 = vector.load %arg5[%c0_26, %c64] : memref<20x128xbf16, #tpu.memory_space<vmem>>, vector<20x32xbf16>
    tpu.vector_store %arg5[%c0_26, %c64], %122 {strides = array<i32>} : memref<20x128xbf16, #tpu.memory_space<vmem>>, vector<20x32xbf16>,
    %124 = vector.extract_strided_slice %1 {offsets = [0, 96], sizes = [20, 32], strides = [1, 1]} : vector<20x384xbf16> to vector<20x32xbf16>
    %125 = arith.extf %124 : vector<20x32xbf16> to vector<20x32xf32>
    %126 = vector.extract_strided_slice %1 {offsets = [0, 224], sizes = [20, 32], strides = [1, 1]} : vector<20x384xbf16> to vector<20x32xbf16>
    %127 = arith.extf %126 : vector<20x32xbf16> to vector<20x32xf32>
    %128 = vector.extract_strided_slice %1 {offsets = [0, 352], sizes = [20, 32], strides = [1, 1]} : vector<20x384xbf16> to vector<20x32xbf16>
    %129 = arith.mulf %125, %2 : vector<20x32xf32>
    %130 = vector.extract_strided_slice %125 {offsets = [0, 16], sizes = [20, 16], strides = [1, 1]} : vector<20x32xf32> to vector<20x16xf32>
    %131 = vector.extract_strided_slice %125 {offsets = [0, 0], sizes = [20, 16], strides = [1, 1]} : vector<20x32xf32> to vector<20x16xf32>
    %132 = tpu.concatenate %130, %131 in 1 : vector<20x16xf32>, vector<20x16xf32> -> vector<20x32xf32>
    %133 = arith.mulf %132, %3 : vector<20x32xf32>
    %134 = arith.addf %129, %133 : vector<20x32xf32>
    %135 = arith.mulf %127, %2 : vector<20x32xf32>
    %136 = vector.extract_strided_slice %127 {offsets = [0, 16], sizes = [20, 16], strides = [1, 1]} : vector<20x32xf32> to vector<20x16xf32>
    %137 = vector.extract_strided_slice %127 {offsets = [0, 0], sizes = [20, 16], strides = [1, 1]} : vector<20x32xf32> to vector<20x16xf32>
    %138 = tpu.concatenate %136, %137 in 1 : vector<20x16xf32>, vector<20x16xf32> -> vector<20x32xf32>
    %139 = arith.mulf %138, %3 : vector<20x32xf32>
    %140 = arith.addf %135, %139 : vector<20x32xf32>
    %141 = arith.truncf %134 : vector<20x32xf32> to vector<20x32xbf16>
    %142 = arith.truncf %140 : vector<20x32xf32> to vector<20x32xbf16>
    %cst_27 = arith.constant dense<0.000000e+00> : vector<20x20xf32>
    %143 = tpu.matmul %141, %142, %cst_27 {dimension_numbers = #tpu.dot_dimension_numbers<[1], [1], [0], [0], [0, 0, 1, 0], [], []>} : vector<20x32xbf16>, vector<20x32xbf16>, vector<20x20xf32> -> vector<20x20xf32>
    %cst_28 = arith.constant 0.176776692 : f32
    %144 = vector.broadcast %cst_28 : f32 to vector<20x20xf32>
    %145 = arith.mulf %143, %144 : vector<20x20xf32>
    %cst_29 = arith.constant -1.000000e+09 : f32
    %146 = vector.broadcast %cst_29 : f32 to vector<20x20xf32>
    %147 = arith.select %9, %145, %146 : vector<20x20xi1>, vector<20x20xf32>
    %cst_30 = arith.constant dense<0xFF800000> : vector<20xf32>
    %148 = vector.multi_reduction <maximumf>, %147, %cst_30 [1] : vector<20x20xf32> to vector<20xf32>
    %149 = vector.shape_cast %148 : vector<20xf32> to vector<20x1xf32>
    %150 = vector.broadcast %149 : vector<20x1xf32> to vector<20x20xf32>
    %151 = arith.subf %147, %150 : vector<20x20xf32>
    %152 = math.exp %151 : vector<20x20xf32>
    %cst_31 = arith.constant dense<0.000000e+00> : vector<20xf32>
    %153 = vector.multi_reduction <add>, %152, %cst_31 [1] : vector<20x20xf32> to vector<20xf32>
    %154 = vector.shape_cast %153 : vector<20xf32> to vector<20x1xf32>
    %155 = arith.truncf %152 : vector<20x20xf32> to vector<20x20xbf16>
    %cst_32 = arith.constant dense<0.000000e+00> : vector<20x32xf32>
    %156 = tpu.matmul %155, %128, %cst_32 {dimension_numbers = #tpu.dot_dimension_numbers<[1], [0], [0], [1], [0, 0, 1, 1], [], []>} : vector<20x20xbf16>, vector<20x32xbf16>, vector<20x32xf32> -> vector<20x32xf32>
    %157 = tpu.reciprocal %154 {approx = true} : vector<20x1xf32> -> vector<20x1xf32>
    %158 = vector.broadcast %157 : vector<20x1xf32> to vector<20x32xf32>
    %159 = arith.mulf %156, %158 : vector<20x32xf32>
    %160 = arith.truncf %159 : vector<20x32xf32> to vector<20x32xbf16>
    %c0_33 = arith.constant 0 : index
    %c96 = arith.constant 96 : index
    %161 = vector.load %arg5[%c0_33, %c96] : memref<20x128xbf16, #tpu.memory_space<vmem>>, vector<20x32xbf16>
    tpu.vector_store %arg5[%c0_33, %c96], %160 {strides = array<i32>} : memref<20x128xbf16, #tpu.memory_space<vmem>>, vector<20x32xbf16>,
    %c0_34 = arith.constant 0 : index
    %c0_35 = arith.constant 0 : index
    %162 = vector.load %arg5[%c0_34, %c0_35] : memref<20x128xbf16, #tpu.memory_space<vmem>>, vector<20x128xbf16>
    %c0_36 = arith.constant 0 : index
    %c0_37 = arith.constant 0 : index
    %c0_38 = arith.constant 0 : index
    %163 = vector.load %arg4[%c0_36, %c0_37, %c0_38] : memref<1x20x128xbf16, #tpu.memory_space<vmem>>, vector<1x20x128xbf16>
    %164 = vector.shape_cast %163 : vector<1x20x128xbf16> to vector<20x128xbf16>
    %165 = vector.shape_cast %162 : vector<20x128xbf16> to vector<1x20x128xbf16>
    tpu.vector_store %arg4[%c0_36, %c0_37, %c0_38], %165 {strides = array<i32>} : memref<1x20x128xbf16, #tpu.memory_space<vmem>>, vector<1x20x128xbf16>,
    return
  }
  func.func @transform_0(%arg0: i32) -> (i32, i32, i32) {
    %c0_i32 = arith.constant 0 : i32
    %c0_i32_0 = arith.constant 0 : i32
    %c0_i32_1 = arith.constant 0 : i32
    return %arg0, %c0_i32, %c0_i32_0 : i32, i32, i32
  }
  func.func @transform_1(%arg0: i32) -> (i32, i32) {
    %c0_i32 = arith.constant 0 : i32
    %c0_i32_0 = arith.constant 0 : i32
    %c0_i32_1 = arith.constant 0 : i32
    return %c0_i32, %c0_i32_0 : i32, i32
  }
  func.func @transform_2(%arg0: i32) -> (i32, i32) {
    %c0_i32 = arith.constant 0 : i32
    %c0_i32_0 = arith.constant 0 : i32
    %c0_i32_1 = arith.constant 0 : i32
    return %c0_i32, %c0_i32_0 : i32, i32
  }
  func.func @transform_3(%arg0: i32) -> (i32, i32, i32) {
    %c0_i32 = arith.constant 0 : i32
    %c0_i32_0 = arith.constant 0 : i32
    %c0_i32_1 = arith.constant 0 : i32
    return %arg0, %c0_i32, %c0_i32_0 : i32, i32, i32
  }
}

module attributes {stable_mosaic.version = 11 : i64} {
  func.func @_matmul_kernel(%arg0: i32, %arg1: i32, %arg2: i32, %arg3: memref<40x128xbf16, #tpu.memory_space<vmem>>, %arg4: memref<128x128xbf16, #tpu.memory_space<vmem>>, %arg5: memref<1x128xf32, #tpu.memory_space<vmem>>, %arg6: memref<40x128xbf16, #tpu.memory_space<vmem>>, %arg7: memref<40x128xbf16, #tpu.memory_space<vmem>>, %arg8: memref<40x128xf32, #tpu.memory_space<vmem>>) attributes {dimension_semantics = [#tpu.dimension_semantics<parallel>, #tpu.dimension_semantics<parallel>, #tpu.dimension_semantics<arbitrary>], iteration_bounds = array<i64: 1, 1, 1>, scalar_prefetch = 0 : i64, scratch_operands = 1 : i64, tpu.core_type = #tpu.core_type<tc>, window_params = [{transform_indices = @transform_0, window_bounds = array<i64: 40, 128>}, {transform_indices = @transform_1, window_bounds = array<i64: 128, 128>}, {transform_indices = @transform_2, window_bounds = array<i64: 1, 128>}, {transform_indices = @transform_3, window_bounds = array<i64: 40, 128>}, {transform_indices = @transform_4, window_bounds = array<i64: 40, 128>}]} {
    %c0_i32 = arith.constant 0 : i32
    %0 = arith.cmpi eq, %arg2, %c0_i32 : i32
    %1 = arith.extui %0 : i1 to i32
    %c0_i32_0 = arith.constant 0 : i32
    %2 = arith.cmpi ne, %1, %c0_i32_0 : i32
    scf.if %2 {
      %c0_10 = arith.constant 0 : index
      %c0_11 = arith.constant 0 : index
      %12 = vector.load %arg6[%c0_10, %c0_11] : memref<40x128xbf16, #tpu.memory_space<vmem>>, vector<40x128xbf16>
      %13 = arith.extf %12 : vector<40x128xbf16> to vector<40x128xf32>
      %c0_12 = arith.constant 0 : index
      %c0_13 = arith.constant 0 : index
      %14 = vector.load %arg8[%c0_12, %c0_13] : memref<40x128xf32, #tpu.memory_space<vmem>>, vector<40x128xf32>
      tpu.vector_store %arg8[%c0_12, %c0_13], %13 {strides = array<i32>} : memref<40x128xf32, #tpu.memory_space<vmem>>, vector<40x128xf32>,
    } else {
    }
    %c0 = arith.constant 0 : index
    %c0_1 = arith.constant 0 : index
    %3 = vector.load %arg8[%c0, %c0_1] : memref<40x128xf32, #tpu.memory_space<vmem>>, vector<40x128xf32>
    %c0_2 = arith.constant 0 : index
    %c0_3 = arith.constant 0 : index
    %4 = vector.load %arg3[%c0_2, %c0_3] : memref<40x128xbf16, #tpu.memory_space<vmem>>, vector<40x128xbf16>
    %c0_4 = arith.constant 0 : index
    %c0_5 = arith.constant 0 : index
    %5 = vector.load %arg4[%c0_4, %c0_5] : memref<128x128xbf16, #tpu.memory_space<vmem>>, vector<128x128xbf16>
    %cst = arith.constant dense<0.000000e+00> : vector<40x128xf32>
    %6 = tpu.matmul %4, %5, %cst {dimension_numbers = #tpu.dot_dimension_numbers<[1], [0], [0], [1], [0, 0, 1, 1], [], []>} : vector<40x128xbf16>, vector<128x128xbf16>, vector<40x128xf32> -> vector<40x128xf32>
    %7 = arith.addf %3, %6 : vector<40x128xf32>
    %c0_6 = arith.constant 0 : index
    %c0_7 = arith.constant 0 : index
    %8 = vector.load %arg8[%c0_6, %c0_7] : memref<40x128xf32, #tpu.memory_space<vmem>>, vector<40x128xf32>
    tpu.vector_store %arg8[%c0_6, %c0_7], %7 {strides = array<i32>} : memref<40x128xf32, #tpu.memory_space<vmem>>, vector<40x128xf32>,
    %c0_i32_8 = arith.constant 0 : i32
    %9 = arith.cmpi eq, %arg2, %c0_i32_8 : i32
    %10 = arith.extui %9 : i1 to i32
    %c0_i32_9 = arith.constant 0 : i32
    %11 = arith.cmpi ne, %10, %c0_i32_9 : i32
    scf.if %11 {
      %c0_10 = arith.constant 0 : index
      %c0_11 = arith.constant 0 : index
      %12 = vector.load %arg8[%c0_10, %c0_11] : memref<40x128xf32, #tpu.memory_space<vmem>>, vector<40x128xf32>
      %c0_12 = arith.constant 0 : index
      %c0_13 = arith.constant 0 : index
      %13 = vector.load %arg5[%c0_12, %c0_13] : memref<1x128xf32, #tpu.memory_space<vmem>>, vector<1x128xf32>
      %14 = vector.broadcast %13 : vector<1x128xf32> to vector<40x128xf32>
      %15 = arith.addf %12, %14 : vector<40x128xf32>
      %16 = arith.truncf %15 : vector<40x128xf32> to vector<40x128xbf16>
      %c0_14 = arith.constant 0 : index
      %c0_15 = arith.constant 0 : index
      %17 = vector.load %arg7[%c0_14, %c0_15] : memref<40x128xbf16, #tpu.memory_space<vmem>>, vector<40x128xbf16>
      tpu.vector_store %arg7[%c0_14, %c0_15], %16 {strides = array<i32>} : memref<40x128xbf16, #tpu.memory_space<vmem>>, vector<40x128xbf16>,
    } else {
    }
    return
  }
  func.func @transform_0(%arg0: i32, %arg1: i32, %arg2: i32) -> (i32, i32) {
    %c0_i32 = arith.constant 0 : i32
    return %arg0, %arg2 : i32, i32
  }
  func.func @transform_1(%arg0: i32, %arg1: i32, %arg2: i32) -> (i32, i32) {
    %c0_i32 = arith.constant 0 : i32
    return %arg2, %arg1 : i32, i32
  }
  func.func @transform_2(%arg0: i32, %arg1: i32, %arg2: i32) -> (i32, i32) {
    %c0_i32 = arith.constant 0 : i32
    %c0_i32_0 = arith.constant 0 : i32
    return %c0_i32, %arg1 : i32, i32
  }
  func.func @transform_3(%arg0: i32, %arg1: i32, %arg2: i32) -> (i32, i32) {
    %c0_i32 = arith.constant 0 : i32
    return %arg0, %arg1 : i32, i32
  }
  func.func @transform_4(%arg0: i32, %arg1: i32, %arg2: i32) -> (i32, i32) {
    %c0_i32 = arith.constant 0 : i32
    return %arg0, %arg1 : i32, i32
  }
}

module attributes {stable_mosaic.version = 11 : i64} {
  func.func @_ln_matmul_kernel(%arg0: i32, %arg1: i32, %arg2: memref<40x128xbf16, #tpu.memory_space<vmem>>, %arg3: memref<1x128xf32, #tpu.memory_space<vmem>>, %arg4: memref<1x128xf32, #tpu.memory_space<vmem>>, %arg5: memref<128x512xbf16, #tpu.memory_space<vmem>>, %arg6: memref<1x512xf32, #tpu.memory_space<vmem>>, %arg7: memref<40x512xbf16, #tpu.memory_space<vmem>>, %arg8: memref<40x128xbf16, #tpu.memory_space<vmem>>) attributes {dimension_semantics = [#tpu.dimension_semantics<parallel>, #tpu.dimension_semantics<arbitrary>], iteration_bounds = array<i64: 1, 1>, scalar_prefetch = 0 : i64, scratch_operands = 1 : i64, tpu.core_type = #tpu.core_type<tc>, window_params = [{transform_indices = @transform_0, window_bounds = array<i64: 40, 128>}, {pipeline_mode = #tpu.pipeline_mode<synchronous>, transform_indices = @transform_1, window_bounds = array<i64: 1, 128>}, {pipeline_mode = #tpu.pipeline_mode<synchronous>, transform_indices = @transform_2, window_bounds = array<i64: 1, 128>}, {transform_indices = @transform_3, window_bounds = array<i64: 128, 512>}, {transform_indices = @transform_4, window_bounds = array<i64: 1, 512>}, {transform_indices = @transform_5, window_bounds = array<i64: 40, 512>}]} {
    %c0_i32 = arith.constant 0 : i32
    %0 = arith.cmpi eq, %arg1, %c0_i32 : i32
    %1 = arith.extui %0 : i1 to i32
    %c0_i32_0 = arith.constant 0 : i32
    %2 = arith.cmpi ne, %1, %c0_i32_0 : i32
    scf.if %2 {
      %c0_12 = arith.constant 0 : index
      %c0_13 = arith.constant 0 : index
      %24 = vector.load %arg2[%c0_12, %c0_13] : memref<40x128xbf16, #tpu.memory_space<vmem>>, vector<40x128xbf16>
      %25 = arith.extf %24 : vector<40x128xbf16> to vector<40x128xf32>
      %cst_14 = arith.constant dense<0.000000e+00> : vector<40xf32>
      %26 = vector.multi_reduction <add>, %25, %cst_14 [1] : vector<40x128xf32> to vector<40xf32>
      %27 = vector.shape_cast %26 : vector<40xf32> to vector<40x1xf32>
      %cst_15 = arith.constant 7.812500e-03 : f32
      %28 = vector.broadcast %cst_15 : f32 to vector<40x1xf32>
      %29 = arith.mulf %27, %28 : vector<40x1xf32>
      %30 = vector.broadcast %29 : vector<40x1xf32> to vector<40x128xf32>
      %31 = arith.subf %25, %30 : vector<40x128xf32>
      %32 = arith.mulf %31, %31 : vector<40x128xf32>
      %cst_16 = arith.constant dense<0.000000e+00> : vector<40xf32>
      %33 = vector.multi_reduction <add>, %32, %cst_16 [1] : vector<40x128xf32> to vector<40xf32>
      %34 = vector.shape_cast %33 : vector<40xf32> to vector<40x1xf32>
      %cst_17 = arith.constant 7.812500e-03 : f32
      %35 = vector.broadcast %cst_17 : f32 to vector<40x1xf32>
      %36 = arith.mulf %34, %35 : vector<40x1xf32>
      %cst_18 = arith.constant 9.99999974E-6 : f32
      %37 = vector.broadcast %cst_18 : f32 to vector<40x1xf32>
      %38 = arith.addf %36, %37 : vector<40x1xf32>
      %39 = math.rsqrt %38 : vector<40x1xf32>
      %40 = vector.broadcast %39 : vector<40x1xf32> to vector<40x128xf32>
      %41 = arith.mulf %31, %40 : vector<40x128xf32>
      %c0_19 = arith.constant 0 : index
      %c0_20 = arith.constant 0 : index
      %42 = vector.load %arg3[%c0_19, %c0_20] : memref<1x128xf32, #tpu.memory_space<vmem>>, vector<1x128xf32>
      %43 = vector.broadcast %42 : vector<1x128xf32> to vector<40x128xf32>
      %44 = arith.mulf %41, %43 : vector<40x128xf32>
      %c0_21 = arith.constant 0 : index
      %c0_22 = arith.constant 0 : index
      %45 = vector.load %arg4[%c0_21, %c0_22] : memref<1x128xf32, #tpu.memory_space<vmem>>, vector<1x128xf32>
      %46 = vector.broadcast %45 : vector<1x128xf32> to vector<40x128xf32>
      %47 = arith.addf %44, %46 : vector<40x128xf32>
      %48 = arith.truncf %47 : vector<40x128xf32> to vector<40x128xbf16>
      %c0_23 = arith.constant 0 : index
      %c0_24 = arith.constant 0 : index
      %49 = vector.load %arg8[%c0_23, %c0_24] : memref<40x128xbf16, #tpu.memory_space<vmem>>, vector<40x128xbf16>
      tpu.vector_store %arg8[%c0_23, %c0_24], %48 {strides = array<i32>} : memref<40x128xbf16, #tpu.memory_space<vmem>>, vector<40x128xbf16>,
    } else {
    }
    %c0 = arith.constant 0 : index
    %c0_1 = arith.constant 0 : index
    %3 = vector.load %arg8[%c0, %c0_1] : memref<40x128xbf16, #tpu.memory_space<vmem>>, vector<40x128xbf16>
    %c0_2 = arith.constant 0 : index
    %c0_3 = arith.constant 0 : index
    %4 = vector.load %arg5[%c0_2, %c0_3] : memref<128x512xbf16, #tpu.memory_space<vmem>>, vector<128x512xbf16>
    %cst = arith.constant dense<0.000000e+00> : vector<40x512xf32>
    %5 = tpu.matmul %3, %4, %cst {dimension_numbers = #tpu.dot_dimension_numbers<[1], [0], [0], [1], [0, 0, 1, 1], [], []>} : vector<40x128xbf16>, vector<128x512xbf16>, vector<40x512xf32> -> vector<40x512xf32>
    %c0_4 = arith.constant 0 : index
    %c0_5 = arith.constant 0 : index
    %6 = vector.load %arg6[%c0_4, %c0_5] : memref<1x512xf32, #tpu.memory_space<vmem>>, vector<1x512xf32>
    %7 = vector.broadcast %6 : vector<1x512xf32> to vector<40x512xf32>
    %8 = arith.addf %5, %7 : vector<40x512xf32>
    %9 = arith.mulf %8, %8 : vector<40x512xf32>
    %10 = arith.mulf %8, %9 : vector<40x512xf32>
    %cst_6 = arith.constant 4.471500e-02 : f32
    %11 = vector.broadcast %cst_6 : f32 to vector<40x512xf32>
    %12 = arith.mulf %11, %10 : vector<40x512xf32>
    %13 = arith.addf %8, %12 : vector<40x512xf32>
    %cst_7 = arith.constant 0.797884583 : f32
    %14 = vector.broadcast %cst_7 : f32 to vector<40x512xf32>
    %15 = arith.mulf %14, %13 : vector<40x512xf32>
    %16 = math.tanh %15 : vector<40x512xf32>
    %cst_8 = arith.constant 1.000000e+00 : f32
    %17 = vector.broadcast %cst_8 : f32 to vector<40x512xf32>
    %18 = arith.addf %17, %16 : vector<40x512xf32>
    %cst_9 = arith.constant 5.000000e-01 : f32
    %19 = vector.broadcast %cst_9 : f32 to vector<40x512xf32>
    %20 = arith.mulf %19, %18 : vector<40x512xf32>
    %21 = arith.mulf %8, %20 : vector<40x512xf32>
    %22 = arith.truncf %21 : vector<40x512xf32> to vector<40x512xbf16>
    %c0_10 = arith.constant 0 : index
    %c0_11 = arith.constant 0 : index
    %23 = vector.load %arg7[%c0_10, %c0_11] : memref<40x512xbf16, #tpu.memory_space<vmem>>, vector<40x512xbf16>
    tpu.vector_store %arg7[%c0_10, %c0_11], %22 {strides = array<i32>} : memref<40x512xbf16, #tpu.memory_space<vmem>>, vector<40x512xbf16>,
    return
  }
  func.func @transform_0(%arg0: i32, %arg1: i32) -> (i32, i32) {
    %c0_i32 = arith.constant 0 : i32
    %c0_i32_0 = arith.constant 0 : i32
    return %arg0, %c0_i32 : i32, i32
  }
  func.func @transform_1(%arg0: i32, %arg1: i32) -> (i32, i32) {
    %c0_i32 = arith.constant 0 : i32
    %c0_i32_0 = arith.constant 0 : i32
    %c0_i32_1 = arith.constant 0 : i32
    return %c0_i32, %c0_i32_0 : i32, i32
  }
  func.func @transform_2(%arg0: i32, %arg1: i32) -> (i32, i32) {
    %c0_i32 = arith.constant 0 : i32
    %c0_i32_0 = arith.constant 0 : i32
    %c0_i32_1 = arith.constant 0 : i32
    return %c0_i32, %c0_i32_0 : i32, i32
  }
  func.func @transform_3(%arg0: i32, %arg1: i32) -> (i32, i32) {
    %c0_i32 = arith.constant 0 : i32
    %c0_i32_0 = arith.constant 0 : i32
    return %c0_i32, %arg1 : i32, i32
  }
  func.func @transform_4(%arg0: i32, %arg1: i32) -> (i32, i32) {
    %c0_i32 = arith.constant 0 : i32
    %c0_i32_0 = arith.constant 0 : i32
    return %c0_i32, %arg1 : i32, i32
  }
  func.func @transform_5(%arg0: i32, %arg1: i32) -> (i32, i32) {
    %c0_i32 = arith.constant 0 : i32
    return %arg0, %arg1 : i32, i32
  }
}

module attributes {stable_mosaic.version = 11 : i64} {
  func.func @_matmul_kernel(%arg0: i32, %arg1: i32, %arg2: i32, %arg3: memref<40x512xbf16, #tpu.memory_space<vmem>>, %arg4: memref<512x128xbf16, #tpu.memory_space<vmem>>, %arg5: memref<1x128xf32, #tpu.memory_space<vmem>>, %arg6: memref<40x128xbf16, #tpu.memory_space<vmem>>, %arg7: memref<40x128xbf16, #tpu.memory_space<vmem>>, %arg8: memref<40x128xf32, #tpu.memory_space<vmem>>) attributes {dimension_semantics = [#tpu.dimension_semantics<parallel>, #tpu.dimension_semantics<parallel>, #tpu.dimension_semantics<arbitrary>], iteration_bounds = array<i64: 1, 1, 1>, scalar_prefetch = 0 : i64, scratch_operands = 1 : i64, tpu.core_type = #tpu.core_type<tc>, window_params = [{transform_indices = @transform_0, window_bounds = array<i64: 40, 512>}, {transform_indices = @transform_1, window_bounds = array<i64: 512, 128>}, {transform_indices = @transform_2, window_bounds = array<i64: 1, 128>}, {transform_indices = @transform_3, window_bounds = array<i64: 40, 128>}, {transform_indices = @transform_4, window_bounds = array<i64: 40, 128>}]} {
    %c0_i32 = arith.constant 0 : i32
    %0 = arith.cmpi eq, %arg2, %c0_i32 : i32
    %1 = arith.extui %0 : i1 to i32
    %c0_i32_0 = arith.constant 0 : i32
    %2 = arith.cmpi ne, %1, %c0_i32_0 : i32
    scf.if %2 {
      %c0_10 = arith.constant 0 : index
      %c0_11 = arith.constant 0 : index
      %12 = vector.load %arg6[%c0_10, %c0_11] : memref<40x128xbf16, #tpu.memory_space<vmem>>, vector<40x128xbf16>
      %13 = arith.extf %12 : vector<40x128xbf16> to vector<40x128xf32>
      %c0_12 = arith.constant 0 : index
      %c0_13 = arith.constant 0 : index
      %14 = vector.load %arg8[%c0_12, %c0_13] : memref<40x128xf32, #tpu.memory_space<vmem>>, vector<40x128xf32>
      tpu.vector_store %arg8[%c0_12, %c0_13], %13 {strides = array<i32>} : memref<40x128xf32, #tpu.memory_space<vmem>>, vector<40x128xf32>,
    } else {
    }
    %c0 = arith.constant 0 : index
    %c0_1 = arith.constant 0 : index
    %3 = vector.load %arg8[%c0, %c0_1] : memref<40x128xf32, #tpu.memory_space<vmem>>, vector<40x128xf32>
    %c0_2 = arith.constant 0 : index
    %c0_3 = arith.constant 0 : index
    %4 = vector.load %arg3[%c0_2, %c0_3] : memref<40x512xbf16, #tpu.memory_space<vmem>>, vector<40x512xbf16>
    %c0_4 = arith.constant 0 : index
    %c0_5 = arith.constant 0 : index
    %5 = vector.load %arg4[%c0_4, %c0_5] : memref<512x128xbf16, #tpu.memory_space<vmem>>, vector<512x128xbf16>
    %cst = arith.constant dense<0.000000e+00> : vector<40x128xf32>
    %6 = tpu.matmul %4, %5, %cst {dimension_numbers = #tpu.dot_dimension_numbers<[1], [0], [0], [1], [0, 0, 1, 1], [], []>} : vector<40x512xbf16>, vector<512x128xbf16>, vector<40x128xf32> -> vector<40x128xf32>
    %7 = arith.addf %3, %6 : vector<40x128xf32>
    %c0_6 = arith.constant 0 : index
    %c0_7 = arith.constant 0 : index
    %8 = vector.load %arg8[%c0_6, %c0_7] : memref<40x128xf32, #tpu.memory_space<vmem>>, vector<40x128xf32>
    tpu.vector_store %arg8[%c0_6, %c0_7], %7 {strides = array<i32>} : memref<40x128xf32, #tpu.memory_space<vmem>>, vector<40x128xf32>,
    %c0_i32_8 = arith.constant 0 : i32
    %9 = arith.cmpi eq, %arg2, %c0_i32_8 : i32
    %10 = arith.extui %9 : i1 to i32
    %c0_i32_9 = arith.constant 0 : i32
    %11 = arith.cmpi ne, %10, %c0_i32_9 : i32
    scf.if %11 {
      %c0_10 = arith.constant 0 : index
      %c0_11 = arith.constant 0 : index
      %12 = vector.load %arg8[%c0_10, %c0_11] : memref<40x128xf32, #tpu.memory_space<vmem>>, vector<40x128xf32>
      %c0_12 = arith.constant 0 : index
      %c0_13 = arith.constant 0 : index
      %13 = vector.load %arg5[%c0_12, %c0_13] : memref<1x128xf32, #tpu.memory_space<vmem>>, vector<1x128xf32>
      %14 = vector.broadcast %13 : vector<1x128xf32> to vector<40x128xf32>
      %15 = arith.addf %12, %14 : vector<40x128xf32>
      %16 = arith.truncf %15 : vector<40x128xf32> to vector<40x128xbf16>
      %c0_14 = arith.constant 0 : index
      %c0_15 = arith.constant 0 : index
      %17 = vector.load %arg7[%c0_14, %c0_15] : memref<40x128xbf16, #tpu.memory_space<vmem>>, vector<40x128xbf16>
      tpu.vector_store %arg7[%c0_14, %c0_15], %16 {strides = array<i32>} : memref<40x128xbf16, #tpu.memory_space<vmem>>, vector<40x128xbf16>,
    } else {
    }
    return
  }
  func.func @transform_0(%arg0: i32, %arg1: i32, %arg2: i32) -> (i32, i32) {
    %c0_i32 = arith.constant 0 : i32
    return %arg0, %arg2 : i32, i32
  }
  func.func @transform_1(%arg0: i32, %arg1: i32, %arg2: i32) -> (i32, i32) {
    %c0_i32 = arith.constant 0 : i32
    return %arg2, %arg1 : i32, i32
  }
  func.func @transform_2(%arg0: i32, %arg1: i32, %arg2: i32) -> (i32, i32) {
    %c0_i32 = arith.constant 0 : i32
    %c0_i32_0 = arith.constant 0 : i32
    return %c0_i32, %arg1 : i32, i32
  }
  func.func @transform_3(%arg0: i32, %arg1: i32, %arg2: i32) -> (i32, i32) {
    %c0_i32 = arith.constant 0 : i32
    return %arg0, %arg1 : i32, i32
  }
  func.func @transform_4(%arg0: i32, %arg1: i32, %arg2: i32) -> (i32, i32) {
    %c0_i32 = arith.constant 0 : i32
    return %arg0, %arg1 : i32, i32
  }
}

module attributes {stable_mosaic.version = 11 : i64} {
  func.func @_ln_matmul_kernel(%arg0: i32, %arg1: i32, %arg2: memref<40x128xbf16, #tpu.memory_space<vmem>>, %arg3: memref<1x128xf32, #tpu.memory_space<vmem>>, %arg4: memref<1x128xf32, #tpu.memory_space<vmem>>, %arg5: memref<128x128xbf16, #tpu.memory_space<vmem>>, %arg6: memref<1x128xf32, #tpu.memory_space<vmem>>, %arg7: memref<40x128xf32, #tpu.memory_space<vmem>>, %arg8: memref<40x128xbf16, #tpu.memory_space<vmem>>) attributes {dimension_semantics = [#tpu.dimension_semantics<parallel>, #tpu.dimension_semantics<arbitrary>], iteration_bounds = array<i64: 1, 1>, scalar_prefetch = 0 : i64, scratch_operands = 1 : i64, tpu.core_type = #tpu.core_type<tc>, window_params = [{transform_indices = @transform_0, window_bounds = array<i64: 40, 128>}, {pipeline_mode = #tpu.pipeline_mode<synchronous>, transform_indices = @transform_1, window_bounds = array<i64: 1, 128>}, {pipeline_mode = #tpu.pipeline_mode<synchronous>, transform_indices = @transform_2, window_bounds = array<i64: 1, 128>}, {transform_indices = @transform_3, window_bounds = array<i64: 128, 128>}, {transform_indices = @transform_4, window_bounds = array<i64: 1, 128>}, {transform_indices = @transform_5, window_bounds = array<i64: 40, 128>}]} {
    %c0_i32 = arith.constant 0 : i32
    %0 = arith.cmpi eq, %arg1, %c0_i32 : i32
    %1 = arith.extui %0 : i1 to i32
    %c0_i32_0 = arith.constant 0 : i32
    %2 = arith.cmpi ne, %1, %c0_i32_0 : i32
    scf.if %2 {
      %c0_8 = arith.constant 0 : index
      %c0_9 = arith.constant 0 : index
      %10 = vector.load %arg2[%c0_8, %c0_9] : memref<40x128xbf16, #tpu.memory_space<vmem>>, vector<40x128xbf16>
      %11 = arith.extf %10 : vector<40x128xbf16> to vector<40x128xf32>
      %cst_10 = arith.constant dense<0.000000e+00> : vector<40xf32>
      %12 = vector.multi_reduction <add>, %11, %cst_10 [1] : vector<40x128xf32> to vector<40xf32>
      %13 = vector.shape_cast %12 : vector<40xf32> to vector<40x1xf32>
      %cst_11 = arith.constant 7.812500e-03 : f32
      %14 = vector.broadcast %cst_11 : f32 to vector<40x1xf32>
      %15 = arith.mulf %13, %14 : vector<40x1xf32>
      %16 = vector.broadcast %15 : vector<40x1xf32> to vector<40x128xf32>
      %17 = arith.subf %11, %16 : vector<40x128xf32>
      %18 = arith.mulf %17, %17 : vector<40x128xf32>
      %cst_12 = arith.constant dense<0.000000e+00> : vector<40xf32>
      %19 = vector.multi_reduction <add>, %18, %cst_12 [1] : vector<40x128xf32> to vector<40xf32>
      %20 = vector.shape_cast %19 : vector<40xf32> to vector<40x1xf32>
      %cst_13 = arith.constant 7.812500e-03 : f32
      %21 = vector.broadcast %cst_13 : f32 to vector<40x1xf32>
      %22 = arith.mulf %20, %21 : vector<40x1xf32>
      %cst_14 = arith.constant 9.99999974E-6 : f32
      %23 = vector.broadcast %cst_14 : f32 to vector<40x1xf32>
      %24 = arith.addf %22, %23 : vector<40x1xf32>
      %25 = math.rsqrt %24 : vector<40x1xf32>
      %26 = vector.broadcast %25 : vector<40x1xf32> to vector<40x128xf32>
      %27 = arith.mulf %17, %26 : vector<40x128xf32>
      %c0_15 = arith.constant 0 : index
      %c0_16 = arith.constant 0 : index
      %28 = vector.load %arg3[%c0_15, %c0_16] : memref<1x128xf32, #tpu.memory_space<vmem>>, vector<1x128xf32>
      %29 = vector.broadcast %28 : vector<1x128xf32> to vector<40x128xf32>
      %30 = arith.mulf %27, %29 : vector<40x128xf32>
      %c0_17 = arith.constant 0 : index
      %c0_18 = arith.constant 0 : index
      %31 = vector.load %arg4[%c0_17, %c0_18] : memref<1x128xf32, #tpu.memory_space<vmem>>, vector<1x128xf32>
      %32 = vector.broadcast %31 : vector<1x128xf32> to vector<40x128xf32>
      %33 = arith.addf %30, %32 : vector<40x128xf32>
      %34 = arith.truncf %33 : vector<40x128xf32> to vector<40x128xbf16>
      %c0_19 = arith.constant 0 : index
      %c0_20 = arith.constant 0 : index
      %35 = vector.load %arg8[%c0_19, %c0_20] : memref<40x128xbf16, #tpu.memory_space<vmem>>, vector<40x128xbf16>
      tpu.vector_store %arg8[%c0_19, %c0_20], %34 {strides = array<i32>} : memref<40x128xbf16, #tpu.memory_space<vmem>>, vector<40x128xbf16>,
    } else {
    }
    %c0 = arith.constant 0 : index
    %c0_1 = arith.constant 0 : index
    %3 = vector.load %arg8[%c0, %c0_1] : memref<40x128xbf16, #tpu.memory_space<vmem>>, vector<40x128xbf16>
    %c0_2 = arith.constant 0 : index
    %c0_3 = arith.constant 0 : index
    %4 = vector.load %arg5[%c0_2, %c0_3] : memref<128x128xbf16, #tpu.memory_space<vmem>>, vector<128x128xbf16>
    %cst = arith.constant dense<0.000000e+00> : vector<40x128xf32>
    %5 = tpu.matmul %3, %4, %cst {dimension_numbers = #tpu.dot_dimension_numbers<[1], [0], [0], [1], [0, 0, 1, 1], [], []>} : vector<40x128xbf16>, vector<128x128xbf16>, vector<40x128xf32> -> vector<40x128xf32>
    %c0_4 = arith.constant 0 : index
    %c0_5 = arith.constant 0 : index
    %6 = vector.load %arg6[%c0_4, %c0_5] : memref<1x128xf32, #tpu.memory_space<vmem>>, vector<1x128xf32>
    %7 = vector.broadcast %6 : vector<1x128xf32> to vector<40x128xf32>
    %8 = arith.addf %5, %7 : vector<40x128xf32>
    %c0_6 = arith.constant 0 : index
    %c0_7 = arith.constant 0 : index
    %9 = vector.load %arg7[%c0_6, %c0_7] : memref<40x128xf32, #tpu.memory_space<vmem>>, vector<40x128xf32>
    tpu.vector_store %arg7[%c0_6, %c0_7], %8 {strides = array<i32>} : memref<40x128xf32, #tpu.memory_space<vmem>>, vector<40x128xf32>,
    return
  }
  func.func @transform_0(%arg0: i32, %arg1: i32) -> (i32, i32) {
    %c0_i32 = arith.constant 0 : i32
    %c0_i32_0 = arith.constant 0 : i32
    return %arg0, %c0_i32 : i32, i32
  }
  func.func @transform_1(%arg0: i32, %arg1: i32) -> (i32, i32) {
    %c0_i32 = arith.constant 0 : i32
    %c0_i32_0 = arith.constant 0 : i32
    %c0_i32_1 = arith.constant 0 : i32
    return %c0_i32, %c0_i32_0 : i32, i32
  }
  func.func @transform_2(%arg0: i32, %arg1: i32) -> (i32, i32) {
    %c0_i32 = arith.constant 0 : i32
    %c0_i32_0 = arith.constant 0 : i32
    %c0_i32_1 = arith.constant 0 : i32
    return %c0_i32, %c0_i32_0 : i32, i32
  }
  func.func @transform_3(%arg0: i32, %arg1: i32) -> (i32, i32) {
    %c0_i32 = arith.constant 0 : i32
    %c0_i32_0 = arith.constant 0 : i32
    return %c0_i32, %arg1 : i32, i32
  }
  func.func @transform_4(%arg0: i32, %arg1: i32) -> (i32, i32) {
    %c0_i32 = arith.constant 0 : i32
    %c0_i32_0 = arith.constant 0 : i32
    return %c0_i32, %arg1 : i32, i32
  }
  func.func @transform_5(%arg0: i32, %arg1: i32) -> (i32, i32) {
    %c0_i32 = arith.constant 0 : i32
    return %arg0, %arg1 : i32, i32
  }
}

</mosaic_0001>

<llo_original>
// kernel: ccot_forward.20
$region0: #{ccot_forward.20}
  #allocation0 [shape = 'u32[]', space=smem, size = 0x4, offset = 0x4, fixed_abs, tag = 'smem constant byte address 0x4 - core index']
  #allocation1 [shape = 'u32[144,128]{1,0:T(1,128)}', space=vmem, size = 0x12000, scoped, tag = 'internal scratch']
  #allocation2 [shape = 'f32[24,128]{1,0:T(8,128)}', space=vmem, size = 0x3000, scoped, tag = 'scratch operand']
  %s0 = inlined_call_operand.vmem [shape: bf16[24,128], index: 0, kind: input, shape index: {}]
  %s1 = inlined_call_operand.vmem [shape: bf16[128,128], index: 1, kind: input, shape index: {}]
  %s2 = inlined_call_operand.vmem [shape: f32[1,128], index: 2, kind: input, shape index: {}]
  %s3 = inlined_call_operand.vmem [shape: bf16[24,128], index: 3, kind: input, shape index: {}]
  %s4 = inlined_call_operand.vmem [shape: bf16[24,128], index: 4, kind: output, shape index: {}]
  %s5 = sld [smem:[#allocation0]]
  $region34: #{ccot_forward.20} parent=0
    _
  %s7 = ssub.s32 1, %s5
  %s8 = scalar_select 0, %s7, %s5
  // Predicated region
  $region2: #{ccot_forward.20} parent=0 // pred_check
    _
  $region3: #{ccot_forward.20} parent=0 // pred_check_branch
    %10 = sbr.rel (0) target = $region5
  $region4: #{ccot_forward.20} parent=0 // pred_region
    _
  $region5: #{ccot_forward.20} parent=0 // pred_fallthru
    _
  // Predicated region
  $region6: #{ccot_forward.20} parent=0 // pred_check
    _
  $region7: #{ccot_forward.20} parent=0 // pred_check_branch
    %12 = sbr.rel (0) target = $region9
  $region8: #{ccot_forward.20} parent=0 // pred_region
    _
  $region9: #{ccot_forward.20} parent=0 // pred_fallthru
    _
  // Predicated region
  $region10: #{ccot_forward.20} parent=0 // pred_check
    _
  $region11: #{ccot_forward.20} parent=0 // pred_check_branch
    %14 = sbr.rel (0) target = $region13
  $region12: #{ccot_forward.20} parent=0 // pred_region
    _
  $region13: #{ccot_forward.20} parent=0 // pred_fallthru
    _
  // Predicated region
  $region14: #{ccot_forward.20} parent=0 // pred_check
    _
  $region15: #{ccot_forward.20} parent=0 // pred_check_branch
    %16 = sbr.rel (0) target = $region17
  $region16: #{ccot_forward.20} parent=0 // pred_region
    _
  $region17: #{ccot_forward.20} parent=0 // pred_fallthru
    _
  %p18 = scmp.eq.s32.totalorder 0, 0
  // Predicated region
  $region18: #{ccot_forward.20} parent=0 // pred_check
    %p19 = pneg %p18
  $region19: #{ccot_forward.20} parent=0 // pred_check_branch
    %21 = sbr.rel (%p19) target = $region21
  $region20: #{ccot_forward.20} parent=0 // pred_region
    %v22 = vld [vmem:[%s3] sm:$0xf]
    %v23 = vld [vmem:[%s3 + $0x4] sm:$0xf]
    %v24 = vld [vmem:[%s3 + $0x8] sm:$0xf]
    %v25 = vunpack.c.l.bf16 %v22
    %v26 = vunpack.c.l.bf16 %v23
    %v27 = vunpack.c.l.bf16 %v24
    %28 = vst [vmem:[#allocation2] sm:$0xff] %v25
    %29 = vst [vmem:[#allocation2 + $0x8] sm:$0xff] %v26
    %30 = vst [vmem:[#allocation2 + $0x10] sm:$0xff] %v27
  $region21: #{ccot_forward.20} parent=0 // pred_fallthru
    _
  %v31 = vld [vmem:[#allocation2] sm:$0xff]
  %v32 = vld [vmem:[#allocation2 + $0x8] sm:$0xff]
  %v33 = vld [vmem:[#allocation2 + $0x10] sm:$0xff]
  %v34 = vld [vmem:[%s0] sm:$0xf]
  %v35 = vld [vmem:[%s0 + $0x4] sm:$0xf]
  %v36 = vld [vmem:[%s0 + $0x8] sm:$0xf]
  %v37 = vld [vmem:[%s1] sm:$0xf]
  %v38 = vld [vmem:[%s1 + $0x4] sm:$0xf]
  %v39 = vld [vmem:[%s1 + $0x8] sm:$0xf]
  %v40 = vld [vmem:[%s1 + $0xc] sm:$0xf]
  %v41 = vld [vmem:[%s1 + $0x10] sm:$0xf]
  %v42 = vld [vmem:[%s1 + $0x14] sm:$0xf]
  %v43 = vld [vmem:[%s1 + $0x18] sm:$0xf]
  %v44 = vld [vmem:[%s1 + $0x1c] sm:$0xf]
  %v45 = vld [vmem:[%s1 + $0x20] sm:$0xf]
  %v46 = vld [vmem:[%s1 + $0x24] sm:$0xf]
  %v47 = vld [vmem:[%s1 + $0x28] sm:$0xf]
  %v48 = vld [vmem:[%s1 + $0x2c] sm:$0xf]
  %v49 = vld [vmem:[%s1 + $0x30] sm:$0xf]
  %v50 = vld [vmem:[%s1 + $0x34] sm:$0xf]
  %v51 = vld [vmem:[%s1 + $0x38] sm:$0xf]
  %v52 = vld [vmem:[%s1 + $0x3c] sm:$0xf]
  %v56 = vunpack.c.l.b16 %v34
  %v57 = vunpack.c.l.b16 %v35
  %v58 = vunpack.c.l.b16 %v36
  %v59 = vpack.c.b16 %v57, %v56
  %v60 = vpack.c.b16 %v58, %v58
  %v79 = vunpack.c.l.b16 %v37
  %v80 = vunpack.c.l.b16 %v38
  %v81 = vunpack.c.l.b16 %v39
  %v82 = vunpack.c.l.b16 %v40
  %v83 = vunpack.c.l.b16 %v41
  %v84 = vunpack.c.l.b16 %v42
  %v85 = vunpack.c.l.b16 %v43
  %v86 = vunpack.c.l.b16 %v44
  %v87 = vunpack.c.l.b16 %v45
  %v88 = vunpack.c.l.b16 %v46
  %v89 = vunpack.c.l.b16 %v47
  %v90 = vunpack.c.l.b16 %v48
  %v91 = vunpack.c.l.b16 %v49
  %v92 = vunpack.c.l.b16 %v50
  %v93 = vunpack.c.l.b16 %v51
  %v94 = vunpack.c.l.b16 %v52
  %v95 = vpack.c.b16 %v80, %v79
  %v96 = vpack.c.b16 %v82, %v81
  %v97 = vpack.c.b16 %v84, %v83
  %v98 = vpack.c.b16 %v86, %v85
  %v99 = vpack.c.b16 %v88, %v87
  %v100 = vpack.c.b16 %v90, %v89
  %v101 = vpack.c.b16 %v92, %v91
  %v102 = vpack.c.b16 %v94, %v93
  %111 = vmatprep.subr.bf16.mxu0 0
  %112 = vmatpush1.bf16.msra.mxu0 %v95
  %113 = vmatprep.subr.bf16.mxu0 0
  %114 = vmatpush1.bf16.msra.mxu0 %v96
  %115 = vmatprep.subr.bf16.mxu0 0
  %116 = vmatpush1.bf16.msra.mxu0 %v97
  %117 = vmatprep.subr.bf16.mxu0 0
  %118 = vmatpush1.bf16.msra.mxu0 %v98
  %119 = vmatprep.subr.bf16.mxu0 0
  %120 = vmatpush1.bf16.msra.mxu0 %v99
  %121 = vmatprep.subr.bf16.mxu0 0
  %122 = vmatpush1.bf16.msra.mxu0 %v100
  %123 = vmatprep.subr.bf16.mxu0 0
  %124 = vmatpush1.bf16.msra.mxu0 %v101
  %125 = vmatprep.subr.bf16.mxu0 0
  %126 = vmatpush1.bf16.msra.mxu0 %v102
  %127 = vmatprep.subr.bf16.mxu0 0
  %128 = vmatpush1.bf16.msra.mxu0 0
  %129 = vmatprep.subr.bf16.mxu0 0
  %130 = vmatpush1.bf16.msra.mxu0 0
  %131 = vmatprep.subr.bf16.mxu0 0
  %132 = vmatpush1.bf16.msra.mxu0 0
  %133 = vmatprep.subr.bf16.mxu0 0
  %134 = vmatpush1.bf16.msra.mxu0 0
  %135 = vmatprep.subr.bf16.mxu0 0
  %136 = vmatpush1.bf16.msra.mxu0 0
  %137 = vmatprep.subr.bf16.mxu0 0
  %138 = vmatpush1.bf16.msra.mxu0 0
  %139 = vmatprep.subr.bf16.mxu0 0
  %140 = vmatpush1.bf16.msra.mxu0 0
  %141 = vmatprep.subr.bf16.mxu0 0
  %142 = vmatpush1.bf16.msra.mxu0 0
  %143 = vmatprep.mubr.bf16.mxu0 0
  %144 = vmatmul.mubr.bf16.gmra.mrb[0].mxu0 %v59
  %v145 = vpop.f32.mrb[0].mxu0
  %v146 = vadd.f32 0.0, %v145
  %v147 = vpop.f32.mrb[0].mxu0
  %v148 = vpop.f32.mrb[0].mxu0
  %v149 = vadd.f32 0.0, %v148
  %v150 = vpop.f32.mrb[0].mxu0
  %151 = vmatprep.mubr.bf16.mxu0 0
  %152 = vmatmul.mubr.bf16.gmra.mrb[0].mxu0 %v60
  %v153 = vpop.f32.mrb[0].mxu0
  %v154 = vadd.f32 0.0, %v153
  %v155 = vpop.f32.mrb[0].mxu0
  %v156 = vpop.f32.mrb[0].mxu0
  %v157 = vpop.f32.mrb[0].mxu0
  %158 = vdwg.mxu0
  %v159 = vadd.f32 %v31, %v146
  %v160 = vadd.f32 %v32, %v149
  %v161 = vadd.f32 %v33, %v154
  %162 = vst [vmem:[#allocation2] sm:$0xff] %v159
  %163 = vst [vmem:[#allocation2 + $0x8] sm:$0xff] %v160
  %164 = vst [vmem:[#allocation2 + $0x10] sm:$0xff] %v161
  // Predicated region
  $region22: #{ccot_forward.20} parent=0 // pred_check
    %p165 = pneg %p18
  $region23: #{ccot_forward.20} parent=0 // pred_check_branch
    %167 = sbr.rel (%p165) target = $region25
  $region24: #{ccot_forward.20} parent=0 // pred_region
    %v168 = vld [vmem:[#allocation2] sm:$0xff]
    %v169 = vld [vmem:[#allocation2 + $0x8] sm:$0xff]
    %v170 = vld [vmem:[#allocation2 + $0x10] sm:$0xff]
    %v171 = vld [vmem:[%s2] sm:$0x1]
    %v173 = vlaneseq
    %v174 = vshrl.u32 %v173, 7
    %v175 = vsub.s32 0, %v174
    %v176 = vrot.slane %v171, %v175
    %v178 = vadd.f32 %v168, %v176
    %v179 = vadd.f32 %v169, %v176
    %v180 = vadd.f32 %v170, %v176
    %v181 = vpack.c.bf16 %v179, %v178
    %v182 = vpack.c.bf16 %v180, %v180
    %v185 = vunpack.c.l.b16 %v181
    %v186 = vunpack.c.h.b16 %v181
    %v187 = vunpack.c.l.b16 %v182
    %v188 = vpack.c.b16 %v185, %v185
    %v189 = vpack.c.b16 %v186, %v186
    %v190 = vpack.c.b16 %v187, %v187
    %194 = vst [vmem:[%s4] sm:$0xf] %v188
    %195 = vst [vmem:[%s4 + $0x4] sm:$0xf] %v189
    %196 = vst [vmem:[%s4 + $0x8] sm:$0xf] %v190
  $region25: #{ccot_forward.20} parent=0 // pred_fallthru
    _
  // Predicated region
  $region26: #{ccot_forward.20} parent=0 // pred_check
    _
  $region27: #{ccot_forward.20} parent=0 // pred_check_branch
    %198 = sbr.rel (0) target = $region29
  $region28: #{ccot_forward.20} parent=0 // pred_region
    _
  $region29: #{ccot_forward.20} parent=0 // pred_fallthru
    _
  // Predicated region
  $region30: #{ccot_forward.20} parent=0 // pred_check
    _
  $region31: #{ccot_forward.20} parent=0 // pred_check_branch
    %200 = sbr.rel (0) target = $region33
  $region32: #{ccot_forward.20} parent=0 // pred_region
    _
  $region33: #{ccot_forward.20} parent=0 // pred_fallthru
    _

// kernel: ccot_forward.18
$region0: #{ccot_forward.18}
  #allocation0 [shape = 'u32[]', space=smem, size = 0x4, offset = 0x4, fixed_abs, tag = 'smem constant byte address 0x4 - core index']
  #allocation1 [shape = 'u32[144,128]{1,0:T(1,128)}', space=vmem, size = 0x12000, scoped, tag = 'internal scratch']
  #allocation2 [shape = 'bf16[24,128]{1,0:T(8,128)(2,1)}', space=vmem, size = 0x1800, scoped, tag = 'scratch operand']
  %s0 = inlined_call_operand.vmem [shape: bf16[24,128], index: 0, kind: input, shape index: {}]
  %s1 = inlined_call_operand.vmem [shape: f32[1,128], index: 1, kind: input, shape index: {}]
  %s2 = inlined_call_operand.vmem [shape: f32[1,128], index: 2, kind: input, shape index: {}]
  %s3 = inlined_call_operand.vmem [shape: bf16[128,384], index: 3, kind: input, shape index: {}]
  %s4 = inlined_call_operand.vmem [shape: f32[1,384], index: 4, kind: input, shape index: {}]
  %s5 = inlined_call_operand.vmem [shape: bf16[24,384], index: 5, kind: output, shape index: {}]
  %s6 = sld [smem:[#allocation0]]
  $region34: #{ccot_forward.18} parent=0
    _
  %s8 = ssub.s32 1, %s6
  %s9 = scalar_select 0, %s8, %s6
  // Predicated region
  $region2: #{ccot_forward.18} parent=0 // pred_check
    _
  $region3: #{ccot_forward.18} parent=0 // pred_check_branch
    %11 = sbr.rel (0) target = $region5
  $region4: #{ccot_forward.18} parent=0 // pred_region
    _
  $region5: #{ccot_forward.18} parent=0 // pred_fallthru
    _
  // Predicated region
  $region6: #{ccot_forward.18} parent=0 // pred_check
    _
  $region7: #{ccot_forward.18} parent=0 // pred_check_branch
    %13 = sbr.rel (0) target = $region9
  $region8: #{ccot_forward.18} parent=0 // pred_region
    _
  $region9: #{ccot_forward.18} parent=0 // pred_fallthru
    _
  // Predicated region
  $region10: #{ccot_forward.18} parent=0 // pred_check
    _
  $region11: #{ccot_forward.18} parent=0 // pred_check_branch
    %15 = sbr.rel (0) target = $region13
  $region12: #{ccot_forward.18} parent=0 // pred_region
    _
  $region13: #{ccot_forward.18} parent=0 // pred_fallthru
    _
  // Predicated region
  $region14: #{ccot_forward.18} parent=0 // pred_check
    _
  $region15: #{ccot_forward.18} parent=0 // pred_check_branch
    %17 = sbr.rel (0) target = $region17
  $region16: #{ccot_forward.18} parent=0 // pred_region
    _
  $region17: #{ccot_forward.18} parent=0 // pred_fallthru
    _
  // Predicated region
  $region18: #{ccot_forward.18} parent=0 // pred_check
    _
  $region19: #{ccot_forward.18} parent=0 // pred_check_branch
    %19 = sbr.rel (0) target = $region21
  $region20: #{ccot_forward.18} parent=0 // pred_region
    _
  $region21: #{ccot_forward.18} parent=0 // pred_fallthru
    _
  %p21 = scmp.eq.s32.totalorder 0, 0
  // Predicated region
  $region22: #{ccot_forward.18} parent=0 // pred_check
    %p22 = pneg %p21
  $region23: #{ccot_forward.18} parent=0 // pred_check_branch
    %24 = sbr.rel (%p22) target = $region25
  $region24: #{ccot_forward.18} parent=0 // pred_region
    %v25 = vld [vmem:[%s0] sm:$0xf]
    %v26 = vld [vmem:[%s0 + $0x4] sm:$0xf]
    %v27 = vld [vmem:[%s0 + $0x8] sm:$0xf]
    %v28 = vunpack.c.l.bf16 %v25
    %v29 = vunpack.c.l.bf16 %v26
    %v30 = vunpack.c.l.bf16 %v27
    %31 = vadd.xlane.f32.xlu0 %v28
    %v32 = vpop.xlane.xlu0 %31
    %33 = vadd.xlane.f32.xlu0 %v29
    %v34 = vpop.xlane.xlu0 %33
    %35 = vadd.xlane.f32.xlu0 %v30
    %v36 = vpop.xlane.xlu0 %35
    %v37 = vmul.f32 %v32, 0.0078125
    %v38 = vmul.f32 %v34, 0.0078125
    %v39 = vmul.f32 %v36, 0.0078125
    %v40 = vsub.f32 %v28, %v37
    %v41 = vsub.f32 %v29, %v38
    %v42 = vsub.f32 %v30, %v39
    %v43 = vmul.f32 %v40, %v40
    %v44 = vmul.f32 %v41, %v41
    %v45 = vmul.f32 %v42, %v42
    %46 = vadd.xlane.f32.xlu0 %v43
    %v47 = vpop.xlane.xlu0 %46
    %48 = vadd.xlane.f32.xlu0 %v44
    %v49 = vpop.xlane.xlu0 %48
    %50 = vadd.xlane.f32.xlu0 %v45
    %v51 = vpop.xlane.xlu0 %50
    %v52 = vmul.f32 %v47, 0.0078125
    %v53 = vmul.f32 %v49, 0.0078125
    %v54 = vmul.f32 %v51, 0.0078125
    %v55 = vadd.f32 %v52, 1e-05
    %v56 = vadd.f32 %v53, 1e-05
    %v57 = vadd.f32 %v54, 1e-05
    %v58 = vrsqrt.pop %v55
    %v59 = vrsqrt.pop %v56
    %v60 = vrsqrt.pop %v57
    %v61 = vmul.f32 %v40, %v58
    %v62 = vmul.f32 %v41, %v59
    %v63 = vmul.f32 %v42, %v60
    %v64 = vld [vmem:[%s1] sm:$0x1]
    %v66 = vlaneseq
    %v67 = vshrl.u32 %v66, 7
    %v68 = vsub.s32 0, %v67
    %v69 = vrot.slane %v64, %v68
    %v71 = vmul.f32 %v61, %v69
    %v72 = vmul.f32 %v62, %v69
    %v73 = vmul.f32 %v63, %v69
    %v74 = vld [vmem:[%s2] sm:$0x1]
    %v76 = vlaneseq
    %v77 = vshrl.u32 %v76, 7
    %v78 = vsub.s32 0, %v77
    %v79 = vrot.slane %v74, %v78
    %v81 = vadd.f32 %v71, %v79
    %v82 = vadd.f32 %v72, %v79
    %v83 = vadd.f32 %v73, %v79
    %v84 = vpack.c.bf16 %v82, %v81
    %v85 = vpack.c.bf16 %v83, %v83
    %v88 = vunpack.c.l.b16 %v84
    %v89 = vunpack.c.h.b16 %v84
    %v90 = vunpack.c.l.b16 %v85
    %v91 = vpack.c.b16 %v88, %v88
    %v92 = vpack.c.b16 %v89, %v89
    %v93 = vpack.c.b16 %v90, %v90
    %97 = vst [vmem:[#allocation2] sm:$0xf] %v91
    %98 = vst [vmem:[#allocation2 + $0x4] sm:$0xf] %v92
    %99 = vst [vmem:[#allocation2 + $0x8] sm:$0xf] %v93
  $region25: #{ccot_forward.18} parent=0 // pred_fallthru
    _
  %v100 = vld [vmem:[#allocation2] sm:$0xf]
  %v101 = vld [vmem:[#allocation2 + $0x4] sm:$0xf]
  %v102 = vld [vmem:[#allocation2 + $0x8] sm:$0xf]
  %v103 = vld [vmem:[%s3] sm:$0xff]
  %v104 = vld [vmem:[%s3 + $0x8] sm:$0xf]
  %v105 = vld [vmem:[%s3 + $0xc] sm:$0xff]
  %v106 = vld [vmem:[%s3 + $0x14] sm:$0xf]
  %v107 = vld [vmem:[%s3 + $0x18] sm:$0xff]
  %v108 = vld [vmem:[%s3 + $0x20] sm:$0xf]
  %v109 = vld [vmem:[%s3 + $0x24] sm:$0xff]
  %v110 = vld [vmem:[%s3 + $0x2c] sm:$0xf]
  %v111 = vld [vmem:[%s3 + $0x30] sm:$0xff]
  %v112 = vld [vmem:[%s3 + $0x38] sm:$0xf]
  %v113 = vld [vmem:[%s3 + $0x3c] sm:$0xff]
  %v114 = vld [vmem:[%s3 + $0x44] sm:$0xf]
  %v115 = vld [vmem:[%s3 + $0x48] sm:$0xff]
  %v116 = vld [vmem:[%s3 + $0x50] sm:$0xf]
  %v117 = vld [vmem:[%s3 + $0x54] sm:$0xff]
  %v118 = vld [vmem:[%s3 + $0x5c] sm:$0xf]
  %v119 = vld [vmem:[%s3 + $0x60] sm:$0xff]
  %v120 = vld [vmem:[%s3 + $0x68] sm:$0xf]
  %v121 = vld [vmem:[%s3 + $0x6c] sm:$0xff]
  %v122 = vld [vmem:[%s3 + $0x74] sm:$0xf]
  %v123 = vld [vmem:[%s3 + $0x78] sm:$0xff]
  %v124 = vld [vmem:[%s3 + $0x80] sm:$0xf]
  %v125 = vld [vmem:[%s3 + $0x84] sm:$0xff]
  %v126 = vld [vmem:[%s3 + $0x8c] sm:$0xf]
  %v127 = vld [vmem:[%s3 + $0x90] sm:$0xff]
  %v128 = vld [vmem:[%s3 + $0x98] sm:$0xf]
  %v129 = vld [vmem:[%s3 + $0x9c] sm:$0xff]
  %v130 = vld [vmem:[%s3 + $0xa4] sm:$0xf]
  %v131 = vld [vmem:[%s3 + $0xa8] sm:$0xff]
  %v132 = vld [vmem:[%s3 + $0xb0] sm:$0xf]
  %v133 = vld [vmem:[%s3 + $0xb4] sm:$0xff]
  %v134 = vld [vmem:[%s3 + $0xbc] sm:$0xf]
  %v135 = vld [vmem:[%s4] sm:$0x7]
  %v137 = vlaneseq
  %v138 = vshrl.u32 %v137, 7
  %v139 = vsub.s32 0, %v138
  %v140 = vrot.slane %v135, %v139
  %v141 = vlaneseq
  %v142 = vshrl.u32 %v141, 7
  %v143 = vsub.s32 1, %v142
  %v144 = vrot.slane %v135, %v143
  %v145 = vlaneseq
  %v146 = vshrl.u32 %v145, 7
  %v147 = vsub.s32 2, %v146
  %v148 = vrot.slane %v135, %v147
  %v155 = vunpack.c.l.b16 %v100
  %v156 = vunpack.c.l.b16 %v101
  %v157 = vunpack.c.l.b16 %v102
  %v158 = vpack.c.b16 %v156, %v155
  %v159 = vpack.c.b16 %v157, %v157
  %v194 = vunpack.c.l.b16 %v103
  %v195 = vunpack.c.h.b16 %v103
  %v196 = vunpack.c.l.b16 %v104
  %v197 = vunpack.c.l.b16 %v105
  %v198 = vunpack.c.h.b16 %v105
  %v199 = vunpack.c.l.b16 %v106
  %v200 = vunpack.c.l.b16 %v107
  %v201 = vunpack.c.h.b16 %v107
  %v202 = vunpack.c.l.b16 %v108
  %v203 = vunpack.c.l.b16 %v109
  %v204 = vunpack.c.h.b16 %v109
  %v205 = vunpack.c.l.b16 %v110
  %v206 = vunpack.c.l.b16 %v111
  %v207 = vunpack.c.h.b16 %v111
  %v208 = vunpack.c.l.b16 %v112
  %v209 = vunpack.c.l.b16 %v113
  %v210 = vunpack.c.h.b16 %v113
  %v211 = vunpack.c.l.b16 %v114
  %v212 = vunpack.c.l.b16 %v115
  %v213 = vunpack.c.h.b16 %v115
  %v214 = vunpack.c.l.b16 %v116
  %v215 = vunpack.c.l.b16 %v117
  %v216 = vunpack.c.h.b16 %v117
  %v217 = vunpack.c.l.b16 %v118
  %v218 = vunpack.c.l.b16 %v119
  %v219 = vunpack.c.h.b16 %v119
  %v220 = vunpack.c.l.b16 %v120
  %v221 = vunpack.c.l.b16 %v121
  %v222 = vunpack.c.h.b16 %v121
  %v223 = vunpack.c.l.b16 %v122
  %v224 = vunpack.c.l.b16 %v123
  %v225 = vunpack.c.h.b16 %v123
  %v226 = vunpack.c.l.b16 %v124
  %v227 = vunpack.c.l.b16 %v125
  %v228 = vunpack.c.h.b16 %v125
  %v229 = vunpack.c.l.b16 %v126
  %v230 = vunpack.c.l.b16 %v127
  %v231 = vunpack.c.h.b16 %v127
  %v232 = vunpack.c.l.b16 %v128
  %v233 = vunpack.c.l.b16 %v129
  %v234 = vunpack.c.h.b16 %v129
  %v235 = vunpack.c.l.b16 %v130
  %v236 = vunpack.c.l.b16 %v131
  %v237 = vunpack.c.h.b16 %v131
  %v238 = vunpack.c.l.b16 %v132
  %v239 = vunpack.c.l.b16 %v133
  %v240 = vunpack.c.h.b16 %v133
  %v241 = vunpack.c.l.b16 %v134
  %v242 = vpack.c.b16 %v197, %v194
  %v243 = vpack.c.b16 %v198, %v195
  %v244 = vpack.c.b16 %v199, %v196
  %v245 = vpack.c.b16 %v203, %v200
  %v246 = vpack.c.b16 %v204, %v201
  %v247 = vpack.c.b16 %v205, %v202
  %v248 = vpack.c.b16 %v209, %v206
  %v249 = vpack.c.b16 %v210, %v207
  %v250 = vpack.c.b16 %v211, %v208
  %v251 = vpack.c.b16 %v215, %v212
  %v252 = vpack.c.b16 %v216, %v213
  %v253 = vpack.c.b16 %v217, %v214
  %v254 = vpack.c.b16 %v221, %v218
  %v255 = vpack.c.b16 %v222, %v219
  %v256 = vpack.c.b16 %v223, %v220
  %v257 = vpack.c.b16 %v227, %v224
  %v258 = vpack.c.b16 %v228, %v225
  %v259 = vpack.c.b16 %v229, %v226
  %v260 = vpack.c.b16 %v233, %v230
  %v261 = vpack.c.b16 %v234, %v231
  %v262 = vpack.c.b16 %v235, %v232
  %v263 = vpack.c.b16 %v239, %v236
  %v264 = vpack.c.b16 %v240, %v237
  %v265 = vpack.c.b16 %v241, %v238
  %290 = vmatprep.subr.bf16.mxu0 %v243
  %291 = vmatpush1.bf16.msra.mxu0 %v242
  %292 = vmatprep.subr.bf16.mxu0 %v246
  %293 = vmatpush1.bf16.msra.mxu0 %v245
  %294 = vmatprep.subr.bf16.mxu0 %v249
  %295 = vmatpush1.bf16.msra.mxu0 %v248
  %296 = vmatprep.subr.bf16.mxu0 %v252
  %297 = vmatpush1.bf16.msra.mxu0 %v251
  %298 = vmatprep.subr.bf16.mxu0 %v255
  %299 = vmatpush1.bf16.msra.mxu0 %v254
  %300 = vmatprep.subr.bf16.mxu0 %v258
  %301 = vmatpush1.bf16.msra.mxu0 %v257
  %302 = vmatprep.subr.bf16.mxu0 %v261
  %303 = vmatpush1.bf16.msra.mxu0 %v260
  %304 = vmatprep.subr.bf16.mxu0 %v264
  %305 = vmatpush1.bf16.msra.mxu0 %v263
  %306 = vmatprep.subr.bf16.mxu0 0
  %307 = vmatpush1.bf16.msra.mxu0 0
  %308 = vmatprep.subr.bf16.mxu0 0
  %309 = vmatpush1.bf16.msra.mxu0 0
  %310 = vmatprep.subr.bf16.mxu0 0
  %311 = vmatpush1.bf16.msra.mxu0 0
  %312 = vmatprep.subr.bf16.mxu0 0
  %313 = vmatpush1.bf16.msra.mxu0 0
  %314 = vmatprep.subr.bf16.mxu0 0
  %315 = vmatpush1.bf16.msra.mxu0 0
  %316 = vmatprep.subr.bf16.mxu0 0
  %317 = vmatpush1.bf16.msra.mxu0 0
  %318 = vmatprep.subr.bf16.mxu0 0
  %319 = vmatpush1.bf16.msra.mxu0 0
  %320 = vmatprep.subr.bf16.mxu0 0
  %321 = vmatpush1.bf16.msra.mxu0 0
  %322 = vmatprep.mubr.bf16.mxu0 0
  %323 = vmatmul.mubr.bf16.gmra.mrb[0].mxu0 %v158
  %v324 = vpop.f32.mrb[0].mxu0
  %v325 = vadd.f32 %v140, %v324
  %v326 = vpop.f32.mrb[0].mxu0
  %v327 = vadd.f32 %v144, %v326
  %v328 = vpop.f32.mrb[0].mxu0
  %v329 = vadd.f32 %v140, %v328
  %v330 = vpop.f32.mrb[0].mxu0
  %v331 = vadd.f32 %v144, %v330
  %332 = vmatprep.mubr.bf16.mxu0 0
  %333 = vmatmul.mubr.bf16.gmra.mrb[0].mxu0 %v159
  %v334 = vpop.f32.mrb[0].mxu0
  %v335 = vadd.f32 %v140, %v334
  %v336 = vpop.f32.mrb[0].mxu0
  %v337 = vadd.f32 %v144, %v336
  %v338 = vpop.f32.mrb[0].mxu0
  %v339 = vpop.f32.mrb[0].mxu0
  %340 = vdwg.mxu0
  %341 = vmatprep.subr.bf16.mxu0 0
  %342 = vmatpush1.bf16.msra.mxu0 %v244
  %343 = vmatprep.subr.bf16.mxu0 0
  %344 = vmatpush1.bf16.msra.mxu0 %v247
  %345 = vmatprep.subr.bf16.mxu0 0
  %346 = vmatpush1.bf16.msra.mxu0 %v250
  %347 = vmatprep.subr.bf16.mxu0 0
  %348 = vmatpush1.bf16.msra.mxu0 %v253
  %349 = vmatprep.subr.bf16.mxu0 0
  %350 = vmatpush1.bf16.msra.mxu0 %v256
  %351 = vmatprep.subr.bf16.mxu0 0
  %352 = vmatpush1.bf16.msra.mxu0 %v259
  %353 = vmatprep.subr.bf16.mxu0 0
  %354 = vmatpush1.bf16.msra.mxu0 %v262
  %355 = vmatprep.subr.bf16.mxu0 0
  %356 = vmatpush1.bf16.msra.mxu0 %v265
  %357 = vmatprep.subr.bf16.mxu0 0
  %358 = vmatpush1.bf16.msra.mxu0 0
  %359 = vmatprep.subr.bf16.mxu0 0
  %360 = vmatpush1.bf16.msra.mxu0 0
  %361 = vmatprep.subr.bf16.mxu0 0
  %362 = vmatpush1.bf16.msra.mxu0 0
  %363 = vmatprep.subr.bf16.mxu0 0
  %364 = vmatpush1.bf16.msra.mxu0 0
  %365 = vmatprep.subr.bf16.mxu0 0
  %366 = vmatpush1.bf16.msra.mxu0 0
  %367 = vmatprep.subr.bf16.mxu0 0
  %368 = vmatpush1.bf16.msra.mxu0 0
  %369 = vmatprep.subr.bf16.mxu0 0
  %370 = vmatpush1.bf16.msra.mxu0 0
  %371 = vmatprep.subr.bf16.mxu0 0
  %372 = vmatpush1.bf16.msra.mxu0 0
  %373 = vmatprep.mubr.bf16.mxu0 0
  %374 = vmatmul.mubr.bf16.gmra.mrb[0].mxu0 %v158
  %v375 = vpop.f32.mrb[0].mxu0
  %v376 = vadd.f32 %v148, %v375
  %v377 = vpop.f32.mrb[0].mxu0
  %v378 = vpop.f32.mrb[0].mxu0
  %v379 = vadd.f32 %v148, %v378
  %v380 = vpop.f32.mrb[0].mxu0
  %381 = vmatprep.mubr.bf16.mxu0 0
  %382 = vmatmul.mubr.bf16.gmra.mrb[0].mxu0 %v159
  %v383 = vpop.f32.mrb[0].mxu0
  %v384 = vadd.f32 %v148, %v383
  %v385 = vpop.f32.mrb[0].mxu0
  %v386 = vpop.f32.mrb[0].mxu0
  %v387 = vpop.f32.mrb[0].mxu0
  %388 = vdwg.mxu0
  %v389 = vpack.c.bf16 %v329, %v325
  %v390 = vpack.c.bf16 %v331, %v327
  %v391 = vpack.c.bf16 %v379, %v376
  %v392 = vpack.c.bf16 %v335, %v335
  %v393 = vpack.c.bf16 %v337, %v337
  %v394 = vpack.c.bf16 %v384, %v384
  %v401 = vunpack.c.l.b16 %v389
  %v402 = vunpack.c.l.b16 %v390
  %v403 = vunpack.c.l.b16 %v391
  %v404 = vunpack.c.h.b16 %v389
  %v405 = vunpack.c.h.b16 %v390
  %v406 = vunpack.c.h.b16 %v391
  %v407 = vunpack.c.l.b16 %v392
  %v408 = vunpack.c.l.b16 %v393
  %v409 = vunpack.c.l.b16 %v394
  %v410 = vpack.c.b16 %v402, %v401
  %v411 = vpack.c.b16 %v403, %v403
  %v412 = vpack.c.b16 %v405, %v404
  %v413 = vpack.c.b16 %v406, %v406
  %v414 = vpack.c.b16 %v408, %v407
  %v415 = vpack.c.b16 %v409, %v409
  %422 = vst [vmem:[%s5] sm:$0xff] %v410
  %423 = vst [vmem:[%s5 + $0x8] sm:$0xf] %v411
  %424 = vst [vmem:[%s5 + $0xc] sm:$0xff] %v412
  %425 = vst [vmem:[%s5 + $0x14] sm:$0xf] %v413
  %426 = vst [vmem:[%s5 + $0x18] sm:$0xff] %v414
  %427 = vst [vmem:[%s5 + $0x20] sm:$0xf] %v415
  // Predicated region
  $region26: #{ccot_forward.18} parent=0 // pred_check
    _
  $region27: #{ccot_forward.18} parent=0 // pred_check_branch
    %429 = sbr.rel (0) target = $region29
  $region28: #{ccot_forward.18} parent=0 // pred_region
    _
  $region29: #{ccot_forward.18} parent=0 // pred_fallthru
    _
  // Predicated region
  $region30: #{ccot_forward.18} parent=0 // pred_check
    _
  $region31: #{ccot_forward.18} parent=0 // pred_check_branch
    %431 = sbr.rel (0) target = $region33
  $region32: #{ccot_forward.18} parent=0 // pred_region
    _
  $region33: #{ccot_forward.18} parent=0 // pred_fallthru
    _

// kernel: ccot_forward.21
$region0: #{ccot_forward.21}
  #allocation0 [shape = 'u32[]', space=smem, size = 0x4, offset = 0x4, fixed_abs, tag = 'smem constant byte address 0x4 - core index']
  #allocation1 [shape = 'u32[144,128]{1,0:T(1,128)}', space=vmem, size = 0x12000, scoped, tag = 'internal scratch']
  #allocation2 [shape = 'bf16[24,128]{1,0:T(8,128)(2,1)}', space=vmem, size = 0x1800, scoped, tag = 'scratch operand']
  %s0 = inlined_call_operand.vmem [shape: bf16[24,128], index: 0, kind: input, shape index: {}]
  %s1 = inlined_call_operand.vmem [shape: f32[1,128], index: 1, kind: input, shape index: {}]
  %s2 = inlined_call_operand.vmem [shape: f32[1,128], index: 2, kind: input, shape index: {}]
  %s3 = inlined_call_operand.vmem [shape: bf16[128,512], index: 3, kind: input, shape index: {}]
  %s4 = inlined_call_operand.vmem [shape: f32[1,512], index: 4, kind: input, shape index: {}]
  %s5 = inlined_call_operand.vmem [shape: bf16[24,512], index: 5, kind: output, shape index: {}]
  %s6 = sld [smem:[#allocation0]]
  $region34: #{ccot_forward.21} parent=0
    _
  %s8 = ssub.s32 1, %s6
  %s9 = scalar_select 0, %s8, %s6
  // Predicated region
  $region2: #{ccot_forward.21} parent=0 // pred_check
    _
  $region3: #{ccot_forward.21} parent=0 // pred_check_branch
    %11 = sbr.rel (0) target = $region5
  $region4: #{ccot_forward.21} parent=0 // pred_region
    _
  $region5: #{ccot_forward.21} parent=0 // pred_fallthru
    _
  // Predicated region
  $region6: #{ccot_forward.21} parent=0 // pred_check
    _
  $region7: #{ccot_forward.21} parent=0 // pred_check_branch
    %13 = sbr.rel (0) target = $region9
  $region8: #{ccot_forward.21} parent=0 // pred_region
    _
  $region9: #{ccot_forward.21} parent=0 // pred_fallthru
    _
  // Predicated region
  $region10: #{ccot_forward.21} parent=0 // pred_check
    _
  $region11: #{ccot_forward.21} parent=0 // pred_check_branch
    %15 = sbr.rel (0) target = $region13
  $region12: #{ccot_forward.21} parent=0 // pred_region
    _
  $region13: #{ccot_forward.21} parent=0 // pred_fallthru
    _
  // Predicated region
  $region14: #{ccot_forward.21} parent=0 // pred_check
    _
  $region15: #{ccot_forward.21} parent=0 // pred_check_branch
    %17 = sbr.rel (0) target = $region17
  $region16: #{ccot_forward.21} parent=0 // pred_region
    _
  $region17: #{ccot_forward.21} parent=0 // pred_fallthru
    _
  // Predicated region
  $region18: #{ccot_forward.21} parent=0 // pred_check
    _
  $region19: #{ccot_forward.21} parent=0 // pred_check_branch
    %19 = sbr.rel (0) target = $region21
  $region20: #{ccot_forward.21} parent=0 // pred_region
    _
  $region21: #{ccot_forward.21} parent=0 // pred_fallthru
    _
  %p21 = scmp.eq.s32.totalorder 0, 0
  // Predicated region
  $region22: #{ccot_forward.21} parent=0 // pred_check
    %p22 = pneg %p21
  $region23: #{ccot_forward.21} parent=0 // pred_check_branch
    %24 = sbr.rel (%p22) target = $region25
  $region24: #{ccot_forward.21} parent=0 // pred_region
    %v25 = vld [vmem:[%s0] sm:$0xf]
    %v26 = vld [vmem:[%s0 + $0x4] sm:$0xf]
    %v27 = vld [vmem:[%s0 + $0x8] sm:$0xf]
    %v28 = vunpack.c.l.bf16 %v25
    %v29 = vunpack.c.l.bf16 %v26
    %v30 = vunpack.c.l.bf16 %v27
    %31 = vadd.xlane.f32.xlu0 %v28
    %v32 = vpop.xlane.xlu0 %31
    %33 = vadd.xlane.f32.xlu0 %v29
    %v34 = vpop.xlane.xlu0 %33
    %35 = vadd.xlane.f32.xlu0 %v30
    %v36 = vpop.xlane.xlu0 %35
    %v37 = vmul.f32 %v32, 0.0078125
    %v38 = vmul.f32 %v34, 0.0078125
    %v39 = vmul.f32 %v36, 0.0078125
    %v40 = vsub.f32 %v28, %v37
    %v41 = vsub.f32 %v29, %v38
    %v42 = vsub.f32 %v30, %v39
    %v43 = vmul.f32 %v40, %v40
    %v44 = vmul.f32 %v41, %v41
    %v45 = vmul.f32 %v42, %v42
    %46 = vadd.xlane.f32.xlu0 %v43
    %v47 = vpop.xlane.xlu0 %46
    %48 = vadd.xlane.f32.xlu0 %v44
    %v49 = vpop.xlane.xlu0 %48
    %50 = vadd.xlane.f32.xlu0 %v45
    %v51 = vpop.xlane.xlu0 %50
    %v52 = vmul.f32 %v47, 0.0078125
    %v53 = vmul.f32 %v49, 0.0078125
    %v54 = vmul.f32 %v51, 0.0078125
    %v55 = vadd.f32 %v52, 1e-05
    %v56 = vadd.f32 %v53, 1e-05
    %v57 = vadd.f32 %v54, 1e-05
    %v58 = vrsqrt.pop %v55
    %v59 = vrsqrt.pop %v56
    %v60 = vrsqrt.pop %v57
    %v61 = vmul.f32 %v40, %v58
    %v62 = vmul.f32 %v41, %v59
    %v63 = vmul.f32 %v42, %v60
    %v64 = vld [vmem:[%s1] sm:$0x1]
    %v66 = vlaneseq
    %v67 = vshrl.u32 %v66, 7
    %v68 = vsub.s32 0, %v67
    %v69 = vrot.slane %v64, %v68
    %v71 = vmul.f32 %v61, %v69
    %v72 = vmul.f32 %v62, %v69
    %v73 = vmul.f32 %v63, %v69
    %v74 = vld [vmem:[%s2] sm:$0x1]
    %v76 = vlaneseq
    %v77 = vshrl.u32 %v76, 7
    %v78 = vsub.s32 0, %v77
    %v79 = vrot.slane %v74, %v78
    %v81 = vadd.f32 %v71, %v79
    %v82 = vadd.f32 %v72, %v79
    %v83 = vadd.f32 %v73, %v79
    %v84 = vpack.c.bf16 %v82, %v81
    %v85 = vpack.c.bf16 %v83, %v83
    %v88 = vunpack.c.l.b16 %v84
    %v89 = vunpack.c.h.b16 %v84
    %v90 = vunpack.c.l.b16 %v85
    %v91 = vpack.c.b16 %v88, %v88
    %v92 = vpack.c.b16 %v89, %v89
    %v93 = vpack.c.b16 %v90, %v90
    %97 = vst [vmem:[#allocation2] sm:$0xf] %v91
    %98 = vst [vmem:[#allocation2 + $0x4] sm:$0xf] %v92
    %99 = vst [vmem:[#allocation2 + $0x8] sm:$0xf] %v93
  $region25: #{ccot_forward.21} parent=0 // pred_fallthru
    _
  %v100 = vld [vmem:[#allocation2] sm:$0xf]
  %v101 = vld [vmem:[#allocation2 + $0x4] sm:$0xf]
  %v102 = vld [vmem:[#allocation2 + $0x8] sm:$0xf]
  %v103 = vld [vmem:[%s3] sm:$0xff]
  %v104 = vld [vmem:[%s3 + $0x8] sm:$0xff]
  %v105 = vld [vmem:[%s3 + $0x10] sm:$0xff]
  %v106 = vld [vmem:[%s3 + $0x18] sm:$0xff]
  %v107 = vld [vmem:[%s3 + $0x20] sm:$0xff]
  %v108 = vld [vmem:[%s3 + $0x28] sm:$0xff]
  %v109 = vld [vmem:[%s3 + $0x30] sm:$0xff]
  %v110 = vld [vmem:[%s3 + $0x38] sm:$0xff]
  %v111 = vld [vmem:[%s3 + $0x40] sm:$0xff]
  %v112 = vld [vmem:[%s3 + $0x48] sm:$0xff]
  %v113 = vld [vmem:[%s3 + $0x50] sm:$0xff]
  %v114 = vld [vmem:[%s3 + $0x58] sm:$0xff]
  %v115 = vld [vmem:[%s3 + $0x60] sm:$0xff]
  %v116 = vld [vmem:[%s3 + $0x68] sm:$0xff]
  %v117 = vld [vmem:[%s3 + $0x70] sm:$0xff]
  %v118 = vld [vmem:[%s3 + $0x78] sm:$0xff]
  %v119 = vld [vmem:[%s3 + $0x80] sm:$0xff]
  %v120 = vld [vmem:[%s3 + $0x88] sm:$0xff]
  %v121 = vld [vmem:[%s3 + $0x90] sm:$0xff]
  %v122 = vld [vmem:[%s3 + $0x98] sm:$0xff]
  %v123 = vld [vmem:[%s3 + $0xa0] sm:$0xff]
  %v124 = vld [vmem:[%s3 + $0xa8] sm:$0xff]
  %v125 = vld [vmem:[%s3 + $0xb0] sm:$0xff]
  %v126 = vld [vmem:[%s3 + $0xb8] sm:$0xff]
  %v127 = vld [vmem:[%s3 + $0xc0] sm:$0xff]
  %v128 = vld [vmem:[%s3 + $0xc8] sm:$0xff]
  %v129 = vld [vmem:[%s3 + $0xd0] sm:$0xff]
  %v130 = vld [vmem:[%s3 + $0xd8] sm:$0xff]
  %v131 = vld [vmem:[%s3 + $0xe0] sm:$0xff]
  %v132 = vld [vmem:[%s3 + $0xe8] sm:$0xff]
  %v133 = vld [vmem:[%s3 + $0xf0] sm:$0xff]
  %v134 = vld [vmem:[%s3 + $0xf8] sm:$0xff]
  %v135 = vld [vmem:[%s4] sm:$0xf]
  %v137 = vlaneseq
  %v138 = vshrl.u32 %v137, 7
  %v139 = vsub.s32 0, %v138
  %v140 = vrot.slane %v135, %v139
  %v141 = vlaneseq
  %v142 = vshrl.u32 %v141, 7
  %v143 = vsub.s32 1, %v142
  %v144 = vrot.slane %v135, %v143
  %v145 = vlaneseq
  %v146 = vshrl.u32 %v145, 7
  %v147 = vsub.s32 2, %v146
  %v148 = vrot.slane %v135, %v147
  %v149 = vlaneseq
  %v150 = vshrl.u32 %v149, 7
  %v151 = vsub.s32 3, %v150
  %v152 = vrot.slane %v135, %v151
  %v160 = vunpack.c.l.b16 %v100
  %v161 = vunpack.c.l.b16 %v101
  %v162 = vunpack.c.l.b16 %v102
  %v163 = vpack.c.b16 %v161, %v160
  %v164 = vpack.c.b16 %v162, %v162
  %v199 = vunpack.c.l.b16 %v103
  %v200 = vunpack.c.h.b16 %v103
  %v201 = vunpack.c.l.b16 %v104
  %v202 = vunpack.c.h.b16 %v104
  %v203 = vunpack.c.l.b16 %v105
  %v204 = vunpack.c.h.b16 %v105
  %v205 = vunpack.c.l.b16 %v106
  %v206 = vunpack.c.h.b16 %v106
  %v207 = vunpack.c.l.b16 %v107
  %v208 = vunpack.c.h.b16 %v107
  %v209 = vunpack.c.l.b16 %v108
  %v210 = vunpack.c.h.b16 %v108
  %v211 = vunpack.c.l.b16 %v109
  %v212 = vunpack.c.h.b16 %v109
  %v213 = vunpack.c.l.b16 %v110
  %v214 = vunpack.c.h.b16 %v110
  %v215 = vunpack.c.l.b16 %v111
  %v216 = vunpack.c.h.b16 %v111
  %v217 = vunpack.c.l.b16 %v112
  %v218 = vunpack.c.h.b16 %v112
  %v219 = vunpack.c.l.b16 %v113
  %v220 = vunpack.c.h.b16 %v113
  %v221 = vunpack.c.l.b16 %v114
  %v222 = vunpack.c.h.b16 %v114
  %v223 = vunpack.c.l.b16 %v115
  %v224 = vunpack.c.h.b16 %v115
  %v225 = vunpack.c.l.b16 %v116
  %v226 = vunpack.c.h.b16 %v116
  %v227 = vunpack.c.l.b16 %v117
  %v228 = vunpack.c.h.b16 %v117
  %v229 = vunpack.c.l.b16 %v118
  %v230 = vunpack.c.h.b16 %v118
  %v231 = vunpack.c.l.b16 %v119
  %v232 = vunpack.c.h.b16 %v119
  %v233 = vunpack.c.l.b16 %v120
  %v234 = vunpack.c.h.b16 %v120
  %v235 = vunpack.c.l.b16 %v121
  %v236 = vunpack.c.h.b16 %v121
  %v237 = vunpack.c.l.b16 %v122
  %v238 = vunpack.c.h.b16 %v122
  %v239 = vunpack.c.l.b16 %v123
  %v240 = vunpack.c.h.b16 %v123
  %v241 = vunpack.c.l.b16 %v124
  %v242 = vunpack.c.h.b16 %v124
  %v243 = vunpack.c.l.b16 %v125
  %v244 = vunpack.c.h.b16 %v125
  %v245 = vunpack.c.l.b16 %v126
  %v246 = vunpack.c.h.b16 %v126
  %v247 = vunpack.c.l.b16 %v127
  %v248 = vunpack.c.h.b16 %v127
  %v249 = vunpack.c.l.b16 %v128
  %v250 = vunpack.c.h.b16 %v128
  %v251 = vunpack.c.l.b16 %v129
  %v252 = vunpack.c.h.b16 %v129
  %v253 = vunpack.c.l.b16 %v130
  %v254 = vunpack.c.h.b16 %v130
  %v255 = vunpack.c.l.b16 %v131
  %v256 = vunpack.c.h.b16 %v131
  %v257 = vunpack.c.l.b16 %v132
  %v258 = vunpack.c.h.b16 %v132
  %v259 = vunpack.c.l.b16 %v133
  %v260 = vunpack.c.h.b16 %v133
  %v261 = vunpack.c.l.b16 %v134
  %v262 = vunpack.c.h.b16 %v134
  %v263 = vpack.c.b16 %v203, %v199
  %v264 = vpack.c.b16 %v204, %v200
  %v265 = vpack.c.b16 %v205, %v201
  %v266 = vpack.c.b16 %v206, %v202
  %v267 = vpack.c.b16 %v211, %v207
  %v268 = vpack.c.b16 %v212, %v208
  %v269 = vpack.c.b16 %v213, %v209
  %v270 = vpack.c.b16 %v214, %v210
  %v271 = vpack.c.b16 %v219, %v215
  %v272 = vpack.c.b16 %v220, %v216
  %v273 = vpack.c.b16 %v221, %v217
  %v274 = vpack.c.b16 %v222, %v218
  %v275 = vpack.c.b16 %v227, %v223
  %v276 = vpack.c.b16 %v228, %v224
  %v277 = vpack.c.b16 %v229, %v225
  %v278 = vpack.c.b16 %v230, %v226
  %v279 = vpack.c.b16 %v235, %v231
  %v280 = vpack.c.b16 %v236, %v232
  %v281 = vpack.c.b16 %v237, %v233
  %v282 = vpack.c.b16 %v238, %v234
  %v283 = vpack.c.b16 %v243, %v239
  %v284 = vpack.c.b16 %v244, %v240
  %v285 = vpack.c.b16 %v245, %v241
  %v286 = vpack.c.b16 %v246, %v242
  %v287 = vpack.c.b16 %v251, %v247
  %v288 = vpack.c.b16 %v252, %v248
  %v289 = vpack.c.b16 %v253, %v249
  %v290 = vpack.c.b16 %v254, %v250
  %v291 = vpack.c.b16 %v259, %v255
  %v292 = vpack.c.b16 %v260, %v256
  %v293 = vpack.c.b16 %v261, %v257
  %v294 = vpack.c.b16 %v262, %v258
  %327 = vmatprep.subr.bf16.mxu0 %v264
  %328 = vmatpush1.bf16.msra.mxu0 %v263
  %329 = vmatprep.subr.bf16.mxu0 %v268
  %330 = vmatpush1.bf16.msra.mxu0 %v267
  %331 = vmatprep.subr.bf16.mxu0 %v272
  %332 = vmatpush1.bf16.msra.mxu0 %v271
  %333 = vmatprep.subr.bf16.mxu0 %v276
  %334 = vmatpush1.bf16.msra.mxu0 %v275
  %335 = vmatprep.subr.bf16.mxu0 %v280
  %336 = vmatpush1.bf16.msra.mxu0 %v279
  %337 = vmatprep.subr.bf16.mxu0 %v284
  %338 = vmatpush1.bf16.msra.mxu0 %v283
  %339 = vmatprep.subr.bf16.mxu0 %v288
  %340 = vmatpush1.bf16.msra.mxu0 %v287
  %341 = vmatprep.subr.bf16.mxu0 %v292
  %342 = vmatpush1.bf16.msra.mxu0 %v291
  %343 = vmatprep.subr.bf16.mxu0 0
  %344 = vmatpush1.bf16.msra.mxu0 0
  %345 = vmatprep.subr.bf16.mxu0 0
  %346 = vmatpush1.bf16.msra.mxu0 0
  %347 = vmatprep.subr.bf16.mxu0 0
  %348 = vmatpush1.bf16.msra.mxu0 0
  %349 = vmatprep.subr.bf16.mxu0 0
  %350 = vmatpush1.bf16.msra.mxu0 0
  %351 = vmatprep.subr.bf16.mxu0 0
  %352 = vmatpush1.bf16.msra.mxu0 0
  %353 = vmatprep.subr.bf16.mxu0 0
  %354 = vmatpush1.bf16.msra.mxu0 0
  %355 = vmatprep.subr.bf16.mxu0 0
  %356 = vmatpush1.bf16.msra.mxu0 0
  %357 = vmatprep.subr.bf16.mxu0 0
  %358 = vmatpush1.bf16.msra.mxu0 0
  %359 = vmatprep.mubr.bf16.mxu0 0
  %360 = vmatmul.mubr.bf16.gmra.mrb[0].mxu0 %v163
  %v361 = vpop.f32.mrb[0].mxu0
  %v362 = vadd.f32 %v140, %v361
  %v363 = vpop.f32.mrb[0].mxu0
  %v364 = vadd.f32 %v144, %v363
  %v365 = vpop.f32.mrb[0].mxu0
  %v366 = vadd.f32 %v140, %v365
  %v367 = vpop.f32.mrb[0].mxu0
  %v368 = vadd.f32 %v144, %v367
  %369 = vmatprep.mubr.bf16.mxu0 0
  %370 = vmatmul.mubr.bf16.gmra.mrb[0].mxu0 %v164
  %v371 = vpop.f32.mrb[0].mxu0
  %v372 = vadd.f32 %v140, %v371
  %v373 = vpop.f32.mrb[0].mxu0
  %v374 = vadd.f32 %v144, %v373
  %v375 = vpop.f32.mrb[0].mxu0
  %v376 = vpop.f32.mrb[0].mxu0
  %377 = vdwg.mxu0
  %378 = vmatprep.subr.bf16.mxu0 %v266
  %379 = vmatpush1.bf16.msra.mxu0 %v265
  %380 = vmatprep.subr.bf16.mxu0 %v270
  %381 = vmatpush1.bf16.msra.mxu0 %v269
  %382 = vmatprep.subr.bf16.mxu0 %v274
  %383 = vmatpush1.bf16.msra.mxu0 %v273
  %384 = vmatprep.subr.bf16.mxu0 %v278
  %385 = vmatpush1.bf16.msra.mxu0 %v277
  %386 = vmatprep.subr.bf16.mxu0 %v282
  %387 = vmatpush1.bf16.msra.mxu0 %v281
  %388 = vmatprep.subr.bf16.mxu0 %v286
  %389 = vmatpush1.bf16.msra.mxu0 %v285
  %390 = vmatprep.subr.bf16.mxu0 %v290
  %391 = vmatpush1.bf16.msra.mxu0 %v289
  %392 = vmatprep.subr.bf16.mxu0 %v294
  %393 = vmatpush1.bf16.msra.mxu0 %v293
  %394 = vmatprep.subr.bf16.mxu0 0
  %395 = vmatpush1.bf16.msra.mxu0 0
  %396 = vmatprep.subr.bf16.mxu0 0
  %397 = vmatpush1.bf16.msra.mxu0 0
  %398 = vmatprep.subr.bf16.mxu0 0
  %399 = vmatpush1.bf16.msra.mxu0 0
  %400 = vmatprep.subr.bf16.mxu0 0
  %401 = vmatpush1.bf16.msra.mxu0 0
  %402 = vmatprep.subr.bf16.mxu0 0
  %403 = vmatpush1.bf16.msra.mxu0 0
  %404 = vmatprep.subr.bf16.mxu0 0
  %405 = vmatpush1.bf16.msra.mxu0 0
  %406 = vmatprep.subr.bf16.mxu0 0
  %407 = vmatpush1.bf16.msra.mxu0 0
  %408 = vmatprep.subr.bf16.mxu0 0
  %409 = vmatpush1.bf16.msra.mxu0 0
  %410 = vmatprep.mubr.bf16.mxu0 0
  %411 = vmatmul.mubr.bf16.gmra.mrb[0].mxu0 %v163
  %v412 = vpop.f32.mrb[0].mxu0
  %v413 = vadd.f32 %v148, %v412
  %v414 = vpop.f32.mrb[0].mxu0
  %v415 = vadd.f32 %v152, %v414
  %v416 = vpop.f32.mrb[0].mxu0
  %v417 = vadd.f32 %v148, %v416
  %v418 = vpop.f32.mrb[0].mxu0
  %v419 = vadd.f32 %v152, %v418
  %420 = vmatprep.mubr.bf16.mxu0 0
  %421 = vmatmul.mubr.bf16.gmra.mrb[0].mxu0 %v164
  %v422 = vpop.f32.mrb[0].mxu0
  %v423 = vadd.f32 %v148, %v422
  %v424 = vpop.f32.mrb[0].mxu0
  %v425 = vadd.f32 %v152, %v424
  %v426 = vpop.f32.mrb[0].mxu0
  %v427 = vpop.f32.mrb[0].mxu0
  %428 = vdwg.mxu0
  %v429 = vmul.f32 %v362, %v362
  %v430 = vmul.f32 %v364, %v364
  %v431 = vmul.f32 %v413, %v413
  %v432 = vmul.f32 %v415, %v415
  %v433 = vmul.f32 %v366, %v366
  %v434 = vmul.f32 %v368, %v368
  %v435 = vmul.f32 %v417, %v417
  %v436 = vmul.f32 %v419, %v419
  %v437 = vmul.f32 %v372, %v372
  %v438 = vmul.f32 %v374, %v374
  %v439 = vmul.f32 %v423, %v423
  %v440 = vmul.f32 %v425, %v425
  %v441 = vmul.f32 %v362, %v429
  %v442 = vmul.f32 %v364, %v430
  %v443 = vmul.f32 %v413, %v431
  %v444 = vmul.f32 %v415, %v432
  %v445 = vmul.f32 %v366, %v433
  %v446 = vmul.f32 %v368, %v434
  %v447 = vmul.f32 %v417, %v435
  %v448 = vmul.f32 %v419, %v436
  %v449 = vmul.f32 %v372, %v437
  %v450 = vmul.f32 %v374, %v438
  %v451 = vmul.f32 %v423, %v439
  %v452 = vmul.f32 %v425, %v440
  %v453 = vmul.f32 %v441, 0.044715
  %v454 = vmul.f32 %v442, 0.044715
  %v455 = vmul.f32 %v443, 0.044715
  %v456 = vmul.f32 %v444, 0.044715
  %v457 = vmul.f32 %v445, 0.044715
  %v458 = vmul.f32 %v446, 0.044715
  %v459 = vmul.f32 %v447, 0.044715
  %v460 = vmul.f32 %v448, 0.044715
  %v461 = vmul.f32 %v449, 0.044715
  %v462 = vmul.f32 %v450, 0.044715
  %v463 = vmul.f32 %v451, 0.044715
  %v464 = vmul.f32 %v452, 0.044715
  %v465 = vadd.f32 %v362, %v453
  %v466 = vadd.f32 %v364, %v454
  %v467 = vadd.f32 %v413, %v455
  %v468 = vadd.f32 %v415, %v456
  %v469 = vadd.f32 %v366, %v457
  %v470 = vadd.f32 %v368, %v458
  %v471 = vadd.f32 %v417, %v459
  %v472 = vadd.f32 %v419, %v460
  %v473 = vadd.f32 %v372, %v461
  %v474 = vadd.f32 %v374, %v462
  %v475 = vadd.f32 %v423, %v463
  %v476 = vadd.f32 %v425, %v464
  %v477 = vmul.f32 %v465, 0.7978846
  %v478 = vmul.f32 %v466, 0.7978846
  %v479 = vmul.f32 %v467, 0.7978846
  %v480 = vmul.f32 %v468, 0.7978846
  %v481 = vmul.f32 %v469, 0.7978846
  %v482 = vmul.f32 %v470, 0.7978846
  %v483 = vmul.f32 %v471, 0.7978846
  %v484 = vmul.f32 %v472, 0.7978846
  %v485 = vmul.f32 %v473, 0.7978846
  %v486 = vmul.f32 %v474, 0.7978846
  %v487 = vmul.f32 %v475, 0.7978846
  %v488 = vmul.f32 %v476, 0.7978846
  %v489 = vtanh.pop %v477
  %v490 = vtanh.pop %v478
  %v491 = vtanh.pop %v479
  %v492 = vtanh.pop %v480
  %v493 = vtanh.pop %v481
  %v494 = vtanh.pop %v482
  %v495 = vtanh.pop %v483
  %v496 = vtanh.pop %v484
  %v497 = vtanh.pop %v485
  %v498 = vtanh.pop %v486
  %v499 = vtanh.pop %v487
  %v500 = vtanh.pop %v488
  %v501 = vadd.f32 %v489, 1.0
  %v502 = vadd.f32 %v490, 1.0
  %v503 = vadd.f32 %v491, 1.0
  %v504 = vadd.f32 %v492, 1.0
  %v505 = vadd.f32 %v493, 1.0
  %v506 = vadd.f32 %v494, 1.0
  %v507 = vadd.f32 %v495, 1.0
  %v508 = vadd.f32 %v496, 1.0
  %v509 = vadd.f32 %v497, 1.0
  %v510 = vadd.f32 %v498, 1.0
  %v511 = vadd.f32 %v499, 1.0
  %v512 = vadd.f32 %v500, 1.0
  %v513 = vmul.f32 %v501, 0.5
  %v514 = vmul.f32 %v502, 0.5
  %v515 = vmul.f32 %v503, 0.5
  %v516 = vmul.f32 %v504, 0.5
  %v517 = vmul.f32 %v505, 0.5
  %v518 = vmul.f32 %v506, 0.5
  %v519 = vmul.f32 %v507, 0.5
  %v520 = vmul.f32 %v508, 0.5
  %v521 = vmul.f32 %v509, 0.5
  %v522 = vmul.f32 %v510, 0.5
  %v523 = vmul.f32 %v511, 0.5
  %v524 = vmul.f32 %v512, 0.5
  %v525 = vmul.f32 %v362, %v513
  %v526 = vmul.f32 %v364, %v514
  %v527 = vmul.f32 %v413, %v515
  %v528 = vmul.f32 %v415, %v516
  %v529 = vmul.f32 %v366, %v517
  %v530 = vmul.f32 %v368, %v518
  %v531 = vmul.f32 %v417, %v519
  %v532 = vmul.f32 %v419, %v520
  %v533 = vmul.f32 %v372, %v521
  %v534 = vmul.f32 %v374, %v522
  %v535 = vmul.f32 %v423, %v523
  %v536 = vmul.f32 %v425, %v524
  %v537 = vpack.c.bf16 %v529, %v525
  %v538 = vpack.c.bf16 %v530, %v526
  %v539 = vpack.c.bf16 %v531, %v527
  %v540 = vpack.c.bf16 %v532, %v528
  %v541 = vpack.c.bf16 %v533, %v533
  %v542 = vpack.c.bf16 %v534, %v534
  %v543 = vpack.c.bf16 %v535, %v535
  %v544 = vpack.c.bf16 %v536, %v536
  %v553 = vunpack.c.l.b16 %v537
  %v554 = vunpack.c.l.b16 %v538
  %v555 = vunpack.c.l.b16 %v539
  %v556 = vunpack.c.l.b16 %v540
  %v557 = vunpack.c.h.b16 %v537
  %v558 = vunpack.c.h.b16 %v538
  %v559 = vunpack.c.h.b16 %v539
  %v560 = vunpack.c.h.b16 %v540
  %v561 = vunpack.c.l.b16 %v541
  %v562 = vunpack.c.l.b16 %v542
  %v563 = vunpack.c.l.b16 %v543
  %v564 = vunpack.c.l.b16 %v544
  %v565 = vpack.c.b16 %v554, %v553
  %v566 = vpack.c.b16 %v556, %v555
  %v567 = vpack.c.b16 %v558, %v557
  %v568 = vpack.c.b16 %v560, %v559
  %v569 = vpack.c.b16 %v562, %v561
  %v570 = vpack.c.b16 %v564, %v563
  %577 = vst [vmem:[%s5] sm:$0xff] %v565
  %578 = vst [vmem:[%s5 + $0x8] sm:$0xff] %v566
  %579 = vst [vmem:[%s5 + $0x10] sm:$0xff] %v567
  %580 = vst [vmem:[%s5 + $0x18] sm:$0xff] %v568
  %581 = vst [vmem:[%s5 + $0x20] sm:$0xff] %v569
  %582 = vst [vmem:[%s5 + $0x28] sm:$0xff] %v570
  // Predicated region
  $region26: #{ccot_forward.21} parent=0 // pred_check
    _
  $region27: #{ccot_forward.21} parent=0 // pred_check_branch
    %584 = sbr.rel (0) target = $region29
  $region28: #{ccot_forward.21} parent=0 // pred_region
    _
  $region29: #{ccot_forward.21} parent=0 // pred_fallthru
    _
  // Predicated region
  $region30: #{ccot_forward.21} parent=0 // pred_check
    _
  $region31: #{ccot_forward.21} parent=0 // pred_check_branch
    %586 = sbr.rel (0) target = $region33
  $region32: #{ccot_forward.21} parent=0 // pred_region
    _
  $region33: #{ccot_forward.21} parent=0 // pred_fallthru
    _

// kernel: ccot_forward.19
$region0: #{ccot_forward.19}
  #allocation0 [shape = 'u32[]', space=smem, size = 0x4, offset = 0x4, fixed_abs, tag = 'smem constant byte address 0x4 - core index']
  #allocation1 [shape = 'u32[144,128]{1,0:T(1,128)}', space=vmem, size = 0x12000, scoped, tag = 'internal scratch']
  #allocation2 [shape = 'bf16[12,128]{1,0:T(8,128)(2,1)}', space=vmem, size = 0x1000, scoped, tag = 'scratch operand']
  %s0 = inlined_call_operand.vmem [shape: bf16[2,12,384], index: 0, kind: input, shape index: {}]
  %s1 = inlined_call_operand.vmem [shape: f32[12,32], index: 1, kind: input, shape index: {}]
  %s2 = inlined_call_operand.vmem [shape: f32[12,32], index: 2, kind: input, shape index: {}]
  %s3 = inlined_call_operand.vmem [shape: bf16[2,12,128], index: 3, kind: output, shape index: {}]
  %s4 = sld [smem:[#allocation0]]
  $region45: #{ccot_forward.19} parent=0
    _
  %s6 = ssub.s32 1, %s4
  %s7 = scalar_select 0, %s6, %s4
  loop: start=0, step=1, limit=4
  $region2: #{ccot_forward.19} parent=0 // loop_pre_header
    _
  $region3: #{ccot_forward.19} parent=0 // loop_header
    %s9 = sphi 0, %s13
    %p10 = scmp.ge.s32.totalorder %s9, 4
    %s19 = sphi 0, %s21
    %s22 = sphi 0, %s19
    %s23 = sphi 0, %s22
    %s39 = sphi 0, %s23
    %s43 = sphi 0, %s43
    %s45 = sphi 0, %s43
    %s46 = sphi 0, %s45
    %s60 = sphi 0, %s46
    %s64 = sphi 0, %s64
    %s66 = sphi 0, %s64
    %s67 = sphi 0, %s66
    %s81 = sphi 0, %s67
    %s87 = sphi 0, %s89
    %s90 = sphi 0, %s87
    %s91 = sphi 0, %s90
    %s107 = sphi 0, %s91
  $region4: #{ccot_forward.19} parent=0 // loop_header_branch
    %12 = sbr.rel (%p10) target = $region8
  $region5: #{ccot_forward.19} parent=0 // loop_body
    %s14 = ssub.s32 %s9, 1
    %s15 = ssub.s32 %s9, 2
    %s16 = sadd.s32 %s9, 1
    %s17 = ssub.s32 %s9, %s16
    %p18 = scmp.eq.s32.totalorder %s17, 0
    %s20 = sadd.s32 %s19, 1
    %s21 = scalar_select %p18, %s19, %s20
    %p24 = pneg %p18
    %p25 = scmp.eq.s32.totalorder %s9, 1
    %p26 = por %p24, %p25
    %p27 = scmp.ne.s32.totalorder %s19, %s22
    %p28 = scmp.eq.s32.totalorder %s9, 0
    %p29 = por %p27, %p28
    %p30 = scmp.ne.s32.totalorder %s19, %s22
    %p31 = scmp.eq.s32.totalorder %s14, 1
    %p32 = por %p30, %p31
    %p33 = scmp.ne.s32.totalorder %s22, %s23
    %p34 = scmp.eq.s32.totalorder %s14, 0
    %p35 = por %p33, %p34
    %p36 = scmp.ne.s32.totalorder %s22, %s23
    %p37 = scmp.eq.s32.totalorder %s15, 1
    %p38 = por %p36, %p37
    %p40 = scmp.ne.s32.totalorder %s23, %s39
    %p41 = scmp.eq.s32.totalorder %s15, 0
    %p42 = por %p40, %p41
    %s44 = sadd.s32 %s43, 1
    %p47 = scmp.eq.s32.totalorder %s9, 1
    %p48 = scmp.ne.s32.totalorder %s43, %s45
    %p49 = scmp.eq.s32.totalorder %s9, 0
    %p50 = por %p48, %p49
    %p51 = scmp.ne.s32.totalorder %s43, %s45
    %p52 = scmp.eq.s32.totalorder %s14, 1
    %p53 = por %p51, %p52
    %p54 = scmp.ne.s32.totalorder %s45, %s46
    %p55 = scmp.eq.s32.totalorder %s14, 0
    %p56 = por %p54, %p55
    %p57 = scmp.ne.s32.totalorder %s45, %s46
    %p58 = scmp.eq.s32.totalorder %s15, 1
    %p59 = por %p57, %p58
    %p61 = scmp.ne.s32.totalorder %s46, %s60
    %p62 = scmp.eq.s32.totalorder %s15, 0
    %p63 = por %p61, %p62
    %s65 = sadd.s32 %s64, 1
    %p68 = scmp.eq.s32.totalorder %s9, 1
    %p69 = scmp.ne.s32.totalorder %s64, %s66
    %p70 = scmp.eq.s32.totalorder %s9, 0
    %p71 = por %p69, %p70
    %p72 = scmp.ne.s32.totalorder %s64, %s66
    %p73 = scmp.eq.s32.totalorder %s14, 1
    %p74 = por %p72, %p73
    %p75 = scmp.ne.s32.totalorder %s66, %s67
    %p76 = scmp.eq.s32.totalorder %s14, 0
    %p77 = por %p75, %p76
    %p78 = scmp.ne.s32.totalorder %s66, %s67
    %p79 = scmp.eq.s32.totalorder %s15, 1
    %p80 = por %p78, %p79
    %p82 = scmp.ne.s32.totalorder %s67, %s81
    %p83 = scmp.eq.s32.totalorder %s15, 0
    %p84 = por %p82, %p83
    %s85 = ssub.s32 %s9, %s16
    %p86 = scmp.eq.s32.totalorder %s85, 0
    %s88 = sadd.s32 %s87, 1
    %s89 = scalar_select %p86, %s87, %s88
    %p92 = pneg %p86
    %p93 = scmp.eq.s32.totalorder %s9, 1
    %p94 = por %p92, %p93
    %p95 = scmp.ne.s32.totalorder %s87, %s90
    %p96 = scmp.eq.s32.totalorder %s9, 0
    %p97 = por %p95, %p96
    %p98 = scmp.ne.s32.totalorder %s87, %s90
    %p99 = scmp.eq.s32.totalorder %s14, 1
    %p100 = por %p98, %p99
    %p101 = scmp.ne.s32.totalorder %s90, %s91
    %p102 = scmp.eq.s32.totalorder %s14, 0
    %p103 = por %p101, %p102
    %p104 = scmp.ne.s32.totalorder %s90, %s91
    %p105 = scmp.eq.s32.totalorder %s15, 1
    %p106 = por %p104, %p105
    %p108 = scmp.ne.s32.totalorder %s91, %s107
    %p109 = scmp.eq.s32.totalorder %s15, 0
    %p110 = por %p108, %p109
    %p111 = scmp.le.s32.totalorder 1, %s9
    %p112 = scmp.lt.s32.totalorder %s9, 3
    %p113 = pnand %p111, %p112
    %p114 = pneg %p113
    // Predicated region
    $region9: #{ccot_forward.19} parent=5 // pred_check
      _
    $region10: #{ccot_forward.19} parent=5 // pred_check_branch
      %116 = sbr.rel (%p113) target = $region12
    $region11: #{ccot_forward.19} parent=5 // pred_region
      %s117 = ssub.s32 %s9, 1
      // Predicated region
      $region13: #{ccot_forward.19} parent=11 // pred_check
        %p118 = pneg %p56
      $region14: #{ccot_forward.19} parent=11 // pred_check_branch
        %120 = sbr.rel (%p118) target = $region16
      $region15: #{ccot_forward.19} parent=11 // pred_region
        _
      $region16: #{ccot_forward.19} parent=11 // pred_fallthru
        _
      // Predicated region
      $region17: #{ccot_forward.19} parent=11 // pred_check
        %p121 = pneg %p77
      $region18: #{ccot_forward.19} parent=11 // pred_check_branch
        %123 = sbr.rel (%p121) target = $region20
      $region19: #{ccot_forward.19} parent=11 // pred_region
        _
      $region20: #{ccot_forward.19} parent=11 // pred_fallthru
        _
    $region12: #{ccot_forward.19} parent=5 // pred_fallthru
      _
    %p124 = scmp.lt.s32.totalorder %s9, 2
    // Predicated region
    $region21: #{ccot_forward.19} parent=5 // pred_check
      %p125 = pneg %p124
    $region22: #{ccot_forward.19} parent=5 // pred_check_branch
      %127 = sbr.rel (%p125) target = $region24
    $region23: #{ccot_forward.19} parent=5 // pred_region
      // Predicated region
      $region25: #{ccot_forward.19} parent=23 // pred_check
        %p128 = pneg %p29
      $region26: #{ccot_forward.19} parent=23 // pred_check_branch
        %130 = sbr.rel (%p128) target = $region28
      $region27: #{ccot_forward.19} parent=23 // pred_region
        %p131 = scmp.lt.s32.totalorder %s9, 1
        %s132 = scalar_select %p131, %s9, 1
        %s133 = smul.addr %s132, 6
        %s134 = smul.addr %s133, 4
        %s135 = scalar_lea.vmem %s0, %s134
      $region28: #{ccot_forward.19} parent=23 // pred_fallthru
        _
    $region24: #{ccot_forward.19} parent=5 // pred_fallthru
      _
    %p136 = scmp.le.s32.totalorder 1, %s9
    %p137 = scmp.lt.s32.totalorder %s9, 3
    %p138 = pnand %p136, %p137
    %p139 = pneg %p138
    // Predicated region
    $region29: #{ccot_forward.19} parent=5 // pred_check
      _
    $region30: #{ccot_forward.19} parent=5 // pred_check_branch
      %141 = sbr.rel (%p138) target = $region32
    $region31: #{ccot_forward.19} parent=5 // pred_region
      %s142 = ssub.s32 %s9, 1
      %p143 = scmp.lt.s32.totalorder %s14, 1
      %s144 = scalar_select %p143, %s14, 1
      %s145 = smul.addr %s144, 6
      %s146 = smul.addr %s145, 4
      %s147 = scalar_lea.vmem %s0, %s146
      %p148 = pneg %p35
      %p149 = pneg %p32
      %p150 = pneg %p56
      %p151 = pneg %p53
      %p152 = pneg %p77
      %p153 = pneg %p74
      %p154 = pneg %p103
      %p155 = pneg %p100
      %p156 = scmp.lt.s32.totalorder %s14, 1
      %s157 = scalar_select %p156, %s14, 1
      %s158 = smul.addr %s157, 2
      %s159 = smul.addr %s158, 4
      %s160 = scalar_lea.vmem %s3, %s159
      %p161 = scmp.lt.s32.totalorder %s14, 1
      %s162 = scalar_select %p161, %s14, 1
      %s163 = smul.addr %s162, 6
      %s164 = smul.addr %s163, 4
      %s165 = scalar_lea.vmem %s0, %s164
      %p166 = scmp.lt.s32.totalorder %s14, 1
      %s167 = scalar_select %p166, %s14, 1
      %s168 = smul.addr %s167, 2
      %s169 = smul.addr %s168, 4
      %s170 = scalar_lea.vmem %s3, %s169
      %v172 = vld [vmem:[%s165] sm:$0xff]
      %v173 = vld [vmem:[%s165 + $0x8] sm:$0xf]
      %v174 = vld [vmem:[%s165 + $0xc] sm:$0x33]
      %v175 = vld [vmem:[%s165 + $0x14] sm:$0x3]
      %v176 = vld [vmem:[%s1] sm:$0xff]
      %v177 = vld [vmem:[%s1 + $0x8] sm:$0xf]
      %v178 = vld [vmem:[%s2] sm:$0xff]
      %v179 = vld [vmem:[%s2 + $0x8] sm:$0xf]
      %v180 = vunpack.c.l.bf16 %v172
      %v181 = vunpack.c.l.bf16 %v174
      %v184 = vrot.slane %v172, 4
      %v185 = vrot.slane %v174, 4
      %v188 = vunpack.c.l.bf16 %v184
      %v189 = vunpack.c.l.bf16 %v185
      %v190 = vmul.f32 %v180, %v176
      %v191 = vmul.f32 %v181, %v177
      %194 = vrot.lane.b32.xlu0 %v180, 112
      %v195 = vpop.permute.xlu0 %194
      %196 = vrot.lane.b32.xlu0 %v181, 112
      %v197 = vpop.permute.xlu0 %196
      %200 = vrot.lane.b32.xlu0 %v180, 16
      %v201 = vpop.permute.xlu0 %200
      %202 = vrot.lane.b32.xlu0 %v181, 16
      %v203 = vpop.permute.xlu0 %202
      %vm206 = vcmask 130048
      %v207 = vsel %vm206, %v195, %v201
      %v208 = vsel %vm206, %v197, %v203
      %v209 = vmul.f32 %v207, %v178
      %v210 = vmul.f32 %v208, %v179
      %v211 = vadd.f32 %v190, %v209
      %v212 = vadd.f32 %v191, %v210
      %v213 = vmul.f32 %v188, %v176
      %v214 = vmul.f32 %v189, %v177
      %217 = vrot.lane.b32.xlu0 %v188, 112
      %v218 = vpop.permute.xlu0 %217
      %219 = vrot.lane.b32.xlu0 %v189, 112
      %v220 = vpop.permute.xlu0 %219
      %223 = vrot.lane.b32.xlu0 %v188, 16
      %v224 = vpop.permute.xlu0 %223
      %225 = vrot.lane.b32.xlu0 %v189, 16
      %v226 = vpop.permute.xlu0 %225
      %v229 = vsel %vm206, %v218, %v224
      %v230 = vsel %vm206, %v220, %v226
      %v231 = vmul.f32 %v229, %v178
      %v232 = vmul.f32 %v230, %v179
      %v233 = vadd.f32 %v213, %v231
      %v234 = vadd.f32 %v214, %v232
      %v235 = vpack.c.bf16 %v212, %v211
      %v236 = vpack.c.bf16 %v234, %v233
      %vm237 = vcmask 261120
      %v239 = vsel %vm237, %v235, 0
      %v242 = vsel %vm237, %v236, 0
      %244 = vmatprep.subr.bf16.mxu0 0
      %245 = vmatpush1.bf16.xpose.msra.mxu0 %v242
      %246 = vmatprep.subr.bf16.mxu0 0
      %247 = vmatpush1.bf16.xpose.msra.mxu0 0
      %248 = vmatprep.subr.bf16.mxu0 0
      %249 = vmatpush1.bf16.xpose.msra.mxu0 0
      %250 = vmatprep.subr.bf16.mxu0 0
      %251 = vmatpush1.bf16.xpose.msra.mxu0 0
      %252 = vmatprep.subr.bf16.mxu0 0
      %253 = vmatpush1.bf16.xpose.msra.mxu0 0
      %254 = vmatprep.subr.bf16.mxu0 0
      %255 = vmatpush1.bf16.xpose.msra.mxu0 0
      %256 = vmatprep.subr.bf16.mxu0 0
      %257 = vmatpush1.bf16.xpose.msra.mxu0 0
      %258 = vmatprep.subr.bf16.mxu0 0
      %259 = vmatpush1.bf16.xpose.msra.mxu0 0
      %260 = vmatprep.subr.bf16.mxu0 0
      %261 = vmatpush1.bf16.xpose.msra.mxu0 0
      %262 = vmatprep.subr.bf16.mxu0 0
      %263 = vmatpush1.bf16.xpose.msra.mxu0 0
      %264 = vmatprep.subr.bf16.mxu0 0
      %265 = vmatpush1.bf16.xpose.msra.mxu0 0
      %266 = vmatprep.subr.bf16.mxu0 0
      %267 = vmatpush1.bf16.xpose.msra.mxu0 0
      %268 = vmatprep.subr.bf16.mxu0 0
      %269 = vmatpush1.bf16.xpose.msra.mxu0 0
      %270 = vmatprep.subr.bf16.mxu0 0
      %271 = vmatpush1.bf16.xpose.msra.mxu0 0
      %272 = vmatprep.subr.bf16.mxu0 0
      %273 = vmatpush1.bf16.xpose.msra.mxu0 0
      %274 = vmatprep.subr.bf16.mxu0 0
      %275 = vmatpush1.bf16.xpose.msra.mxu0 0
      %276 = vmatprep.mubr.bf16.mxu0 0
      %277 = vmatmul.mubr.bf16.gmra.mrb[0].mxu0 %v239
      %v278 = vpop.f32.mrb[0].mxu0
      %v279 = vadd.f32 0.0, %v278
      %v280 = vpop.f32.mrb[0].mxu0
      %v281 = vpop.f32.mrb[0].mxu0
      %v282 = vadd.f32 0.0, %v281
      %v283 = vpop.f32.mrb[0].mxu0
      %284 = vdwg.mxu0
      %v285 = vmul.f32 %v279, 0.17677669
      %v286 = vmul.f32 %v282, 0.17677669
      %vm287 = vcmask 97280
      %v288 = vsel %vm287, %v285, -inf
      %289 = vmax.xlane.f32.xlu0 %v288
      %v290 = vpop.xlane.xlu0 %289
      %vm291 = vcmask 93184
      %v292 = vsel %vm291, %v286, -inf
      %293 = vmax.xlane.f32.xlu0 %v292
      %v294 = vpop.xlane.xlu0 %293
      %v295 = vsub.f32 %v285, %v290
      %v296 = vsub.f32 %v286, %v294
      %v297 = vmul.f32 %v295, 1.442695
      %v298 = vpow.pop %v297
      %v299 = vmul.f32 %v296, 1.442695
      %v300 = vpow.pop %v299
      %v301 = vsel %vm287, %v298, 0.0
      %302 = vadd.xlane.f32.xlu0 %v301
      %v303 = vpop.xlane.xlu0 %302
      %v304 = vsel %vm291, %v300, 0.0
      %305 = vadd.xlane.f32.xlu0 %v304
      %v306 = vpop.xlane.xlu0 %305
      %v307 = vpack.c.bf16 %v300, %v298
      %v310 = vunpack.c.l.b16 %v173
      %v311 = vunpack.c.l.b16 %v175
      %v312 = vpack.c.b16 %v311, %v310
      %v314 = vsel %vm287, %v307, 0
      %vm316 = vcmask 1045504
      %v318 = vsel %vm316, %v312, 0
      %320 = vmatprep.subr.bf16.mxu0 0
      %321 = vmatpush1.bf16.msra.mxu0 %v318
      %322 = vmatprep.subr.bf16.mxu0 0
      %323 = vmatpush1.bf16.msra.mxu0 0
      %324 = vmatprep.subr.bf16.mxu0 0
      %325 = vmatpush1.bf16.msra.mxu0 0
      %326 = vmatprep.subr.bf16.mxu0 0
      %327 = vmatpush1.bf16.msra.mxu0 0
      %328 = vmatprep.subr.bf16.mxu0 0
      %329 = vmatpush1.bf16.msra.mxu0 0
      %330 = vmatprep.subr.bf16.mxu0 0
      %331 = vmatpush1.bf16.msra.mxu0 0
      %332 = vmatprep.subr.bf16.mxu0 0
      %333 = vmatpush1.bf16.msra.mxu0 0
      %334 = vmatprep.subr.bf16.mxu0 0
      %335 = vmatpush1.bf16.msra.mxu0 0
      %336 = vmatprep.subr.bf16.mxu0 0
      %337 = vmatpush1.bf16.msra.mxu0 0
      %338 = vmatprep.subr.bf16.mxu0 0
      %339 = vmatpush1.bf16.msra.mxu0 0
      %340 = vmatprep.subr.bf16.mxu0 0
      %341 = vmatpush1.bf16.msra.mxu0 0
      %342 = vmatprep.subr.bf16.mxu0 0
      %343 = vmatpush1.bf16.msra.mxu0 0
      %344 = vmatprep.subr.bf16.mxu0 0
      %345 = vmatpush1.bf16.msra.mxu0 0
      %346 = vmatprep.subr.bf16.mxu0 0
      %347 = vmatpush1.bf16.msra.mxu0 0
      %348 = vmatprep.subr.bf16.mxu0 0
      %349 = vmatpush1.bf16.msra.mxu0 0
      %350 = vmatprep.subr.bf16.mxu0 0
      %351 = vmatpush1.bf16.msra.mxu0 0
      %352 = vmatprep.mubr.bf16.mxu0 0
      %353 = vmatmul.mubr.bf16.gmra.mrb[0].mxu0 %v314
      %v354 = vpop.f32.mrb[0].mxu0
      %v355 = vadd.f32 0.0, %v354
      %v356 = vpop.f32.mrb[0].mxu0
      %v357 = vpop.f32.mrb[0].mxu0
      %v358 = vadd.f32 0.0, %v357
      %v359 = vpop.f32.mrb[0].mxu0
      %360 = vdwg.mxu0
      %v361 = vrcp.pop %v303
      %v362 = vrcp.pop %v306
      %v363 = vmul.f32 %v355, %v361
      %v364 = vmul.f32 %v358, %v362
      %v365 = vpack.c.bf16 %v364, %v363
      %v367 = vunpack.c.l.b16 %v365
      %v368 = vunpack.c.h.b16 %v365
      %v369 = vpack.c.b16 %v367, %v367
      %v370 = vpack.c.b16 %v368, %v368
      %vm373 = vcmask 257024
      %374 = vst.msk [vmem:[#allocation2] sm:$0xf] %vm373, %v369
      %vm375 = vcmask 254976
      %376 = vst.msk [vmem:[#allocation2 + $0x4] sm:$0x3] %vm375, %v370
      %377 = vrot.lane.b32.xlu0 %v172, 96
      %v378 = vpop.permute.xlu0 %377
      %379 = vrot.lane.b32.xlu0 %v174, 96
      %v380 = vpop.permute.xlu0 %379
      %v381 = vrot.slane %v378, 4
      %v382 = vrot.slane %v380, 4
      %v385 = vunpack.c.l.bf16 %v381
      %v386 = vunpack.c.l.bf16 %v382
      %389 = vrot.lane.b32.xlu0 %v176, 32
      %v390 = vpop.permute.xlu0 %389
      %391 = vrot.lane.b32.xlu0 %v177, 32
      %v392 = vpop.permute.xlu0 %391
      %v395 = vmul.f32 %v180, %v390
      %v396 = vmul.f32 %v181, %v392
      %397 = vrot.lane.b32.xlu0 %v180, 80
      %v398 = vpop.permute.xlu0 %397
      %399 = vrot.lane.b32.xlu0 %v181, 80
      %v400 = vpop.permute.xlu0 %399
      %v403 = vsel %vm206, %v398, %v195
      %v404 = vsel %vm206, %v400, %v197
      %v405 = vmul.f32 %v403, %v178
      %v406 = vmul.f32 %v404, %v179
      %409 = vrot.lane.b32.xlu0 %v405, 32
      %v410 = vpop.permute.xlu0 %409
      %411 = vrot.lane.b32.xlu0 %v406, 32
      %v412 = vpop.permute.xlu0 %411
      %v415 = vadd.f32 %v395, %v410
      %v416 = vadd.f32 %v396, %v412
      %v417 = vmul.f32 %v385, %v176
      %v418 = vmul.f32 %v386, %v177
      %421 = vrot.lane.b32.xlu0 %v385, 112
      %v422 = vpop.permute.xlu0 %421
      %423 = vrot.lane.b32.xlu0 %v386, 112
      %v424 = vpop.permute.xlu0 %423
      %427 = vrot.lane.b32.xlu0 %v385, 16
      %v428 = vpop.permute.xlu0 %427
      %429 = vrot.lane.b32.xlu0 %v386, 16
      %v430 = vpop.permute.xlu0 %429
      %v433 = vsel %vm206, %v422, %v428
      %v434 = vsel %vm206, %v424, %v430
      %v435 = vmul.f32 %v433, %v178
      %v436 = vmul.f32 %v434, %v179
      %v437 = vadd.f32 %v417, %v435
      %v438 = vadd.f32 %v418, %v436
      %v439 = vpack.c.bf16 %v416, %v415
      %v440 = vpack.c.bf16 %v438, %v437
      %442 = vrot.lane.b32.xlu0 %v439, 96
      %v443 = vpop.permute.xlu0 %442
      %v445 = vsel %vm237, %v443, 0
      %v448 = vsel %vm237, %v440, 0
      %450 = vmatprep.subr.bf16.mxu0 0
      %451 = vmatpush1.bf16.xpose.msra.mxu0 %v448
      %452 = vmatprep.subr.bf16.mxu0 0
      %453 = vmatpush1.bf16.xpose.msra.mxu0 0
      %454 = vmatprep.subr.bf16.mxu0 0
      %455 = vmatpush1.bf16.xpose.msra.mxu0 0
      %456 = vmatprep.subr.bf16.mxu0 0
      %457 = vmatpush1.bf16.xpose.msra.mxu0 0
      %458 = vmatprep.subr.bf16.mxu0 0
      %459 = vmatpush1.bf16.xpose.msra.mxu0 0
      %460 = vmatprep.subr.bf16.mxu0 0
      %461 = vmatpush1.bf16.xpose.msra.mxu0 0
      %462 = vmatprep.subr.bf16.mxu0 0
      %463 = vmatpush1.bf16.xpose.msra.mxu0 0
      %464 = vmatprep.subr.bf16.mxu0 0
      %465 = vmatpush1.bf16.xpose.msra.mxu0 0
      %466 = vmatprep.subr.bf16.mxu0 0
      %467 = vmatpush1.bf16.xpose.msra.mxu0 0
      %468 = vmatprep.subr.bf16.mxu0 0
      %469 = vmatpush1.bf16.xpose.msra.mxu0 0
      %470 = vmatprep.subr.bf16.mxu0 0
      %471 = vmatpush1.bf16.xpose.msra.mxu0 0
      %472 = vmatprep.subr.bf16.mxu0 0
      %473 = vmatpush1.bf16.xpose.msra.mxu0 0
      %474 = vmatprep.subr.bf16.mxu0 0
      %475 = vmatpush1.bf16.xpose.msra.mxu0 0
      %476 = vmatprep.subr.bf16.mxu0 0
      %477 = vmatpush1.bf16.xpose.msra.mxu0 0
      %478 = vmatprep.subr.bf16.mxu0 0
      %479 = vmatpush1.bf16.xpose.msra.mxu0 0
      %480 = vmatprep.subr.bf16.mxu0 0
      %481 = vmatpush1.bf16.xpose.msra.mxu0 0
      %482 = vmatprep.mubr.bf16.mxu0 0
      %483 = vmatmul.mubr.bf16.gmra.mrb[0].mxu0 %v445
      %v484 = vpop.f32.mrb[0].mxu0
      %v485 = vadd.f32 0.0, %v484
      %v486 = vpop.f32.mrb[0].mxu0
      %v487 = vpop.f32.mrb[0].mxu0
      %v488 = vadd.f32 0.0, %v487
      %v489 = vpop.f32.mrb[0].mxu0
      %490 = vdwg.mxu0
      %v491 = vmul.f32 %v485, 0.17677669
      %v492 = vmul.f32 %v488, 0.17677669
      %v493 = vsel %vm287, %v491, -inf
      %494 = vmax.xlane.f32.xlu0 %v493
      %v495 = vpop.xlane.xlu0 %494
      %v496 = vsel %vm291, %v492, -inf
      %497 = vmax.xlane.f32.xlu0 %v496
      %v498 = vpop.xlane.xlu0 %497
      %v499 = vsub.f32 %v491, %v495
      %v500 = vsub.f32 %v492, %v498
      %v501 = vmul.f32 %v499, 1.442695
      %v502 = vpow.pop %v501
      %v503 = vmul.f32 %v500, 1.442695
      %v504 = vpow.pop %v503
      %v505 = vsel %vm287, %v502, 0.0
      %506 = vadd.xlane.f32.xlu0 %v505
      %v507 = vpop.xlane.xlu0 %506
      %v508 = vsel %vm291, %v504, 0.0
      %509 = vadd.xlane.f32.xlu0 %v508
      %v510 = vpop.xlane.xlu0 %509
      %v511 = vpack.c.bf16 %v504, %v502
      %512 = vrot.lane.b32.xlu0 %v312, 96
      %v513 = vpop.permute.xlu0 %512
      %v515 = vsel %vm287, %v511, 0
      %v518 = vsel %vm316, %v513, 0
      %520 = vmatprep.subr.bf16.mxu0 0
      %521 = vmatpush1.bf16.msra.mxu0 %v518
      %522 = vmatprep.subr.bf16.mxu0 0
      %523 = vmatpush1.bf16.msra.mxu0 0
      %524 = vmatprep.subr.bf16.mxu0 0
      %525 = vmatpush1.bf16.msra.mxu0 0
      %526 = vmatprep.subr.bf16.mxu0 0
      %527 = vmatpush1.bf16.msra.mxu0 0
      %528 = vmatprep.subr.bf16.mxu0 0
      %529 = vmatpush1.bf16.msra.mxu0 0
      %530 = vmatprep.subr.bf16.mxu0 0
      %531 = vmatpush1.bf16.msra.mxu0 0
      %532 = vmatprep.subr.bf16.mxu0 0
      %533 = vmatpush1.bf16.msra.mxu0 0
      %534 = vmatprep.subr.bf16.mxu0 0
      %535 = vmatpush1.bf16.msra.mxu0 0
      %536 = vmatprep.subr.bf16.mxu0 0
      %537 = vmatpush1.bf16.msra.mxu0 0
      %538 = vmatprep.subr.bf16.mxu0 0
      %539 = vmatpush1.bf16.msra.mxu0 0
      %540 = vmatprep.subr.bf16.mxu0 0
      %541 = vmatpush1.bf16.msra.mxu0 0
      %542 = vmatprep.subr.bf16.mxu0 0
      %543 = vmatpush1.bf16.msra.mxu0 0
      %544 = vmatprep.subr.bf16.mxu0 0
      %545 = vmatpush1.bf16.msra.mxu0 0
      %546 = vmatprep.subr.bf16.mxu0 0
      %547 = vmatpush1.bf16.msra.mxu0 0
      %548 = vmatprep.subr.bf16.mxu0 0
      %549 = vmatpush1.bf16.msra.mxu0 0
      %550 = vmatprep.subr.bf16.mxu0 0
      %551 = vmatpush1.bf16.msra.mxu0 0
      %552 = vmatprep.mubr.bf16.mxu0 0
      %553 = vmatmul.mubr.bf16.gmra.mrb[0].mxu0 %v515
      %v554 = vpop.f32.mrb[0].mxu0
      %v555 = vadd.f32 0.0, %v554
      %v556 = vpop.f32.mrb[0].mxu0
      %v557 = vpop.f32.mrb[0].mxu0
      %v558 = vadd.f32 0.0, %v557
      %v559 = vpop.f32.mrb[0].mxu0
      %560 = vdwg.mxu0
      %v561 = vrcp.pop %v507
      %v562 = vrcp.pop %v510
      %v563 = vmul.f32 %v555, %v561
      %v564 = vmul.f32 %v558, %v562
      %v565 = vpack.c.bf16 %v564, %v563
      %v567 = vunpack.c.l.b16 %v565
      %v568 = vunpack.c.h.b16 %v565
      %v569 = vpack.c.b16 %v567, %v567
      %v570 = vpack.c.b16 %v568, %v568
      %571 = vrot.lane.b32.xlu0 %v569, 32
      %v572 = vpop.permute.xlu0 %571
      %573 = vrot.lane.b32.xlu0 %v570, 32
      %v574 = vpop.permute.xlu0 %573
      %vm577 = vcmask 519424
      %578 = vst.msk [vmem:[#allocation2] sm:$0xf] %vm577, %v572
      %vm579 = vcmask 517376
      %580 = vst.msk [vmem:[#allocation2 + $0x4] sm:$0x3] %vm579, %v574
      %581 = vrot.lane.b32.xlu0 %v172, 64
      %v582 = vpop.permute.xlu0 %581
      %583 = vrot.lane.b32.xlu0 %v174, 64
      %v584 = vpop.permute.xlu0 %583
      %v585 = vrot.slane %v582, 4
      %v586 = vrot.slane %v584, 4
      %v589 = vunpack.c.l.bf16 %v585
      %v590 = vunpack.c.l.bf16 %v586
      %591 = vrot.lane.b32.xlu0 %v176, 64
      %v592 = vpop.permute.xlu0 %591
      %593 = vrot.lane.b32.xlu0 %v177, 64
      %v594 = vpop.permute.xlu0 %593
      %v597 = vmul.f32 %v180, %v592
      %v598 = vmul.f32 %v181, %v594
      %599 = vrot.lane.b32.xlu0 %v180, 48
      %v600 = vpop.permute.xlu0 %599
      %601 = vrot.lane.b32.xlu0 %v181, 48
      %v602 = vpop.permute.xlu0 %601
      %v605 = vsel %vm206, %v600, %v398
      %v606 = vsel %vm206, %v602, %v400
      %v607 = vmul.f32 %v605, %v178
      %v608 = vmul.f32 %v606, %v179
      %611 = vrot.lane.b32.xlu0 %v607, 64
      %v612 = vpop.permute.xlu0 %611
      %613 = vrot.lane.b32.xlu0 %v608, 64
      %v614 = vpop.permute.xlu0 %613
      %v617 = vadd.f32 %v597, %v612
      %v618 = vadd.f32 %v598, %v614
      %v619 = vmul.f32 %v589, %v176
      %v620 = vmul.f32 %v590, %v177
      %623 = vrot.lane.b32.xlu0 %v589, 112
      %v624 = vpop.permute.xlu0 %623
      %625 = vrot.lane.b32.xlu0 %v590, 112
      %v626 = vpop.permute.xlu0 %625
      %629 = vrot.lane.b32.xlu0 %v589, 16
      %v630 = vpop.permute.xlu0 %629
      %631 = vrot.lane.b32.xlu0 %v590, 16
      %v632 = vpop.permute.xlu0 %631
      %v635 = vsel %vm206, %v624, %v630
      %v636 = vsel %vm206, %v626, %v632
      %v637 = vmul.f32 %v635, %v178
      %v638 = vmul.f32 %v636, %v179
      %v639 = vadd.f32 %v619, %v637
      %v640 = vadd.f32 %v620, %v638
      %v641 = vpack.c.bf16 %v618, %v617
      %v642 = vpack.c.bf16 %v640, %v639
      %644 = vrot.lane.b32.xlu0 %v641, 64
      %v645 = vpop.permute.xlu0 %644
      %v647 = vsel %vm237, %v645, 0
      %v650 = vsel %vm237, %v642, 0
      %652 = vmatprep.subr.bf16.mxu0 0
      %653 = vmatpush1.bf16.xpose.msra.mxu0 %v650
      %654 = vmatprep.subr.bf16.mxu0 0
      %655 = vmatpush1.bf16.xpose.msra.mxu0 0
      %656 = vmatprep.subr.bf16.mxu0 0
      %657 = vmatpush1.bf16.xpose.msra.mxu0 0
      %658 = vmatprep.subr.bf16.mxu0 0
      %659 = vmatpush1.bf16.xpose.msra.mxu0 0
      %660 = vmatprep.subr.bf16.mxu0 0
      %661 = vmatpush1.bf16.xpose.msra.mxu0 0
      %662 = vmatprep.subr.bf16.mxu0 0
      %663 = vmatpush1.bf16.xpose.msra.mxu0 0
      %664 = vmatprep.subr.bf16.mxu0 0
      %665 = vmatpush1.bf16.xpose.msra.mxu0 0
      %666 = vmatprep.subr.bf16.mxu0 0
      %667 = vmatpush1.bf16.xpose.msra.mxu0 0
      %668 = vmatprep.subr.bf16.mxu0 0
      %669 = vmatpush1.bf16.xpose.msra.mxu0 0
      %670 = vmatprep.subr.bf16.mxu0 0
      %671 = vmatpush1.bf16.xpose.msra.mxu0 0
      %672 = vmatprep.subr.bf16.mxu0 0
      %673 = vmatpush1.bf16.xpose.msra.mxu0 0
      %674 = vmatprep.subr.bf16.mxu0 0
      %675 = vmatpush1.bf16.xpose.msra.mxu0 0
      %676 = vmatprep.subr.bf16.mxu0 0
      %677 = vmatpush1.bf16.xpose.msra.mxu0 0
      %678 = vmatprep.subr.bf16.mxu0 0
      %679 = vmatpush1.bf16.xpose.msra.mxu0 0
      %680 = vmatprep.subr.bf16.mxu0 0
      %681 = vmatpush1.bf16.xpose.msra.mxu0 0
      %682 = vmatprep.subr.bf16.mxu0 0
      %683 = vmatpush1.bf16.xpose.msra.mxu0 0
      %684 = vmatprep.mubr.bf16.mxu0 0
      %685 = vmatmul.mubr.bf16.gmra.mrb[0].mxu0 %v647
      %v686 = vpop.f32.mrb[0].mxu0
      %v687 = vadd.f32 0.0, %v686
      %v688 = vpop.f32.mrb[0].mxu0
      %v689 = vpop.f32.mrb[0].mxu0
      %v690 = vadd.f32 0.0, %v689
      %v691 = vpop.f32.mrb[0].mxu0
      %692 = vdwg.mxu0
      %v693 = vmul.f32 %v687, 0.17677669
      %v694 = vmul.f32 %v690, 0.17677669
      %v695 = vsel %vm287, %v693, -inf
      %696 = vmax.xlane.f32.xlu0 %v695
      %v697 = vpop.xlane.xlu0 %696
      %v698 = vsel %vm291, %v694, -inf
      %699 = vmax.xlane.f32.xlu0 %v698
      %v700 = vpop.xlane.xlu0 %699
      %v701 = vsub.f32 %v693, %v697
      %v702 = vsub.f32 %v694, %v700
      %v703 = vmul.f32 %v701, 1.442695
      %v704 = vpow.pop %v703
      %v705 = vmul.f32 %v702, 1.442695
      %v706 = vpow.pop %v705
      %v707 = vsel %vm287, %v704, 0.0
      %708 = vadd.xlane.f32.xlu0 %v707
      %v709 = vpop.xlane.xlu0 %708
      %v710 = vsel %vm291, %v706, 0.0
      %711 = vadd.xlane.f32.xlu0 %v710
      %v712 = vpop.xlane.xlu0 %711
      %v713 = vpack.c.bf16 %v706, %v704
      %714 = vrot.lane.b32.xlu0 %v312, 64
      %v715 = vpop.permute.xlu0 %714
      %v717 = vsel %vm287, %v713, 0
      %v720 = vsel %vm316, %v715, 0
      %722 = vmatprep.subr.bf16.mxu0 0
      %723 = vmatpush1.bf16.msra.mxu0 %v720
      %724 = vmatprep.subr.bf16.mxu0 0
      %725 = vmatpush1.bf16.msra.mxu0 0
      %726 = vmatprep.subr.bf16.mxu0 0
      %727 = vmatpush1.bf16.msra.mxu0 0
      %728 = vmatprep.subr.bf16.mxu0 0
      %729 = vmatpush1.bf16.msra.mxu0 0
      %730 = vmatprep.subr.bf16.mxu0 0
      %731 = vmatpush1.bf16.msra.mxu0 0
      %732 = vmatprep.subr.bf16.mxu0 0
      %733 = vmatpush1.bf16.msra.mxu0 0
      %734 = vmatprep.subr.bf16.mxu0 0
      %735 = vmatpush1.bf16.msra.mxu0 0
      %736 = vmatprep.subr.bf16.mxu0 0
      %737 = vmatpush1.bf16.msra.mxu0 0
      %738 = vmatprep.subr.bf16.mxu0 0
      %739 = vmatpush1.bf16.msra.mxu0 0
      %740 = vmatprep.subr.bf16.mxu0 0
      %741 = vmatpush1.bf16.msra.mxu0 0
      %742 = vmatprep.subr.bf16.mxu0 0
      %743 = vmatpush1.bf16.msra.mxu0 0
      %744 = vmatprep.subr.bf16.mxu0 0
      %745 = vmatpush1.bf16.msra.mxu0 0
      %746 = vmatprep.subr.bf16.mxu0 0
      %747 = vmatpush1.bf16.msra.mxu0 0
      %748 = vmatprep.subr.bf16.mxu0 0
      %749 = vmatpush1.bf16.msra.mxu0 0
      %750 = vmatprep.subr.bf16.mxu0 0
      %751 = vmatpush1.bf16.msra.mxu0 0
      %752 = vmatprep.subr.bf16.mxu0 0
      %753 = vmatpush1.bf16.msra.mxu0 0
      %754 = vmatprep.mubr.bf16.mxu0 0
      %755 = vmatmul.mubr.bf16.gmra.mrb[0].mxu0 %v717
      %v756 = vpop.f32.mrb[0].mxu0
      %v757 = vadd.f32 0.0, %v756
      %v758 = vpop.f32.mrb[0].mxu0
      %v759 = vpop.f32.mrb[0].mxu0
      %v760 = vadd.f32 0.0, %v759
      %v761 = vpop.f32.mrb[0].mxu0
      %762 = vdwg.mxu0
      %v763 = vrcp.pop %v709
      %v764 = vrcp.pop %v712
      %v765 = vmul.f32 %v757, %v763
      %v766 = vmul.f32 %v760, %v764
      %v767 = vpack.c.bf16 %v766, %v765
      %v769 = vunpack.c.l.b16 %v767
      %v770 = vunpack.c.h.b16 %v767
      %v771 = vpack.c.b16 %v769, %v769
      %v772 = vpack.c.b16 %v770, %v770
      %773 = vrot.lane.b32.xlu0 %v771, 64
      %v774 = vpop.permute.xlu0 %773
      %775 = vrot.lane.b32.xlu0 %v772, 64
      %v776 = vpop.permute.xlu0 %775
      %vm779 = vcmask 781824
      %780 = vst.msk [vmem:[#allocation2] sm:$0xf] %vm779, %v774
      %vm781 = vcmask 779776
      %782 = vst.msk [vmem:[#allocation2 + $0x4] sm:$0x3] %vm781, %v776
      %783 = vrot.lane.b32.xlu0 %v172, 32
      %v784 = vpop.permute.xlu0 %783
      %785 = vrot.lane.b32.xlu0 %v174, 32
      %v786 = vpop.permute.xlu0 %785
      %v787 = vrot.slane %v784, 4
      %v788 = vrot.slane %v786, 4
      %v791 = vunpack.c.l.bf16 %v787
      %v792 = vunpack.c.l.bf16 %v788
      %793 = vrot.lane.b32.xlu0 %v176, 96
      %v794 = vpop.permute.xlu0 %793
      %795 = vrot.lane.b32.xlu0 %v177, 96
      %v796 = vpop.permute.xlu0 %795
      %v799 = vmul.f32 %v180, %v794
      %v800 = vmul.f32 %v181, %v796
      %v801 = vsel %vm206, %v201, %v600
      %v802 = vsel %vm206, %v203, %v602
      %v803 = vmul.f32 %v801, %v178
      %v804 = vmul.f32 %v802, %v179
      %807 = vrot.lane.b32.xlu0 %v803, 96
      %v808 = vpop.permute.xlu0 %807
      %809 = vrot.lane.b32.xlu0 %v804, 96
      %v810 = vpop.permute.xlu0 %809
      %v813 = vadd.f32 %v799, %v808
      %v814 = vadd.f32 %v800, %v810
      %v815 = vmul.f32 %v791, %v176
      %v816 = vmul.f32 %v792, %v177
      %819 = vrot.lane.b32.xlu0 %v791, 112
      %v820 = vpop.permute.xlu0 %819
      %821 = vrot.lane.b32.xlu0 %v792, 112
      %v822 = vpop.permute.xlu0 %821
      %825 = vrot.lane.b32.xlu0 %v791, 16
      %v826 = vpop.permute.xlu0 %825
      %827 = vrot.lane.b32.xlu0 %v792, 16
      %v828 = vpop.permute.xlu0 %827
      %v831 = vsel %vm206, %v820, %v826
      %v832 = vsel %vm206, %v822, %v828
      %v833 = vmul.f32 %v831, %v178
      %v834 = vmul.f32 %v832, %v179
      %v835 = vadd.f32 %v815, %v833
      %v836 = vadd.f32 %v816, %v834
      %v837 = vpack.c.bf16 %v814, %v813
      %v838 = vpack.c.bf16 %v836, %v835
      %840 = vrot.lane.b32.xlu0 %v837, 32
      %v841 = vpop.permute.xlu0 %840
      %v843 = vsel %vm237, %v841, 0
      %v846 = vsel %vm237, %v838, 0
      %848 = vmatprep.subr.bf16.mxu0 0
      %849 = vmatpush1.bf16.xpose.msra.mxu0 %v846
      %850 = vmatprep.subr.bf16.mxu0 0
      %851 = vmatpush1.bf16.xpose.msra.mxu0 0
      %852 = vmatprep.subr.bf16.mxu0 0
      %853 = vmatpush1.bf16.xpose.msra.mxu0 0
      %854 = vmatprep.subr.bf16.mxu0 0
      %855 = vmatpush1.bf16.xpose.msra.mxu0 0
      %856 = vmatprep.subr.bf16.mxu0 0
      %857 = vmatpush1.bf16.xpose.msra.mxu0 0
      %858 = vmatprep.subr.bf16.mxu0 0
      %859 = vmatpush1.bf16.xpose.msra.mxu0 0
      %860 = vmatprep.subr.bf16.mxu0 0
      %861 = vmatpush1.bf16.xpose.msra.mxu0 0
      %862 = vmatprep.subr.bf16.mxu0 0
      %863 = vmatpush1.bf16.xpose.msra.mxu0 0
      %864 = vmatprep.subr.bf16.mxu0 0
      %865 = vmatpush1.bf16.xpose.msra.mxu0 0
      %866 = vmatprep.subr.bf16.mxu0 0
      %867 = vmatpush1.bf16.xpose.msra.mxu0 0
      %868 = vmatprep.subr.bf16.mxu0 0
      %869 = vmatpush1.bf16.xpose.msra.mxu0 0
      %870 = vmatprep.subr.bf16.mxu0 0
      %871 = vmatpush1.bf16.xpose.msra.mxu0 0
      %872 = vmatprep.subr.bf16.mxu0 0
      %873 = vmatpush1.bf16.xpose.msra.mxu0 0
      %874 = vmatprep.subr.bf16.mxu0 0
      %875 = vmatpush1.bf16.xpose.msra.mxu0 0
      %876 = vmatprep.subr.bf16.mxu0 0
      %877 = vmatpush1.bf16.xpose.msra.mxu0 0
      %878 = vmatprep.subr.bf16.mxu0 0
      %879 = vmatpush1.bf16.xpose.msra.mxu0 0
      %880 = vmatprep.mubr.bf16.mxu0 0
      %881 = vmatmul.mubr.bf16.gmra.mrb[0].mxu0 %v843
      %v882 = vpop.f32.mrb[0].mxu0
      %v883 = vadd.f32 0.0, %v882
      %v884 = vpop.f32.mrb[0].mxu0
      %v885 = vpop.f32.mrb[0].mxu0
      %v886 = vadd.f32 0.0, %v885
      %v887 = vpop.f32.mrb[0].mxu0
      %888 = vdwg.mxu0
      %v889 = vmul.f32 %v883, 0.17677669
      %v890 = vmul.f32 %v886, 0.17677669
      %v891 = vsel %vm287, %v889, -inf
      %892 = vmax.xlane.f32.xlu0 %v891
      %v893 = vpop.xlane.xlu0 %892
      %v894 = vsel %vm291, %v890, -inf
      %895 = vmax.xlane.f32.xlu0 %v894
      %v896 = vpop.xlane.xlu0 %895
      %v897 = vsub.f32 %v889, %v893
      %v898 = vsub.f32 %v890, %v896
      %v899 = vmul.f32 %v897, 1.442695
      %v900 = vpow.pop %v899
      %v901 = vmul.f32 %v898, 1.442695
      %v902 = vpow.pop %v901
      %v903 = vsel %vm287, %v900, 0.0
      %904 = vadd.xlane.f32.xlu0 %v903
      %v905 = vpop.xlane.xlu0 %904
      %v906 = vsel %vm291, %v902, 0.0
      %907 = vadd.xlane.f32.xlu0 %v906
      %v908 = vpop.xlane.xlu0 %907
      %v909 = vpack.c.bf16 %v902, %v900
      %910 = vrot.lane.b32.xlu0 %v312, 32
      %v911 = vpop.permute.xlu0 %910
      %v913 = vsel %vm287, %v909, 0
      %v916 = vsel %vm316, %v911, 0
      %918 = vmatprep.subr.bf16.mxu0 0
      %919 = vmatpush1.bf16.msra.mxu0 %v916
      %920 = vmatprep.subr.bf16.mxu0 0
      %921 = vmatpush1.bf16.msra.mxu0 0
      %922 = vmatprep.subr.bf16.mxu0 0
      %923 = vmatpush1.bf16.msra.mxu0 0
      %924 = vmatprep.subr.bf16.mxu0 0
      %925 = vmatpush1.bf16.msra.mxu0 0
      %926 = vmatprep.subr.bf16.mxu0 0
      %927 = vmatpush1.bf16.msra.mxu0 0
      %928 = vmatprep.subr.bf16.mxu0 0
      %929 = vmatpush1.bf16.msra.mxu0 0
      %930 = vmatprep.subr.bf16.mxu0 0
      %931 = vmatpush1.bf16.msra.mxu0 0
      %932 = vmatprep.subr.bf16.mxu0 0
      %933 = vmatpush1.bf16.msra.mxu0 0
      %934 = vmatprep.subr.bf16.mxu0 0
      %935 = vmatpush1.bf16.msra.mxu0 0
      %936 = vmatprep.subr.bf16.mxu0 0
      %937 = vmatpush1.bf16.msra.mxu0 0
      %938 = vmatprep.subr.bf16.mxu0 0
      %939 = vmatpush1.bf16.msra.mxu0 0
      %940 = vmatprep.subr.bf16.mxu0 0
      %941 = vmatpush1.bf16.msra.mxu0 0
      %942 = vmatprep.subr.bf16.mxu0 0
      %943 = vmatpush1.bf16.msra.mxu0 0
      %944 = vmatprep.subr.bf16.mxu0 0
      %945 = vmatpush1.bf16.msra.mxu0 0
      %946 = vmatprep.subr.bf16.mxu0 0
      %947 = vmatpush1.bf16.msra.mxu0 0
      %948 = vmatprep.subr.bf16.mxu0 0
      %949 = vmatpush1.bf16.msra.mxu0 0
      %950 = vmatprep.mubr.bf16.mxu0 0
      %951 = vmatmul.mubr.bf16.gmra.mrb[0].mxu0 %v913
      %v952 = vpop.f32.mrb[0].mxu0
      %v953 = vadd.f32 0.0, %v952
      %v954 = vpop.f32.mrb[0].mxu0
      %v955 = vpop.f32.mrb[0].mxu0
      %v956 = vadd.f32 0.0, %v955
      %v957 = vpop.f32.mrb[0].mxu0
      %958 = vdwg.mxu0
      %v959 = vrcp.pop %v905
      %v960 = vrcp.pop %v908
      %v961 = vmul.f32 %v953, %v959
      %v962 = vmul.f32 %v956, %v960
      %v963 = vpack.c.bf16 %v962, %v961
      %v965 = vunpack.c.l.b16 %v963
      %v966 = vunpack.c.h.b16 %v963
      %v967 = vpack.c.b16 %v965, %v965
      %v968 = vpack.c.b16 %v966, %v966
      %969 = vrot.lane.b32.xlu0 %v967, 96
      %v970 = vpop.permute.xlu0 %969
      %971 = vrot.lane.b32.xlu0 %v968, 96
      %v972 = vpop.permute.xlu0 %971
      %vm975 = vcmask 1044224
      %976 = vst.msk [vmem:[#allocation2] sm:$0xf] %vm975, %v970
      %vm977 = vcmask 1042176
      %978 = vst.msk [vmem:[#allocation2 + $0x4] sm:$0x3] %vm977, %v972
      %v979 = vld [vmem:[#allocation2] sm:$0xf]
      %v980 = vld [vmem:[#allocation2 + $0x4] sm:$0x3]
      %981 = vst [vmem:[%s170] sm:$0xf] %v979
      %982 = vst [vmem:[%s170 + $0x4] sm:$0x3] %v980
      %p983 = scmp.lt.s32.totalorder %s14, 1
      %s984 = scalar_select %p983, %s14, 1
      %s985 = smul.addr %s984, 2
      %s986 = smul.addr %s985, 4
      %s987 = scalar_lea.vmem %s3, %s986
      // Predicated region
      $region33: #{ccot_forward.19} parent=31 // pred_check
        %p988 = pneg %p100
      $region34: #{ccot_forward.19} parent=31 // pred_check_branch
        %990 = sbr.rel (%p988) target = $region36
      $region35: #{ccot_forward.19} parent=31 // pred_region
        _
      $region36: #{ccot_forward.19} parent=31 // pred_fallthru
        _
    $region32: #{ccot_forward.19} parent=5 // pred_fallthru
      _
    %p991 = scmp.le.s32.totalorder 2, %s9
    // Predicated region
    $region37: #{ccot_forward.19} parent=5 // pred_check
      %p992 = pneg %p991
    $region38: #{ccot_forward.19} parent=5 // pred_check_branch
      %994 = sbr.rel (%p992) target = $region40
    $region39: #{ccot_forward.19} parent=5 // pred_region
      %s995 = ssub.s32 %s9, 2
      // Predicated region
      $region41: #{ccot_forward.19} parent=39 // pred_check
        %p996 = pneg %p106
      $region42: #{ccot_forward.19} parent=39 // pred_check_branch
        %998 = sbr.rel (%p996) target = $region44
      $region43: #{ccot_forward.19} parent=39 // pred_region
        %p999 = scmp.lt.s32.totalorder %s15, 1
        %s1000 = scalar_select %p999, %s15, 1
        %s1001 = smul.addr %s1000, 2
        %s1002 = smul.addr %s1001, 4
        %s1003 = scalar_lea.vmem %s3, %s1002
      $region44: #{ccot_forward.19} parent=39 // pred_fallthru
        _
    $region40: #{ccot_forward.19} parent=5 // pred_fallthru
      _
  $region6: #{ccot_forward.19} parent=0 // loop_footer
    %s13 = sadd.s32 1, %s9
  $region7: #{ccot_forward.19} parent=0 // loop_footer_branch
    %8 = sbr.rel target = $region3
  $region8: #{ccot_forward.19} parent=0 // loop_exit
    _

// kernel: ccot_forward.28
$region0: #{ccot_forward.28}
  #allocation0 [shape = 'u32[]', space=smem, size = 0x4, offset = 0x4, fixed_abs, tag = 'smem constant byte address 0x4 - core index']
  #allocation1 [shape = 'u32[144,128]{1,0:T(1,128)}', space=vmem, size = 0x12000, scoped, tag = 'internal scratch']
  %s0 = inlined_call_operand.vmem [shape: bf16[24,128], index: 0, kind: input, shape index: {}]
  %s1 = inlined_call_operand.vmem [shape: f32[1,128], index: 1, kind: input, shape index: {}]
  %s2 = inlined_call_operand.vmem [shape: f32[1,128], index: 2, kind: input, shape index: {}]
  %s3 = inlined_call_operand.vmem [shape: bf16[24,128], index: 3, kind: input, shape index: {}]
  %s4 = inlined_call_operand.vmem [shape: bf16[24,128], index: 4, kind: output, shape index: {}]
  %s5 = sld [smem:[#allocation0]]
  $region26: #{ccot_forward.28} parent=0
    _
  %s7 = ssub.s32 1, %s5
  %s8 = scalar_select 0, %s7, %s5
  // Predicated region
  $region2: #{ccot_forward.28} parent=0 // pred_check
    _
  $region3: #{ccot_forward.28} parent=0 // pred_check_branch
    %10 = sbr.rel (0) target = $region5
  $region4: #{ccot_forward.28} parent=0 // pred_region
    _
  $region5: #{ccot_forward.28} parent=0 // pred_fallthru
    _
  // Predicated region
  $region6: #{ccot_forward.28} parent=0 // pred_check
    _
  $region7: #{ccot_forward.28} parent=0 // pred_check_branch
    %12 = sbr.rel (0) target = $region9
  $region8: #{ccot_forward.28} parent=0 // pred_region
    _
  $region9: #{ccot_forward.28} parent=0 // pred_fallthru
    _
  // Predicated region
  $region10: #{ccot_forward.28} parent=0 // pred_check
    _
  $region11: #{ccot_forward.28} parent=0 // pred_check_branch
    %14 = sbr.rel (0) target = $region13
  $region12: #{ccot_forward.28} parent=0 // pred_region
    _
  $region13: #{ccot_forward.28} parent=0 // pred_fallthru
    _
  // Predicated region
  $region14: #{ccot_forward.28} parent=0 // pred_check
    _
  $region15: #{ccot_forward.28} parent=0 // pred_check_branch
    %16 = sbr.rel (0) target = $region17
  $region16: #{ccot_forward.28} parent=0 // pred_region
    _
  $region17: #{ccot_forward.28} parent=0 // pred_fallthru
    _
  %v17 = vld [vmem:[%s0] sm:$0xf]
  %v18 = vld [vmem:[%s0 + $0x4] sm:$0xf]
  %v19 = vld [vmem:[%s0 + $0x8] sm:$0xf]
  %v20 = vunpack.c.l.bf16 %v17
  %v21 = vunpack.c.l.bf16 %v18
  %v22 = vunpack.c.l.bf16 %v19
  %23 = vadd.xlane.f32.xlu0 %v20
  %v24 = vpop.xlane.xlu0 %23
  %25 = vadd.xlane.f32.xlu0 %v21
  %v26 = vpop.xlane.xlu0 %25
  %27 = vadd.xlane.f32.xlu0 %v22
  %v28 = vpop.xlane.xlu0 %27
  %v29 = vmul.f32 %v24, 0.0078125
  %v30 = vmul.f32 %v26, 0.0078125
  %v31 = vmul.f32 %v28, 0.0078125
  %v32 = vsub.f32 %v20, %v29
  %v33 = vsub.f32 %v21, %v30
  %v34 = vsub.f32 %v22, %v31
  %v35 = vmul.f32 %v32, %v32
  %v36 = vmul.f32 %v33, %v33
  %v37 = vmul.f32 %v34, %v34
  %38 = vadd.xlane.f32.xlu0 %v35
  %v39 = vpop.xlane.xlu0 %38
  %40 = vadd.xlane.f32.xlu0 %v36
  %v41 = vpop.xlane.xlu0 %40
  %42 = vadd.xlane.f32.xlu0 %v37
  %v43 = vpop.xlane.xlu0 %42
  %v44 = vmul.f32 %v39, 0.0078125
  %v45 = vmul.f32 %v41, 0.0078125
  %v46 = vmul.f32 %v43, 0.0078125
  %v47 = vadd.f32 %v44, 1e-05
  %v48 = vadd.f32 %v45, 1e-05
  %v49 = vadd.f32 %v46, 1e-05
  %v50 = vrsqrt.pop %v47
  %v51 = vrsqrt.pop %v48
  %v52 = vrsqrt.pop %v49
  %v53 = vmul.f32 %v32, %v50
  %v54 = vmul.f32 %v33, %v51
  %v55 = vmul.f32 %v34, %v52
  %v56 = vld [vmem:[%s1] sm:$0x1]
  %v58 = vlaneseq
  %v59 = vshrl.u32 %v58, 7
  %v60 = vsub.s32 0, %v59
  %v61 = vrot.slane %v56, %v60
  %v63 = vmul.f32 %v53, %v61
  %v64 = vmul.f32 %v54, %v61
  %v65 = vmul.f32 %v55, %v61
  %v66 = vld [vmem:[%s2] sm:$0x1]
  %v68 = vlaneseq
  %v69 = vshrl.u32 %v68, 7
  %v70 = vsub.s32 0, %v69
  %v71 = vrot.slane %v66, %v70
  %v73 = vadd.f32 %v63, %v71
  %v74 = vadd.f32 %v64, %v71
  %v75 = vadd.f32 %v65, %v71
  %v76 = vld [vmem:[%s3] sm:$0xf]
  %v77 = vld [vmem:[%s3 + $0x4] sm:$0xf]
  %v78 = vld [vmem:[%s3 + $0x8] sm:$0xf]
  %v79 = vunpack.c.l.bf16 %v76
  %v80 = vunpack.c.l.bf16 %v77
  %v81 = vunpack.c.l.bf16 %v78
  %v82 = vadd.f32 %v73, %v79
  %v83 = vadd.f32 %v74, %v80
  %v84 = vadd.f32 %v75, %v81
  %v85 = vpack.c.bf16 %v83, %v82
  %v86 = vpack.c.bf16 %v84, %v84
  %v89 = vunpack.c.l.b16 %v85
  %v90 = vunpack.c.h.b16 %v85
  %v91 = vunpack.c.l.b16 %v86
  %v92 = vpack.c.b16 %v89, %v89
  %v93 = vpack.c.b16 %v90, %v90
  %v94 = vpack.c.b16 %v91, %v91
  %98 = vst [vmem:[%s4] sm:$0xf] %v92
  %99 = vst [vmem:[%s4 + $0x4] sm:$0xf] %v93
  %100 = vst [vmem:[%s4 + $0x8] sm:$0xf] %v94
  // Predicated region
  $region18: #{ccot_forward.28} parent=0 // pred_check
    _
  $region19: #{ccot_forward.28} parent=0 // pred_check_branch
    %102 = sbr.rel (0) target = $region21
  $region20: #{ccot_forward.28} parent=0 // pred_region
    _
  $region21: #{ccot_forward.28} parent=0 // pred_fallthru
    _
  // Predicated region
  $region22: #{ccot_forward.28} parent=0 // pred_check
    _
  $region23: #{ccot_forward.28} parent=0 // pred_check_branch
    %104 = sbr.rel (0) target = $region25
  $region24: #{ccot_forward.28} parent=0 // pred_region
    _
  $region25: #{ccot_forward.28} parent=0 // pred_fallthru
    _

// kernel: ccot_forward.22
$region0: #{ccot_forward.22}
  #allocation0 [shape = 'u32[]', space=smem, size = 0x4, offset = 0x4, fixed_abs, tag = 'smem constant byte address 0x4 - core index']
  #allocation1 [shape = 'u32[144,128]{1,0:T(1,128)}', space=vmem, size = 0x12000, scoped, tag = 'internal scratch']
  #allocation2 [shape = 'f32[24,128]{1,0:T(8,128)}', space=vmem, size = 0x3000, scoped, tag = 'scratch operand']
  %s0 = inlined_call_operand.vmem [shape: bf16[24,512], index: 0, kind: input, shape index: {}]
  %s1 = inlined_call_operand.vmem [shape: bf16[512,128], index: 1, kind: input, shape index: {}]
  %s2 = inlined_call_operand.vmem [shape: f32[1,128], index: 2, kind: input, shape index: {}]
  %s3 = inlined_call_operand.vmem [shape: bf16[24,128], index: 3, kind: input, shape index: {}]
  %s4 = inlined_call_operand.vmem [shape: bf16[24,128], index: 4, kind: output, shape index: {}]
  %s5 = sld [smem:[#allocation0]]
  $region34: #{ccot_forward.22} parent=0
    _
  %s7 = ssub.s32 1, %s5
  %s8 = scalar_select 0, %s7, %s5
  // Predicated region
  $region2: #{ccot_forward.22} parent=0 // pred_check
    _
  $region3: #{ccot_forward.22} parent=0 // pred_check_branch
    %10 = sbr.rel (0) target = $region5
  $region4: #{ccot_forward.22} parent=0 // pred_region
    _
  $region5: #{ccot_forward.22} parent=0 // pred_fallthru
    _
  // Predicated region
  $region6: #{ccot_forward.22} parent=0 // pred_check
    _
  $region7: #{ccot_forward.22} parent=0 // pred_check_branch
    %12 = sbr.rel (0) target = $region9
  $region8: #{ccot_forward.22} parent=0 // pred_region
    _
  $region9: #{ccot_forward.22} parent=0 // pred_fallthru
    _
  // Predicated region
  $region10: #{ccot_forward.22} parent=0 // pred_check
    _
  $region11: #{ccot_forward.22} parent=0 // pred_check_branch
    %14 = sbr.rel (0) target = $region13
  $region12: #{ccot_forward.22} parent=0 // pred_region
    _
  $region13: #{ccot_forward.22} parent=0 // pred_fallthru
    _
  // Predicated region
  $region14: #{ccot_forward.22} parent=0 // pred_check
    _
  $region15: #{ccot_forward.22} parent=0 // pred_check_branch
    %16 = sbr.rel (0) target = $region17
  $region16: #{ccot_forward.22} parent=0 // pred_region
    _
  $region17: #{ccot_forward.22} parent=0 // pred_fallthru
    _
  %p18 = scmp.eq.s32.totalorder 0, 0
  // Predicated region
  $region18: #{ccot_forward.22} parent=0 // pred_check
    %p19 = pneg %p18
  $region19: #{ccot_forward.22} parent=0 // pred_check_branch
    %21 = sbr.rel (%p19) target = $region21
  $region20: #{ccot_forward.22} parent=0 // pred_region
    %v22 = vld [vmem:[%s3] sm:$0xf]
    %v23 = vld [vmem:[%s3 + $0x4] sm:$0xf]
    %v24 = vld [vmem:[%s3 + $0x8] sm:$0xf]
    %v25 = vunpack.c.l.bf16 %v22
    %v26 = vunpack.c.l.bf16 %v23
    %v27 = vunpack.c.l.bf16 %v24
    %28 = vst [vmem:[#allocation2] sm:$0xff] %v25
    %29 = vst [vmem:[#allocation2 + $0x8] sm:$0xff] %v26
    %30 = vst [vmem:[#allocation2 + $0x10] sm:$0xff] %v27
  $region21: #{ccot_forward.22} parent=0 // pred_fallthru
    _
  %v31 = vld [vmem:[#allocation2] sm:$0xff]
  %v32 = vld [vmem:[#allocation2 + $0x8] sm:$0xff]
  %v33 = vld [vmem:[#allocation2 + $0x10] sm:$0xff]
  %v34 = vld [vmem:[%s0] sm:$0xff]
  %v35 = vld [vmem:[%s0 + $0x8] sm:$0xff]
  %v36 = vld [vmem:[%s0 + $0x10] sm:$0xff]
  %v37 = vld [vmem:[%s0 + $0x18] sm:$0xff]
  %v38 = vld [vmem:[%s0 + $0x20] sm:$0xff]
  %v39 = vld [vmem:[%s0 + $0x28] sm:$0xff]
  %v40 = vld [vmem:[%s1] sm:$0xf]
  %v41 = vld [vmem:[%s1 + $0x4] sm:$0xf]
  %v42 = vld [vmem:[%s1 + $0x8] sm:$0xf]
  %v43 = vld [vmem:[%s1 + $0xc] sm:$0xf]
  %v44 = vld [vmem:[%s1 + $0x10] sm:$0xf]
  %v45 = vld [vmem:[%s1 + $0x14] sm:$0xf]
  %v46 = vld [vmem:[%s1 + $0x18] sm:$0xf]
  %v47 = vld [vmem:[%s1 + $0x1c] sm:$0xf]
  %v48 = vld [vmem:[%s1 + $0x20] sm:$0xf]
  %v49 = vld [vmem:[%s1 + $0x24] sm:$0xf]
  %v50 = vld [vmem:[%s1 + $0x28] sm:$0xf]
  %v51 = vld [vmem:[%s1 + $0x2c] sm:$0xf]
  %v52 = vld [vmem:[%s1 + $0x30] sm:$0xf]
  %v53 = vld [vmem:[%s1 + $0x34] sm:$0xf]
  %v54 = vld [vmem:[%s1 + $0x38] sm:$0xf]
  %v55 = vld [vmem:[%s1 + $0x3c] sm:$0xf]
  %v56 = vld [vmem:[%s1 + $0x40] sm:$0xf]
  %v57 = vld [vmem:[%s1 + $0x44] sm:$0xf]
  %v58 = vld [vmem:[%s1 + $0x48] sm:$0xf]
  %v59 = vld [vmem:[%s1 + $0x4c] sm:$0xf]
  %v60 = vld [vmem:[%s1 + $0x50] sm:$0xf]
  %v61 = vld [vmem:[%s1 + $0x54] sm:$0xf]
  %v62 = vld [vmem:[%s1 + $0x58] sm:$0xf]
  %v63 = vld [vmem:[%s1 + $0x5c] sm:$0xf]
  %v64 = vld [vmem:[%s1 + $0x60] sm:$0xf]
  %v65 = vld [vmem:[%s1 + $0x64] sm:$0xf]
  %v66 = vld [vmem:[%s1 + $0x68] sm:$0xf]
  %v67 = vld [vmem:[%s1 + $0x6c] sm:$0xf]
  %v68 = vld [vmem:[%s1 + $0x70] sm:$0xf]
  %v69 = vld [vmem:[%s1 + $0x74] sm:$0xf]
  %v70 = vld [vmem:[%s1 + $0x78] sm:$0xf]
  %v71 = vld [vmem:[%s1 + $0x7c] sm:$0xf]
  %v72 = vld [vmem:[%s1 + $0x80] sm:$0xf]
  %v73 = vld [vmem:[%s1 + $0x84] sm:$0xf]
  %v74 = vld [vmem:[%s1 + $0x88] sm:$0xf]
  %v75 = vld [vmem:[%s1 + $0x8c] sm:$0xf]
  %v76 = vld [vmem:[%s1 + $0x90] sm:$0xf]
  %v77 = vld [vmem:[%s1 + $0x94] sm:$0xf]
  %v78 = vld [vmem:[%s1 + $0x98] sm:$0xf]
  %v79 = vld [vmem:[%s1 + $0x9c] sm:$0xf]
  %v80 = vld [vmem:[%s1 + $0xa0] sm:$0xf]
  %v81 = vld [vmem:[%s1 + $0xa4] sm:$0xf]
  %v82 = vld [vmem:[%s1 + $0xa8] sm:$0xf]
  %v83 = vld [vmem:[%s1 + $0xac] sm:$0xf]
  %v84 = vld [vmem:[%s1 + $0xb0] sm:$0xf]
  %v85 = vld [vmem:[%s1 + $0xb4] sm:$0xf]
  %v86 = vld [vmem:[%s1 + $0xb8] sm:$0xf]
  %v87 = vld [vmem:[%s1 + $0xbc] sm:$0xf]
  %v88 = vld [vmem:[%s1 + $0xc0] sm:$0xf]
  %v89 = vld [vmem:[%s1 + $0xc4] sm:$0xf]
  %v90 = vld [vmem:[%s1 + $0xc8] sm:$0xf]
  %v91 = vld [vmem:[%s1 + $0xcc] sm:$0xf]
  %v92 = vld [vmem:[%s1 + $0xd0] sm:$0xf]
  %v93 = vld [vmem:[%s1 + $0xd4] sm:$0xf]
  %v94 = vld [vmem:[%s1 + $0xd8] sm:$0xf]
  %v95 = vld [vmem:[%s1 + $0xdc] sm:$0xf]
  %v96 = vld [vmem:[%s1 + $0xe0] sm:$0xf]
  %v97 = vld [vmem:[%s1 + $0xe4] sm:$0xf]
  %v98 = vld [vmem:[%s1 + $0xe8] sm:$0xf]
  %v99 = vld [vmem:[%s1 + $0xec] sm:$0xf]
  %v100 = vld [vmem:[%s1 + $0xf0] sm:$0xf]
  %v101 = vld [vmem:[%s1 + $0xf4] sm:$0xf]
  %v102 = vld [vmem:[%s1 + $0xf8] sm:$0xf]
  %v103 = vld [vmem:[%s1 + $0xfc] sm:$0xf]
  %v110 = vunpack.c.l.b16 %v34
  %v111 = vunpack.c.h.b16 %v34
  %v112 = vunpack.c.l.b16 %v35
  %v113 = vunpack.c.h.b16 %v35
  %v114 = vunpack.c.l.b16 %v36
  %v115 = vunpack.c.h.b16 %v36
  %v116 = vunpack.c.l.b16 %v37
  %v117 = vunpack.c.h.b16 %v37
  %v118 = vunpack.c.l.b16 %v38
  %v119 = vunpack.c.h.b16 %v38
  %v120 = vunpack.c.l.b16 %v39
  %v121 = vunpack.c.h.b16 %v39
  %v122 = vpack.c.b16 %v114, %v110
  %v123 = vpack.c.b16 %v115, %v111
  %v124 = vpack.c.b16 %v116, %v112
  %v125 = vpack.c.b16 %v117, %v113
  %v126 = vpack.c.b16 %v118, %v118
  %v127 = vpack.c.b16 %v119, %v119
  %v128 = vpack.c.b16 %v120, %v120
  %v129 = vpack.c.b16 %v121, %v121
  %v202 = vunpack.c.l.b16 %v40
  %v203 = vunpack.c.l.b16 %v41
  %v204 = vunpack.c.l.b16 %v42
  %v205 = vunpack.c.l.b16 %v43
  %v206 = vunpack.c.l.b16 %v44
  %v207 = vunpack.c.l.b16 %v45
  %v208 = vunpack.c.l.b16 %v46
  %v209 = vunpack.c.l.b16 %v47
  %v210 = vunpack.c.l.b16 %v48
  %v211 = vunpack.c.l.b16 %v49
  %v212 = vunpack.c.l.b16 %v50
  %v213 = vunpack.c.l.b16 %v51
  %v214 = vunpack.c.l.b16 %v52
  %v215 = vunpack.c.l.b16 %v53
  %v216 = vunpack.c.l.b16 %v54
  %v217 = vunpack.c.l.b16 %v55
  %v218 = vunpack.c.l.b16 %v56
  %v219 = vunpack.c.l.b16 %v57
  %v220 = vunpack.c.l.b16 %v58
  %v221 = vunpack.c.l.b16 %v59
  %v222 = vunpack.c.l.b16 %v60
  %v223 = vunpack.c.l.b16 %v61
  %v224 = vunpack.c.l.b16 %v62
  %v225 = vunpack.c.l.b16 %v63
  %v226 = vunpack.c.l.b16 %v64
  %v227 = vunpack.c.l.b16 %v65
  %v228 = vunpack.c.l.b16 %v66
  %v229 = vunpack.c.l.b16 %v67
  %v230 = vunpack.c.l.b16 %v68
  %v231 = vunpack.c.l.b16 %v69
  %v232 = vunpack.c.l.b16 %v70
  %v233 = vunpack.c.l.b16 %v71
  %v234 = vunpack.c.l.b16 %v72
  %v235 = vunpack.c.l.b16 %v73
  %v236 = vunpack.c.l.b16 %v74
  %v237 = vunpack.c.l.b16 %v75
  %v238 = vunpack.c.l.b16 %v76
  %v239 = vunpack.c.l.b16 %v77
  %v240 = vunpack.c.l.b16 %v78
  %v241 = vunpack.c.l.b16 %v79
  %v242 = vunpack.c.l.b16 %v80
  %v243 = vunpack.c.l.b16 %v81
  %v244 = vunpack.c.l.b16 %v82
  %v245 = vunpack.c.l.b16 %v83
  %v246 = vunpack.c.l.b16 %v84
  %v247 = vunpack.c.l.b16 %v85
  %v248 = vunpack.c.l.b16 %v86
  %v249 = vunpack.c.l.b16 %v87
  %v250 = vunpack.c.l.b16 %v88
  %v251 = vunpack.c.l.b16 %v89
  %v252 = vunpack.c.l.b16 %v90
  %v253 = vunpack.c.l.b16 %v91
  %v254 = vunpack.c.l.b16 %v92
  %v255 = vunpack.c.l.b16 %v93
  %v256 = vunpack.c.l.b16 %v94
  %v257 = vunpack.c.l.b16 %v95
  %v258 = vunpack.c.l.b16 %v96
  %v259 = vunpack.c.l.b16 %v97
  %v260 = vunpack.c.l.b16 %v98
  %v261 = vunpack.c.l.b16 %v99
  %v262 = vunpack.c.l.b16 %v100
  %v263 = vunpack.c.l.b16 %v101
  %v264 = vunpack.c.l.b16 %v102
  %v265 = vunpack.c.l.b16 %v103
  %v266 = vpack.c.b16 %v203, %v202
  %v267 = vpack.c.b16 %v205, %v204
  %v268 = vpack.c.b16 %v207, %v206
  %v269 = vpack.c.b16 %v209, %v208
  %v270 = vpack.c.b16 %v211, %v210
  %v271 = vpack.c.b16 %v213, %v212
  %v272 = vpack.c.b16 %v215, %v214
  %v273 = vpack.c.b16 %v217, %v216
  %v274 = vpack.c.b16 %v219, %v218
  %v275 = vpack.c.b16 %v221, %v220
  %v276 = vpack.c.b16 %v223, %v222
  %v277 = vpack.c.b16 %v225, %v224
  %v278 = vpack.c.b16 %v227, %v226
  %v279 = vpack.c.b16 %v229, %v228
  %v280 = vpack.c.b16 %v231, %v230
  %v281 = vpack.c.b16 %v233, %v232
  %v282 = vpack.c.b16 %v235, %v234
  %v283 = vpack.c.b16 %v237, %v236
  %v284 = vpack.c.b16 %v239, %v238
  %v285 = vpack.c.b16 %v241, %v240
  %v286 = vpack.c.b16 %v243, %v242
  %v287 = vpack.c.b16 %v245, %v244
  %v288 = vpack.c.b16 %v247, %v246
  %v289 = vpack.c.b16 %v249, %v248
  %v290 = vpack.c.b16 %v251, %v250
  %v291 = vpack.c.b16 %v253, %v252
  %v292 = vpack.c.b16 %v255, %v254
  %v293 = vpack.c.b16 %v257, %v256
  %v294 = vpack.c.b16 %v259, %v258
  %v295 = vpack.c.b16 %v261, %v260
  %v296 = vpack.c.b16 %v263, %v262
  %v297 = vpack.c.b16 %v265, %v264
  %330 = vmatprep.subr.bf16.mxu0 0
  %331 = vmatpush1.bf16.msra.mxu0 %v266
  %332 = vmatprep.subr.bf16.mxu0 0
  %333 = vmatpush1.bf16.msra.mxu0 %v267
  %334 = vmatprep.subr.bf16.mxu0 0
  %335 = vmatpush1.bf16.msra.mxu0 %v268
  %336 = vmatprep.subr.bf16.mxu0 0
  %337 = vmatpush1.bf16.msra.mxu0 %v269
  %338 = vmatprep.subr.bf16.mxu0 0
  %339 = vmatpush1.bf16.msra.mxu0 %v270
  %340 = vmatprep.subr.bf16.mxu0 0
  %341 = vmatpush1.bf16.msra.mxu0 %v271
  %342 = vmatprep.subr.bf16.mxu0 0
  %343 = vmatpush1.bf16.msra.mxu0 %v272
  %344 = vmatprep.subr.bf16.mxu0 0
  %345 = vmatpush1.bf16.msra.mxu0 %v273
  %346 = vmatprep.subr.bf16.mxu0 0
  %347 = vmatpush1.bf16.msra.mxu0 %v274
  %348 = vmatprep.subr.bf16.mxu0 0
  %349 = vmatpush1.bf16.msra.mxu0 %v275
  %350 = vmatprep.subr.bf16.mxu0 0
  %351 = vmatpush1.bf16.msra.mxu0 %v276
  %352 = vmatprep.subr.bf16.mxu0 0
  %353 = vmatpush1.bf16.msra.mxu0 %v277
  %354 = vmatprep.subr.bf16.mxu0 0
  %355 = vmatpush1.bf16.msra.mxu0 %v278
  %356 = vmatprep.subr.bf16.mxu0 0
  %357 = vmatpush1.bf16.msra.mxu0 %v279
  %358 = vmatprep.subr.bf16.mxu0 0
  %359 = vmatpush1.bf16.msra.mxu0 %v280
  %360 = vmatprep.subr.bf16.mxu0 0
  %361 = vmatpush1.bf16.msra.mxu0 %v281
  %362 = vmatprep.mubr.bf16.mxu0 %v123
  %363 = vmatmul.mubr.bf16.gmra.mrb[0].mxu0 %v122
  %v364 = vpop.f32.mrb[0].mxu0
  %v365 = vadd.f32 0.0, %v364
  %v366 = vpop.f32.mrb[0].mxu0
  %v367 = vpop.f32.mrb[0].mxu0
  %v368 = vadd.f32 0.0, %v367
  %v369 = vpop.f32.mrb[0].mxu0
  %370 = vmatprep.mubr.bf16.mxu0 %v127
  %371 = vmatmul.mubr.bf16.gmra.mrb[0].mxu0 %v126
  %v372 = vpop.f32.mrb[0].mxu0
  %v373 = vadd.f32 0.0, %v372
  %v374 = vpop.f32.mrb[0].mxu0
  %v375 = vpop.f32.mrb[0].mxu0
  %v376 = vpop.f32.mrb[0].mxu0
  %377 = vdwg.mxu0
  %378 = vmatprep.subr.bf16.mxu0 0
  %379 = vmatpush1.bf16.msra.mxu0 %v282
  %380 = vmatprep.subr.bf16.mxu0 0
  %381 = vmatpush1.bf16.msra.mxu0 %v283
  %382 = vmatprep.subr.bf16.mxu0 0
  %383 = vmatpush1.bf16.msra.mxu0 %v284
  %384 = vmatprep.subr.bf16.mxu0 0
  %385 = vmatpush1.bf16.msra.mxu0 %v285
  %386 = vmatprep.subr.bf16.mxu0 0
  %387 = vmatpush1.bf16.msra.mxu0 %v286
  %388 = vmatprep.subr.bf16.mxu0 0
  %389 = vmatpush1.bf16.msra.mxu0 %v287
  %390 = vmatprep.subr.bf16.mxu0 0
  %391 = vmatpush1.bf16.msra.mxu0 %v288
  %392 = vmatprep.subr.bf16.mxu0 0
  %393 = vmatpush1.bf16.msra.mxu0 %v289
  %394 = vmatprep.subr.bf16.mxu0 0
  %395 = vmatpush1.bf16.msra.mxu0 %v290
  %396 = vmatprep.subr.bf16.mxu0 0
  %397 = vmatpush1.bf16.msra.mxu0 %v291
  %398 = vmatprep.subr.bf16.mxu0 0
  %399 = vmatpush1.bf16.msra.mxu0 %v292
  %400 = vmatprep.subr.bf16.mxu0 0
  %401 = vmatpush1.bf16.msra.mxu0 %v293
  %402 = vmatprep.subr.bf16.mxu0 0
  %403 = vmatpush1.bf16.msra.mxu0 %v294
  %404 = vmatprep.subr.bf16.mxu0 0
  %405 = vmatpush1.bf16.msra.mxu0 %v295
  %406 = vmatprep.subr.bf16.mxu0 0
  %407 = vmatpush1.bf16.msra.mxu0 %v296
  %408 = vmatprep.subr.bf16.mxu0 0
  %409 = vmatpush1.bf16.msra.mxu0 %v297
  %410 = vmatprep.mubr.bf16.mxu0 %v125
  %411 = vmatmul.mubr.bf16.gmra.mrb[0].mxu0 %v124
  %v412 = vpop.f32.mrb[0].mxu0
  %v413 = vadd.f32 %v365, %v412
  %v414 = vpop.f32.mrb[0].mxu0
  %v415 = vpop.f32.mrb[0].mxu0
  %v416 = vadd.f32 %v368, %v415
  %v417 = vpop.f32.mrb[0].mxu0
  %418 = vmatprep.mubr.bf16.mxu0 %v129
  %419 = vmatmul.mubr.bf16.gmra.mrb[0].mxu0 %v128
  %v420 = vpop.f32.mrb[0].mxu0
  %v421 = vadd.f32 %v373, %v420
  %v422 = vpop.f32.mrb[0].mxu0
  %v423 = vpop.f32.mrb[0].mxu0
  %v424 = vpop.f32.mrb[0].mxu0
  %425 = vdwg.mxu0
  %v426 = vadd.f32 %v31, %v413
  %v427 = vadd.f32 %v32, %v416
  %v428 = vadd.f32 %v33, %v421
  %429 = vst [vmem:[#allocation2] sm:$0xff] %v426
  %430 = vst [vmem:[#allocation2 + $0x8] sm:$0xff] %v427
  %431 = vst [vmem:[#allocation2 + $0x10] sm:$0xff] %v428
  // Predicated region
  $region22: #{ccot_forward.22} parent=0 // pred_check
    %p432 = pneg %p18
  $region23: #{ccot_forward.22} parent=0 // pred_check_branch
    %434 = sbr.rel (%p432) target = $region25
  $region24: #{ccot_forward.22} parent=0 // pred_region
    %v435 = vld [vmem:[#allocation2] sm:$0xff]
    %v436 = vld [vmem:[#allocation2 + $0x8] sm:$0xff]
    %v437 = vld [vmem:[#allocation2 + $0x10] sm:$0xff]
    %v438 = vld [vmem:[%s2] sm:$0x1]
    %v440 = vlaneseq
    %v441 = vshrl.u32 %v440, 7
    %v442 = vsub.s32 0, %v441
    %v443 = vrot.slane %v438, %v442
    %v445 = vadd.f32 %v435, %v443
    %v446 = vadd.f32 %v436, %v443
    %v447 = vadd.f32 %v437, %v443
    %v448 = vpack.c.bf16 %v446, %v445
    %v449 = vpack.c.bf16 %v447, %v447
    %v452 = vunpack.c.l.b16 %v448
    %v453 = vunpack.c.h.b16 %v448
    %v454 = vunpack.c.l.b16 %v449
    %v455 = vpack.c.b16 %v452, %v452
    %v456 = vpack.c.b16 %v453, %v453
    %v457 = vpack.c.b16 %v454, %v454
    %461 = vst [vmem:[%s4] sm:$0xf] %v455
    %462 = vst [vmem:[%s4 + $0x4] sm:$0xf] %v456
    %463 = vst [vmem:[%s4 + $0x8] sm:$0xf] %v457
  $region25: #{ccot_forward.22} parent=0 // pred_fallthru
    _
  // Predicated region
  $region26: #{ccot_forward.22} parent=0 // pred_check
    _
  $region27: #{ccot_forward.22} parent=0 // pred_check_branch
    %465 = sbr.rel (0) target = $region29
  $region28: #{ccot_forward.22} parent=0 // pred_region
    _
  $region29: #{ccot_forward.22} parent=0 // pred_fallthru
    _
  // Predicated region
  $region30: #{ccot_forward.22} parent=0 // pred_check
    _
  $region31: #{ccot_forward.22} parent=0 // pred_check_branch
    %467 = sbr.rel (0) target = $region33
  $region32: #{ccot_forward.22} parent=0 // pred_region
    _
  $region33: #{ccot_forward.22} parent=0 // pred_fallthru
    _

// kernel: ccot_forward.29
$region0: #{ccot_forward.29}
  #allocation0 [shape = 'u32[]', space=smem, size = 0x4, offset = 0x4, fixed_abs, tag = 'smem constant byte address 0x4 - core index']
  #allocation1 [shape = 'u32[144,128]{1,0:T(1,128)}', space=vmem, size = 0x12000, scoped, tag = 'internal scratch']
  #allocation2 [shape = 'bf16[24,128]{1,0:T(8,128)(2,1)}', space=vmem, size = 0x1800, scoped, tag = 'scratch operand']
  %s0 = inlined_call_operand.vmem [shape: bf16[24,128], index: 0, kind: input, shape index: {}]
  %s1 = inlined_call_operand.vmem [shape: f32[1,128], index: 1, kind: input, shape index: {}]
  %s2 = inlined_call_operand.vmem [shape: f32[1,128], index: 2, kind: input, shape index: {}]
  %s3 = inlined_call_operand.vmem [shape: bf16[128,128], index: 3, kind: input, shape index: {}]
  %s4 = inlined_call_operand.vmem [shape: f32[1,128], index: 4, kind: input, shape index: {}]
  %s5 = inlined_call_operand.vmem [shape: bf16[24,128], index: 5, kind: output, shape index: {}]
  %s6 = sld [smem:[#allocation0]]
  $region34: #{ccot_forward.29} parent=0
    _
  %s8 = ssub.s32 1, %s6
  %s9 = scalar_select 0, %s8, %s6
  // Predicated region
  $region2: #{ccot_forward.29} parent=0 // pred_check
    _
  $region3: #{ccot_forward.29} parent=0 // pred_check_branch
    %11 = sbr.rel (0) target = $region5
  $region4: #{ccot_forward.29} parent=0 // pred_region
    _
  $region5: #{ccot_forward.29} parent=0 // pred_fallthru
    _
  // Predicated region
  $region6: #{ccot_forward.29} parent=0 // pred_check
    _
  $region7: #{ccot_forward.29} parent=0 // pred_check_branch
    %13 = sbr.rel (0) target = $region9
  $region8: #{ccot_forward.29} parent=0 // pred_region
    _
  $region9: #{ccot_forward.29} parent=0 // pred_fallthru
    _
  // Predicated region
  $region10: #{ccot_forward.29} parent=0 // pred_check
    _
  $region11: #{ccot_forward.29} parent=0 // pred_check_branch
    %15 = sbr.rel (0) target = $region13
  $region12: #{ccot_forward.29} parent=0 // pred_region
    _
  $region13: #{ccot_forward.29} parent=0 // pred_fallthru
    _
  // Predicated region
  $region14: #{ccot_forward.29} parent=0 // pred_check
    _
  $region15: #{ccot_forward.29} parent=0 // pred_check_branch
    %17 = sbr.rel (0) target = $region17
  $region16: #{ccot_forward.29} parent=0 // pred_region
    _
  $region17: #{ccot_forward.29} parent=0 // pred_fallthru
    _
  // Predicated region
  $region18: #{ccot_forward.29} parent=0 // pred_check
    _
  $region19: #{ccot_forward.29} parent=0 // pred_check_branch
    %19 = sbr.rel (0) target = $region21
  $region20: #{ccot_forward.29} parent=0 // pred_region
    _
  $region21: #{ccot_forward.29} parent=0 // pred_fallthru
    _
  %p21 = scmp.eq.s32.totalorder 0, 0
  // Predicated region
  $region22: #{ccot_forward.29} parent=0 // pred_check
    %p22 = pneg %p21
  $region23: #{ccot_forward.29} parent=0 // pred_check_branch
    %24 = sbr.rel (%p22) target = $region25
  $region24: #{ccot_forward.29} parent=0 // pred_region
    %v25 = vld [vmem:[%s0] sm:$0xf]
    %v26 = vld [vmem:[%s0 + $0x4] sm:$0xf]
    %v27 = vld [vmem:[%s0 + $0x8] sm:$0xf]
    %v28 = vunpack.c.l.bf16 %v25
    %v29 = vunpack.c.l.bf16 %v26
    %v30 = vunpack.c.l.bf16 %v27
    %31 = vadd.xlane.f32.xlu0 %v28
    %v32 = vpop.xlane.xlu0 %31
    %33 = vadd.xlane.f32.xlu0 %v29
    %v34 = vpop.xlane.xlu0 %33
    %35 = vadd.xlane.f32.xlu0 %v30
    %v36 = vpop.xlane.xlu0 %35
    %v37 = vmul.f32 %v32, 0.0078125
    %v38 = vmul.f32 %v34, 0.0078125
    %v39 = vmul.f32 %v36, 0.0078125
    %v40 = vsub.f32 %v28, %v37
    %v41 = vsub.f32 %v29, %v38
    %v42 = vsub.f32 %v30, %v39
    %v43 = vmul.f32 %v40, %v40
    %v44 = vmul.f32 %v41, %v41
    %v45 = vmul.f32 %v42, %v42
    %46 = vadd.xlane.f32.xlu0 %v43
    %v47 = vpop.xlane.xlu0 %46
    %48 = vadd.xlane.f32.xlu0 %v44
    %v49 = vpop.xlane.xlu0 %48
    %50 = vadd.xlane.f32.xlu0 %v45
    %v51 = vpop.xlane.xlu0 %50
    %v52 = vmul.f32 %v47, 0.0078125
    %v53 = vmul.f32 %v49, 0.0078125
    %v54 = vmul.f32 %v51, 0.0078125
    %v55 = vadd.f32 %v52, 1e-05
    %v56 = vadd.f32 %v53, 1e-05
    %v57 = vadd.f32 %v54, 1e-05
    %v58 = vrsqrt.pop %v55
    %v59 = vrsqrt.pop %v56
    %v60 = vrsqrt.pop %v57
    %v61 = vmul.f32 %v40, %v58
    %v62 = vmul.f32 %v41, %v59
    %v63 = vmul.f32 %v42, %v60
    %v64 = vld [vmem:[%s1] sm:$0x1]
    %v66 = vlaneseq
    %v67 = vshrl.u32 %v66, 7
    %v68 = vsub.s32 0, %v67
    %v69 = vrot.slane %v64, %v68
    %v71 = vmul.f32 %v61, %v69
    %v72 = vmul.f32 %v62, %v69
    %v73 = vmul.f32 %v63, %v69
    %v74 = vld [vmem:[%s2] sm:$0x1]
    %v76 = vlaneseq
    %v77 = vshrl.u32 %v76, 7
    %v78 = vsub.s32 0, %v77
    %v79 = vrot.slane %v74, %v78
    %v81 = vadd.f32 %v71, %v79
    %v82 = vadd.f32 %v72, %v79
    %v83 = vadd.f32 %v73, %v79
    %v84 = vpack.c.bf16 %v82, %v81
    %v85 = vpack.c.bf16 %v83, %v83
    %v88 = vunpack.c.l.b16 %v84
    %v89 = vunpack.c.h.b16 %v84
    %v90 = vunpack.c.l.b16 %v85
    %v91 = vpack.c.b16 %v88, %v88
    %v92 = vpack.c.b16 %v89, %v89
    %v93 = vpack.c.b16 %v90, %v90
    %97 = vst [vmem:[#allocation2] sm:$0xf] %v91
    %98 = vst [vmem:[#allocation2 + $0x4] sm:$0xf] %v92
    %99 = vst [vmem:[#allocation2 + $0x8] sm:$0xf] %v93
  $region25: #{ccot_forward.29} parent=0 // pred_fallthru
    _
  %v100 = vld [vmem:[#allocation2] sm:$0xf]
  %v101 = vld [vmem:[#allocation2 + $0x4] sm:$0xf]
  %v102 = vld [vmem:[#allocation2 + $0x8] sm:$0xf]
  %v103 = vld [vmem:[%s3] sm:$0xf]
  %v104 = vld [vmem:[%s3 + $0x4] sm:$0xf]
  %v105 = vld [vmem:[%s3 + $0x8] sm:$0xf]
  %v106 = vld [vmem:[%s3 + $0xc] sm:$0xf]
  %v107 = vld [vmem:[%s3 + $0x10] sm:$0xf]
  %v108 = vld [vmem:[%s3 + $0x14] sm:$0xf]
  %v109 = vld [vmem:[%s3 + $0x18] sm:$0xf]
  %v110 = vld [vmem:[%s3 + $0x1c] sm:$0xf]
  %v111 = vld [vmem:[%s3 + $0x20] sm:$0xf]
  %v112 = vld [vmem:[%s3 + $0x24] sm:$0xf]
  %v113 = vld [vmem:[%s3 + $0x28] sm:$0xf]
  %v114 = vld [vmem:[%s3 + $0x2c] sm:$0xf]
  %v115 = vld [vmem:[%s3 + $0x30] sm:$0xf]
  %v116 = vld [vmem:[%s3 + $0x34] sm:$0xf]
  %v117 = vld [vmem:[%s3 + $0x38] sm:$0xf]
  %v118 = vld [vmem:[%s3 + $0x3c] sm:$0xf]
  %v119 = vld [vmem:[%s4] sm:$0x1]
  %v121 = vlaneseq
  %v122 = vshrl.u32 %v121, 7
  %v123 = vsub.s32 0, %v122
  %v124 = vrot.slane %v119, %v123
  %v129 = vunpack.c.l.b16 %v100
  %v130 = vunpack.c.l.b16 %v101
  %v131 = vunpack.c.l.b16 %v102
  %v132 = vpack.c.b16 %v130, %v129
  %v133 = vpack.c.b16 %v131, %v131
  %v152 = vunpack.c.l.b16 %v103
  %v153 = vunpack.c.l.b16 %v104
  %v154 = vunpack.c.l.b16 %v105
  %v155 = vunpack.c.l.b16 %v106
  %v156 = vunpack.c.l.b16 %v107
  %v157 = vunpack.c.l.b16 %v108
  %v158 = vunpack.c.l.b16 %v109
  %v159 = vunpack.c.l.b16 %v110
  %v160 = vunpack.c.l.b16 %v111
  %v161 = vunpack.c.l.b16 %v112
  %v162 = vunpack.c.l.b16 %v113
  %v163 = vunpack.c.l.b16 %v114
  %v164 = vunpack.c.l.b16 %v115
  %v165 = vunpack.c.l.b16 %v116
  %v166 = vunpack.c.l.b16 %v117
  %v167 = vunpack.c.l.b16 %v118
  %v168 = vpack.c.b16 %v153, %v152
  %v169 = vpack.c.b16 %v155, %v154
  %v170 = vpack.c.b16 %v157, %v156
  %v171 = vpack.c.b16 %v159, %v158
  %v172 = vpack.c.b16 %v161, %v160
  %v173 = vpack.c.b16 %v163, %v162
  %v174 = vpack.c.b16 %v165, %v164
  %v175 = vpack.c.b16 %v167, %v166
  %184 = vmatprep.subr.bf16.mxu0 0
  %185 = vmatpush1.bf16.msra.mxu0 %v168
  %186 = vmatprep.subr.bf16.mxu0 0
  %187 = vmatpush1.bf16.msra.mxu0 %v169
  %188 = vmatprep.subr.bf16.mxu0 0
  %189 = vmatpush1.bf16.msra.mxu0 %v170
  %190 = vmatprep.subr.bf16.mxu0 0
  %191 = vmatpush1.bf16.msra.mxu0 %v171
  %192 = vmatprep.subr.bf16.mxu0 0
  %193 = vmatpush1.bf16.msra.mxu0 %v172
  %194 = vmatprep.subr.bf16.mxu0 0
  %195 = vmatpush1.bf16.msra.mxu0 %v173
  %196 = vmatprep.subr.bf16.mxu0 0
  %197 = vmatpush1.bf16.msra.mxu0 %v174
  %198 = vmatprep.subr.bf16.mxu0 0
  %199 = vmatpush1.bf16.msra.mxu0 %v175
  %200 = vmatprep.subr.bf16.mxu0 0
  %201 = vmatpush1.bf16.msra.mxu0 0
  %202 = vmatprep.subr.bf16.mxu0 0
  %203 = vmatpush1.bf16.msra.mxu0 0
  %204 = vmatprep.subr.bf16.mxu0 0
  %205 = vmatpush1.bf16.msra.mxu0 0
  %206 = vmatprep.subr.bf16.mxu0 0
  %207 = vmatpush1.bf16.msra.mxu0 0
  %208 = vmatprep.subr.bf16.mxu0 0
  %209 = vmatpush1.bf16.msra.mxu0 0
  %210 = vmatprep.subr.bf16.mxu0 0
  %211 = vmatpush1.bf16.msra.mxu0 0
  %212 = vmatprep.subr.bf16.mxu0 0
  %213 = vmatpush1.bf16.msra.mxu0 0
  %214 = vmatprep.subr.bf16.mxu0 0
  %215 = vmatpush1.bf16.msra.mxu0 0
  %216 = vmatprep.mubr.bf16.mxu0 0
  %217 = vmatmul.mubr.bf16.gmra.mrb[0].mxu0 %v132
  %v218 = vpop.f32.mrb[0].mxu0
  %v219 = vadd.f32 %v124, %v218
  %v220 = vpop.f32.mrb[0].mxu0
  %v221 = vpop.f32.mrb[0].mxu0
  %v222 = vadd.f32 %v124, %v221
  %v223 = vpop.f32.mrb[0].mxu0
  %224 = vmatprep.mubr.bf16.mxu0 0
  %225 = vmatmul.mubr.bf16.gmra.mrb[0].mxu0 %v133
  %v226 = vpop.f32.mrb[0].mxu0
  %v227 = vadd.f32 %v124, %v226
  %v228 = vpop.f32.mrb[0].mxu0
  %v229 = vpop.f32.mrb[0].mxu0
  %v230 = vpop.f32.mrb[0].mxu0
  %231 = vdwg.mxu0
  %v232 = vpack.c.bf16 %v222, %v219
  %v233 = vpack.c.bf16 %v227, %v227
  %v236 = vunpack.c.l.b16 %v232
  %v237 = vunpack.c.h.b16 %v232
  %v238 = vunpack.c.l.b16 %v233
  %v239 = vpack.c.b16 %v236, %v236
  %v240 = vpack.c.b16 %v237, %v237
  %v241 = vpack.c.b16 %v238, %v238
  %245 = vst [vmem:[%s5] sm:$0xf] %v239
  %246 = vst [vmem:[%s5 + $0x4] sm:$0xf] %v240
  %247 = vst [vmem:[%s5 + $0x8] sm:$0xf] %v241
  // Predicated region
  $region26: #{ccot_forward.29} parent=0 // pred_check
    _
  $region27: #{ccot_forward.29} parent=0 // pred_check_branch
    %249 = sbr.rel (0) target = $region29
  $region28: #{ccot_forward.29} parent=0 // pred_region
    _
  $region29: #{ccot_forward.29} parent=0 // pred_fallthru
    _
  // Predicated region
  $region30: #{ccot_forward.29} parent=0 // pred_check
    _
  $region31: #{ccot_forward.29} parent=0 // pred_check_branch
    %251 = sbr.rel (0) target = $region33
  $region32: #{ccot_forward.29} parent=0 // pred_region
    _
  $region33: #{ccot_forward.29} parent=0 // pred_fallthru
    _

// kernel: ccot_forward.32
$region0: #{ccot_forward.32}
  #allocation0 [shape = 'u32[]', space=smem, size = 0x4, offset = 0x4, fixed_abs, tag = 'smem constant byte address 0x4 - core index']
  #allocation1 [shape = 'u32[144,128]{1,0:T(1,128)}', space=vmem, size = 0x12000, scoped, tag = 'internal scratch']
  #allocation2 [shape = 'f32[40,128]{1,0:T(8,128)}', space=vmem, size = 0x5000, scoped, tag = 'scratch operand']
  %s0 = inlined_call_operand.vmem [shape: bf16[40,128], index: 0, kind: input, shape index: {}]
  %s1 = inlined_call_operand.vmem [shape: bf16[128,128], index: 1, kind: input, shape index: {}]
  %s2 = inlined_call_operand.vmem [shape: f32[1,128], index: 2, kind: input, shape index: {}]
  %s3 = inlined_call_operand.vmem [shape: bf16[40,128], index: 3, kind: input, shape index: {}]
  %s4 = inlined_call_operand.vmem [shape: bf16[40,128], index: 4, kind: output, shape index: {}]
  %s5 = sld [smem:[#allocation0]]
  $region34: #{ccot_forward.32} parent=0
    _
  %s7 = ssub.s32 1, %s5
  %s8 = scalar_select 0, %s7, %s5
  // Predicated region
  $region2: #{ccot_forward.32} parent=0 // pred_check
    _
  $region3: #{ccot_forward.32} parent=0 // pred_check_branch
    %10 = sbr.rel (0) target = $region5
  $region4: #{ccot_forward.32} parent=0 // pred_region
    _
  $region5: #{ccot_forward.32} parent=0 // pred_fallthru
    _
  // Predicated region
  $region6: #{ccot_forward.32} parent=0 // pred_check
    _
  $region7: #{ccot_forward.32} parent=0 // pred_check_branch
    %12 = sbr.rel (0) target = $region9
  $region8: #{ccot_forward.32} parent=0 // pred_region
    _
  $region9: #{ccot_forward.32} parent=0 // pred_fallthru
    _
  // Predicated region
  $region10: #{ccot_forward.32} parent=0 // pred_check
    _
  $region11: #{ccot_forward.32} parent=0 // pred_check_branch
    %14 = sbr.rel (0) target = $region13
  $region12: #{ccot_forward.32} parent=0 // pred_region
    _
  $region13: #{ccot_forward.32} parent=0 // pred_fallthru
    _
  // Predicated region
  $region14: #{ccot_forward.32} parent=0 // pred_check
    _
  $region15: #{ccot_forward.32} parent=0 // pred_check_branch
    %16 = sbr.rel (0) target = $region17
  $region16: #{ccot_forward.32} parent=0 // pred_region
    _
  $region17: #{ccot_forward.32} parent=0 // pred_fallthru
    _
  %p18 = scmp.eq.s32.totalorder 0, 0
  // Predicated region
  $region18: #{ccot_forward.32} parent=0 // pred_check
    %p19 = pneg %p18
  $region19: #{ccot_forward.32} parent=0 // pred_check_branch
    %21 = sbr.rel (%p19) target = $region21
  $region20: #{ccot_forward.32} parent=0 // pred_region
    %v22 = vld [vmem:[%s3] sm:$0xf]
    %v23 = vld [vmem:[%s3 + $0x4] sm:$0xf]
    %v24 = vld [vmem:[%s3 + $0x8] sm:$0xf]
    %v25 = vld [vmem:[%s3 + $0xc] sm:$0xf]
    %v26 = vld [vmem:[%s3 + $0x10] sm:$0xf]
    %v27 = vunpack.c.l.bf16 %v22
    %v28 = vunpack.c.l.bf16 %v23
    %v29 = vunpack.c.l.bf16 %v24
    %v30 = vunpack.c.l.bf16 %v25
    %v31 = vunpack.c.l.bf16 %v26
    %32 = vst [vmem:[#allocation2] sm:$0xff] %v27
    %33 = vst [vmem:[#allocation2 + $0x8] sm:$0xff] %v28
    %34 = vst [vmem:[#allocation2 + $0x10] sm:$0xff] %v29
    %35 = vst [vmem:[#allocation2 + $0x18] sm:$0xff] %v30
    %36 = vst [vmem:[#allocation2 + $0x20] sm:$0xff] %v31
  $region21: #{ccot_forward.32} parent=0 // pred_fallthru
    _
  %v37 = vld [vmem:[#allocation2] sm:$0xff]
  %v38 = vld [vmem:[#allocation2 + $0x8] sm:$0xff]
  %v39 = vld [vmem:[#allocation2 + $0x10] sm:$0xff]
  %v40 = vld [vmem:[#allocation2 + $0x18] sm:$0xff]
  %v41 = vld [vmem:[#allocation2 + $0x20] sm:$0xff]
  %v42 = vld [vmem:[%s0] sm:$0xf]
  %v43 = vld [vmem:[%s0 + $0x4] sm:$0xf]
  %v44 = vld [vmem:[%s0 + $0x8] sm:$0xf]
  %v45 = vld [vmem:[%s0 + $0xc] sm:$0xf]
  %v46 = vld [vmem:[%s0 + $0x10] sm:$0xf]
  %v47 = vld [vmem:[%s1] sm:$0xf]
  %v48 = vld [vmem:[%s1 + $0x4] sm:$0xf]
  %v49 = vld [vmem:[%s1 + $0x8] sm:$0xf]
  %v50 = vld [vmem:[%s1 + $0xc] sm:$0xf]
  %v51 = vld [vmem:[%s1 + $0x10] sm:$0xf]
  %v52 = vld [vmem:[%s1 + $0x14] sm:$0xf]
  %v53 = vld [vmem:[%s1 + $0x18] sm:$0xf]
  %v54 = vld [vmem:[%s1 + $0x1c] sm:$0xf]
  %v55 = vld [vmem:[%s1 + $0x20] sm:$0xf]
  %v56 = vld [vmem:[%s1 + $0x24] sm:$0xf]
  %v57 = vld [vmem:[%s1 + $0x28] sm:$0xf]
  %v58 = vld [vmem:[%s1 + $0x2c] sm:$0xf]
  %v59 = vld [vmem:[%s1 + $0x30] sm:$0xf]
  %v60 = vld [vmem:[%s1 + $0x34] sm:$0xf]
  %v61 = vld [vmem:[%s1 + $0x38] sm:$0xf]
  %v62 = vld [vmem:[%s1 + $0x3c] sm:$0xf]
  %v68 = vunpack.c.l.b16 %v42
  %v69 = vunpack.c.l.b16 %v43
  %v70 = vunpack.c.l.b16 %v44
  %v71 = vunpack.c.l.b16 %v45
  %v72 = vunpack.c.l.b16 %v46
  %v73 = vpack.c.b16 %v69, %v68
  %v74 = vpack.c.b16 %v71, %v70
  %v75 = vpack.c.b16 %v72, %v72
  %v95 = vunpack.c.l.b16 %v47
  %v96 = vunpack.c.l.b16 %v48
  %v97 = vunpack.c.l.b16 %v49
  %v98 = vunpack.c.l.b16 %v50
  %v99 = vunpack.c.l.b16 %v51
  %v100 = vunpack.c.l.b16 %v52
  %v101 = vunpack.c.l.b16 %v53
  %v102 = vunpack.c.l.b16 %v54
  %v103 = vunpack.c.l.b16 %v55
  %v104 = vunpack.c.l.b16 %v56
  %v105 = vunpack.c.l.b16 %v57
  %v106 = vunpack.c.l.b16 %v58
  %v107 = vunpack.c.l.b16 %v59
  %v108 = vunpack.c.l.b16 %v60
  %v109 = vunpack.c.l.b16 %v61
  %v110 = vunpack.c.l.b16 %v62
  %v111 = vpack.c.b16 %v96, %v95
  %v112 = vpack.c.b16 %v98, %v97
  %v113 = vpack.c.b16 %v100, %v99
  %v114 = vpack.c.b16 %v102, %v101
  %v115 = vpack.c.b16 %v104, %v103
  %v116 = vpack.c.b16 %v106, %v105
  %v117 = vpack.c.b16 %v108, %v107
  %v118 = vpack.c.b16 %v110, %v109
  %127 = vmatprep.subr.bf16.mxu0 0
  %128 = vmatpush1.bf16.msra.mxu0 %v111
  %129 = vmatprep.subr.bf16.mxu0 0
  %130 = vmatpush1.bf16.msra.mxu0 %v112
  %131 = vmatprep.subr.bf16.mxu0 0
  %132 = vmatpush1.bf16.msra.mxu0 %v113
  %133 = vmatprep.subr.bf16.mxu0 0
  %134 = vmatpush1.bf16.msra.mxu0 %v114
  %135 = vmatprep.subr.bf16.mxu0 0
  %136 = vmatpush1.bf16.msra.mxu0 %v115
  %137 = vmatprep.subr.bf16.mxu0 0
  %138 = vmatpush1.bf16.msra.mxu0 %v116
  %139 = vmatprep.subr.bf16.mxu0 0
  %140 = vmatpush1.bf16.msra.mxu0 %v117
  %141 = vmatprep.subr.bf16.mxu0 0
  %142 = vmatpush1.bf16.msra.mxu0 %v118
  %143 = vmatprep.subr.bf16.mxu0 0
  %144 = vmatpush1.bf16.msra.mxu0 0
  %145 = vmatprep.subr.bf16.mxu0 0
  %146 = vmatpush1.bf16.msra.mxu0 0
  %147 = vmatprep.subr.bf16.mxu0 0
  %148 = vmatpush1.bf16.msra.mxu0 0
  %149 = vmatprep.subr.bf16.mxu0 0
  %150 = vmatpush1.bf16.msra.mxu0 0
  %151 = vmatprep.subr.bf16.mxu0 0
  %152 = vmatpush1.bf16.msra.mxu0 0
  %153 = vmatprep.subr.bf16.mxu0 0
  %154 = vmatpush1.bf16.msra.mxu0 0
  %155 = vmatprep.subr.bf16.mxu0 0
  %156 = vmatpush1.bf16.msra.mxu0 0
  %157 = vmatprep.subr.bf16.mxu0 0
  %158 = vmatpush1.bf16.msra.mxu0 0
  %159 = vmatprep.mubr.bf16.mxu0 0
  %160 = vmatmul.mubr.bf16.gmra.mrb[0].mxu0 %v73
  %v161 = vpop.f32.mrb[0].mxu0
  %v162 = vadd.f32 0.0, %v161
  %v163 = vpop.f32.mrb[0].mxu0
  %v164 = vpop.f32.mrb[0].mxu0
  %v165 = vadd.f32 0.0, %v164
  %v166 = vpop.f32.mrb[0].mxu0
  %167 = vmatprep.mubr.bf16.mxu0 0
  %168 = vmatmul.mubr.bf16.gmra.mrb[0].mxu0 %v74
  %v169 = vpop.f32.mrb[0].mxu0
  %v170 = vadd.f32 0.0, %v169
  %v171 = vpop.f32.mrb[0].mxu0
  %v172 = vpop.f32.mrb[0].mxu0
  %v173 = vadd.f32 0.0, %v172
  %v174 = vpop.f32.mrb[0].mxu0
  %175 = vmatprep.mubr.bf16.mxu0 0
  %176 = vmatmul.mubr.bf16.gmra.mrb[0].mxu0 %v75
  %v177 = vpop.f32.mrb[0].mxu0
  %v178 = vadd.f32 0.0, %v177
  %v179 = vpop.f32.mrb[0].mxu0
  %v180 = vpop.f32.mrb[0].mxu0
  %v181 = vpop.f32.mrb[0].mxu0
  %182 = vdwg.mxu0
  %v183 = vadd.f32 %v37, %v162
  %v184 = vadd.f32 %v38, %v165
  %v185 = vadd.f32 %v39, %v170
  %v186 = vadd.f32 %v40, %v173
  %v187 = vadd.f32 %v41, %v178
  %188 = vst [vmem:[#allocation2] sm:$0xff] %v183
  %189 = vst [vmem:[#allocation2 + $0x8] sm:$0xff] %v184
  %190 = vst [vmem:[#allocation2 + $0x10] sm:$0xff] %v185
  %191 = vst [vmem:[#allocation2 + $0x18] sm:$0xff] %v186
  %192 = vst [vmem:[#allocation2 + $0x20] sm:$0xff] %v187
  // Predicated region
  $region22: #{ccot_forward.32} parent=0 // pred_check
    %p193 = pneg %p18
  $region23: #{ccot_forward.32} parent=0 // pred_check_branch
    %195 = sbr.rel (%p193) target = $region25
  $region24: #{ccot_forward.32} parent=0 // pred_region
    %v196 = vld [vmem:[#allocation2] sm:$0xff]
    %v197 = vld [vmem:[#allocation2 + $0x8] sm:$0xff]
    %v198 = vld [vmem:[#allocation2 + $0x10] sm:$0xff]
    %v199 = vld [vmem:[#allocation2 + $0x18] sm:$0xff]
    %v200 = vld [vmem:[#allocation2 + $0x20] sm:$0xff]
    %v201 = vld [vmem:[%s2] sm:$0x1]
    %v203 = vlaneseq
    %v204 = vshrl.u32 %v203, 7
    %v205 = vsub.s32 0, %v204
    %v206 = vrot.slane %v201, %v205
    %v208 = vadd.f32 %v196, %v206
    %v209 = vadd.f32 %v197, %v206
    %v210 = vadd.f32 %v198, %v206
    %v211 = vadd.f32 %v199, %v206
    %v212 = vadd.f32 %v200, %v206
    %v213 = vpack.c.bf16 %v209, %v208
    %v214 = vpack.c.bf16 %v211, %v210
    %v215 = vpack.c.bf16 %v212, %v212
    %v219 = vunpack.c.l.b16 %v213
    %v220 = vunpack.c.h.b16 %v213
    %v221 = vunpack.c.l.b16 %v214
    %v222 = vunpack.c.h.b16 %v214
    %v223 = vunpack.c.l.b16 %v215
    %v224 = vpack.c.b16 %v219, %v219
    %v225 = vpack.c.b16 %v220, %v220
    %v226 = vpack.c.b16 %v221, %v221
    %v227 = vpack.c.b16 %v222, %v222
    %v228 = vpack.c.b16 %v223, %v223
    %234 = vst [vmem:[%s4] sm:$0xf] %v224
    %235 = vst [vmem:[%s4 + $0x4] sm:$0xf] %v225
    %236 = vst [vmem:[%s4 + $0x8] sm:$0xf] %v226
    %237 = vst [vmem:[%s4 + $0xc] sm:$0xf] %v227
    %238 = vst [vmem:[%s4 + $0x10] sm:$0xf] %v228
  $region25: #{ccot_forward.32} parent=0 // pred_fallthru
    _
  // Predicated region
  $region26: #{ccot_forward.32} parent=0 // pred_check
    _
  $region27: #{ccot_forward.32} parent=0 // pred_check_branch
    %240 = sbr.rel (0) target = $region29
  $region28: #{ccot_forward.32} parent=0 // pred_region
    _
  $region29: #{ccot_forward.32} parent=0 // pred_fallthru
    _
  // Predicated region
  $region30: #{ccot_forward.32} parent=0 // pred_check
    _
  $region31: #{ccot_forward.32} parent=0 // pred_check_branch
    %242 = sbr.rel (0) target = $region33
  $region32: #{ccot_forward.32} parent=0 // pred_region
    _
  $region33: #{ccot_forward.32} parent=0 // pred_fallthru
    _

// kernel: ccot_forward.30
$region0: #{ccot_forward.30}
  #allocation0 [shape = 'u32[]', space=smem, size = 0x4, offset = 0x4, fixed_abs, tag = 'smem constant byte address 0x4 - core index']
  #allocation1 [shape = 'u32[144,128]{1,0:T(1,128)}', space=vmem, size = 0x12000, scoped, tag = 'internal scratch']
  #allocation2 [shape = 'bf16[40,128]{1,0:T(8,128)(2,1)}', space=vmem, size = 0x2800, scoped, tag = 'scratch operand']
  %s0 = inlined_call_operand.vmem [shape: bf16[40,128], index: 0, kind: input, shape index: {}]
  %s1 = inlined_call_operand.vmem [shape: f32[1,128], index: 1, kind: input, shape index: {}]
  %s2 = inlined_call_operand.vmem [shape: f32[1,128], index: 2, kind: input, shape index: {}]
  %s3 = inlined_call_operand.vmem [shape: bf16[128,384], index: 3, kind: input, shape index: {}]
  %s4 = inlined_call_operand.vmem [shape: f32[1,384], index: 4, kind: input, shape index: {}]
  %s5 = inlined_call_operand.vmem [shape: bf16[40,384], index: 5, kind: output, shape index: {}]
  %s6 = sld [smem:[#allocation0]]
  $region34: #{ccot_forward.30} parent=0
    _
  %s8 = ssub.s32 1, %s6
  %s9 = scalar_select 0, %s8, %s6
  // Predicated region
  $region2: #{ccot_forward.30} parent=0 // pred_check
    _
  $region3: #{ccot_forward.30} parent=0 // pred_check_branch
    %11 = sbr.rel (0) target = $region5
  $region4: #{ccot_forward.30} parent=0 // pred_region
    _
  $region5: #{ccot_forward.30} parent=0 // pred_fallthru
    _
  // Predicated region
  $region6: #{ccot_forward.30} parent=0 // pred_check
    _
  $region7: #{ccot_forward.30} parent=0 // pred_check_branch
    %13 = sbr.rel (0) target = $region9
  $region8: #{ccot_forward.30} parent=0 // pred_region
    _
  $region9: #{ccot_forward.30} parent=0 // pred_fallthru
    _
  // Predicated region
  $region10: #{ccot_forward.30} parent=0 // pred_check
    _
  $region11: #{ccot_forward.30} parent=0 // pred_check_branch
    %15 = sbr.rel (0) target = $region13
  $region12: #{ccot_forward.30} parent=0 // pred_region
    _
  $region13: #{ccot_forward.30} parent=0 // pred_fallthru
    _
  // Predicated region
  $region14: #{ccot_forward.30} parent=0 // pred_check
    _
  $region15: #{ccot_forward.30} parent=0 // pred_check_branch
    %17 = sbr.rel (0) target = $region17
  $region16: #{ccot_forward.30} parent=0 // pred_region
    _
  $region17: #{ccot_forward.30} parent=0 // pred_fallthru
    _
  // Predicated region
  $region18: #{ccot_forward.30} parent=0 // pred_check
    _
  $region19: #{ccot_forward.30} parent=0 // pred_check_branch
    %19 = sbr.rel (0) target = $region21
  $region20: #{ccot_forward.30} parent=0 // pred_region
    _
  $region21: #{ccot_forward.30} parent=0 // pred_fallthru
    _
  %p21 = scmp.eq.s32.totalorder 0, 0
  // Predicated region
  $region22: #{ccot_forward.30} parent=0 // pred_check
    %p22 = pneg %p21
  $region23: #{ccot_forward.30} parent=0 // pred_check_branch
    %24 = sbr.rel (%p22) target = $region25
  $region24: #{ccot_forward.30} parent=0 // pred_region
    %v25 = vld [vmem:[%s0] sm:$0xf]
    %v26 = vld [vmem:[%s0 + $0x4] sm:$0xf]
    %v27 = vld [vmem:[%s0 + $0x8] sm:$0xf]
    %v28 = vld [vmem:[%s0 + $0xc] sm:$0xf]
    %v29 = vld [vmem:[%s0 + $0x10] sm:$0xf]
    %v30 = vunpack.c.l.bf16 %v25
    %v31 = vunpack.c.l.bf16 %v26
    %v32 = vunpack.c.l.bf16 %v27
    %v33 = vunpack.c.l.bf16 %v28
    %v34 = vunpack.c.l.bf16 %v29
    %35 = vadd.xlane.f32.xlu0 %v30
    %v36 = vpop.xlane.xlu0 %35
    %37 = vadd.xlane.f32.xlu0 %v31
    %v38 = vpop.xlane.xlu0 %37
    %39 = vadd.xlane.f32.xlu0 %v32
    %v40 = vpop.xlane.xlu0 %39
    %41 = vadd.xlane.f32.xlu0 %v33
    %v42 = vpop.xlane.xlu0 %41
    %43 = vadd.xlane.f32.xlu0 %v34
    %v44 = vpop.xlane.xlu0 %43
    %v45 = vmul.f32 %v36, 0.0078125
    %v46 = vmul.f32 %v38, 0.0078125
    %v47 = vmul.f32 %v40, 0.0078125
    %v48 = vmul.f32 %v42, 0.0078125
    %v49 = vmul.f32 %v44, 0.0078125
    %v50 = vsub.f32 %v30, %v45
    %v51 = vsub.f32 %v31, %v46
    %v52 = vsub.f32 %v32, %v47
    %v53 = vsub.f32 %v33, %v48
    %v54 = vsub.f32 %v34, %v49
    %v55 = vmul.f32 %v50, %v50
    %v56 = vmul.f32 %v51, %v51
    %v57 = vmul.f32 %v52, %v52
    %v58 = vmul.f32 %v53, %v53
    %v59 = vmul.f32 %v54, %v54
    %60 = vadd.xlane.f32.xlu0 %v55
    %v61 = vpop.xlane.xlu0 %60
    %62 = vadd.xlane.f32.xlu0 %v56
    %v63 = vpop.xlane.xlu0 %62
    %64 = vadd.xlane.f32.xlu0 %v57
    %v65 = vpop.xlane.xlu0 %64
    %66 = vadd.xlane.f32.xlu0 %v58
    %v67 = vpop.xlane.xlu0 %66
    %68 = vadd.xlane.f32.xlu0 %v59
    %v69 = vpop.xlane.xlu0 %68
    %v70 = vmul.f32 %v61, 0.0078125
    %v71 = vmul.f32 %v63, 0.0078125
    %v72 = vmul.f32 %v65, 0.0078125
    %v73 = vmul.f32 %v67, 0.0078125
    %v74 = vmul.f32 %v69, 0.0078125
    %v75 = vadd.f32 %v70, 1e-05
    %v76 = vadd.f32 %v71, 1e-05
    %v77 = vadd.f32 %v72, 1e-05
    %v78 = vadd.f32 %v73, 1e-05
    %v79 = vadd.f32 %v74, 1e-05
    %v80 = vrsqrt.pop %v75
    %v81 = vrsqrt.pop %v76
    %v82 = vrsqrt.pop %v77
    %v83 = vrsqrt.pop %v78
    %v84 = vrsqrt.pop %v79
    %v85 = vmul.f32 %v50, %v80
    %v86 = vmul.f32 %v51, %v81
    %v87 = vmul.f32 %v52, %v82
    %v88 = vmul.f32 %v53, %v83
    %v89 = vmul.f32 %v54, %v84
    %v90 = vld [vmem:[%s1] sm:$0x1]
    %v92 = vlaneseq
    %v93 = vshrl.u32 %v92, 7
    %v94 = vsub.s32 0, %v93
    %v95 = vrot.slane %v90, %v94
    %v97 = vmul.f32 %v85, %v95
    %v98 = vmul.f32 %v86, %v95
    %v99 = vmul.f32 %v87, %v95
    %v100 = vmul.f32 %v88, %v95
    %v101 = vmul.f32 %v89, %v95
    %v102 = vld [vmem:[%s2] sm:$0x1]
    %v104 = vlaneseq
    %v105 = vshrl.u32 %v104, 7
    %v106 = vsub.s32 0, %v105
    %v107 = vrot.slane %v102, %v106
    %v109 = vadd.f32 %v97, %v107
    %v110 = vadd.f32 %v98, %v107
    %v111 = vadd.f32 %v99, %v107
    %v112 = vadd.f32 %v100, %v107
    %v113 = vadd.f32 %v101, %v107
    %v114 = vpack.c.bf16 %v110, %v109
    %v115 = vpack.c.bf16 %v112, %v111
    %v116 = vpack.c.bf16 %v113, %v113
    %v120 = vunpack.c.l.b16 %v114
    %v121 = vunpack.c.h.b16 %v114
    %v122 = vunpack.c.l.b16 %v115
    %v123 = vunpack.c.h.b16 %v115
    %v124 = vunpack.c.l.b16 %v116
    %v125 = vpack.c.b16 %v120, %v120
    %v126 = vpack.c.b16 %v121, %v121
    %v127 = vpack.c.b16 %v122, %v122
    %v128 = vpack.c.b16 %v123, %v123
    %v129 = vpack.c.b16 %v124, %v124
    %135 = vst [vmem:[#allocation2] sm:$0xf] %v125
    %136 = vst [vmem:[#allocation2 + $0x4] sm:$0xf] %v126
    %137 = vst [vmem:[#allocation2 + $0x8] sm:$0xf] %v127
    %138 = vst [vmem:[#allocation2 + $0xc] sm:$0xf] %v128
    %139 = vst [vmem:[#allocation2 + $0x10] sm:$0xf] %v129
  $region25: #{ccot_forward.30} parent=0 // pred_fallthru
    _
  %v140 = vld [vmem:[#allocation2] sm:$0xf]
  %v141 = vld [vmem:[#allocation2 + $0x4] sm:$0xf]
  %v142 = vld [vmem:[#allocation2 + $0x8] sm:$0xf]
  %v143 = vld [vmem:[#allocation2 + $0xc] sm:$0xf]
  %v144 = vld [vmem:[#allocation2 + $0x10] sm:$0xf]
  %v145 = vld [vmem:[%s3] sm:$0xff]
  %v146 = vld [vmem:[%s3 + $0x8] sm:$0xf]
  %v147 = vld [vmem:[%s3 + $0xc] sm:$0xff]
  %v148 = vld [vmem:[%s3 + $0x14] sm:$0xf]
  %v149 = vld [vmem:[%s3 + $0x18] sm:$0xff]
  %v150 = vld [vmem:[%s3 + $0x20] sm:$0xf]
  %v151 = vld [vmem:[%s3 + $0x24] sm:$0xff]
  %v152 = vld [vmem:[%s3 + $0x2c] sm:$0xf]
  %v153 = vld [vmem:[%s3 + $0x30] sm:$0xff]
  %v154 = vld [vmem:[%s3 + $0x38] sm:$0xf]
  %v155 = vld [vmem:[%s3 + $0x3c] sm:$0xff]
  %v156 = vld [vmem:[%s3 + $0x44] sm:$0xf]
  %v157 = vld [vmem:[%s3 + $0x48] sm:$0xff]
  %v158 = vld [vmem:[%s3 + $0x50] sm:$0xf]
  %v159 = vld [vmem:[%s3 + $0x54] sm:$0xff]
  %v160 = vld [vmem:[%s3 + $0x5c] sm:$0xf]
  %v161 = vld [vmem:[%s3 + $0x60] sm:$0xff]
  %v162 = vld [vmem:[%s3 + $0x68] sm:$0xf]
  %v163 = vld [vmem:[%s3 + $0x6c] sm:$0xff]
  %v164 = vld [vmem:[%s3 + $0x74] sm:$0xf]
  %v165 = vld [vmem:[%s3 + $0x78] sm:$0xff]
  %v166 = vld [vmem:[%s3 + $0x80] sm:$0xf]
  %v167 = vld [vmem:[%s3 + $0x84] sm:$0xff]
  %v168 = vld [vmem:[%s3 + $0x8c] sm:$0xf]
  %v169 = vld [vmem:[%s3 + $0x90] sm:$0xff]
  %v170 = vld [vmem:[%s3 + $0x98] sm:$0xf]
  %v171 = vld [vmem:[%s3 + $0x9c] sm:$0xff]
  %v172 = vld [vmem:[%s3 + $0xa4] sm:$0xf]
  %v173 = vld [vmem:[%s3 + $0xa8] sm:$0xff]
  %v174 = vld [vmem:[%s3 + $0xb0] sm:$0xf]
  %v175 = vld [vmem:[%s3 + $0xb4] sm:$0xff]
  %v176 = vld [vmem:[%s3 + $0xbc] sm:$0xf]
  %v177 = vld [vmem:[%s4] sm:$0x7]
  %v179 = vlaneseq
  %v180 = vshrl.u32 %v179, 7
  %v181 = vsub.s32 0, %v180
  %v182 = vrot.slane %v177, %v181
  %v183 = vlaneseq
  %v184 = vshrl.u32 %v183, 7
  %v185 = vsub.s32 1, %v184
  %v186 = vrot.slane %v177, %v185
  %v187 = vlaneseq
  %v188 = vshrl.u32 %v187, 7
  %v189 = vsub.s32 2, %v188
  %v190 = vrot.slane %v177, %v189
  %v199 = vunpack.c.l.b16 %v140
  %v200 = vunpack.c.l.b16 %v141
  %v201 = vunpack.c.l.b16 %v142
  %v202 = vunpack.c.l.b16 %v143
  %v203 = vunpack.c.l.b16 %v144
  %v204 = vpack.c.b16 %v200, %v199
  %v205 = vpack.c.b16 %v202, %v201
  %v206 = vpack.c.b16 %v203, %v203
  %v242 = vunpack.c.l.b16 %v145
  %v243 = vunpack.c.h.b16 %v145
  %v244 = vunpack.c.l.b16 %v146
  %v245 = vunpack.c.l.b16 %v147
  %v246 = vunpack.c.h.b16 %v147
  %v247 = vunpack.c.l.b16 %v148
  %v248 = vunpack.c.l.b16 %v149
  %v249 = vunpack.c.h.b16 %v149
  %v250 = vunpack.c.l.b16 %v150
  %v251 = vunpack.c.l.b16 %v151
  %v252 = vunpack.c.h.b16 %v151
  %v253 = vunpack.c.l.b16 %v152
  %v254 = vunpack.c.l.b16 %v153
  %v255 = vunpack.c.h.b16 %v153
  %v256 = vunpack.c.l.b16 %v154
  %v257 = vunpack.c.l.b16 %v155
  %v258 = vunpack.c.h.b16 %v155
  %v259 = vunpack.c.l.b16 %v156
  %v260 = vunpack.c.l.b16 %v157
  %v261 = vunpack.c.h.b16 %v157
  %v262 = vunpack.c.l.b16 %v158
  %v263 = vunpack.c.l.b16 %v159
  %v264 = vunpack.c.h.b16 %v159
  %v265 = vunpack.c.l.b16 %v160
  %v266 = vunpack.c.l.b16 %v161
  %v267 = vunpack.c.h.b16 %v161
  %v268 = vunpack.c.l.b16 %v162
  %v269 = vunpack.c.l.b16 %v163
  %v270 = vunpack.c.h.b16 %v163
  %v271 = vunpack.c.l.b16 %v164
  %v272 = vunpack.c.l.b16 %v165
  %v273 = vunpack.c.h.b16 %v165
  %v274 = vunpack.c.l.b16 %v166
  %v275 = vunpack.c.l.b16 %v167
  %v276 = vunpack.c.h.b16 %v167
  %v277 = vunpack.c.l.b16 %v168
  %v278 = vunpack.c.l.b16 %v169
  %v279 = vunpack.c.h.b16 %v169
  %v280 = vunpack.c.l.b16 %v170
  %v281 = vunpack.c.l.b16 %v171
  %v282 = vunpack.c.h.b16 %v171
  %v283 = vunpack.c.l.b16 %v172
  %v284 = vunpack.c.l.b16 %v173
  %v285 = vunpack.c.h.b16 %v173
  %v286 = vunpack.c.l.b16 %v174
  %v287 = vunpack.c.l.b16 %v175
  %v288 = vunpack.c.h.b16 %v175
  %v289 = vunpack.c.l.b16 %v176
  %v290 = vpack.c.b16 %v245, %v242
  %v291 = vpack.c.b16 %v246, %v243
  %v292 = vpack.c.b16 %v247, %v244
  %v293 = vpack.c.b16 %v251, %v248
  %v294 = vpack.c.b16 %v252, %v249
  %v295 = vpack.c.b16 %v253, %v250
  %v296 = vpack.c.b16 %v257, %v254
  %v297 = vpack.c.b16 %v258, %v255
  %v298 = vpack.c.b16 %v259, %v256
  %v299 = vpack.c.b16 %v263, %v260
  %v300 = vpack.c.b16 %v264, %v261
  %v301 = vpack.c.b16 %v265, %v262
  %v302 = vpack.c.b16 %v269, %v266
  %v303 = vpack.c.b16 %v270, %v267
  %v304 = vpack.c.b16 %v271, %v268
  %v305 = vpack.c.b16 %v275, %v272
  %v306 = vpack.c.b16 %v276, %v273
  %v307 = vpack.c.b16 %v277, %v274
  %v308 = vpack.c.b16 %v281, %v278
  %v309 = vpack.c.b16 %v282, %v279
  %v310 = vpack.c.b16 %v283, %v280
  %v311 = vpack.c.b16 %v287, %v284
  %v312 = vpack.c.b16 %v288, %v285
  %v313 = vpack.c.b16 %v289, %v286
  %338 = vmatprep.subr.bf16.mxu0 %v291
  %339 = vmatpush1.bf16.msra.mxu0 %v290
  %340 = vmatprep.subr.bf16.mxu0 %v294
  %341 = vmatpush1.bf16.msra.mxu0 %v293
  %342 = vmatprep.subr.bf16.mxu0 %v297
  %343 = vmatpush1.bf16.msra.mxu0 %v296
  %344 = vmatprep.subr.bf16.mxu0 %v300
  %345 = vmatpush1.bf16.msra.mxu0 %v299
  %346 = vmatprep.subr.bf16.mxu0 %v303
  %347 = vmatpush1.bf16.msra.mxu0 %v302
  %348 = vmatprep.subr.bf16.mxu0 %v306
  %349 = vmatpush1.bf16.msra.mxu0 %v305
  %350 = vmatprep.subr.bf16.mxu0 %v309
  %351 = vmatpush1.bf16.msra.mxu0 %v308
  %352 = vmatprep.subr.bf16.mxu0 %v312
  %353 = vmatpush1.bf16.msra.mxu0 %v311
  %354 = vmatprep.subr.bf16.mxu0 0
  %355 = vmatpush1.bf16.msra.mxu0 0
  %356 = vmatprep.subr.bf16.mxu0 0
  %357 = vmatpush1.bf16.msra.mxu0 0
  %358 = vmatprep.subr.bf16.mxu0 0
  %359 = vmatpush1.bf16.msra.mxu0 0
  %360 = vmatprep.subr.bf16.mxu0 0
  %361 = vmatpush1.bf16.msra.mxu0 0
  %362 = vmatprep.subr.bf16.mxu0 0
  %363 = vmatpush1.bf16.msra.mxu0 0
  %364 = vmatprep.subr.bf16.mxu0 0
  %365 = vmatpush1.bf16.msra.mxu0 0
  %366 = vmatprep.subr.bf16.mxu0 0
  %367 = vmatpush1.bf16.msra.mxu0 0
  %368 = vmatprep.subr.bf16.mxu0 0
  %369 = vmatpush1.bf16.msra.mxu0 0
  %370 = vmatprep.mubr.bf16.mxu0 0
  %371 = vmatmul.mubr.bf16.gmra.mrb[0].mxu0 %v204
  %v372 = vpop.f32.mrb[0].mxu0
  %v373 = vadd.f32 %v182, %v372
  %v374 = vpop.f32.mrb[0].mxu0
  %v375 = vadd.f32 %v186, %v374
  %v376 = vpop.f32.mrb[0].mxu0
  %v377 = vadd.f32 %v182, %v376
  %v378 = vpop.f32.mrb[0].mxu0
  %v379 = vadd.f32 %v186, %v378
  %380 = vmatprep.mubr.bf16.mxu0 0
  %381 = vmatmul.mubr.bf16.gmra.mrb[0].mxu0 %v205
  %v382 = vpop.f32.mrb[0].mxu0
  %v383 = vadd.f32 %v182, %v382
  %v384 = vpop.f32.mrb[0].mxu0
  %v385 = vadd.f32 %v186, %v384
  %v386 = vpop.f32.mrb[0].mxu0
  %v387 = vadd.f32 %v182, %v386
  %v388 = vpop.f32.mrb[0].mxu0
  %v389 = vadd.f32 %v186, %v388
  %390 = vmatprep.mubr.bf16.mxu0 0
  %391 = vmatmul.mubr.bf16.gmra.mrb[0].mxu0 %v206
  %v392 = vpop.f32.mrb[0].mxu0
  %v393 = vadd.f32 %v182, %v392
  %v394 = vpop.f32.mrb[0].mxu0
  %v395 = vadd.f32 %v186, %v394
  %v396 = vpop.f32.mrb[0].mxu0
  %v397 = vpop.f32.mrb[0].mxu0
  %398 = vdwg.mxu0
  %399 = vmatprep.subr.bf16.mxu0 0
  %400 = vmatpush1.bf16.msra.mxu0 %v292
  %401 = vmatprep.subr.bf16.mxu0 0
  %402 = vmatpush1.bf16.msra.mxu0 %v295
  %403 = vmatprep.subr.bf16.mxu0 0
  %404 = vmatpush1.bf16.msra.mxu0 %v298
  %405 = vmatprep.subr.bf16.mxu0 0
  %406 = vmatpush1.bf16.msra.mxu0 %v301
  %407 = vmatprep.subr.bf16.mxu0 0
  %408 = vmatpush1.bf16.msra.mxu0 %v304
  %409 = vmatprep.subr.bf16.mxu0 0
  %410 = vmatpush1.bf16.msra.mxu0 %v307
  %411 = vmatprep.subr.bf16.mxu0 0
  %412 = vmatpush1.bf16.msra.mxu0 %v310
  %413 = vmatprep.subr.bf16.mxu0 0
  %414 = vmatpush1.bf16.msra.mxu0 %v313
  %415 = vmatprep.subr.bf16.mxu0 0
  %416 = vmatpush1.bf16.msra.mxu0 0
  %417 = vmatprep.subr.bf16.mxu0 0
  %418 = vmatpush1.bf16.msra.mxu0 0
  %419 = vmatprep.subr.bf16.mxu0 0
  %420 = vmatpush1.bf16.msra.mxu0 0
  %421 = vmatprep.subr.bf16.mxu0 0
  %422 = vmatpush1.bf16.msra.mxu0 0
  %423 = vmatprep.subr.bf16.mxu0 0
  %424 = vmatpush1.bf16.msra.mxu0 0
  %425 = vmatprep.subr.bf16.mxu0 0
  %426 = vmatpush1.bf16.msra.mxu0 0
  %427 = vmatprep.subr.bf16.mxu0 0
  %428 = vmatpush1.bf16.msra.mxu0 0
  %429 = vmatprep.subr.bf16.mxu0 0
  %430 = vmatpush1.bf16.msra.mxu0 0
  %431 = vmatprep.mubr.bf16.mxu0 0
  %432 = vmatmul.mubr.bf16.gmra.mrb[0].mxu0 %v204
  %v433 = vpop.f32.mrb[0].mxu0
  %v434 = vadd.f32 %v190, %v433
  %v435 = vpop.f32.mrb[0].mxu0
  %v436 = vpop.f32.mrb[0].mxu0
  %v437 = vadd.f32 %v190, %v436
  %v438 = vpop.f32.mrb[0].mxu0
  %439 = vmatprep.mubr.bf16.mxu0 0
  %440 = vmatmul.mubr.bf16.gmra.mrb[0].mxu0 %v205
  %v441 = vpop.f32.mrb[0].mxu0
  %v442 = vadd.f32 %v190, %v441
  %v443 = vpop.f32.mrb[0].mxu0
  %v444 = vpop.f32.mrb[0].mxu0
  %v445 = vadd.f32 %v190, %v444
  %v446 = vpop.f32.mrb[0].mxu0
  %447 = vmatprep.mubr.bf16.mxu0 0
  %448 = vmatmul.mubr.bf16.gmra.mrb[0].mxu0 %v206
  %v449 = vpop.f32.mrb[0].mxu0
  %v450 = vadd.f32 %v190, %v449
  %v451 = vpop.f32.mrb[0].mxu0
  %v452 = vpop.f32.mrb[0].mxu0
  %v453 = vpop.f32.mrb[0].mxu0
  %454 = vdwg.mxu0
  %v455 = vpack.c.bf16 %v377, %v373
  %v456 = vpack.c.bf16 %v379, %v375
  %v457 = vpack.c.bf16 %v437, %v434
  %v458 = vpack.c.bf16 %v387, %v383
  %v459 = vpack.c.bf16 %v389, %v385
  %v460 = vpack.c.bf16 %v445, %v442
  %v461 = vpack.c.bf16 %v393, %v393
  %v462 = vpack.c.bf16 %v395, %v395
  %v463 = vpack.c.bf16 %v450, %v450
  %v473 = vunpack.c.l.b16 %v455
  %v474 = vunpack.c.l.b16 %v456
  %v475 = vunpack.c.l.b16 %v457
  %v476 = vunpack.c.h.b16 %v455
  %v477 = vunpack.c.h.b16 %v456
  %v478 = vunpack.c.h.b16 %v457
  %v479 = vunpack.c.l.b16 %v458
  %v480 = vunpack.c.l.b16 %v459
  %v481 = vunpack.c.l.b16 %v460
  %v482 = vunpack.c.h.b16 %v458
  %v483 = vunpack.c.h.b16 %v459
  %v484 = vunpack.c.h.b16 %v460
  %v485 = vunpack.c.l.b16 %v461
  %v486 = vunpack.c.l.b16 %v462
  %v487 = vunpack.c.l.b16 %v463
  %v488 = vpack.c.b16 %v474, %v473
  %v489 = vpack.c.b16 %v475, %v475
  %v490 = vpack.c.b16 %v477, %v476
  %v491 = vpack.c.b16 %v478, %v478
  %v492 = vpack.c.b16 %v480, %v479
  %v493 = vpack.c.b16 %v481, %v481
  %v494 = vpack.c.b16 %v483, %v482
  %v495 = vpack.c.b16 %v484, %v484
  %v496 = vpack.c.b16 %v486, %v485
  %v497 = vpack.c.b16 %v487, %v487
  %508 = vst [vmem:[%s5] sm:$0xff] %v488
  %509 = vst [vmem:[%s5 + $0x8] sm:$0xf] %v489
  %510 = vst [vmem:[%s5 + $0xc] sm:$0xff] %v490
  %511 = vst [vmem:[%s5 + $0x14] sm:$0xf] %v491
  %512 = vst [vmem:[%s5 + $0x18] sm:$0xff] %v492
  %513 = vst [vmem:[%s5 + $0x20] sm:$0xf] %v493
  %514 = vst [vmem:[%s5 + $0x24] sm:$0xff] %v494
  %515 = vst [vmem:[%s5 + $0x2c] sm:$0xf] %v495
  %516 = vst [vmem:[%s5 + $0x30] sm:$0xff] %v496
  %517 = vst [vmem:[%s5 + $0x38] sm:$0xf] %v497
  // Predicated region
  $region26: #{ccot_forward.30} parent=0 // pred_check
    _
  $region27: #{ccot_forward.30} parent=0 // pred_check_branch
    %519 = sbr.rel (0) target = $region29
  $region28: #{ccot_forward.30} parent=0 // pred_region
    _
  $region29: #{ccot_forward.30} parent=0 // pred_fallthru
    _
  // Predicated region
  $region30: #{ccot_forward.30} parent=0 // pred_check
    _
  $region31: #{ccot_forward.30} parent=0 // pred_check_branch
    %521 = sbr.rel (0) target = $region33
  $region32: #{ccot_forward.30} parent=0 // pred_region
    _
  $region33: #{ccot_forward.30} parent=0 // pred_fallthru
    _

// kernel: ccot_forward.33
$region0: #{ccot_forward.33}
  #allocation0 [shape = 'u32[]', space=smem, size = 0x4, offset = 0x4, fixed_abs, tag = 'smem constant byte address 0x4 - core index']
  #allocation1 [shape = 'u32[144,128]{1,0:T(1,128)}', space=vmem, size = 0x12000, scoped, tag = 'internal scratch']
  #allocation2 [shape = 'bf16[40,128]{1,0:T(8,128)(2,1)}', space=vmem, size = 0x2800, scoped, tag = 'scratch operand']
  %s0 = inlined_call_operand.vmem [shape: bf16[40,128], index: 0, kind: input, shape index: {}]
  %s1 = inlined_call_operand.vmem [shape: f32[1,128], index: 1, kind: input, shape index: {}]
  %s2 = inlined_call_operand.vmem [shape: f32[1,128], index: 2, kind: input, shape index: {}]
  %s3 = inlined_call_operand.vmem [shape: bf16[128,512], index: 3, kind: input, shape index: {}]
  %s4 = inlined_call_operand.vmem [shape: f32[1,512], index: 4, kind: input, shape index: {}]
  %s5 = inlined_call_operand.vmem [shape: bf16[40,512], index: 5, kind: output, shape index: {}]
  %s6 = sld [smem:[#allocation0]]
  $region34: #{ccot_forward.33} parent=0
    _
  %s8 = ssub.s32 1, %s6
  %s9 = scalar_select 0, %s8, %s6
  // Predicated region
  $region2: #{ccot_forward.33} parent=0 // pred_check
    _
  $region3: #{ccot_forward.33} parent=0 // pred_check_branch
    %11 = sbr.rel (0) target = $region5
  $region4: #{ccot_forward.33} parent=0 // pred_region
    _
  $region5: #{ccot_forward.33} parent=0 // pred_fallthru
    _
  // Predicated region
  $region6: #{ccot_forward.33} parent=0 // pred_check
    _
  $region7: #{ccot_forward.33} parent=0 // pred_check_branch
    %13 = sbr.rel (0) target = $region9
  $region8: #{ccot_forward.33} parent=0 // pred_region
    _
  $region9: #{ccot_forward.33} parent=0 // pred_fallthru
    _
  // Predicated region
  $region10: #{ccot_forward.33} parent=0 // pred_check
    _
  $region11: #{ccot_forward.33} parent=0 // pred_check_branch
    %15 = sbr.rel (0) target = $region13
  $region12: #{ccot_forward.33} parent=0 // pred_region
    _
  $region13: #{ccot_forward.33} parent=0 // pred_fallthru
    _
  // Predicated region
  $region14: #{ccot_forward.33} parent=0 // pred_check
    _
  $region15: #{ccot_forward.33} parent=0 // pred_check_branch
    %17 = sbr.rel (0) target = $region17
  $region16: #{ccot_forward.33} parent=0 // pred_region
    _
  $region17: #{ccot_forward.33} parent=0 // pred_fallthru
    _
  // Predicated region
  $region18: #{ccot_forward.33} parent=0 // pred_check
    _
  $region19: #{ccot_forward.33} parent=0 // pred_check_branch
    %19 = sbr.rel (0) target = $region21
  $region20: #{ccot_forward.33} parent=0 // pred_region
    _
  $region21: #{ccot_forward.33} parent=0 // pred_fallthru
    _
  %p21 = scmp.eq.s32.totalorder 0, 0
  // Predicated region
  $region22: #{ccot_forward.33} parent=0 // pred_check
    %p22 = pneg %p21
  $region23: #{ccot_forward.33} parent=0 // pred_check_branch
    %24 = sbr.rel (%p22) target = $region25
  $region24: #{ccot_forward.33} parent=0 // pred_region
    %v25 = vld [vmem:[%s0] sm:$0xf]
    %v26 = vld [vmem:[%s0 + $0x4] sm:$0xf]
    %v27 = vld [vmem:[%s0 + $0x8] sm:$0xf]
    %v28 = vld [vmem:[%s0 + $0xc] sm:$0xf]
    %v29 = vld [vmem:[%s0 + $0x10] sm:$0xf]
    %v30 = vunpack.c.l.bf16 %v25
    %v31 = vunpack.c.l.bf16 %v26
    %v32 = vunpack.c.l.bf16 %v27
    %v33 = vunpack.c.l.bf16 %v28
    %v34 = vunpack.c.l.bf16 %v29
    %35 = vadd.xlane.f32.xlu0 %v30
    %v36 = vpop.xlane.xlu0 %35
    %37 = vadd.xlane.f32.xlu0 %v31
    %v38 = vpop.xlane.xlu0 %37
    %39 = vadd.xlane.f32.xlu0 %v32
    %v40 = vpop.xlane.xlu0 %39
    %41 = vadd.xlane.f32.xlu0 %v33
    %v42 = vpop.xlane.xlu0 %41
    %43 = vadd.xlane.f32.xlu0 %v34
    %v44 = vpop.xlane.xlu0 %43
    %v45 = vmul.f32 %v36, 0.0078125
    %v46 = vmul.f32 %v38, 0.0078125
    %v47 = vmul.f32 %v40, 0.0078125
    %v48 = vmul.f32 %v42, 0.0078125
    %v49 = vmul.f32 %v44, 0.0078125
    %v50 = vsub.f32 %v30, %v45
    %v51 = vsub.f32 %v31, %v46
    %v52 = vsub.f32 %v32, %v47
    %v53 = vsub.f32 %v33, %v48
    %v54 = vsub.f32 %v34, %v49
    %v55 = vmul.f32 %v50, %v50
    %v56 = vmul.f32 %v51, %v51
    %v57 = vmul.f32 %v52, %v52
    %v58 = vmul.f32 %v53, %v53
    %v59 = vmul.f32 %v54, %v54
    %60 = vadd.xlane.f32.xlu0 %v55
    %v61 = vpop.xlane.xlu0 %60
    %62 = vadd.xlane.f32.xlu0 %v56
    %v63 = vpop.xlane.xlu0 %62
    %64 = vadd.xlane.f32.xlu0 %v57
    %v65 = vpop.xlane.xlu0 %64
    %66 = vadd.xlane.f32.xlu0 %v58
    %v67 = vpop.xlane.xlu0 %66
    %68 = vadd.xlane.f32.xlu0 %v59
    %v69 = vpop.xlane.xlu0 %68
    %v70 = vmul.f32 %v61, 0.0078125
    %v71 = vmul.f32 %v63, 0.0078125
    %v72 = vmul.f32 %v65, 0.0078125
    %v73 = vmul.f32 %v67, 0.0078125
    %v74 = vmul.f32 %v69, 0.0078125
    %v75 = vadd.f32 %v70, 1e-05
    %v76 = vadd.f32 %v71, 1e-05
    %v77 = vadd.f32 %v72, 1e-05
    %v78 = vadd.f32 %v73, 1e-05
    %v79 = vadd.f32 %v74, 1e-05
    %v80 = vrsqrt.pop %v75
    %v81 = vrsqrt.pop %v76
    %v82 = vrsqrt.pop %v77
    %v83 = vrsqrt.pop %v78
    %v84 = vrsqrt.pop %v79
    %v85 = vmul.f32 %v50, %v80
    %v86 = vmul.f32 %v51, %v81
    %v87 = vmul.f32 %v52, %v82
    %v88 = vmul.f32 %v53, %v83
    %v89 = vmul.f32 %v54, %v84
    %v90 = vld [vmem:[%s1] sm:$0x1]
    %v92 = vlaneseq
    %v93 = vshrl.u32 %v92, 7
    %v94 = vsub.s32 0, %v93
    %v95 = vrot.slane %v90, %v94
    %v97 = vmul.f32 %v85, %v95
    %v98 = vmul.f32 %v86, %v95
    %v99 = vmul.f32 %v87, %v95
    %v100 = vmul.f32 %v88, %v95
    %v101 = vmul.f32 %v89, %v95
    %v102 = vld [vmem:[%s2] sm:$0x1]
    %v104 = vlaneseq
    %v105 = vshrl.u32 %v104, 7
    %v106 = vsub.s32 0, %v105
    %v107 = vrot.slane %v102, %v106
    %v109 = vadd.f32 %v97, %v107
    %v110 = vadd.f32 %v98, %v107
    %v111 = vadd.f32 %v99, %v107
    %v112 = vadd.f32 %v100, %v107
    %v113 = vadd.f32 %v101, %v107
    %v114 = vpack.c.bf16 %v110, %v109
    %v115 = vpack.c.bf16 %v112, %v111
    %v116 = vpack.c.bf16 %v113, %v113
    %v120 = vunpack.c.l.b16 %v114
    %v121 = vunpack.c.h.b16 %v114
    %v122 = vunpack.c.l.b16 %v115
    %v123 = vunpack.c.h.b16 %v115
    %v124 = vunpack.c.l.b16 %v116
    %v125 = vpack.c.b16 %v120, %v120
    %v126 = vpack.c.b16 %v121, %v121
    %v127 = vpack.c.b16 %v122, %v122
    %v128 = vpack.c.b16 %v123, %v123
    %v129 = vpack.c.b16 %v124, %v124
    %135 = vst [vmem:[#allocation2] sm:$0xf] %v125
    %136 = vst [vmem:[#allocation2 + $0x4] sm:$0xf] %v126
    %137 = vst [vmem:[#allocation2 + $0x8] sm:$0xf] %v127
    %138 = vst [vmem:[#allocation2 + $0xc] sm:$0xf] %v128
    %139 = vst [vmem:[#allocation2 + $0x10] sm:$0xf] %v129
  $region25: #{ccot_forward.33} parent=0 // pred_fallthru
    _
  %v140 = vld [vmem:[#allocation2] sm:$0xf]
  %v141 = vld [vmem:[#allocation2 + $0x4] sm:$0xf]
  %v142 = vld [vmem:[#allocation2 + $0x8] sm:$0xf]
  %v143 = vld [vmem:[#allocation2 + $0xc] sm:$0xf]
  %v144 = vld [vmem:[#allocation2 + $0x10] sm:$0xf]
  %v145 = vld [vmem:[%s3] sm:$0xff]
  %v146 = vld [vmem:[%s3 + $0x8] sm:$0xff]
  %v147 = vld [vmem:[%s3 + $0x10] sm:$0xff]
  %v148 = vld [vmem:[%s3 + $0x18] sm:$0xff]
  %v149 = vld [vmem:[%s3 + $0x20] sm:$0xff]
  %v150 = vld [vmem:[%s3 + $0x28] sm:$0xff]
  %v151 = vld [vmem:[%s3 + $0x30] sm:$0xff]
  %v152 = vld [vmem:[%s3 + $0x38] sm:$0xff]
  %v153 = vld [vmem:[%s3 + $0x40] sm:$0xff]
  %v154 = vld [vmem:[%s3 + $0x48] sm:$0xff]
  %v155 = vld [vmem:[%s3 + $0x50] sm:$0xff]
  %v156 = vld [vmem:[%s3 + $0x58] sm:$0xff]
  %v157 = vld [vmem:[%s3 + $0x60] sm:$0xff]
  %v158 = vld [vmem:[%s3 + $0x68] sm:$0xff]
  %v159 = vld [vmem:[%s3 + $0x70] sm:$0xff]
  %v160 = vld [vmem:[%s3 + $0x78] sm:$0xff]
  %v161 = vld [vmem:[%s3 + $0x80] sm:$0xff]
  %v162 = vld [vmem:[%s3 + $0x88] sm:$0xff]
  %v163 = vld [vmem:[%s3 + $0x90] sm:$0xff]
  %v164 = vld [vmem:[%s3 + $0x98] sm:$0xff]
  %v165 = vld [vmem:[%s3 + $0xa0] sm:$0xff]
  %v166 = vld [vmem:[%s3 + $0xa8] sm:$0xff]
  %v167 = vld [vmem:[%s3 + $0xb0] sm:$0xff]
  %v168 = vld [vmem:[%s3 + $0xb8] sm:$0xff]
  %v169 = vld [vmem:[%s3 + $0xc0] sm:$0xff]
  %v170 = vld [vmem:[%s3 + $0xc8] sm:$0xff]
  %v171 = vld [vmem:[%s3 + $0xd0] sm:$0xff]
  %v172 = vld [vmem:[%s3 + $0xd8] sm:$0xff]
  %v173 = vld [vmem:[%s3 + $0xe0] sm:$0xff]
  %v174 = vld [vmem:[%s3 + $0xe8] sm:$0xff]
  %v175 = vld [vmem:[%s3 + $0xf0] sm:$0xff]
  %v176 = vld [vmem:[%s3 + $0xf8] sm:$0xff]
  %v177 = vld [vmem:[%s4] sm:$0xf]
  %v179 = vlaneseq
  %v180 = vshrl.u32 %v179, 7
  %v181 = vsub.s32 0, %v180
  %v182 = vrot.slane %v177, %v181
  %v183 = vlaneseq
  %v184 = vshrl.u32 %v183, 7
  %v185 = vsub.s32 1, %v184
  %v186 = vrot.slane %v177, %v185
  %v187 = vlaneseq
  %v188 = vshrl.u32 %v187, 7
  %v189 = vsub.s32 2, %v188
  %v190 = vrot.slane %v177, %v189
  %v191 = vlaneseq
  %v192 = vshrl.u32 %v191, 7
  %v193 = vsub.s32 3, %v192
  %v194 = vrot.slane %v177, %v193
  %v204 = vunpack.c.l.b16 %v140
  %v205 = vunpack.c.l.b16 %v141
  %v206 = vunpack.c.l.b16 %v142
  %v207 = vunpack.c.l.b16 %v143
  %v208 = vunpack.c.l.b16 %v144
  %v209 = vpack.c.b16 %v205, %v204
  %v210 = vpack.c.b16 %v207, %v206
  %v211 = vpack.c.b16 %v208, %v208
  %v247 = vunpack.c.l.b16 %v145
  %v248 = vunpack.c.h.b16 %v145
  %v249 = vunpack.c.l.b16 %v146
  %v250 = vunpack.c.h.b16 %v146
  %v251 = vunpack.c.l.b16 %v147
  %v252 = vunpack.c.h.b16 %v147
  %v253 = vunpack.c.l.b16 %v148
  %v254 = vunpack.c.h.b16 %v148
  %v255 = vunpack.c.l.b16 %v149
  %v256 = vunpack.c.h.b16 %v149
  %v257 = vunpack.c.l.b16 %v150
  %v258 = vunpack.c.h.b16 %v150
  %v259 = vunpack.c.l.b16 %v151
  %v260 = vunpack.c.h.b16 %v151
  %v261 = vunpack.c.l.b16 %v152
  %v262 = vunpack.c.h.b16 %v152
  %v263 = vunpack.c.l.b16 %v153
  %v264 = vunpack.c.h.b16 %v153
  %v265 = vunpack.c.l.b16 %v154
  %v266 = vunpack.c.h.b16 %v154
  %v267 = vunpack.c.l.b16 %v155
  %v268 = vunpack.c.h.b16 %v155
  %v269 = vunpack.c.l.b16 %v156
  %v270 = vunpack.c.h.b16 %v156
  %v271 = vunpack.c.l.b16 %v157
  %v272 = vunpack.c.h.b16 %v157
  %v273 = vunpack.c.l.b16 %v158
  %v274 = vunpack.c.h.b16 %v158
  %v275 = vunpack.c.l.b16 %v159
  %v276 = vunpack.c.h.b16 %v159
  %v277 = vunpack.c.l.b16 %v160
  %v278 = vunpack.c.h.b16 %v160
  %v279 = vunpack.c.l.b16 %v161
  %v280 = vunpack.c.h.b16 %v161
  %v281 = vunpack.c.l.b16 %v162
  %v282 = vunpack.c.h.b16 %v162
  %v283 = vunpack.c.l.b16 %v163
  %v284 = vunpack.c.h.b16 %v163
  %v285 = vunpack.c.l.b16 %v164
  %v286 = vunpack.c.h.b16 %v164
  %v287 = vunpack.c.l.b16 %v165
  %v288 = vunpack.c.h.b16 %v165
  %v289 = vunpack.c.l.b16 %v166
  %v290 = vunpack.c.h.b16 %v166
  %v291 = vunpack.c.l.b16 %v167
  %v292 = vunpack.c.h.b16 %v167
  %v293 = vunpack.c.l.b16 %v168
  %v294 = vunpack.c.h.b16 %v168
  %v295 = vunpack.c.l.b16 %v169
  %v296 = vunpack.c.h.b16 %v169
  %v297 = vunpack.c.l.b16 %v170
  %v298 = vunpack.c.h.b16 %v170
  %v299 = vunpack.c.l.b16 %v171
  %v300 = vunpack.c.h.b16 %v171
  %v301 = vunpack.c.l.b16 %v172
  %v302 = vunpack.c.h.b16 %v172
  %v303 = vunpack.c.l.b16 %v173
  %v304 = vunpack.c.h.b16 %v173
  %v305 = vunpack.c.l.b16 %v174
  %v306 = vunpack.c.h.b16 %v174
  %v307 = vunpack.c.l.b16 %v175
  %v308 = vunpack.c.h.b16 %v175
  %v309 = vunpack.c.l.b16 %v176
  %v310 = vunpack.c.h.b16 %v176
  %v311 = vpack.c.b16 %v251, %v247
  %v312 = vpack.c.b16 %v252, %v248
  %v313 = vpack.c.b16 %v253, %v249
  %v314 = vpack.c.b16 %v254, %v250
  %v315 = vpack.c.b16 %v259, %v255
  %v316 = vpack.c.b16 %v260, %v256
  %v317 = vpack.c.b16 %v261, %v257
  %v318 = vpack.c.b16 %v262, %v258
  %v319 = vpack.c.b16 %v267, %v263
  %v320 = vpack.c.b16 %v268, %v264
  %v321 = vpack.c.b16 %v269, %v265
  %v322 = vpack.c.b16 %v270, %v266
  %v323 = vpack.c.b16 %v275, %v271
  %v324 = vpack.c.b16 %v276, %v272
  %v325 = vpack.c.b16 %v277, %v273
  %v326 = vpack.c.b16 %v278, %v274
  %v327 = vpack.c.b16 %v283, %v279
  %v328 = vpack.c.b16 %v284, %v280
  %v329 = vpack.c.b16 %v285, %v281
  %v330 = vpack.c.b16 %v286, %v282
  %v331 = vpack.c.b16 %v291, %v287
  %v332 = vpack.c.b16 %v292, %v288
  %v333 = vpack.c.b16 %v293, %v289
  %v334 = vpack.c.b16 %v294, %v290
  %v335 = vpack.c.b16 %v299, %v295
  %v336 = vpack.c.b16 %v300, %v296
  %v337 = vpack.c.b16 %v301, %v297
  %v338 = vpack.c.b16 %v302, %v298
  %v339 = vpack.c.b16 %v307, %v303
  %v340 = vpack.c.b16 %v308, %v304
  %v341 = vpack.c.b16 %v309, %v305
  %v342 = vpack.c.b16 %v310, %v306
  %375 = vmatprep.subr.bf16.mxu0 %v312
  %376 = vmatpush1.bf16.msra.mxu0 %v311
  %377 = vmatprep.subr.bf16.mxu0 %v316
  %378 = vmatpush1.bf16.msra.mxu0 %v315
  %379 = vmatprep.subr.bf16.mxu0 %v320
  %380 = vmatpush1.bf16.msra.mxu0 %v319
  %381 = vmatprep.subr.bf16.mxu0 %v324
  %382 = vmatpush1.bf16.msra.mxu0 %v323
  %383 = vmatprep.subr.bf16.mxu0 %v328
  %384 = vmatpush1.bf16.msra.mxu0 %v327
  %385 = vmatprep.subr.bf16.mxu0 %v332
  %386 = vmatpush1.bf16.msra.mxu0 %v331
  %387 = vmatprep.subr.bf16.mxu0 %v336
  %388 = vmatpush1.bf16.msra.mxu0 %v335
  %389 = vmatprep.subr.bf16.mxu0 %v340
  %390 = vmatpush1.bf16.msra.mxu0 %v339
  %391 = vmatprep.subr.bf16.mxu0 0
  %392 = vmatpush1.bf16.msra.mxu0 0
  %393 = vmatprep.subr.bf16.mxu0 0
  %394 = vmatpush1.bf16.msra.mxu0 0
  %395 = vmatprep.subr.bf16.mxu0 0
  %396 = vmatpush1.bf16.msra.mxu0 0
  %397 = vmatprep.subr.bf16.mxu0 0
  %398 = vmatpush1.bf16.msra.mxu0 0
  %399 = vmatprep.subr.bf16.mxu0 0
  %400 = vmatpush1.bf16.msra.mxu0 0
  %401 = vmatprep.subr.bf16.mxu0 0
  %402 = vmatpush1.bf16.msra.mxu0 0
  %403 = vmatprep.subr.bf16.mxu0 0
  %404 = vmatpush1.bf16.msra.mxu0 0
  %405 = vmatprep.subr.bf16.mxu0 0
  %406 = vmatpush1.bf16.msra.mxu0 0
  %407 = vmatprep.mubr.bf16.mxu0 0
  %408 = vmatmul.mubr.bf16.gmra.mrb[0].mxu0 %v209
  %v409 = vpop.f32.mrb[0].mxu0
  %v410 = vadd.f32 %v182, %v409
  %v411 = vpop.f32.mrb[0].mxu0
  %v412 = vadd.f32 %v186, %v411
  %v413 = vpop.f32.mrb[0].mxu0
  %v414 = vadd.f32 %v182, %v413
  %v415 = vpop.f32.mrb[0].mxu0
  %v416 = vadd.f32 %v186, %v415
  %417 = vmatprep.mubr.bf16.mxu0 0
  %418 = vmatmul.mubr.bf16.gmra.mrb[0].mxu0 %v210
  %v419 = vpop.f32.mrb[0].mxu0
  %v420 = vadd.f32 %v182, %v419
  %v421 = vpop.f32.mrb[0].mxu0
  %v422 = vadd.f32 %v186, %v421
  %v423 = vpop.f32.mrb[0].mxu0
  %v424 = vadd.f32 %v182, %v423
  %v425 = vpop.f32.mrb[0].mxu0
  %v426 = vadd.f32 %v186, %v425
  %427 = vmatprep.mubr.bf16.mxu0 0
  %428 = vmatmul.mubr.bf16.gmra.mrb[0].mxu0 %v211
  %v429 = vpop.f32.mrb[0].mxu0
  %v430 = vadd.f32 %v182, %v429
  %v431 = vpop.f32.mrb[0].mxu0
  %v432 = vadd.f32 %v186, %v431
  %v433 = vpop.f32.mrb[0].mxu0
  %v434 = vpop.f32.mrb[0].mxu0
  %435 = vdwg.mxu0
  %436 = vmatprep.subr.bf16.mxu0 %v314
  %437 = vmatpush1.bf16.msra.mxu0 %v313
  %438 = vmatprep.subr.bf16.mxu0 %v318
  %439 = vmatpush1.bf16.msra.mxu0 %v317
  %440 = vmatprep.subr.bf16.mxu0 %v322
  %441 = vmatpush1.bf16.msra.mxu0 %v321
  %442 = vmatprep.subr.bf16.mxu0 %v326
  %443 = vmatpush1.bf16.msra.mxu0 %v325
  %444 = vmatprep.subr.bf16.mxu0 %v330
  %445 = vmatpush1.bf16.msra.mxu0 %v329
  %446 = vmatprep.subr.bf16.mxu0 %v334
  %447 = vmatpush1.bf16.msra.mxu0 %v333
  %448 = vmatprep.subr.bf16.mxu0 %v338
  %449 = vmatpush1.bf16.msra.mxu0 %v337
  %450 = vmatprep.subr.bf16.mxu0 %v342
  %451 = vmatpush1.bf16.msra.mxu0 %v341
  %452 = vmatprep.subr.bf16.mxu0 0
  %453 = vmatpush1.bf16.msra.mxu0 0
  %454 = vmatprep.subr.bf16.mxu0 0
  %455 = vmatpush1.bf16.msra.mxu0 0
  %456 = vmatprep.subr.bf16.mxu0 0
  %457 = vmatpush1.bf16.msra.mxu0 0
  %458 = vmatprep.subr.bf16.mxu0 0
  %459 = vmatpush1.bf16.msra.mxu0 0
  %460 = vmatprep.subr.bf16.mxu0 0
  %461 = vmatpush1.bf16.msra.mxu0 0
  %462 = vmatprep.subr.bf16.mxu0 0
  %463 = vmatpush1.bf16.msra.mxu0 0
  %464 = vmatprep.subr.bf16.mxu0 0
  %465 = vmatpush1.bf16.msra.mxu0 0
  %466 = vmatprep.subr.bf16.mxu0 0
  %467 = vmatpush1.bf16.msra.mxu0 0
  %468 = vmatprep.mubr.bf16.mxu0 0
  %469 = vmatmul.mubr.bf16.gmra.mrb[0].mxu0 %v209
  %v470 = vpop.f32.mrb[0].mxu0
  %v471 = vadd.f32 %v190, %v470
  %v472 = vpop.f32.mrb[0].mxu0
  %v473 = vadd.f32 %v194, %v472
  %v474 = vpop.f32.mrb[0].mxu0
  %v475 = vadd.f32 %v190, %v474
  %v476 = vpop.f32.mrb[0].mxu0
  %v477 = vadd.f32 %v194, %v476
  %478 = vmatprep.mubr.bf16.mxu0 0
  %479 = vmatmul.mubr.bf16.gmra.mrb[0].mxu0 %v210
  %v480 = vpop.f32.mrb[0].mxu0
  %v481 = vadd.f32 %v190, %v480
  %v482 = vpop.f32.mrb[0].mxu0
  %v483 = vadd.f32 %v194, %v482
  %v484 = vpop.f32.mrb[0].mxu0
  %v485 = vadd.f32 %v190, %v484
  %v486 = vpop.f32.mrb[0].mxu0
  %v487 = vadd.f32 %v194, %v486
  %488 = vmatprep.mubr.bf16.mxu0 0
  %489 = vmatmul.mubr.bf16.gmra.mrb[0].mxu0 %v211
  %v490 = vpop.f32.mrb[0].mxu0
  %v491 = vadd.f32 %v190, %v490
  %v492 = vpop.f32.mrb[0].mxu0
  %v493 = vadd.f32 %v194, %v492
  %v494 = vpop.f32.mrb[0].mxu0
  %v495 = vpop.f32.mrb[0].mxu0
  %496 = vdwg.mxu0
  %v497 = vmul.f32 %v410, %v410
  %v498 = vmul.f32 %v412, %v412
  %v499 = vmul.f32 %v471, %v471
  %v500 = vmul.f32 %v473, %v473
  %v501 = vmul.f32 %v414, %v414
  %v502 = vmul.f32 %v416, %v416
  %v503 = vmul.f32 %v475, %v475
  %v504 = vmul.f32 %v477, %v477
  %v505 = vmul.f32 %v420, %v420
  %v506 = vmul.f32 %v422, %v422
  %v507 = vmul.f32 %v481, %v481
  %v508 = vmul.f32 %v483, %v483
  %v509 = vmul.f32 %v424, %v424
  %v510 = vmul.f32 %v426, %v426
  %v511 = vmul.f32 %v485, %v485
  %v512 = vmul.f32 %v487, %v487
  %v513 = vmul.f32 %v430, %v430
  %v514 = vmul.f32 %v432, %v432
  %v515 = vmul.f32 %v491, %v491
  %v516 = vmul.f32 %v493, %v493
  %v517 = vmul.f32 %v410, %v497
  %v518 = vmul.f32 %v412, %v498
  %v519 = vmul.f32 %v471, %v499
  %v520 = vmul.f32 %v473, %v500
  %v521 = vmul.f32 %v414, %v501
  %v522 = vmul.f32 %v416, %v502
  %v523 = vmul.f32 %v475, %v503
  %v524 = vmul.f32 %v477, %v504
  %v525 = vmul.f32 %v420, %v505
  %v526 = vmul.f32 %v422, %v506
  %v527 = vmul.f32 %v481, %v507
  %v528 = vmul.f32 %v483, %v508
  %v529 = vmul.f32 %v424, %v509
  %v530 = vmul.f32 %v426, %v510
  %v531 = vmul.f32 %v485, %v511
  %v532 = vmul.f32 %v487, %v512
  %v533 = vmul.f32 %v430, %v513
  %v534 = vmul.f32 %v432, %v514
  %v535 = vmul.f32 %v491, %v515
  %v536 = vmul.f32 %v493, %v516
  %v537 = vmul.f32 %v517, 0.044715
  %v538 = vmul.f32 %v518, 0.044715
  %v539 = vmul.f32 %v519, 0.044715
  %v540 = vmul.f32 %v520, 0.044715
  %v541 = vmul.f32 %v521, 0.044715
  %v542 = vmul.f32 %v522, 0.044715
  %v543 = vmul.f32 %v523, 0.044715
  %v544 = vmul.f32 %v524, 0.044715
  %v545 = vmul.f32 %v525, 0.044715
  %v546 = vmul.f32 %v526, 0.044715
  %v547 = vmul.f32 %v527, 0.044715
  %v548 = vmul.f32 %v528, 0.044715
  %v549 = vmul.f32 %v529, 0.044715
  %v550 = vmul.f32 %v530, 0.044715
  %v551 = vmul.f32 %v531, 0.044715
  %v552 = vmul.f32 %v532, 0.044715
  %v553 = vmul.f32 %v533, 0.044715
  %v554 = vmul.f32 %v534, 0.044715
  %v555 = vmul.f32 %v535, 0.044715
  %v556 = vmul.f32 %v536, 0.044715
  %v557 = vadd.f32 %v410, %v537
  %v558 = vadd.f32 %v412, %v538
  %v559 = vadd.f32 %v471, %v539
  %v560 = vadd.f32 %v473, %v540
  %v561 = vadd.f32 %v414, %v541
  %v562 = vadd.f32 %v416, %v542
  %v563 = vadd.f32 %v475, %v543
  %v564 = vadd.f32 %v477, %v544
  %v565 = vadd.f32 %v420, %v545
  %v566 = vadd.f32 %v422, %v546
  %v567 = vadd.f32 %v481, %v547
  %v568 = vadd.f32 %v483, %v548
  %v569 = vadd.f32 %v424, %v549
  %v570 = vadd.f32 %v426, %v550
  %v571 = vadd.f32 %v485, %v551
  %v572 = vadd.f32 %v487, %v552
  %v573 = vadd.f32 %v430, %v553
  %v574 = vadd.f32 %v432, %v554
  %v575 = vadd.f32 %v491, %v555
  %v576 = vadd.f32 %v493, %v556
  %v577 = vmul.f32 %v557, 0.7978846
  %v578 = vmul.f32 %v558, 0.7978846
  %v579 = vmul.f32 %v559, 0.7978846
  %v580 = vmul.f32 %v560, 0.7978846
  %v581 = vmul.f32 %v561, 0.7978846
  %v582 = vmul.f32 %v562, 0.7978846
  %v583 = vmul.f32 %v563, 0.7978846
  %v584 = vmul.f32 %v564, 0.7978846
  %v585 = vmul.f32 %v565, 0.7978846
  %v586 = vmul.f32 %v566, 0.7978846
  %v587 = vmul.f32 %v567, 0.7978846
  %v588 = vmul.f32 %v568, 0.7978846
  %v589 = vmul.f32 %v569, 0.7978846
  %v590 = vmul.f32 %v570, 0.7978846
  %v591 = vmul.f32 %v571, 0.7978846
  %v592 = vmul.f32 %v572, 0.7978846
  %v593 = vmul.f32 %v573, 0.7978846
  %v594 = vmul.f32 %v574, 0.7978846
  %v595 = vmul.f32 %v575, 0.7978846
  %v596 = vmul.f32 %v576, 0.7978846
  %v597 = vtanh.pop %v577
  %v598 = vtanh.pop %v578
  %v599 = vtanh.pop %v579
  %v600 = vtanh.pop %v580
  %v601 = vtanh.pop %v581
  %v602 = vtanh.pop %v582
  %v603 = vtanh.pop %v583
  %v604 = vtanh.pop %v584
  %v605 = vtanh.pop %v585
  %v606 = vtanh.pop %v586
  %v607 = vtanh.pop %v587
  %v608 = vtanh.pop %v588
  %v609 = vtanh.pop %v589
  %v610 = vtanh.pop %v590
  %v611 = vtanh.pop %v591
  %v612 = vtanh.pop %v592
  %v613 = vtanh.pop %v593
  %v614 = vtanh.pop %v594
  %v615 = vtanh.pop %v595
  %v616 = vtanh.pop %v596
  %v617 = vadd.f32 %v597, 1.0
  %v618 = vadd.f32 %v598, 1.0
  %v619 = vadd.f32 %v599, 1.0
  %v620 = vadd.f32 %v600, 1.0
  %v621 = vadd.f32 %v601, 1.0
  %v622 = vadd.f32 %v602, 1.0
  %v623 = vadd.f32 %v603, 1.0
  %v624 = vadd.f32 %v604, 1.0
  %v625 = vadd.f32 %v605, 1.0
  %v626 = vadd.f32 %v606, 1.0
  %v627 = vadd.f32 %v607, 1.0
  %v628 = vadd.f32 %v608, 1.0
  %v629 = vadd.f32 %v609, 1.0
  %v630 = vadd.f32 %v610, 1.0
  %v631 = vadd.f32 %v611, 1.0
  %v632 = vadd.f32 %v612, 1.0
  %v633 = vadd.f32 %v613, 1.0
  %v634 = vadd.f32 %v614, 1.0
  %v635 = vadd.f32 %v615, 1.0
  %v636 = vadd.f32 %v616, 1.0
  %v637 = vmul.f32 %v617, 0.5
  %v638 = vmul.f32 %v618, 0.5
  %v639 = vmul.f32 %v619, 0.5
  %v640 = vmul.f32 %v620, 0.5
  %v641 = vmul.f32 %v621, 0.5
  %v642 = vmul.f32 %v622, 0.5
  %v643 = vmul.f32 %v623, 0.5
  %v644 = vmul.f32 %v624, 0.5
  %v645 = vmul.f32 %v625, 0.5
  %v646 = vmul.f32 %v626, 0.5
  %v647 = vmul.f32 %v627, 0.5
  %v648 = vmul.f32 %v628, 0.5
  %v649 = vmul.f32 %v629, 0.5
  %v650 = vmul.f32 %v630, 0.5
  %v651 = vmul.f32 %v631, 0.5
  %v652 = vmul.f32 %v632, 0.5
  %v653 = vmul.f32 %v633, 0.5
  %v654 = vmul.f32 %v634, 0.5
  %v655 = vmul.f32 %v635, 0.5
  %v656 = vmul.f32 %v636, 0.5
  %v657 = vmul.f32 %v410, %v637
  %v658 = vmul.f32 %v412, %v638
  %v659 = vmul.f32 %v471, %v639
  %v660 = vmul.f32 %v473, %v640
  %v661 = vmul.f32 %v414, %v641
  %v662 = vmul.f32 %v416, %v642
  %v663 = vmul.f32 %v475, %v643
  %v664 = vmul.f32 %v477, %v644
  %v665 = vmul.f32 %v420, %v645
  %v666 = vmul.f32 %v422, %v646
  %v667 = vmul.f32 %v481, %v647
  %v668 = vmul.f32 %v483, %v648
  %v669 = vmul.f32 %v424, %v649
  %v670 = vmul.f32 %v426, %v650
  %v671 = vmul.f32 %v485, %v651
  %v672 = vmul.f32 %v487, %v652
  %v673 = vmul.f32 %v430, %v653
  %v674 = vmul.f32 %v432, %v654
  %v675 = vmul.f32 %v491, %v655
  %v676 = vmul.f32 %v493, %v656
  %v677 = vpack.c.bf16 %v661, %v657
  %v678 = vpack.c.bf16 %v662, %v658
  %v679 = vpack.c.bf16 %v663, %v659
  %v680 = vpack.c.bf16 %v664, %v660
  %v681 = vpack.c.bf16 %v669, %v665
  %v682 = vpack.c.bf16 %v670, %v666
  %v683 = vpack.c.bf16 %v671, %v667
  %v684 = vpack.c.bf16 %v672, %v668
  %v685 = vpack.c.bf16 %v673, %v673
  %v686 = vpack.c.bf16 %v674, %v674
  %v687 = vpack.c.bf16 %v675, %v675
  %v688 = vpack.c.bf16 %v676, %v676
  %v701 = vunpack.c.l.b16 %v677
  %v702 = vunpack.c.l.b16 %v678
  %v703 = vunpack.c.l.b16 %v679
  %v704 = vunpack.c.l.b16 %v680
  %v705 = vunpack.c.h.b16 %v677
  %v706 = vunpack.c.h.b16 %v678
  %v707 = vunpack.c.h.b16 %v679
  %v708 = vunpack.c.h.b16 %v680
  %v709 = vunpack.c.l.b16 %v681
  %v710 = vunpack.c.l.b16 %v682
  %v711 = vunpack.c.l.b16 %v683
  %v712 = vunpack.c.l.b16 %v684
  %v713 = vunpack.c.h.b16 %v681
  %v714 = vunpack.c.h.b16 %v682
  %v715 = vunpack.c.h.b16 %v683
  %v716 = vunpack.c.h.b16 %v684
  %v717 = vunpack.c.l.b16 %v685
  %v718 = vunpack.c.l.b16 %v686
  %v719 = vunpack.c.l.b16 %v687
  %v720 = vunpack.c.l.b16 %v688
  %v721 = vpack.c.b16 %v702, %v701
  %v722 = vpack.c.b16 %v704, %v703
  %v723 = vpack.c.b16 %v706, %v705
  %v724 = vpack.c.b16 %v708, %v707
  %v725 = vpack.c.b16 %v710, %v709
  %v726 = vpack.c.b16 %v712, %v711
  %v727 = vpack.c.b16 %v714, %v713
  %v728 = vpack.c.b16 %v716, %v715
  %v729 = vpack.c.b16 %v718, %v717
  %v730 = vpack.c.b16 %v720, %v719
  %741 = vst [vmem:[%s5] sm:$0xff] %v721
  %742 = vst [vmem:[%s5 + $0x8] sm:$0xff] %v722
  %743 = vst [vmem:[%s5 + $0x10] sm:$0xff] %v723
  %744 = vst [vmem:[%s5 + $0x18] sm:$0xff] %v724
  %745 = vst [vmem:[%s5 + $0x20] sm:$0xff] %v725
  %746 = vst [vmem:[%s5 + $0x28] sm:$0xff] %v726
  %747 = vst [vmem:[%s5 + $0x30] sm:$0xff] %v727
  %748 = vst [vmem:[%s5 + $0x38] sm:$0xff] %v728
  %749 = vst [vmem:[%s5 + $0x40] sm:$0xff] %v729
  %750 = vst [vmem:[%s5 + $0x48] sm:$0xff] %v730
  // Predicated region
  $region26: #{ccot_forward.33} parent=0 // pred_check
    _
  $region27: #{ccot_forward.33} parent=0 // pred_check_branch
    %752 = sbr.rel (0) target = $region29
  $region28: #{ccot_forward.33} parent=0 // pred_region
    _
  $region29: #{ccot_forward.33} parent=0 // pred_fallthru
    _
  // Predicated region
  $region30: #{ccot_forward.33} parent=0 // pred_check
    _
  $region31: #{ccot_forward.33} parent=0 // pred_check_branch
    %754 = sbr.rel (0) target = $region33
  $region32: #{ccot_forward.33} parent=0 // pred_region
    _
  $region33: #{ccot_forward.33} parent=0 // pred_fallthru
    _

// kernel: ccot_forward.31
$region0: #{ccot_forward.31}
  #allocation0 [shape = 'u32[]', space=smem, size = 0x4, offset = 0x4, fixed_abs, tag = 'smem constant byte address 0x4 - core index']
  #allocation1 [shape = 'u32[144,128]{1,0:T(1,128)}', space=vmem, size = 0x12000, scoped, tag = 'internal scratch']
  #allocation2 [shape = 'bf16[20,128]{1,0:T(8,128)(2,1)}', space=vmem, size = 0x1800, scoped, tag = 'scratch operand']
  %s0 = inlined_call_operand.vmem [shape: bf16[2,20,384], index: 0, kind: input, shape index: {}]
  %s1 = inlined_call_operand.vmem [shape: f32[20,32], index: 1, kind: input, shape index: {}]
  %s2 = inlined_call_operand.vmem [shape: f32[20,32], index: 2, kind: input, shape index: {}]
  %s3 = inlined_call_operand.vmem [shape: bf16[2,20,128], index: 3, kind: output, shape index: {}]
  %s4 = sld [smem:[#allocation0]]
  $region45: #{ccot_forward.31} parent=0
    _
  %s6 = ssub.s32 1, %s4
  %s7 = scalar_select 0, %s6, %s4
  loop: start=0, step=1, limit=4
  $region2: #{ccot_forward.31} parent=0 // loop_pre_header
    _
  $region3: #{ccot_forward.31} parent=0 // loop_header
    %s9 = sphi 0, %s13
    %p10 = scmp.ge.s32.totalorder %s9, 4
    %s19 = sphi 0, %s21
    %s22 = sphi 0, %s19
    %s23 = sphi 0, %s22
    %s39 = sphi 0, %s23
    %s43 = sphi 0, %s43
    %s45 = sphi 0, %s43
    %s46 = sphi 0, %s45
    %s60 = sphi 0, %s46
    %s64 = sphi 0, %s64
    %s66 = sphi 0, %s64
    %s67 = sphi 0, %s66
    %s81 = sphi 0, %s67
    %s87 = sphi 0, %s89
    %s90 = sphi 0, %s87
    %s91 = sphi 0, %s90
    %s107 = sphi 0, %s91
  $region4: #{ccot_forward.31} parent=0 // loop_header_branch
    %12 = sbr.rel (%p10) target = $region8
  $region5: #{ccot_forward.31} parent=0 // loop_body
    %s14 = ssub.s32 %s9, 1
    %s15 = ssub.s32 %s9, 2
    %s16 = sadd.s32 %s9, 1
    %s17 = ssub.s32 %s9, %s16
    %p18 = scmp.eq.s32.totalorder %s17, 0
    %s20 = sadd.s32 %s19, 1
    %s21 = scalar_select %p18, %s19, %s20
    %p24 = pneg %p18
    %p25 = scmp.eq.s32.totalorder %s9, 1
    %p26 = por %p24, %p25
    %p27 = scmp.ne.s32.totalorder %s19, %s22
    %p28 = scmp.eq.s32.totalorder %s9, 0
    %p29 = por %p27, %p28
    %p30 = scmp.ne.s32.totalorder %s19, %s22
    %p31 = scmp.eq.s32.totalorder %s14, 1
    %p32 = por %p30, %p31
    %p33 = scmp.ne.s32.totalorder %s22, %s23
    %p34 = scmp.eq.s32.totalorder %s14, 0
    %p35 = por %p33, %p34
    %p36 = scmp.ne.s32.totalorder %s22, %s23
    %p37 = scmp.eq.s32.totalorder %s15, 1
    %p38 = por %p36, %p37
    %p40 = scmp.ne.s32.totalorder %s23, %s39
    %p41 = scmp.eq.s32.totalorder %s15, 0
    %p42 = por %p40, %p41
    %s44 = sadd.s32 %s43, 1
    %p47 = scmp.eq.s32.totalorder %s9, 1
    %p48 = scmp.ne.s32.totalorder %s43, %s45
    %p49 = scmp.eq.s32.totalorder %s9, 0
    %p50 = por %p48, %p49
    %p51 = scmp.ne.s32.totalorder %s43, %s45
    %p52 = scmp.eq.s32.totalorder %s14, 1
    %p53 = por %p51, %p52
    %p54 = scmp.ne.s32.totalorder %s45, %s46
    %p55 = scmp.eq.s32.totalorder %s14, 0
    %p56 = por %p54, %p55
    %p57 = scmp.ne.s32.totalorder %s45, %s46
    %p58 = scmp.eq.s32.totalorder %s15, 1
    %p59 = por %p57, %p58
    %p61 = scmp.ne.s32.totalorder %s46, %s60
    %p62 = scmp.eq.s32.totalorder %s15, 0
    %p63 = por %p61, %p62
    %s65 = sadd.s32 %s64, 1
    %p68 = scmp.eq.s32.totalorder %s9, 1
    %p69 = scmp.ne.s32.totalorder %s64, %s66
    %p70 = scmp.eq.s32.totalorder %s9, 0
    %p71 = por %p69, %p70
    %p72 = scmp.ne.s32.totalorder %s64, %s66
    %p73 = scmp.eq.s32.totalorder %s14, 1
    %p74 = por %p72, %p73
    %p75 = scmp.ne.s32.totalorder %s66, %s67
    %p76 = scmp.eq.s32.totalorder %s14, 0
    %p77 = por %p75, %p76
    %p78 = scmp.ne.s32.totalorder %s66, %s67
    %p79 = scmp.eq.s32.totalorder %s15, 1
    %p80 = por %p78, %p79
    %p82 = scmp.ne.s32.totalorder %s67, %s81
    %p83 = scmp.eq.s32.totalorder %s15, 0
    %p84 = por %p82, %p83
    %s85 = ssub.s32 %s9, %s16
    %p86 = scmp.eq.s32.totalorder %s85, 0
    %s88 = sadd.s32 %s87, 1
    %s89 = scalar_select %p86, %s87, %s88
    %p92 = pneg %p86
    %p93 = scmp.eq.s32.totalorder %s9, 1
    %p94 = por %p92, %p93
    %p95 = scmp.ne.s32.totalorder %s87, %s90
    %p96 = scmp.eq.s32.totalorder %s9, 0
    %p97 = por %p95, %p96
    %p98 = scmp.ne.s32.totalorder %s87, %s90
    %p99 = scmp.eq.s32.totalorder %s14, 1
    %p100 = por %p98, %p99
    %p101 = scmp.ne.s32.totalorder %s90, %s91
    %p102 = scmp.eq.s32.totalorder %s14, 0
    %p103 = por %p101, %p102
    %p104 = scmp.ne.s32.totalorder %s90, %s91
    %p105 = scmp.eq.s32.totalorder %s15, 1
    %p106 = por %p104, %p105
    %p108 = scmp.ne.s32.totalorder %s91, %s107
    %p109 = scmp.eq.s32.totalorder %s15, 0
    %p110 = por %p108, %p109
    %p111 = scmp.le.s32.totalorder 1, %s9
    %p112 = scmp.lt.s32.totalorder %s9, 3
    %p113 = pnand %p111, %p112
    %p114 = pneg %p113
    // Predicated region
    $region9: #{ccot_forward.31} parent=5 // pred_check
      _
    $region10: #{ccot_forward.31} parent=5 // pred_check_branch
      %116 = sbr.rel (%p113) target = $region12
    $region11: #{ccot_forward.31} parent=5 // pred_region
      %s117 = ssub.s32 %s9, 1
      // Predicated region
      $region13: #{ccot_forward.31} parent=11 // pred_check
        %p118 = pneg %p56
      $region14: #{ccot_forward.31} parent=11 // pred_check_branch
        %120 = sbr.rel (%p118) target = $region16
      $region15: #{ccot_forward.31} parent=11 // pred_region
        _
      $region16: #{ccot_forward.31} parent=11 // pred_fallthru
        _
      // Predicated region
      $region17: #{ccot_forward.31} parent=11 // pred_check
        %p121 = pneg %p77
      $region18: #{ccot_forward.31} parent=11 // pred_check_branch
        %123 = sbr.rel (%p121) target = $region20
      $region19: #{ccot_forward.31} parent=11 // pred_region
        _
      $region20: #{ccot_forward.31} parent=11 // pred_fallthru
        _
    $region12: #{ccot_forward.31} parent=5 // pred_fallthru
      _
    %p124 = scmp.lt.s32.totalorder %s9, 2
    // Predicated region
    $region21: #{ccot_forward.31} parent=5 // pred_check
      %p125 = pneg %p124
    $region22: #{ccot_forward.31} parent=5 // pred_check_branch
      %127 = sbr.rel (%p125) target = $region24
    $region23: #{ccot_forward.31} parent=5 // pred_region
      // Predicated region
      $region25: #{ccot_forward.31} parent=23 // pred_check
        %p128 = pneg %p29
      $region26: #{ccot_forward.31} parent=23 // pred_check_branch
        %130 = sbr.rel (%p128) target = $region28
      $region27: #{ccot_forward.31} parent=23 // pred_region
        %p131 = scmp.lt.s32.totalorder %s9, 1
        %s132 = scalar_select %p131, %s9, 1
        %s133 = smul.addr %s132, 9
        %s134 = smul.addr %s133, 4
        %s135 = scalar_lea.vmem %s0, %s134
      $region28: #{ccot_forward.31} parent=23 // pred_fallthru
        _
    $region24: #{ccot_forward.31} parent=5 // pred_fallthru
      _
    %p136 = scmp.le.s32.totalorder 1, %s9
    %p137 = scmp.lt.s32.totalorder %s9, 3
    %p138 = pnand %p136, %p137
    %p139 = pneg %p138
    // Predicated region
    $region29: #{ccot_forward.31} parent=5 // pred_check
      _
    $region30: #{ccot_forward.31} parent=5 // pred_check_branch
      %141 = sbr.rel (%p138) target = $region32
    $region31: #{ccot_forward.31} parent=5 // pred_region
      %s142 = ssub.s32 %s9, 1
      %p143 = scmp.lt.s32.totalorder %s14, 1
      %s144 = scalar_select %p143, %s14, 1
      %s145 = smul.addr %s144, 9
      %s146 = smul.addr %s145, 4
      %s147 = scalar_lea.vmem %s0, %s146
      %p148 = pneg %p35
      %p149 = pneg %p32
      %p150 = pneg %p56
      %p151 = pneg %p53
      %p152 = pneg %p77
      %p153 = pneg %p74
      %p154 = pneg %p103
      %p155 = pneg %p100
      %p156 = scmp.lt.s32.totalorder %s14, 1
      %s157 = scalar_select %p156, %s14, 1
      %s158 = smul.addr %s157, 3
      %s159 = smul.addr %s158, 4
      %s160 = scalar_lea.vmem %s3, %s159
      %p161 = scmp.lt.s32.totalorder %s14, 1
      %s162 = scalar_select %p161, %s14, 1
      %s163 = smul.addr %s162, 9
      %s164 = smul.addr %s163, 4
      %s165 = scalar_lea.vmem %s0, %s164
      %p166 = scmp.lt.s32.totalorder %s14, 1
      %s167 = scalar_select %p166, %s14, 1
      %s168 = smul.addr %s167, 3
      %s169 = smul.addr %s168, 4
      %s170 = scalar_lea.vmem %s3, %s169
      %v172 = vld [vmem:[%s165] sm:$0xff]
      %v173 = vld [vmem:[%s165 + $0x8] sm:$0xf]
      %v174 = vld [vmem:[%s165 + $0xc] sm:$0xff]
      %v175 = vld [vmem:[%s165 + $0x14] sm:$0xf]
      %v176 = vld [vmem:[%s165 + $0x18] sm:$0x33]
      %v177 = vld [vmem:[%s165 + $0x20] sm:$0x3]
      %v178 = vld [vmem:[%s1] sm:$0xff]
      %v179 = vld [vmem:[%s1 + $0x8] sm:$0xff]
      %v180 = vld [vmem:[%s1 + $0x10] sm:$0xf]
      %v181 = vld [vmem:[%s2] sm:$0xff]
      %v182 = vld [vmem:[%s2 + $0x8] sm:$0xff]
      %v183 = vld [vmem:[%s2 + $0x10] sm:$0xf]
      %v184 = vlaneseq
      %v185 = vshrl.u32 %v184, 7
      %v186 = vadd.s32 %v185, 8
      %v187 = vadd.s32 %v185, 16
      %v188 = vlaneseq
      %v189 = vand.u32 %v188, 127
      %vm190 = vcmp.le.s32.totalorder %v189, %v185
      %vm191 = vcmp.le.s32.totalorder %v189, %v186
      %vm192 = vcmp.le.s32.totalorder %v189, %v187
      %vm193 = vcmp.lt.s32.totalorder %v189, 12
      %vm194 = vmor %vm190, %vm193
      %vm195 = vmor %vm191, %vm193
      %vm196 = vmor %vm192, %vm193
      %v197 = vunpack.c.l.bf16 %v172
      %v198 = vunpack.c.l.bf16 %v174
      %v199 = vunpack.c.l.bf16 %v176
      %v203 = vrot.slane %v172, 4
      %v204 = vrot.slane %v174, 4
      %v205 = vrot.slane %v176, 4
      %v209 = vunpack.c.l.bf16 %v203
      %v210 = vunpack.c.l.bf16 %v204
      %v211 = vunpack.c.l.bf16 %v205
      %v212 = vmul.f32 %v197, %v178
      %v213 = vmul.f32 %v198, %v179
      %v214 = vmul.f32 %v199, %v180
      %218 = vrot.lane.b32.xlu0 %v197, 112
      %v219 = vpop.permute.xlu0 %218
      %220 = vrot.lane.b32.xlu0 %v198, 112
      %v221 = vpop.permute.xlu0 %220
      %222 = vrot.lane.b32.xlu0 %v199, 112
      %v223 = vpop.permute.xlu0 %222
      %227 = vrot.lane.b32.xlu0 %v197, 16
      %v228 = vpop.permute.xlu0 %227
      %229 = vrot.lane.b32.xlu0 %v198, 16
      %v230 = vpop.permute.xlu0 %229
      %231 = vrot.lane.b32.xlu0 %v199, 16
      %v232 = vpop.permute.xlu0 %231
      %vm236 = vcmask 130048
      %v237 = vsel %vm236, %v219, %v228
      %v238 = vsel %vm236, %v221, %v230
      %v239 = vsel %vm236, %v223, %v232
      %v240 = vmul.f32 %v237, %v181
      %v241 = vmul.f32 %v238, %v182
      %v242 = vmul.f32 %v239, %v183
      %v243 = vadd.f32 %v212, %v240
      %v244 = vadd.f32 %v213, %v241
      %v245 = vadd.f32 %v214, %v242
      %v246 = vmul.f32 %v209, %v178
      %v247 = vmul.f32 %v210, %v179
      %v248 = vmul.f32 %v211, %v180
      %252 = vrot.lane.b32.xlu0 %v209, 112
      %v253 = vpop.permute.xlu0 %252
      %254 = vrot.lane.b32.xlu0 %v210, 112
      %v255 = vpop.permute.xlu0 %254
      %256 = vrot.lane.b32.xlu0 %v211, 112
      %v257 = vpop.permute.xlu0 %256
      %261 = vrot.lane.b32.xlu0 %v209, 16
      %v262 = vpop.permute.xlu0 %261
      %263 = vrot.lane.b32.xlu0 %v210, 16
      %v264 = vpop.permute.xlu0 %263
      %265 = vrot.lane.b32.xlu0 %v211, 16
      %v266 = vpop.permute.xlu0 %265
      %v270 = vsel %vm236, %v253, %v262
      %v271 = vsel %vm236, %v255, %v264
      %v272 = vsel %vm236, %v257, %v266
      %v273 = vmul.f32 %v270, %v181
      %v274 = vmul.f32 %v271, %v182
      %v275 = vmul.f32 %v272, %v183
      %v276 = vadd.f32 %v246, %v273
      %v277 = vadd.f32 %v247, %v274
      %v278 = vadd.f32 %v248, %v275
      %v279 = vpack.c.bf16 %v244, %v243
      %v280 = vpack.c.bf16 %v245, %v245
      %v281 = vpack.c.bf16 %v277, %v276
      %v282 = vpack.c.bf16 %v278, %v278
      %vm283 = vcmask 261120
      %v285 = vsel %vm283, %v279, 0
      %v288 = vsel %vm283, %v280, 0
      %v291 = vsel %vm283, %v281, 0
      %v294 = vsel %vm283, %v282, 0
      %296 = vmatprep.subr.bf16.mxu0 0
      %297 = vmatpush1.bf16.xpose.msra.mxu0 %v291
      %298 = vmatprep.subr.bf16.mxu0 0
      %299 = vmatpush1.bf16.xpose.msra.mxu0 %v294
      %300 = vmatprep.subr.bf16.mxu0 0
      %301 = vmatpush1.bf16.xpose.msra.mxu0 0
      %302 = vmatprep.subr.bf16.mxu0 0
      %303 = vmatpush1.bf16.xpose.msra.mxu0 0
      %304 = vmatprep.subr.bf16.mxu0 0
      %305 = vmatpush1.bf16.xpose.msra.mxu0 0
      %306 = vmatprep.subr.bf16.mxu0 0
      %307 = vmatpush1.bf16.xpose.msra.mxu0 0
      %308 = vmatprep.subr.bf16.mxu0 0
      %309 = vmatpush1.bf16.xpose.msra.mxu0 0
      %310 = vmatprep.subr.bf16.mxu0 0
      %311 = vmatpush1.bf16.xpose.msra.mxu0 0
      %312 = vmatprep.subr.bf16.mxu0 0
      %313 = vmatpush1.bf16.xpose.msra.mxu0 0
      %314 = vmatprep.subr.bf16.mxu0 0
      %315 = vmatpush1.bf16.xpose.msra.mxu0 0
      %316 = vmatprep.subr.bf16.mxu0 0
      %317 = vmatpush1.bf16.xpose.msra.mxu0 0
      %318 = vmatprep.subr.bf16.mxu0 0
      %319 = vmatpush1.bf16.xpose.msra.mxu0 0
      %320 = vmatprep.subr.bf16.mxu0 0
      %321 = vmatpush1.bf16.xpose.msra.mxu0 0
      %322 = vmatprep.subr.bf16.mxu0 0
      %323 = vmatpush1.bf16.xpose.msra.mxu0 0
      %324 = vmatprep.subr.bf16.mxu0 0
      %325 = vmatpush1.bf16.xpose.msra.mxu0 0
      %326 = vmatprep.subr.bf16.mxu0 0
      %327 = vmatpush1.bf16.xpose.msra.mxu0 0
      %328 = vmatprep.mubr.bf16.mxu0 0
      %329 = vmatmul.mubr.bf16.gmra.mrb[0].mxu0 %v285
      %v330 = vpop.f32.mrb[0].mxu0
      %v331 = vadd.f32 0.0, %v330
      %v332 = vpop.f32.mrb[0].mxu0
      %v333 = vpop.f32.mrb[0].mxu0
      %v334 = vadd.f32 0.0, %v333
      %v335 = vpop.f32.mrb[0].mxu0
      %336 = vmatprep.mubr.bf16.mxu0 0
      %337 = vmatmul.mubr.bf16.gmra.mrb[0].mxu0 %v288
      %v338 = vpop.f32.mrb[0].mxu0
      %v339 = vadd.f32 0.0, %v338
      %v340 = vpop.f32.mrb[0].mxu0
      %v341 = vpop.f32.mrb[0].mxu0
      %v342 = vpop.f32.mrb[0].mxu0
      %343 = vdwg.mxu0
      %v344 = vmul.f32 %v331, 0.17677669
      %v345 = vmul.f32 %v334, 0.17677669
      %v346 = vmul.f32 %v339, 0.17677669
      %v347 = vsel %vm194, %v344, -1e+09
      %v348 = vsel %vm195, %v345, -1e+09
      %v349 = vsel %vm196, %v346, -1e+09
      %vm350 = vcmask 162816
      %v351 = vsel %vm350, %v347, -inf
      %352 = vmax.xlane.f32.xlu0 %v351
      %v353 = vpop.xlane.xlu0 %352
      %v354 = vsel %vm350, %v348, -inf
      %355 = vmax.xlane.f32.xlu0 %v354
      %v356 = vpop.xlane.xlu0 %355
      %vm357 = vcmask 158720
      %v358 = vsel %vm357, %v349, -inf
      %359 = vmax.xlane.f32.xlu0 %v358
      %v360 = vpop.xlane.xlu0 %359
      %v361 = vsub.f32 %v347, %v353
      %v362 = vsub.f32 %v348, %v356
      %v363 = vsub.f32 %v349, %v360
      %v364 = vmul.f32 %v361, 1.442695
      %v365 = vpow.pop %v364
      %v366 = vmul.f32 %v362, 1.442695
      %v367 = vpow.pop %v366
      %v368 = vmul.f32 %v363, 1.442695
      %v369 = vpow.pop %v368
      %v370 = vsel %vm350, %v365, 0.0
      %371 = vadd.xlane.f32.xlu0 %v370
      %v372 = vpop.xlane.xlu0 %371
      %v373 = vsel %vm350, %v367, 0.0
      %374 = vadd.xlane.f32.xlu0 %v373
      %v375 = vpop.xlane.xlu0 %374
      %v376 = vsel %vm357, %v369, 0.0
      %377 = vadd.xlane.f32.xlu0 %v376
      %v378 = vpop.xlane.xlu0 %377
      %v379 = vpack.c.bf16 %v367, %v365
      %v380 = vpack.c.bf16 %v369, %v369
      %v384 = vunpack.c.l.b16 %v173
      %v385 = vunpack.c.l.b16 %v175
      %v386 = vunpack.c.l.b16 %v177
      %v387 = vpack.c.b16 %v385, %v384
      %v388 = vpack.c.b16 %v386, %v386
      %v391 = vsel %vm350, %v379, 0
      %v394 = vsel %vm350, %v380, 0
      %vm396 = vcmask 1041408
      %v398 = vsel %vm396, %v388, 0
      %400 = vmatprep.subr.bf16.mxu0 0
      %401 = vmatpush1.bf16.msra.mxu0 %v387
      %402 = vmatprep.subr.bf16.mxu0 0
      %403 = vmatpush1.bf16.msra.mxu0 %v398
      %404 = vmatprep.subr.bf16.mxu0 0
      %405 = vmatpush1.bf16.msra.mxu0 0
      %406 = vmatprep.subr.bf16.mxu0 0
      %407 = vmatpush1.bf16.msra.mxu0 0
      %408 = vmatprep.subr.bf16.mxu0 0
      %409 = vmatpush1.bf16.msra.mxu0 0
      %410 = vmatprep.subr.bf16.mxu0 0
      %411 = vmatpush1.bf16.msra.mxu0 0
      %412 = vmatprep.subr.bf16.mxu0 0
      %413 = vmatpush1.bf16.msra.mxu0 0
      %414 = vmatprep.subr.bf16.mxu0 0
      %415 = vmatpush1.bf16.msra.mxu0 0
      %416 = vmatprep.subr.bf16.mxu0 0
      %417 = vmatpush1.bf16.msra.mxu0 0
      %418 = vmatprep.subr.bf16.mxu0 0
      %419 = vmatpush1.bf16.msra.mxu0 0
      %420 = vmatprep.subr.bf16.mxu0 0
      %421 = vmatpush1.bf16.msra.mxu0 0
      %422 = vmatprep.subr.bf16.mxu0 0
      %423 = vmatpush1.bf16.msra.mxu0 0
      %424 = vmatprep.subr.bf16.mxu0 0
      %425 = vmatpush1.bf16.msra.mxu0 0
      %426 = vmatprep.subr.bf16.mxu0 0
      %427 = vmatpush1.bf16.msra.mxu0 0
      %428 = vmatprep.subr.bf16.mxu0 0
      %429 = vmatpush1.bf16.msra.mxu0 0
      %430 = vmatprep.subr.bf16.mxu0 0
      %431 = vmatpush1.bf16.msra.mxu0 0
      %432 = vmatprep.mubr.bf16.mxu0 0
      %433 = vmatmul.mubr.bf16.gmra.mrb[0].mxu0 %v391
      %v434 = vpop.f32.mrb[0].mxu0
      %v435 = vadd.f32 0.0, %v434
      %v436 = vpop.f32.mrb[0].mxu0
      %v437 = vpop.f32.mrb[0].mxu0
      %v438 = vadd.f32 0.0, %v437
      %v439 = vpop.f32.mrb[0].mxu0
      %440 = vmatprep.mubr.bf16.mxu0 0
      %441 = vmatmul.mubr.bf16.gmra.mrb[0].mxu0 %v394
      %v442 = vpop.f32.mrb[0].mxu0
      %v443 = vadd.f32 0.0, %v442
      %v444 = vpop.f32.mrb[0].mxu0
      %v445 = vpop.f32.mrb[0].mxu0
      %v446 = vpop.f32.mrb[0].mxu0
      %447 = vdwg.mxu0
      %v448 = vrcp.pop %v372
      %v449 = vrcp.pop %v375
      %v450 = vrcp.pop %v378
      %v451 = vmul.f32 %v435, %v448
      %v452 = vmul.f32 %v438, %v449
      %v453 = vmul.f32 %v443, %v450
      %v454 = vpack.c.bf16 %v452, %v451
      %v455 = vpack.c.bf16 %v453, %v453
      %v458 = vunpack.c.l.b16 %v454
      %v459 = vunpack.c.h.b16 %v454
      %v460 = vunpack.c.l.b16 %v455
      %v461 = vpack.c.b16 %v458, %v458
      %v462 = vpack.c.b16 %v459, %v459
      %v463 = vpack.c.b16 %v460, %v460
      %vm467 = vcmask 257024
      %468 = vst.msk [vmem:[#allocation2] sm:$0xf] %vm467, %v461
      %469 = vst.msk [vmem:[#allocation2 + $0x4] sm:$0xf] %vm467, %v462
      %vm470 = vcmask 254976
      %471 = vst.msk [vmem:[#allocation2 + $0x8] sm:$0x3] %vm470, %v463
      %472 = vrot.lane.b32.xlu0 %v172, 96
      %v473 = vpop.permute.xlu0 %472
      %474 = vrot.lane.b32.xlu0 %v174, 96
      %v475 = vpop.permute.xlu0 %474
      %476 = vrot.lane.b32.xlu0 %v176, 96
      %v477 = vpop.permute.xlu0 %476
      %v478 = vrot.slane %v473, 4
      %v479 = vrot.slane %v475, 4
      %v480 = vrot.slane %v477, 4
      %v484 = vunpack.c.l.bf16 %v478
      %v485 = vunpack.c.l.bf16 %v479
      %v486 = vunpack.c.l.bf16 %v480
      %490 = vrot.lane.b32.xlu0 %v178, 32
      %v491 = vpop.permute.xlu0 %490
      %492 = vrot.lane.b32.xlu0 %v179, 32
      %v493 = vpop.permute.xlu0 %492
      %494 = vrot.lane.b32.xlu0 %v180, 32
      %v495 = vpop.permute.xlu0 %494
      %v499 = vmul.f32 %v197, %v491
      %v500 = vmul.f32 %v198, %v493
      %v501 = vmul.f32 %v199, %v495
      %502 = vrot.lane.b32.xlu0 %v197, 80
      %v503 = vpop.permute.xlu0 %502
      %504 = vrot.lane.b32.xlu0 %v198, 80
      %v505 = vpop.permute.xlu0 %504
      %506 = vrot.lane.b32.xlu0 %v199, 80
      %v507 = vpop.permute.xlu0 %506
      %v511 = vsel %vm236, %v503, %v219
      %v512 = vsel %vm236, %v505, %v221
      %v513 = vsel %vm236, %v507, %v223
      %v514 = vmul.f32 %v511, %v181
      %v515 = vmul.f32 %v512, %v182
      %v516 = vmul.f32 %v513, %v183
      %520 = vrot.lane.b32.xlu0 %v514, 32
      %v521 = vpop.permute.xlu0 %520
      %522 = vrot.lane.b32.xlu0 %v515, 32
      %v523 = vpop.permute.xlu0 %522
      %524 = vrot.lane.b32.xlu0 %v516, 32
      %v525 = vpop.permute.xlu0 %524
      %v529 = vadd.f32 %v499, %v521
      %v530 = vadd.f32 %v500, %v523
      %v531 = vadd.f32 %v501, %v525
      %v532 = vmul.f32 %v484, %v178
      %v533 = vmul.f32 %v485, %v179
      %v534 = vmul.f32 %v486, %v180
      %538 = vrot.lane.b32.xlu0 %v484, 112
      %v539 = vpop.permute.xlu0 %538
      %540 = vrot.lane.b32.xlu0 %v485, 112
      %v541 = vpop.permute.xlu0 %540
      %542 = vrot.lane.b32.xlu0 %v486, 112
      %v543 = vpop.permute.xlu0 %542
      %547 = vrot.lane.b32.xlu0 %v484, 16
      %v548 = vpop.permute.xlu0 %547
      %549 = vrot.lane.b32.xlu0 %v485, 16
      %v550 = vpop.permute.xlu0 %549
      %551 = vrot.lane.b32.xlu0 %v486, 16
      %v552 = vpop.permute.xlu0 %551
      %v556 = vsel %vm236, %v539, %v548
      %v557 = vsel %vm236, %v541, %v550
      %v558 = vsel %vm236, %v543, %v552
      %v559 = vmul.f32 %v556, %v181
      %v560 = vmul.f32 %v557, %v182
      %v561 = vmul.f32 %v558, %v183
      %v562 = vadd.f32 %v532, %v559
      %v563 = vadd.f32 %v533, %v560
      %v564 = vadd.f32 %v534, %v561
      %v565 = vpack.c.bf16 %v530, %v529
      %v566 = vpack.c.bf16 %v531, %v531
      %v567 = vpack.c.bf16 %v563, %v562
      %v568 = vpack.c.bf16 %v564, %v564
      %571 = vrot.lane.b32.xlu0 %v565, 96
      %v572 = vpop.permute.xlu0 %571
      %573 = vrot.lane.b32.xlu0 %v566, 96
      %v574 = vpop.permute.xlu0 %573
      %v576 = vsel %vm283, %v572, 0
      %v579 = vsel %vm283, %v574, 0
      %v582 = vsel %vm283, %v567, 0
      %v585 = vsel %vm283, %v568, 0
      %587 = vmatprep.subr.bf16.mxu0 0
      %588 = vmatpush1.bf16.xpose.msra.mxu0 %v582
      %589 = vmatprep.subr.bf16.mxu0 0
      %590 = vmatpush1.bf16.xpose.msra.mxu0 %v585
      %591 = vmatprep.subr.bf16.mxu0 0
      %592 = vmatpush1.bf16.xpose.msra.mxu0 0
      %593 = vmatprep.subr.bf16.mxu0 0
      %594 = vmatpush1.bf16.xpose.msra.mxu0 0
      %595 = vmatprep.subr.bf16.mxu0 0
      %596 = vmatpush1.bf16.xpose.msra.mxu0 0
      %597 = vmatprep.subr.bf16.mxu0 0
      %598 = vmatpush1.bf16.xpose.msra.mxu0 0
      %599 = vmatprep.subr.bf16.mxu0 0
      %600 = vmatpush1.bf16.xpose.msra.mxu0 0
      %601 = vmatprep.subr.bf16.mxu0 0
      %602 = vmatpush1.bf16.xpose.msra.mxu0 0
      %603 = vmatprep.subr.bf16.mxu0 0
      %604 = vmatpush1.bf16.xpose.msra.mxu0 0
      %605 = vmatprep.subr.bf16.mxu0 0
      %606 = vmatpush1.bf16.xpose.msra.mxu0 0
      %607 = vmatprep.subr.bf16.mxu0 0
      %608 = vmatpush1.bf16.xpose.msra.mxu0 0
      %609 = vmatprep.subr.bf16.mxu0 0
      %610 = vmatpush1.bf16.xpose.msra.mxu0 0
      %611 = vmatprep.subr.bf16.mxu0 0
      %612 = vmatpush1.bf16.xpose.msra.mxu0 0
      %613 = vmatprep.subr.bf16.mxu0 0
      %614 = vmatpush1.bf16.xpose.msra.mxu0 0
      %615 = vmatprep.subr.bf16.mxu0 0
      %616 = vmatpush1.bf16.xpose.msra.mxu0 0
      %617 = vmatprep.subr.bf16.mxu0 0
      %618 = vmatpush1.bf16.xpose.msra.mxu0 0
      %619 = vmatprep.mubr.bf16.mxu0 0
      %620 = vmatmul.mubr.bf16.gmra.mrb[0].mxu0 %v576
      %v621 = vpop.f32.mrb[0].mxu0
      %v622 = vadd.f32 0.0, %v621
      %v623 = vpop.f32.mrb[0].mxu0
      %v624 = vpop.f32.mrb[0].mxu0
      %v625 = vadd.f32 0.0, %v624
      %v626 = vpop.f32.mrb[0].mxu0
      %627 = vmatprep.mubr.bf16.mxu0 0
      %628 = vmatmul.mubr.bf16.gmra.mrb[0].mxu0 %v579
      %v629 = vpop.f32.mrb[0].mxu0
      %v630 = vadd.f32 0.0, %v629
      %v631 = vpop.f32.mrb[0].mxu0
      %v632 = vpop.f32.mrb[0].mxu0
      %v633 = vpop.f32.mrb[0].mxu0
      %634 = vdwg.mxu0
      %v635 = vmul.f32 %v622, 0.17677669
      %v636 = vmul.f32 %v625, 0.17677669
      %v637 = vmul.f32 %v630, 0.17677669
      %v638 = vsel %vm194, %v635, -1e+09
      %v639 = vsel %vm195, %v636, -1e+09
      %v640 = vsel %vm196, %v637, -1e+09
      %v641 = vsel %vm350, %v638, -inf
      %642 = vmax.xlane.f32.xlu0 %v641
      %v643 = vpop.xlane.xlu0 %642
      %v644 = vsel %vm350, %v639, -inf
      %645 = vmax.xlane.f32.xlu0 %v644
      %v646 = vpop.xlane.xlu0 %645
      %v647 = vsel %vm357, %v640, -inf
      %648 = vmax.xlane.f32.xlu0 %v647
      %v649 = vpop.xlane.xlu0 %648
      %v650 = vsub.f32 %v638, %v643
      %v651 = vsub.f32 %v639, %v646
      %v652 = vsub.f32 %v640, %v649
      %v653 = vmul.f32 %v650, 1.442695
      %v654 = vpow.pop %v653
      %v655 = vmul.f32 %v651, 1.442695
      %v656 = vpow.pop %v655
      %v657 = vmul.f32 %v652, 1.442695
      %v658 = vpow.pop %v657
      %v659 = vsel %vm350, %v654, 0.0
      %660 = vadd.xlane.f32.xlu0 %v659
      %v661 = vpop.xlane.xlu0 %660
      %v662 = vsel %vm350, %v656, 0.0
      %663 = vadd.xlane.f32.xlu0 %v662
      %v664 = vpop.xlane.xlu0 %663
      %v665 = vsel %vm357, %v658, 0.0
      %666 = vadd.xlane.f32.xlu0 %v665
      %v667 = vpop.xlane.xlu0 %666
      %v668 = vpack.c.bf16 %v656, %v654
      %v669 = vpack.c.bf16 %v658, %v658
      %670 = vrot.lane.b32.xlu0 %v387, 96
      %v671 = vpop.permute.xlu0 %670
      %672 = vrot.lane.b32.xlu0 %v388, 96
      %v673 = vpop.permute.xlu0 %672
      %v676 = vsel %vm350, %v668, 0
      %v679 = vsel %vm350, %v669, 0
      %v682 = vsel %vm396, %v673, 0
      %684 = vmatprep.subr.bf16.mxu0 0
      %685 = vmatpush1.bf16.msra.mxu0 %v671
      %686 = vmatprep.subr.bf16.mxu0 0
      %687 = vmatpush1.bf16.msra.mxu0 %v682
      %688 = vmatprep.subr.bf16.mxu0 0
      %689 = vmatpush1.bf16.msra.mxu0 0
      %690 = vmatprep.subr.bf16.mxu0 0
      %691 = vmatpush1.bf16.msra.mxu0 0
      %692 = vmatprep.subr.bf16.mxu0 0
      %693 = vmatpush1.bf16.msra.mxu0 0
      %694 = vmatprep.subr.bf16.mxu0 0
      %695 = vmatpush1.bf16.msra.mxu0 0
      %696 = vmatprep.subr.bf16.mxu0 0
      %697 = vmatpush1.bf16.msra.mxu0 0
      %698 = vmatprep.subr.bf16.mxu0 0
      %699 = vmatpush1.bf16.msra.mxu0 0
      %700 = vmatprep.subr.bf16.mxu0 0
      %701 = vmatpush1.bf16.msra.mxu0 0
      %702 = vmatprep.subr.bf16.mxu0 0
      %703 = vmatpush1.bf16.msra.mxu0 0
      %704 = vmatprep.subr.bf16.mxu0 0
      %705 = vmatpush1.bf16.msra.mxu0 0
      %706 = vmatprep.subr.bf16.mxu0 0
      %707 = vmatpush1.bf16.msra.mxu0 0
      %708 = vmatprep.subr.bf16.mxu0 0
      %709 = vmatpush1.bf16.msra.mxu0 0
      %710 = vmatprep.subr.bf16.mxu0 0
      %711 = vmatpush1.bf16.msra.mxu0 0
      %712 = vmatprep.subr.bf16.mxu0 0
      %713 = vmatpush1.bf16.msra.mxu0 0
      %714 = vmatprep.subr.bf16.mxu0 0
      %715 = vmatpush1.bf16.msra.mxu0 0
      %716 = vmatprep.mubr.bf16.mxu0 0
      %717 = vmatmul.mubr.bf16.gmra.mrb[0].mxu0 %v676
      %v718 = vpop.f32.mrb[0].mxu0
      %v719 = vadd.f32 0.0, %v718
      %v720 = vpop.f32.mrb[0].mxu0
      %v721 = vpop.f32.mrb[0].mxu0
      %v722 = vadd.f32 0.0, %v721
      %v723 = vpop.f32.mrb[0].mxu0
      %724 = vmatprep.mubr.bf16.mxu0 0
      %725 = vmatmul.mubr.bf16.gmra.mrb[0].mxu0 %v679
      %v726 = vpop.f32.mrb[0].mxu0
      %v727 = vadd.f32 0.0, %v726
      %v728 = vpop.f32.mrb[0].mxu0
      %v729 = vpop.f32.mrb[0].mxu0
      %v730 = vpop.f32.mrb[0].mxu0
      %731 = vdwg.mxu0
      %v732 = vrcp.pop %v661
      %v733 = vrcp.pop %v664
      %v734 = vrcp.pop %v667
      %v735 = vmul.f32 %v719, %v732
      %v736 = vmul.f32 %v722, %v733
      %v737 = vmul.f32 %v727, %v734
      %v738 = vpack.c.bf16 %v736, %v735
      %v739 = vpack.c.bf16 %v737, %v737
      %v742 = vunpack.c.l.b16 %v738
      %v743 = vunpack.c.h.b16 %v738
      %v744 = vunpack.c.l.b16 %v739
      %v745 = vpack.c.b16 %v742, %v742
      %v746 = vpack.c.b16 %v743, %v743
      %v747 = vpack.c.b16 %v744, %v744
      %748 = vrot.lane.b32.xlu0 %v745, 32
      %v749 = vpop.permute.xlu0 %748
      %750 = vrot.lane.b32.xlu0 %v746, 32
      %v751 = vpop.permute.xlu0 %750
      %752 = vrot.lane.b32.xlu0 %v747, 32
      %v753 = vpop.permute.xlu0 %752
      %vm757 = vcmask 519424
      %758 = vst.msk [vmem:[#allocation2] sm:$0xf] %vm757, %v749
      %759 = vst.msk [vmem:[#allocation2 + $0x4] sm:$0xf] %vm757, %v751
      %vm760 = vcmask 517376
      %761 = vst.msk [vmem:[#allocation2 + $0x8] sm:$0x3] %vm760, %v753
      %762 = vrot.lane.b32.xlu0 %v172, 64
      %v763 = vpop.permute.xlu0 %762
      %764 = vrot.lane.b32.xlu0 %v174, 64
      %v765 = vpop.permute.xlu0 %764
      %766 = vrot.lane.b32.xlu0 %v176, 64
      %v767 = vpop.permute.xlu0 %766
      %v768 = vrot.slane %v763, 4
      %v769 = vrot.slane %v765, 4
      %v770 = vrot.slane %v767, 4
      %v774 = vunpack.c.l.bf16 %v768
      %v775 = vunpack.c.l.bf16 %v769
      %v776 = vunpack.c.l.bf16 %v770
      %777 = vrot.lane.b32.xlu0 %v178, 64
      %v778 = vpop.permute.xlu0 %777
      %779 = vrot.lane.b32.xlu0 %v179, 64
      %v780 = vpop.permute.xlu0 %779
      %781 = vrot.lane.b32.xlu0 %v180, 64
      %v782 = vpop.permute.xlu0 %781
      %v786 = vmul.f32 %v197, %v778
      %v787 = vmul.f32 %v198, %v780
      %v788 = vmul.f32 %v199, %v782
      %789 = vrot.lane.b32.xlu0 %v197, 48
      %v790 = vpop.permute.xlu0 %789
      %791 = vrot.lane.b32.xlu0 %v198, 48
      %v792 = vpop.permute.xlu0 %791
      %793 = vrot.lane.b32.xlu0 %v199, 48
      %v794 = vpop.permute.xlu0 %793
      %v798 = vsel %vm236, %v790, %v503
      %v799 = vsel %vm236, %v792, %v505
      %v800 = vsel %vm236, %v794, %v507
      %v801 = vmul.f32 %v798, %v181
      %v802 = vmul.f32 %v799, %v182
      %v803 = vmul.f32 %v800, %v183
      %807 = vrot.lane.b32.xlu0 %v801, 64
      %v808 = vpop.permute.xlu0 %807
      %809 = vrot.lane.b32.xlu0 %v802, 64
      %v810 = vpop.permute.xlu0 %809
      %811 = vrot.lane.b32.xlu0 %v803, 64
      %v812 = vpop.permute.xlu0 %811
      %v816 = vadd.f32 %v786, %v808
      %v817 = vadd.f32 %v787, %v810
      %v818 = vadd.f32 %v788, %v812
      %v819 = vmul.f32 %v774, %v178
      %v820 = vmul.f32 %v775, %v179
      %v821 = vmul.f32 %v776, %v180
      %825 = vrot.lane.b32.xlu0 %v774, 112
      %v826 = vpop.permute.xlu0 %825
      %827 = vrot.lane.b32.xlu0 %v775, 112
      %v828 = vpop.permute.xlu0 %827
      %829 = vrot.lane.b32.xlu0 %v776, 112
      %v830 = vpop.permute.xlu0 %829
      %834 = vrot.lane.b32.xlu0 %v774, 16
      %v835 = vpop.permute.xlu0 %834
      %836 = vrot.lane.b32.xlu0 %v775, 16
      %v837 = vpop.permute.xlu0 %836
      %838 = vrot.lane.b32.xlu0 %v776, 16
      %v839 = vpop.permute.xlu0 %838
      %v843 = vsel %vm236, %v826, %v835
      %v844 = vsel %vm236, %v828, %v837
      %v845 = vsel %vm236, %v830, %v839
      %v846 = vmul.f32 %v843, %v181
      %v847 = vmul.f32 %v844, %v182
      %v848 = vmul.f32 %v845, %v183
      %v849 = vadd.f32 %v819, %v846
      %v850 = vadd.f32 %v820, %v847
      %v851 = vadd.f32 %v821, %v848
      %v852 = vpack.c.bf16 %v817, %v816
      %v853 = vpack.c.bf16 %v818, %v818
      %v854 = vpack.c.bf16 %v850, %v849
      %v855 = vpack.c.bf16 %v851, %v851
      %858 = vrot.lane.b32.xlu0 %v852, 64
      %v859 = vpop.permute.xlu0 %858
      %860 = vrot.lane.b32.xlu0 %v853, 64
      %v861 = vpop.permute.xlu0 %860
      %v863 = vsel %vm283, %v859, 0
      %v866 = vsel %vm283, %v861, 0
      %v869 = vsel %vm283, %v854, 0
      %v872 = vsel %vm283, %v855, 0
      %874 = vmatprep.subr.bf16.mxu0 0
      %875 = vmatpush1.bf16.xpose.msra.mxu0 %v869
      %876 = vmatprep.subr.bf16.mxu0 0
      %877 = vmatpush1.bf16.xpose.msra.mxu0 %v872
      %878 = vmatprep.subr.bf16.mxu0 0
      %879 = vmatpush1.bf16.xpose.msra.mxu0 0
      %880 = vmatprep.subr.bf16.mxu0 0
      %881 = vmatpush1.bf16.xpose.msra.mxu0 0
      %882 = vmatprep.subr.bf16.mxu0 0
      %883 = vmatpush1.bf16.xpose.msra.mxu0 0
      %884 = vmatprep.subr.bf16.mxu0 0
      %885 = vmatpush1.bf16.xpose.msra.mxu0 0
      %886 = vmatprep.subr.bf16.mxu0 0
      %887 = vmatpush1.bf16.xpose.msra.mxu0 0
      %888 = vmatprep.subr.bf16.mxu0 0
      %889 = vmatpush1.bf16.xpose.msra.mxu0 0
      %890 = vmatprep.subr.bf16.mxu0 0
      %891 = vmatpush1.bf16.xpose.msra.mxu0 0
      %892 = vmatprep.subr.bf16.mxu0 0
      %893 = vmatpush1.bf16.xpose.msra.mxu0 0
      %894 = vmatprep.subr.bf16.mxu0 0
      %895 = vmatpush1.bf16.xpose.msra.mxu0 0
      %896 = vmatprep.subr.bf16.mxu0 0
      %897 = vmatpush1.bf16.xpose.msra.mxu0 0
      %898 = vmatprep.subr.bf16.mxu0 0
      %899 = vmatpush1.bf16.xpose.msra.mxu0 0
      %900 = vmatprep.subr.bf16.mxu0 0
      %901 = vmatpush1.bf16.xpose.msra.mxu0 0
      %902 = vmatprep.subr.bf16.mxu0 0
      %903 = vmatpush1.bf16.xpose.msra.mxu0 0
      %904 = vmatprep.subr.bf16.mxu0 0
      %905 = vmatpush1.bf16.xpose.msra.mxu0 0
      %906 = vmatprep.mubr.bf16.mxu0 0
      %907 = vmatmul.mubr.bf16.gmra.mrb[0].mxu0 %v863
      %v908 = vpop.f32.mrb[0].mxu0
      %v909 = vadd.f32 0.0, %v908
      %v910 = vpop.f32.mrb[0].mxu0
      %v911 = vpop.f32.mrb[0].mxu0
      %v912 = vadd.f32 0.0, %v911
      %v913 = vpop.f32.mrb[0].mxu0
      %914 = vmatprep.mubr.bf16.mxu0 0
      %915 = vmatmul.mubr.bf16.gmra.mrb[0].mxu0 %v866
      %v916 = vpop.f32.mrb[0].mxu0
      %v917 = vadd.f32 0.0, %v916
      %v918 = vpop.f32.mrb[0].mxu0
      %v919 = vpop.f32.mrb[0].mxu0
      %v920 = vpop.f32.mrb[0].mxu0
      %921 = vdwg.mxu0
      %v922 = vmul.f32 %v909, 0.17677669
      %v923 = vmul.f32 %v912, 0.17677669
      %v924 = vmul.f32 %v917, 0.17677669
      %v925 = vsel %vm194, %v922, -1e+09
      %v926 = vsel %vm195, %v923, -1e+09
      %v927 = vsel %vm196, %v924, -1e+09
      %v928 = vsel %vm350, %v925, -inf
      %929 = vmax.xlane.f32.xlu0 %v928
      %v930 = vpop.xlane.xlu0 %929
      %v931 = vsel %vm350, %v926, -inf
      %932 = vmax.xlane.f32.xlu0 %v931
      %v933 = vpop.xlane.xlu0 %932
      %v934 = vsel %vm357, %v927, -inf
      %935 = vmax.xlane.f32.xlu0 %v934
      %v936 = vpop.xlane.xlu0 %935
      %v937 = vsub.f32 %v925, %v930
      %v938 = vsub.f32 %v926, %v933
      %v939 = vsub.f32 %v927, %v936
      %v940 = vmul.f32 %v937, 1.442695
      %v941 = vpow.pop %v940
      %v942 = vmul.f32 %v938, 1.442695
      %v943 = vpow.pop %v942
      %v944 = vmul.f32 %v939, 1.442695
      %v945 = vpow.pop %v944
      %v946 = vsel %vm350, %v941, 0.0
      %947 = vadd.xlane.f32.xlu0 %v946
      %v948 = vpop.xlane.xlu0 %947
      %v949 = vsel %vm350, %v943, 0.0
      %950 = vadd.xlane.f32.xlu0 %v949
      %v951 = vpop.xlane.xlu0 %950
      %v952 = vsel %vm357, %v945, 0.0
      %953 = vadd.xlane.f32.xlu0 %v952
      %v954 = vpop.xlane.xlu0 %953
      %v955 = vpack.c.bf16 %v943, %v941
      %v956 = vpack.c.bf16 %v945, %v945
      %957 = vrot.lane.b32.xlu0 %v387, 64
      %v958 = vpop.permute.xlu0 %957
      %959 = vrot.lane.b32.xlu0 %v388, 64
      %v960 = vpop.permute.xlu0 %959
      %v963 = vsel %vm350, %v955, 0
      %v966 = vsel %vm350, %v956, 0
      %v969 = vsel %vm396, %v960, 0
      %971 = vmatprep.subr.bf16.mxu0 0
      %972 = vmatpush1.bf16.msra.mxu0 %v958
      %973 = vmatprep.subr.bf16.mxu0 0
      %974 = vmatpush1.bf16.msra.mxu0 %v969
      %975 = vmatprep.subr.bf16.mxu0 0
      %976 = vmatpush1.bf16.msra.mxu0 0
      %977 = vmatprep.subr.bf16.mxu0 0
      %978 = vmatpush1.bf16.msra.mxu0 0
      %979 = vmatprep.subr.bf16.mxu0 0
      %980 = vmatpush1.bf16.msra.mxu0 0
      %981 = vmatprep.subr.bf16.mxu0 0
      %982 = vmatpush1.bf16.msra.mxu0 0
      %983 = vmatprep.subr.bf16.mxu0 0
      %984 = vmatpush1.bf16.msra.mxu0 0
      %985 = vmatprep.subr.bf16.mxu0 0
      %986 = vmatpush1.bf16.msra.mxu0 0
      %987 = vmatprep.subr.bf16.mxu0 0
      %988 = vmatpush1.bf16.msra.mxu0 0
      %989 = vmatprep.subr.bf16.mxu0 0
      %990 = vmatpush1.bf16.msra.mxu0 0
      %991 = vmatprep.subr.bf16.mxu0 0
      %992 = vmatpush1.bf16.msra.mxu0 0
      %993 = vmatprep.subr.bf16.mxu0 0
      %994 = vmatpush1.bf16.msra.mxu0 0
      %995 = vmatprep.subr.bf16.mxu0 0
      %996 = vmatpush1.bf16.msra.mxu0 0
      %997 = vmatprep.subr.bf16.mxu0 0
      %998 = vmatpush1.bf16.msra.mxu0 0
      %999 = vmatprep.subr.bf16.mxu0 0
      %1000 = vmatpush1.bf16.msra.mxu0 0
      %1001 = vmatprep.subr.bf16.mxu0 0
      %1002 = vmatpush1.bf16.msra.mxu0 0
      %1003 = vmatprep.mubr.bf16.mxu0 0
      %1004 = vmatmul.mubr.bf16.gmra.mrb[0].mxu0 %v963
      %v1005 = vpop.f32.mrb[0].mxu0
      %v1006 = vadd.f32 0.0, %v1005
      %v1007 = vpop.f32.mrb[0].mxu0
      %v1008 = vpop.f32.mrb[0].mxu0
      %v1009 = vadd.f32 0.0, %v1008
      %v1010 = vpop.f32.mrb[0].mxu0
      %1011 = vmatprep.mubr.bf16.mxu0 0
      %1012 = vmatmul.mubr.bf16.gmra.mrb[0].mxu0 %v966
      %v1013 = vpop.f32.mrb[0].mxu0
      %v1014 = vadd.f32 0.0, %v1013
      %v1015 = vpop.f32.mrb[0].mxu0
      %v1016 = vpop.f32.mrb[0].mxu0
      %v1017 = vpop.f32.mrb[0].mxu0
      %1018 = vdwg.mxu0
      %v1019 = vrcp.pop %v948
      %v1020 = vrcp.pop %v951
      %v1021 = vrcp.pop %v954
      %v1022 = vmul.f32 %v1006, %v1019
      %v1023 = vmul.f32 %v1009, %v1020
      %v1024 = vmul.f32 %v1014, %v1021
      %v1025 = vpack.c.bf16 %v1023, %v1022
      %v1026 = vpack.c.bf16 %v1024, %v1024
      %v1029 = vunpack.c.l.b16 %v1025
      %v1030 = vunpack.c.h.b16 %v1025
      %v1031 = vunpack.c.l.b16 %v1026
      %v1032 = vpack.c.b16 %v1029, %v1029
      %v1033 = vpack.c.b16 %v1030, %v1030
      %v1034 = vpack.c.b16 %v1031, %v1031
      %1035 = vrot.lane.b32.xlu0 %v1032, 64
      %v1036 = vpop.permute.xlu0 %1035
      %1037 = vrot.lane.b32.xlu0 %v1033, 64
      %v1038 = vpop.permute.xlu0 %1037
      %1039 = vrot.lane.b32.xlu0 %v1034, 64
      %v1040 = vpop.permute.xlu0 %1039
      %vm1044 = vcmask 781824
      %1045 = vst.msk [vmem:[#allocation2] sm:$0xf] %vm1044, %v1036
      %1046 = vst.msk [vmem:[#allocation2 + $0x4] sm:$0xf] %vm1044, %v1038
      %vm1047 = vcmask 779776
      %1048 = vst.msk [vmem:[#allocation2 + $0x8] sm:$0x3] %vm1047, %v1040
      %1049 = vrot.lane.b32.xlu0 %v172, 32
      %v1050 = vpop.permute.xlu0 %1049
      %1051 = vrot.lane.b32.xlu0 %v174, 32
      %v1052 = vpop.permute.xlu0 %1051
      %1053 = vrot.lane.b32.xlu0 %v176, 32
      %v1054 = vpop.permute.xlu0 %1053
      %v1055 = vrot.slane %v1050, 4
      %v1056 = vrot.slane %v1052, 4
      %v1057 = vrot.slane %v1054, 4
      %v1061 = vunpack.c.l.bf16 %v1055
      %v1062 = vunpack.c.l.bf16 %v1056
      %v1063 = vunpack.c.l.bf16 %v1057
      %1064 = vrot.lane.b32.xlu0 %v178, 96
      %v1065 = vpop.permute.xlu0 %1064
      %1066 = vrot.lane.b32.xlu0 %v179, 96
      %v1067 = vpop.permute.xlu0 %1066
      %1068 = vrot.lane.b32.xlu0 %v180, 96
      %v1069 = vpop.permute.xlu0 %1068
      %v1073 = vmul.f32 %v197, %v1065
      %v1074 = vmul.f32 %v198, %v1067
      %v1075 = vmul.f32 %v199, %v1069
      %v1076 = vsel %vm236, %v228, %v790
      %v1077 = vsel %vm236, %v230, %v792
      %v1078 = vsel %vm236, %v232, %v794
      %v1079 = vmul.f32 %v1076, %v181
      %v1080 = vmul.f32 %v1077, %v182
      %v1081 = vmul.f32 %v1078, %v183
      %1085 = vrot.lane.b32.xlu0 %v1079, 96
      %v1086 = vpop.permute.xlu0 %1085
      %1087 = vrot.lane.b32.xlu0 %v1080, 96
      %v1088 = vpop.permute.xlu0 %1087
      %1089 = vrot.lane.b32.xlu0 %v1081, 96
      %v1090 = vpop.permute.xlu0 %1089
      %v1094 = vadd.f32 %v1073, %v1086
      %v1095 = vadd.f32 %v1074, %v1088
      %v1096 = vadd.f32 %v1075, %v1090
      %v1097 = vmul.f32 %v1061, %v178
      %v1098 = vmul.f32 %v1062, %v179
      %v1099 = vmul.f32 %v1063, %v180
      %1103 = vrot.lane.b32.xlu0 %v1061, 112
      %v1104 = vpop.permute.xlu0 %1103
      %1105 = vrot.lane.b32.xlu0 %v1062, 112
      %v1106 = vpop.permute.xlu0 %1105
      %1107 = vrot.lane.b32.xlu0 %v1063, 112
      %v1108 = vpop.permute.xlu0 %1107
      %1112 = vrot.lane.b32.xlu0 %v1061, 16
      %v1113 = vpop.permute.xlu0 %1112
      %1114 = vrot.lane.b32.xlu0 %v1062, 16
      %v1115 = vpop.permute.xlu0 %1114
      %1116 = vrot.lane.b32.xlu0 %v1063, 16
      %v1117 = vpop.permute.xlu0 %1116
      %v1121 = vsel %vm236, %v1104, %v1113
      %v1122 = vsel %vm236, %v1106, %v1115
      %v1123 = vsel %vm236, %v1108, %v1117
      %v1124 = vmul.f32 %v1121, %v181
      %v1125 = vmul.f32 %v1122, %v182
      %v1126 = vmul.f32 %v1123, %v183
      %v1127 = vadd.f32 %v1097, %v1124
      %v1128 = vadd.f32 %v1098, %v1125
      %v1129 = vadd.f32 %v1099, %v1126
      %v1130 = vpack.c.bf16 %v1095, %v1094
      %v1131 = vpack.c.bf16 %v1096, %v1096
      %v1132 = vpack.c.bf16 %v1128, %v1127
      %v1133 = vpack.c.bf16 %v1129, %v1129
      %1136 = vrot.lane.b32.xlu0 %v1130, 32
      %v1137 = vpop.permute.xlu0 %1136
      %1138 = vrot.lane.b32.xlu0 %v1131, 32
      %v1139 = vpop.permute.xlu0 %1138
      %v1141 = vsel %vm283, %v1137, 0
      %v1144 = vsel %vm283, %v1139, 0
      %v1147 = vsel %vm283, %v1132, 0
      %v1150 = vsel %vm283, %v1133, 0
      %1152 = vmatprep.subr.bf16.mxu0 0
      %1153 = vmatpush1.bf16.xpose.msra.mxu0 %v1147
      %1154 = vmatprep.subr.bf16.mxu0 0
      %1155 = vmatpush1.bf16.xpose.msra.mxu0 %v1150
      %1156 = vmatprep.subr.bf16.mxu0 0
      %1157 = vmatpush1.bf16.xpose.msra.mxu0 0
      %1158 = vmatprep.subr.bf16.mxu0 0
      %1159 = vmatpush1.bf16.xpose.msra.mxu0 0
      %1160 = vmatprep.subr.bf16.mxu0 0
      %1161 = vmatpush1.bf16.xpose.msra.mxu0 0
      %1162 = vmatprep.subr.bf16.mxu0 0
      %1163 = vmatpush1.bf16.xpose.msra.mxu0 0
      %1164 = vmatprep.subr.bf16.mxu0 0
      %1165 = vmatpush1.bf16.xpose.msra.mxu0 0
      %1166 = vmatprep.subr.bf16.mxu0 0
      %1167 = vmatpush1.bf16.xpose.msra.mxu0 0
      %1168 = vmatprep.subr.bf16.mxu0 0
      %1169 = vmatpush1.bf16.xpose.msra.mxu0 0
      %1170 = vmatprep.subr.bf16.mxu0 0
      %1171 = vmatpush1.bf16.xpose.msra.mxu0 0
      %1172 = vmatprep.subr.bf16.mxu0 0
      %1173 = vmatpush1.bf16.xpose.msra.mxu0 0
      %1174 = vmatprep.subr.bf16.mxu0 0
      %1175 = vmatpush1.bf16.xpose.msra.mxu0 0
      %1176 = vmatprep.subr.bf16.mxu0 0
      %1177 = vmatpush1.bf16.xpose.msra.mxu0 0
      %1178 = vmatprep.subr.bf16.mxu0 0
      %1179 = vmatpush1.bf16.xpose.msra.mxu0 0
      %1180 = vmatprep.subr.bf16.mxu0 0
      %1181 = vmatpush1.bf16.xpose.msra.mxu0 0
      %1182 = vmatprep.subr.bf16.mxu0 0
      %1183 = vmatpush1.bf16.xpose.msra.mxu0 0
      %1184 = vmatprep.mubr.bf16.mxu0 0
      %1185 = vmatmul.mubr.bf16.gmra.mrb[0].mxu0 %v1141
      %v1186 = vpop.f32.mrb[0].mxu0
      %v1187 = vadd.f32 0.0, %v1186
      %v1188 = vpop.f32.mrb[0].mxu0
      %v1189 = vpop.f32.mrb[0].mxu0
      %v1190 = vadd.f32 0.0, %v1189
      %v1191 = vpop.f32.mrb[0].mxu0
      %1192 = vmatprep.mubr.bf16.mxu0 0
      %1193 = vmatmul.mubr.bf16.gmra.mrb[0].mxu0 %v1144
      %v1194 = vpop.f32.mrb[0].mxu0
      %v1195 = vadd.f32 0.0, %v1194
      %v1196 = vpop.f32.mrb[0].mxu0
      %v1197 = vpop.f32.mrb[0].mxu0
      %v1198 = vpop.f32.mrb[0].mxu0
      %1199 = vdwg.mxu0
      %v1200 = vmul.f32 %v1187, 0.17677669
      %v1201 = vmul.f32 %v1190, 0.17677669
      %v1202 = vmul.f32 %v1195, 0.17677669
      %v1203 = vsel %vm194, %v1200, -1e+09
      %v1204 = vsel %vm195, %v1201, -1e+09
      %v1205 = vsel %vm196, %v1202, -1e+09
      %v1206 = vsel %vm350, %v1203, -inf
      %1207 = vmax.xlane.f32.xlu0 %v1206
      %v1208 = vpop.xlane.xlu0 %1207
      %v1209 = vsel %vm350, %v1204, -inf
      %1210 = vmax.xlane.f32.xlu0 %v1209
      %v1211 = vpop.xlane.xlu0 %1210
      %v1212 = vsel %vm357, %v1205, -inf
      %1213 = vmax.xlane.f32.xlu0 %v1212
      %v1214 = vpop.xlane.xlu0 %1213
      %v1215 = vsub.f32 %v1203, %v1208
      %v1216 = vsub.f32 %v1204, %v1211
      %v1217 = vsub.f32 %v1205, %v1214
      %v1218 = vmul.f32 %v1215, 1.442695
      %v1219 = vpow.pop %v1218
      %v1220 = vmul.f32 %v1216, 1.442695
      %v1221 = vpow.pop %v1220
      %v1222 = vmul.f32 %v1217, 1.442695
      %v1223 = vpow.pop %v1222
      %v1224 = vsel %vm350, %v1219, 0.0
      %1225 = vadd.xlane.f32.xlu0 %v1224
      %v1226 = vpop.xlane.xlu0 %1225
      %v1227 = vsel %vm350, %v1221, 0.0
      %1228 = vadd.xlane.f32.xlu0 %v1227
      %v1229 = vpop.xlane.xlu0 %1228
      %v1230 = vsel %vm357, %v1223, 0.0
      %1231 = vadd.xlane.f32.xlu0 %v1230
      %v1232 = vpop.xlane.xlu0 %1231
      %v1233 = vpack.c.bf16 %v1221, %v1219
      %v1234 = vpack.c.bf16 %v1223, %v1223
      %1235 = vrot.lane.b32.xlu0 %v387, 32
      %v1236 = vpop.permute.xlu0 %1235
      %1237 = vrot.lane.b32.xlu0 %v388, 32
      %v1238 = vpop.permute.xlu0 %1237
      %v1241 = vsel %vm350, %v1233, 0
      %v1244 = vsel %vm350, %v1234, 0
      %v1247 = vsel %vm396, %v1238, 0
      %1249 = vmatprep.subr.bf16.mxu0 0
      %1250 = vmatpush1.bf16.msra.mxu0 %v1236
      %1251 = vmatprep.subr.bf16.mxu0 0
      %1252 = vmatpush1.bf16.msra.mxu0 %v1247
      %1253 = vmatprep.subr.bf16.mxu0 0
      %1254 = vmatpush1.bf16.msra.mxu0 0
      %1255 = vmatprep.subr.bf16.mxu0 0
      %1256 = vmatpush1.bf16.msra.mxu0 0
      %1257 = vmatprep.subr.bf16.mxu0 0
      %1258 = vmatpush1.bf16.msra.mxu0 0
      %1259 = vmatprep.subr.bf16.mxu0 0
      %1260 = vmatpush1.bf16.msra.mxu0 0
      %1261 = vmatprep.subr.bf16.mxu0 0
      %1262 = vmatpush1.bf16.msra.mxu0 0
      %1263 = vmatprep.subr.bf16.mxu0 0
      %1264 = vmatpush1.bf16.msra.mxu0 0
      %1265 = vmatprep.subr.bf16.mxu0 0
      %1266 = vmatpush1.bf16.msra.mxu0 0
      %1267 = vmatprep.subr.bf16.mxu0 0
      %1268 = vmatpush1.bf16.msra.mxu0 0
      %1269 = vmatprep.subr.bf16.mxu0 0
      %1270 = vmatpush1.bf16.msra.mxu0 0
      %1271 = vmatprep.subr.bf16.mxu0 0
      %1272 = vmatpush1.bf16.msra.mxu0 0
      %1273 = vmatprep.subr.bf16.mxu0 0
      %1274 = vmatpush1.bf16.msra.mxu0 0
      %1275 = vmatprep.subr.bf16.mxu0 0
      %1276 = vmatpush1.bf16.msra.mxu0 0
      %1277 = vmatprep.subr.bf16.mxu0 0
      %1278 = vmatpush1.bf16.msra.mxu0 0
      %1279 = vmatprep.subr.bf16.mxu0 0
      %1280 = vmatpush1.bf16.msra.mxu0 0
      %1281 = vmatprep.mubr.bf16.mxu0 0
      %1282 = vmatmul.mubr.bf16.gmra.mrb[0].mxu0 %v1241
      %v1283 = vpop.f32.mrb[0].mxu0
      %v1284 = vadd.f32 0.0, %v1283
      %v1285 = vpop.f32.mrb[0].mxu0
      %v1286 = vpop.f32.mrb[0].mxu0
      %v1287 = vadd.f32 0.0, %v1286
      %v1288 = vpop.f32.mrb[0].mxu0
      %1289 = vmatprep.mubr.bf16.mxu0 0
      %1290 = vmatmul.mubr.bf16.gmra.mrb[0].mxu0 %v1244
      %v1291 = vpop.f32.mrb[0].mxu0
      %v1292 = vadd.f32 0.0, %v1291
      %v1293 = vpop.f32.mrb[0].mxu0
      %v1294 = vpop.f32.mrb[0].mxu0
      %v1295 = vpop.f32.mrb[0].mxu0
      %1296 = vdwg.mxu0
      %v1297 = vrcp.pop %v1226
      %v1298 = vrcp.pop %v1229
      %v1299 = vrcp.pop %v1232
      %v1300 = vmul.f32 %v1284, %v1297
      %v1301 = vmul.f32 %v1287, %v1298
      %v1302 = vmul.f32 %v1292, %v1299
      %v1303 = vpack.c.bf16 %v1301, %v1300
      %v1304 = vpack.c.bf16 %v1302, %v1302
      %v1307 = vunpack.c.l.b16 %v1303
      %v1308 = vunpack.c.h.b16 %v1303
      %v1309 = vunpack.c.l.b16 %v1304
      %v1310 = vpack.c.b16 %v1307, %v1307
      %v1311 = vpack.c.b16 %v1308, %v1308
      %v1312 = vpack.c.b16 %v1309, %v1309
      %1313 = vrot.lane.b32.xlu0 %v1310, 96
      %v1314 = vpop.permute.xlu0 %1313
      %1315 = vrot.lane.b32.xlu0 %v1311, 96
      %v1316 = vpop.permute.xlu0 %1315
      %1317 = vrot.lane.b32.xlu0 %v1312, 96
      %v1318 = vpop.permute.xlu0 %1317
      %vm1322 = vcmask 1044224
      %1323 = vst.msk [vmem:[#allocation2] sm:$0xf] %vm1322, %v1314
      %1324 = vst.msk [vmem:[#allocation2 + $0x4] sm:$0xf] %vm1322, %v1316
      %vm1325 = vcmask 1042176
      %1326 = vst.msk [vmem:[#allocation2 + $0x8] sm:$0x3] %vm1325, %v1318
      %v1327 = vld [vmem:[#allocation2] sm:$0xf]
      %v1328 = vld [vmem:[#allocation2 + $0x4] sm:$0xf]
      %v1329 = vld [vmem:[#allocation2 + $0x8] sm:$0x3]
      %1330 = vst [vmem:[%s170] sm:$0xf] %v1327
      %1331 = vst [vmem:[%s170 + $0x4] sm:$0xf] %v1328
      %1332 = vst [vmem:[%s170 + $0x8] sm:$0x3] %v1329
      %p1333 = scmp.lt.s32.totalorder %s14, 1
      %s1334 = scalar_select %p1333, %s14, 1
      %s1335 = smul.addr %s1334, 3
      %s1336 = smul.addr %s1335, 4
      %s1337 = scalar_lea.vmem %s3, %s1336
      // Predicated region
      $region33: #{ccot_forward.31} parent=31 // pred_check
        %p1338 = pneg %p100
      $region34: #{ccot_forward.31} parent=31 // pred_check_branch
        %1340 = sbr.rel (%p1338) target = $region36
      $region35: #{ccot_forward.31} parent=31 // pred_region
        _
      $region36: #{ccot_forward.31} parent=31 // pred_fallthru
        _
    $region32: #{ccot_forward.31} parent=5 // pred_fallthru
      _
    %p1341 = scmp.le.s32.totalorder 2, %s9
    // Predicated region
    $region37: #{ccot_forward.31} parent=5 // pred_check
      %p1342 = pneg %p1341
    $region38: #{ccot_forward.31} parent=5 // pred_check_branch
      %1344 = sbr.rel (%p1342) target = $region40
    $region39: #{ccot_forward.31} parent=5 // pred_region
      %s1345 = ssub.s32 %s9, 2
      // Predicated region
      $region41: #{ccot_forward.31} parent=39 // pred_check
        %p1346 = pneg %p106
      $region42: #{ccot_forward.31} parent=39 // pred_check_branch
        %1348 = sbr.rel (%p1346) target = $region44
      $region43: #{ccot_forward.31} parent=39 // pred_region
        %p1349 = scmp.lt.s32.totalorder %s15, 1
        %s1350 = scalar_select %p1349, %s15, 1
        %s1351 = smul.addr %s1350, 3
        %s1352 = smul.addr %s1351, 4
        %s1353 = scalar_lea.vmem %s3, %s1352
      $region44: #{ccot_forward.31} parent=39 // pred_fallthru
        _
    $region40: #{ccot_forward.31} parent=5 // pred_fallthru
      _
  $region6: #{ccot_forward.31} parent=0 // loop_footer
    %s13 = sadd.s32 1, %s9
  $region7: #{ccot_forward.31} parent=0 // loop_footer_branch
    %8 = sbr.rel target = $region3
  $region8: #{ccot_forward.31} parent=0 // loop_exit
    _

// kernel: ccot_forward.35
$region0: #{ccot_forward.35}
  #allocation0 [shape = 'u32[]', space=smem, size = 0x4, offset = 0x4, fixed_abs, tag = 'smem constant byte address 0x4 - core index']
  #allocation1 [shape = 'u32[144,128]{1,0:T(1,128)}', space=vmem, size = 0x12000, scoped, tag = 'internal scratch']
  #allocation2 [shape = 'bf16[40,128]{1,0:T(8,128)(2,1)}', space=vmem, size = 0x2800, scoped, tag = 'scratch operand']
  %s0 = inlined_call_operand.vmem [shape: bf16[40,128], index: 0, kind: input, shape index: {}]
  %s1 = inlined_call_operand.vmem [shape: f32[1,128], index: 1, kind: input, shape index: {}]
  %s2 = inlined_call_operand.vmem [shape: f32[1,128], index: 2, kind: input, shape index: {}]
  %s3 = inlined_call_operand.vmem [shape: bf16[128,128], index: 3, kind: input, shape index: {}]
  %s4 = inlined_call_operand.vmem [shape: f32[1,128], index: 4, kind: input, shape index: {}]
  %s5 = inlined_call_operand.vmem [shape: f32[40,128], index: 5, kind: output, shape index: {}]
  %s6 = sld [smem:[#allocation0]]
  $region34: #{ccot_forward.35} parent=0
    _
  %s8 = ssub.s32 1, %s6
  %s9 = scalar_select 0, %s8, %s6
  // Predicated region
  $region2: #{ccot_forward.35} parent=0 // pred_check
    _
  $region3: #{ccot_forward.35} parent=0 // pred_check_branch
    %11 = sbr.rel (0) target = $region5
  $region4: #{ccot_forward.35} parent=0 // pred_region
    _
  $region5: #{ccot_forward.35} parent=0 // pred_fallthru
    _
  // Predicated region
  $region6: #{ccot_forward.35} parent=0 // pred_check
    _
  $region7: #{ccot_forward.35} parent=0 // pred_check_branch
    %13 = sbr.rel (0) target = $region9
  $region8: #{ccot_forward.35} parent=0 // pred_region
    _
  $region9: #{ccot_forward.35} parent=0 // pred_fallthru
    _
  // Predicated region
  $region10: #{ccot_forward.35} parent=0 // pred_check
    _
  $region11: #{ccot_forward.35} parent=0 // pred_check_branch
    %15 = sbr.rel (0) target = $region13
  $region12: #{ccot_forward.35} parent=0 // pred_region
    _
  $region13: #{ccot_forward.35} parent=0 // pred_fallthru
    _
  // Predicated region
  $region14: #{ccot_forward.35} parent=0 // pred_check
    _
  $region15: #{ccot_forward.35} parent=0 // pred_check_branch
    %17 = sbr.rel (0) target = $region17
  $region16: #{ccot_forward.35} parent=0 // pred_region
    _
  $region17: #{ccot_forward.35} parent=0 // pred_fallthru
    _
  // Predicated region
  $region18: #{ccot_forward.35} parent=0 // pred_check
    _
  $region19: #{ccot_forward.35} parent=0 // pred_check_branch
    %19 = sbr.rel (0) target = $region21
  $region20: #{ccot_forward.35} parent=0 // pred_region
    _
  $region21: #{ccot_forward.35} parent=0 // pred_fallthru
    _
  %p21 = scmp.eq.s32.totalorder 0, 0
  // Predicated region
  $region22: #{ccot_forward.35} parent=0 // pred_check
    %p22 = pneg %p21
  $region23: #{ccot_forward.35} parent=0 // pred_check_branch
    %24 = sbr.rel (%p22) target = $region25
  $region24: #{ccot_forward.35} parent=0 // pred_region
    %v25 = vld [vmem:[%s0] sm:$0xf]
    %v26 = vld [vmem:[%s0 + $0x4] sm:$0xf]
    %v27 = vld [vmem:[%s0 + $0x8] sm:$0xf]
    %v28 = vld [vmem:[%s0 + $0xc] sm:$0xf]
    %v29 = vld [vmem:[%s0 + $0x10] sm:$0xf]
    %v30 = vunpack.c.l.bf16 %v25
    %v31 = vunpack.c.l.bf16 %v26
    %v32 = vunpack.c.l.bf16 %v27
    %v33 = vunpack.c.l.bf16 %v28
    %v34 = vunpack.c.l.bf16 %v29
    %35 = vadd.xlane.f32.xlu0 %v30
    %v36 = vpop.xlane.xlu0 %35
    %37 = vadd.xlane.f32.xlu0 %v31
    %v38 = vpop.xlane.xlu0 %37
    %39 = vadd.xlane.f32.xlu0 %v32
    %v40 = vpop.xlane.xlu0 %39
    %41 = vadd.xlane.f32.xlu0 %v33
    %v42 = vpop.xlane.xlu0 %41
    %43 = vadd.xlane.f32.xlu0 %v34
    %v44 = vpop.xlane.xlu0 %43
    %v45 = vmul.f32 %v36, 0.0078125
    %v46 = vmul.f32 %v38, 0.0078125
    %v47 = vmul.f32 %v40, 0.0078125
    %v48 = vmul.f32 %v42, 0.0078125
    %v49 = vmul.f32 %v44, 0.0078125
    %v50 = vsub.f32 %v30, %v45
    %v51 = vsub.f32 %v31, %v46
    %v52 = vsub.f32 %v32, %v47
    %v53 = vsub.f32 %v33, %v48
    %v54 = vsub.f32 %v34, %v49
    %v55 = vmul.f32 %v50, %v50
    %v56 = vmul.f32 %v51, %v51
    %v57 = vmul.f32 %v52, %v52
    %v58 = vmul.f32 %v53, %v53
    %v59 = vmul.f32 %v54, %v54
    %60 = vadd.xlane.f32.xlu0 %v55
    %v61 = vpop.xlane.xlu0 %60
    %62 = vadd.xlane.f32.xlu0 %v56
    %v63 = vpop.xlane.xlu0 %62
    %64 = vadd.xlane.f32.xlu0 %v57
    %v65 = vpop.xlane.xlu0 %64
    %66 = vadd.xlane.f32.xlu0 %v58
    %v67 = vpop.xlane.xlu0 %66
    %68 = vadd.xlane.f32.xlu0 %v59
    %v69 = vpop.xlane.xlu0 %68
    %v70 = vmul.f32 %v61, 0.0078125
    %v71 = vmul.f32 %v63, 0.0078125
    %v72 = vmul.f32 %v65, 0.0078125
    %v73 = vmul.f32 %v67, 0.0078125
    %v74 = vmul.f32 %v69, 0.0078125
    %v75 = vadd.f32 %v70, 1e-05
    %v76 = vadd.f32 %v71, 1e-05
    %v77 = vadd.f32 %v72, 1e-05
    %v78 = vadd.f32 %v73, 1e-05
    %v79 = vadd.f32 %v74, 1e-05
    %v80 = vrsqrt.pop %v75
    %v81 = vrsqrt.pop %v76
    %v82 = vrsqrt.pop %v77
    %v83 = vrsqrt.pop %v78
    %v84 = vrsqrt.pop %v79
    %v85 = vmul.f32 %v50, %v80
    %v86 = vmul.f32 %v51, %v81
    %v87 = vmul.f32 %v52, %v82
    %v88 = vmul.f32 %v53, %v83
    %v89 = vmul.f32 %v54, %v84
    %v90 = vld [vmem:[%s1] sm:$0x1]
    %v92 = vlaneseq
    %v93 = vshrl.u32 %v92, 7
    %v94 = vsub.s32 0, %v93
    %v95 = vrot.slane %v90, %v94
    %v97 = vmul.f32 %v85, %v95
    %v98 = vmul.f32 %v86, %v95
    %v99 = vmul.f32 %v87, %v95
    %v100 = vmul.f32 %v88, %v95
    %v101 = vmul.f32 %v89, %v95
    %v102 = vld [vmem:[%s2] sm:$0x1]
    %v104 = vlaneseq
    %v105 = vshrl.u32 %v104, 7
    %v106 = vsub.s32 0, %v105
    %v107 = vrot.slane %v102, %v106
    %v109 = vadd.f32 %v97, %v107
    %v110 = vadd.f32 %v98, %v107
    %v111 = vadd.f32 %v99, %v107
    %v112 = vadd.f32 %v100, %v107
    %v113 = vadd.f32 %v101, %v107
    %v114 = vpack.c.bf16 %v110, %v109
    %v115 = vpack.c.bf16 %v112, %v111
    %v116 = vpack.c.bf16 %v113, %v113
    %v120 = vunpack.c.l.b16 %v114
    %v121 = vunpack.c.h.b16 %v114
    %v122 = vunpack.c.l.b16 %v115
    %v123 = vunpack.c.h.b16 %v115
    %v124 = vunpack.c.l.b16 %v116
    %v125 = vpack.c.b16 %v120, %v120
    %v126 = vpack.c.b16 %v121, %v121
    %v127 = vpack.c.b16 %v122, %v122
    %v128 = vpack.c.b16 %v123, %v123
    %v129 = vpack.c.b16 %v124, %v124
    %135 = vst [vmem:[#allocation2] sm:$0xf] %v125
    %136 = vst [vmem:[#allocation2 + $0x4] sm:$0xf] %v126
    %137 = vst [vmem:[#allocation2 + $0x8] sm:$0xf] %v127
    %138 = vst [vmem:[#allocation2 + $0xc] sm:$0xf] %v128
    %139 = vst [vmem:[#allocation2 + $0x10] sm:$0xf] %v129
  $region25: #{ccot_forward.35} parent=0 // pred_fallthru
    _
  %v140 = vld [vmem:[#allocation2] sm:$0xf]
  %v141 = vld [vmem:[#allocation2 + $0x4] sm:$0xf]
  %v142 = vld [vmem:[#allocation2 + $0x8] sm:$0xf]
  %v143 = vld [vmem:[#allocation2 + $0xc] sm:$0xf]
  %v144 = vld [vmem:[#allocation2 + $0x10] sm:$0xf]
  %v145 = vld [vmem:[%s3] sm:$0xf]
  %v146 = vld [vmem:[%s3 + $0x4] sm:$0xf]
  %v147 = vld [vmem:[%s3 + $0x8] sm:$0xf]
  %v148 = vld [vmem:[%s3 + $0xc] sm:$0xf]
  %v149 = vld [vmem:[%s3 + $0x10] sm:$0xf]
  %v150 = vld [vmem:[%s3 + $0x14] sm:$0xf]
  %v151 = vld [vmem:[%s3 + $0x18] sm:$0xf]
  %v152 = vld [vmem:[%s3 + $0x1c] sm:$0xf]
  %v153 = vld [vmem:[%s3 + $0x20] sm:$0xf]
  %v154 = vld [vmem:[%s3 + $0x24] sm:$0xf]
  %v155 = vld [vmem:[%s3 + $0x28] sm:$0xf]
  %v156 = vld [vmem:[%s3 + $0x2c] sm:$0xf]
  %v157 = vld [vmem:[%s3 + $0x30] sm:$0xf]
  %v158 = vld [vmem:[%s3 + $0x34] sm:$0xf]
  %v159 = vld [vmem:[%s3 + $0x38] sm:$0xf]
  %v160 = vld [vmem:[%s3 + $0x3c] sm:$0xf]
  %v161 = vld [vmem:[%s4] sm:$0x1]
  %v163 = vlaneseq
  %v164 = vshrl.u32 %v163, 7
  %v165 = vsub.s32 0, %v164
  %v166 = vrot.slane %v161, %v165
  %v173 = vunpack.c.l.b16 %v140
  %v174 = vunpack.c.l.b16 %v141
  %v175 = vunpack.c.l.b16 %v142
  %v176 = vunpack.c.l.b16 %v143
  %v177 = vunpack.c.l.b16 %v144
  %v178 = vpack.c.b16 %v174, %v173
  %v179 = vpack.c.b16 %v176, %v175
  %v180 = vpack.c.b16 %v177, %v177
  %v200 = vunpack.c.l.b16 %v145
  %v201 = vunpack.c.l.b16 %v146
  %v202 = vunpack.c.l.b16 %v147
  %v203 = vunpack.c.l.b16 %v148
  %v204 = vunpack.c.l.b16 %v149
  %v205 = vunpack.c.l.b16 %v150
  %v206 = vunpack.c.l.b16 %v151
  %v207 = vunpack.c.l.b16 %v152
  %v208 = vunpack.c.l.b16 %v153
  %v209 = vunpack.c.l.b16 %v154
  %v210 = vunpack.c.l.b16 %v155
  %v211 = vunpack.c.l.b16 %v156
  %v212 = vunpack.c.l.b16 %v157
  %v213 = vunpack.c.l.b16 %v158
  %v214 = vunpack.c.l.b16 %v159
  %v215 = vunpack.c.l.b16 %v160
  %v216 = vpack.c.b16 %v201, %v200
  %v217 = vpack.c.b16 %v203, %v202
  %v218 = vpack.c.b16 %v205, %v204
  %v219 = vpack.c.b16 %v207, %v206
  %v220 = vpack.c.b16 %v209, %v208
  %v221 = vpack.c.b16 %v211, %v210
  %v222 = vpack.c.b16 %v213, %v212
  %v223 = vpack.c.b16 %v215, %v214
  %232 = vmatprep.subr.bf16.mxu0 0
  %233 = vmatpush1.bf16.msra.mxu0 %v216
  %234 = vmatprep.subr.bf16.mxu0 0
  %235 = vmatpush1.bf16.msra.mxu0 %v217
  %236 = vmatprep.subr.bf16.mxu0 0
  %237 = vmatpush1.bf16.msra.mxu0 %v218
  %238 = vmatprep.subr.bf16.mxu0 0
  %239 = vmatpush1.bf16.msra.mxu0 %v219
  %240 = vmatprep.subr.bf16.mxu0 0
  %241 = vmatpush1.bf16.msra.mxu0 %v220
  %242 = vmatprep.subr.bf16.mxu0 0
  %243 = vmatpush1.bf16.msra.mxu0 %v221
  %244 = vmatprep.subr.bf16.mxu0 0
  %245 = vmatpush1.bf16.msra.mxu0 %v222
  %246 = vmatprep.subr.bf16.mxu0 0
  %247 = vmatpush1.bf16.msra.mxu0 %v223
  %248 = vmatprep.subr.bf16.mxu0 0
  %249 = vmatpush1.bf16.msra.mxu0 0
  %250 = vmatprep.subr.bf16.mxu0 0
  %251 = vmatpush1.bf16.msra.mxu0 0
  %252 = vmatprep.subr.bf16.mxu0 0
  %253 = vmatpush1.bf16.msra.mxu0 0
  %254 = vmatprep.subr.bf16.mxu0 0
  %255 = vmatpush1.bf16.msra.mxu0 0
  %256 = vmatprep.subr.bf16.mxu0 0
  %257 = vmatpush1.bf16.msra.mxu0 0
  %258 = vmatprep.subr.bf16.mxu0 0
  %259 = vmatpush1.bf16.msra.mxu0 0
  %260 = vmatprep.subr.bf16.mxu0 0
  %261 = vmatpush1.bf16.msra.mxu0 0
  %262 = vmatprep.subr.bf16.mxu0 0
  %263 = vmatpush1.bf16.msra.mxu0 0
  %264 = vmatprep.mubr.bf16.mxu0 0
  %265 = vmatmul.mubr.bf16.gmra.mrb[0].mxu0 %v178
  %v266 = vpop.f32.mrb[0].mxu0
  %v267 = vadd.f32 %v166, %v266
  %v268 = vpop.f32.mrb[0].mxu0
  %v269 = vpop.f32.mrb[0].mxu0
  %v270 = vadd.f32 %v166, %v269
  %v271 = vpop.f32.mrb[0].mxu0
  %272 = vmatprep.mubr.bf16.mxu0 0
  %273 = vmatmul.mubr.bf16.gmra.mrb[0].mxu0 %v179
  %v274 = vpop.f32.mrb[0].mxu0
  %v275 = vadd.f32 %v166, %v274
  %v276 = vpop.f32.mrb[0].mxu0
  %v277 = vpop.f32.mrb[0].mxu0
  %v278 = vadd.f32 %v166, %v277
  %v279 = vpop.f32.mrb[0].mxu0
  %280 = vmatprep.mubr.bf16.mxu0 0
  %281 = vmatmul.mubr.bf16.gmra.mrb[0].mxu0 %v180
  %v282 = vpop.f32.mrb[0].mxu0
  %v283 = vadd.f32 %v166, %v282
  %v284 = vpop.f32.mrb[0].mxu0
  %v285 = vpop.f32.mrb[0].mxu0
  %v286 = vpop.f32.mrb[0].mxu0
  %287 = vdwg.mxu0
  %288 = vst [vmem:[%s5] sm:$0xff] %v267
  %289 = vst [vmem:[%s5 + $0x8] sm:$0xff] %v270
  %290 = vst [vmem:[%s5 + $0x10] sm:$0xff] %v275
  %291 = vst [vmem:[%s5 + $0x18] sm:$0xff] %v278
  %292 = vst [vmem:[%s5 + $0x20] sm:$0xff] %v283
  // Predicated region
  $region26: #{ccot_forward.35} parent=0 // pred_check
    _
  $region27: #{ccot_forward.35} parent=0 // pred_check_branch
    %294 = sbr.rel (0) target = $region29
  $region28: #{ccot_forward.35} parent=0 // pred_region
    _
  $region29: #{ccot_forward.35} parent=0 // pred_fallthru
    _
  // Predicated region
  $region30: #{ccot_forward.35} parent=0 // pred_check
    _
  $region31: #{ccot_forward.35} parent=0 // pred_check_branch
    %296 = sbr.rel (0) target = $region33
  $region32: #{ccot_forward.35} parent=0 // pred_region
    _
  $region33: #{ccot_forward.35} parent=0 // pred_fallthru
    _

// kernel: ccot_forward.34
$region0: #{ccot_forward.34}
  #allocation0 [shape = 'u32[]', space=smem, size = 0x4, offset = 0x4, fixed_abs, tag = 'smem constant byte address 0x4 - core index']
  #allocation1 [shape = 'u32[144,128]{1,0:T(1,128)}', space=vmem, size = 0x12000, scoped, tag = 'internal scratch']
  #allocation2 [shape = 'f32[40,128]{1,0:T(8,128)}', space=vmem, size = 0x5000, scoped, tag = 'scratch operand']
  %s0 = inlined_call_operand.vmem [shape: bf16[40,512], index: 0, kind: input, shape index: {}]
  %s1 = inlined_call_operand.vmem [shape: bf16[512,128], index: 1, kind: input, shape index: {}]
  %s2 = inlined_call_operand.vmem [shape: f32[1,128], index: 2, kind: input, shape index: {}]
  %s3 = inlined_call_operand.vmem [shape: bf16[40,128], index: 3, kind: input, shape index: {}]
  %s4 = inlined_call_operand.vmem [shape: bf16[40,128], index: 4, kind: output, shape index: {}]
  %s5 = sld [smem:[#allocation0]]
  $region34: #{ccot_forward.34} parent=0
    _
  %s7 = ssub.s32 1, %s5
  %s8 = scalar_select 0, %s7, %s5
  // Predicated region
  $region2: #{ccot_forward.34} parent=0 // pred_check
    _
  $region3: #{ccot_forward.34} parent=0 // pred_check_branch
    %10 = sbr.rel (0) target = $region5
  $region4: #{ccot_forward.34} parent=0 // pred_region
    _
  $region5: #{ccot_forward.34} parent=0 // pred_fallthru
    _
  // Predicated region
  $region6: #{ccot_forward.34} parent=0 // pred_check
    _
  $region7: #{ccot_forward.34} parent=0 // pred_check_branch
    %12 = sbr.rel (0) target = $region9
  $region8: #{ccot_forward.34} parent=0 // pred_region
    _
  $region9: #{ccot_forward.34} parent=0 // pred_fallthru
    _
  // Predicated region
  $region10: #{ccot_forward.34} parent=0 // pred_check
    _
  $region11: #{ccot_forward.34} parent=0 // pred_check_branch
    %14 = sbr.rel (0) target = $region13
  $region12: #{ccot_forward.34} parent=0 // pred_region
    _
  $region13: #{ccot_forward.34} parent=0 // pred_fallthru
    _
  // Predicated region
  $region14: #{ccot_forward.34} parent=0 // pred_check
    _
  $region15: #{ccot_forward.34} parent=0 // pred_check_branch
    %16 = sbr.rel (0) target = $region17
  $region16: #{ccot_forward.34} parent=0 // pred_region
    _
  $region17: #{ccot_forward.34} parent=0 // pred_fallthru
    _
  %p18 = scmp.eq.s32.totalorder 0, 0
  // Predicated region
  $region18: #{ccot_forward.34} parent=0 // pred_check
    %p19 = pneg %p18
  $region19: #{ccot_forward.34} parent=0 // pred_check_branch
    %21 = sbr.rel (%p19) target = $region21
  $region20: #{ccot_forward.34} parent=0 // pred_region
    %v22 = vld [vmem:[%s3] sm:$0xf]
    %v23 = vld [vmem:[%s3 + $0x4] sm:$0xf]
    %v24 = vld [vmem:[%s3 + $0x8] sm:$0xf]
    %v25 = vld [vmem:[%s3 + $0xc] sm:$0xf]
    %v26 = vld [vmem:[%s3 + $0x10] sm:$0xf]
    %v27 = vunpack.c.l.bf16 %v22
    %v28 = vunpack.c.l.bf16 %v23
    %v29 = vunpack.c.l.bf16 %v24
    %v30 = vunpack.c.l.bf16 %v25
    %v31 = vunpack.c.l.bf16 %v26
    %32 = vst [vmem:[#allocation2] sm:$0xff] %v27
    %33 = vst [vmem:[#allocation2 + $0x8] sm:$0xff] %v28
    %34 = vst [vmem:[#allocation2 + $0x10] sm:$0xff] %v29
    %35 = vst [vmem:[#allocation2 + $0x18] sm:$0xff] %v30
    %36 = vst [vmem:[#allocation2 + $0x20] sm:$0xff] %v31
  $region21: #{ccot_forward.34} parent=0 // pred_fallthru
    _
  %v37 = vld [vmem:[#allocation2] sm:$0xff]
  %v38 = vld [vmem:[#allocation2 + $0x8] sm:$0xff]
  %v39 = vld [vmem:[#allocation2 + $0x10] sm:$0xff]
  %v40 = vld [vmem:[#allocation2 + $0x18] sm:$0xff]
  %v41 = vld [vmem:[#allocation2 + $0x20] sm:$0xff]
  %v42 = vld [vmem:[%s0] sm:$0xff]
  %v43 = vld [vmem:[%s0 + $0x8] sm:$0xff]
  %v44 = vld [vmem:[%s0 + $0x10] sm:$0xff]
  %v45 = vld [vmem:[%s0 + $0x18] sm:$0xff]
  %v46 = vld [vmem:[%s0 + $0x20] sm:$0xff]
  %v47 = vld [vmem:[%s0 + $0x28] sm:$0xff]
  %v48 = vld [vmem:[%s0 + $0x30] sm:$0xff]
  %v49 = vld [vmem:[%s0 + $0x38] sm:$0xff]
  %v50 = vld [vmem:[%s0 + $0x40] sm:$0xff]
  %v51 = vld [vmem:[%s0 + $0x48] sm:$0xff]
  %v52 = vld [vmem:[%s1] sm:$0xf]
  %v53 = vld [vmem:[%s1 + $0x4] sm:$0xf]
  %v54 = vld [vmem:[%s1 + $0x8] sm:$0xf]
  %v55 = vld [vmem:[%s1 + $0xc] sm:$0xf]
  %v56 = vld [vmem:[%s1 + $0x10] sm:$0xf]
  %v57 = vld [vmem:[%s1 + $0x14] sm:$0xf]
  %v58 = vld [vmem:[%s1 + $0x18] sm:$0xf]
  %v59 = vld [vmem:[%s1 + $0x1c] sm:$0xf]
  %v60 = vld [vmem:[%s1 + $0x20] sm:$0xf]
  %v61 = vld [vmem:[%s1 + $0x24] sm:$0xf]
  %v62 = vld [vmem:[%s1 + $0x28] sm:$0xf]
  %v63 = vld [vmem:[%s1 + $0x2c] sm:$0xf]
  %v64 = vld [vmem:[%s1 + $0x30] sm:$0xf]
  %v65 = vld [vmem:[%s1 + $0x34] sm:$0xf]
  %v66 = vld [vmem:[%s1 + $0x38] sm:$0xf]
  %v67 = vld [vmem:[%s1 + $0x3c] sm:$0xf]
  %v68 = vld [vmem:[%s1 + $0x40] sm:$0xf]
  %v69 = vld [vmem:[%s1 + $0x44] sm:$0xf]
  %v70 = vld [vmem:[%s1 + $0x48] sm:$0xf]
  %v71 = vld [vmem:[%s1 + $0x4c] sm:$0xf]
  %v72 = vld [vmem:[%s1 + $0x50] sm:$0xf]
  %v73 = vld [vmem:[%s1 + $0x54] sm:$0xf]
  %v74 = vld [vmem:[%s1 + $0x58] sm:$0xf]
  %v75 = vld [vmem:[%s1 + $0x5c] sm:$0xf]
  %v76 = vld [vmem:[%s1 + $0x60] sm:$0xf]
  %v77 = vld [vmem:[%s1 + $0x64] sm:$0xf]
  %v78 = vld [vmem:[%s1 + $0x68] sm:$0xf]
  %v79 = vld [vmem:[%s1 + $0x6c] sm:$0xf]
  %v80 = vld [vmem:[%s1 + $0x70] sm:$0xf]
  %v81 = vld [vmem:[%s1 + $0x74] sm:$0xf]
  %v82 = vld [vmem:[%s1 + $0x78] sm:$0xf]
  %v83 = vld [vmem:[%s1 + $0x7c] sm:$0xf]
  %v84 = vld [vmem:[%s1 + $0x80] sm:$0xf]
  %v85 = vld [vmem:[%s1 + $0x84] sm:$0xf]
  %v86 = vld [vmem:[%s1 + $0x88] sm:$0xf]
  %v87 = vld [vmem:[%s1 + $0x8c] sm:$0xf]
  %v88 = vld [vmem:[%s1 + $0x90] sm:$0xf]
  %v89 = vld [vmem:[%s1 + $0x94] sm:$0xf]
  %v90 = vld [vmem:[%s1 + $0x98] sm:$0xf]
  %v91 = vld [vmem:[%s1 + $0x9c] sm:$0xf]
  %v92 = vld [vmem:[%s1 + $0xa0] sm:$0xf]
  %v93 = vld [vmem:[%s1 + $0xa4] sm:$0xf]
  %v94 = vld [vmem:[%s1 + $0xa8] sm:$0xf]
  %v95 = vld [vmem:[%s1 + $0xac] sm:$0xf]
  %v96 = vld [vmem:[%s1 + $0xb0] sm:$0xf]
  %v97 = vld [vmem:[%s1 + $0xb4] sm:$0xf]
  %v98 = vld [vmem:[%s1 + $0xb8] sm:$0xf]
  %v99 = vld [vmem:[%s1 + $0xbc] sm:$0xf]
  %v100 = vld [vmem:[%s1 + $0xc0] sm:$0xf]
  %v101 = vld [vmem:[%s1 + $0xc4] sm:$0xf]
  %v102 = vld [vmem:[%s1 + $0xc8] sm:$0xf]
  %v103 = vld [vmem:[%s1 + $0xcc] sm:$0xf]
  %v104 = vld [vmem:[%s1 + $0xd0] sm:$0xf]
  %v105 = vld [vmem:[%s1 + $0xd4] sm:$0xf]
  %v106 = vld [vmem:[%s1 + $0xd8] sm:$0xf]
  %v107 = vld [vmem:[%s1 + $0xdc] sm:$0xf]
  %v108 = vld [vmem:[%s1 + $0xe0] sm:$0xf]
  %v109 = vld [vmem:[%s1 + $0xe4] sm:$0xf]
  %v110 = vld [vmem:[%s1 + $0xe8] sm:$0xf]
  %v111 = vld [vmem:[%s1 + $0xec] sm:$0xf]
  %v112 = vld [vmem:[%s1 + $0xf0] sm:$0xf]
  %v113 = vld [vmem:[%s1 + $0xf4] sm:$0xf]
  %v114 = vld [vmem:[%s1 + $0xf8] sm:$0xf]
  %v115 = vld [vmem:[%s1 + $0xfc] sm:$0xf]
  %v126 = vunpack.c.l.b16 %v42
  %v127 = vunpack.c.h.b16 %v42
  %v128 = vunpack.c.l.b16 %v43
  %v129 = vunpack.c.h.b16 %v43
  %v130 = vunpack.c.l.b16 %v44
  %v131 = vunpack.c.h.b16 %v44
  %v132 = vunpack.c.l.b16 %v45
  %v133 = vunpack.c.h.b16 %v45
  %v134 = vunpack.c.l.b16 %v46
  %v135 = vunpack.c.h.b16 %v46
  %v136 = vunpack.c.l.b16 %v47
  %v137 = vunpack.c.h.b16 %v47
  %v138 = vunpack.c.l.b16 %v48
  %v139 = vunpack.c.h.b16 %v48
  %v140 = vunpack.c.l.b16 %v49
  %v141 = vunpack.c.h.b16 %v49
  %v142 = vunpack.c.l.b16 %v50
  %v143 = vunpack.c.h.b16 %v50
  %v144 = vunpack.c.l.b16 %v51
  %v145 = vunpack.c.h.b16 %v51
  %v146 = vpack.c.b16 %v130, %v126
  %v147 = vpack.c.b16 %v131, %v127
  %v148 = vpack.c.b16 %v132, %v128
  %v149 = vpack.c.b16 %v133, %v129
  %v150 = vpack.c.b16 %v138, %v134
  %v151 = vpack.c.b16 %v139, %v135
  %v152 = vpack.c.b16 %v140, %v136
  %v153 = vpack.c.b16 %v141, %v137
  %v154 = vpack.c.b16 %v142, %v142
  %v155 = vpack.c.b16 %v143, %v143
  %v156 = vpack.c.b16 %v144, %v144
  %v157 = vpack.c.b16 %v145, %v145
  %v234 = vunpack.c.l.b16 %v52
  %v235 = vunpack.c.l.b16 %v53
  %v236 = vunpack.c.l.b16 %v54
  %v237 = vunpack.c.l.b16 %v55
  %v238 = vunpack.c.l.b16 %v56
  %v239 = vunpack.c.l.b16 %v57
  %v240 = vunpack.c.l.b16 %v58
  %v241 = vunpack.c.l.b16 %v59
  %v242 = vunpack.c.l.b16 %v60
  %v243 = vunpack.c.l.b16 %v61
  %v244 = vunpack.c.l.b16 %v62
  %v245 = vunpack.c.l.b16 %v63
  %v246 = vunpack.c.l.b16 %v64
  %v247 = vunpack.c.l.b16 %v65
  %v248 = vunpack.c.l.b16 %v66
  %v249 = vunpack.c.l.b16 %v67
  %v250 = vunpack.c.l.b16 %v68
  %v251 = vunpack.c.l.b16 %v69
  %v252 = vunpack.c.l.b16 %v70
  %v253 = vunpack.c.l.b16 %v71
  %v254 = vunpack.c.l.b16 %v72
  %v255 = vunpack.c.l.b16 %v73
  %v256 = vunpack.c.l.b16 %v74
  %v257 = vunpack.c.l.b16 %v75
  %v258 = vunpack.c.l.b16 %v76
  %v259 = vunpack.c.l.b16 %v77
  %v260 = vunpack.c.l.b16 %v78
  %v261 = vunpack.c.l.b16 %v79
  %v262 = vunpack.c.l.b16 %v80
  %v263 = vunpack.c.l.b16 %v81
  %v264 = vunpack.c.l.b16 %v82
  %v265 = vunpack.c.l.b16 %v83
  %v266 = vunpack.c.l.b16 %v84
  %v267 = vunpack.c.l.b16 %v85
  %v268 = vunpack.c.l.b16 %v86
  %v269 = vunpack.c.l.b16 %v87
  %v270 = vunpack.c.l.b16 %v88
  %v271 = vunpack.c.l.b16 %v89
  %v272 = vunpack.c.l.b16 %v90
  %v273 = vunpack.c.l.b16 %v91
  %v274 = vunpack.c.l.b16 %v92
  %v275 = vunpack.c.l.b16 %v93
  %v276 = vunpack.c.l.b16 %v94
  %v277 = vunpack.c.l.b16 %v95
  %v278 = vunpack.c.l.b16 %v96
  %v279 = vunpack.c.l.b16 %v97
  %v280 = vunpack.c.l.b16 %v98
  %v281 = vunpack.c.l.b16 %v99
  %v282 = vunpack.c.l.b16 %v100
  %v283 = vunpack.c.l.b16 %v101
  %v284 = vunpack.c.l.b16 %v102
  %v285 = vunpack.c.l.b16 %v103
  %v286 = vunpack.c.l.b16 %v104
  %v287 = vunpack.c.l.b16 %v105
  %v288 = vunpack.c.l.b16 %v106
  %v289 = vunpack.c.l.b16 %v107
  %v290 = vunpack.c.l.b16 %v108
  %v291 = vunpack.c.l.b16 %v109
  %v292 = vunpack.c.l.b16 %v110
  %v293 = vunpack.c.l.b16 %v111
  %v294 = vunpack.c.l.b16 %v112
  %v295 = vunpack.c.l.b16 %v113
  %v296 = vunpack.c.l.b16 %v114
  %v297 = vunpack.c.l.b16 %v115
  %v298 = vpack.c.b16 %v235, %v234
  %v299 = vpack.c.b16 %v237, %v236
  %v300 = vpack.c.b16 %v239, %v238
  %v301 = vpack.c.b16 %v241, %v240
  %v302 = vpack.c.b16 %v243, %v242
  %v303 = vpack.c.b16 %v245, %v244
  %v304 = vpack.c.b16 %v247, %v246
  %v305 = vpack.c.b16 %v249, %v248
  %v306 = vpack.c.b16 %v251, %v250
  %v307 = vpack.c.b16 %v253, %v252
  %v308 = vpack.c.b16 %v255, %v254
  %v309 = vpack.c.b16 %v257, %v256
  %v310 = vpack.c.b16 %v259, %v258
  %v311 = vpack.c.b16 %v261, %v260
  %v312 = vpack.c.b16 %v263, %v262
  %v313 = vpack.c.b16 %v265, %v264
  %v314 = vpack.c.b16 %v267, %v266
  %v315 = vpack.c.b16 %v269, %v268
  %v316 = vpack.c.b16 %v271, %v270
  %v317 = vpack.c.b16 %v273, %v272
  %v318 = vpack.c.b16 %v275, %v274
  %v319 = vpack.c.b16 %v277, %v276
  %v320 = vpack.c.b16 %v279, %v278
  %v321 = vpack.c.b16 %v281, %v280
  %v322 = vpack.c.b16 %v283, %v282
  %v323 = vpack.c.b16 %v285, %v284
  %v324 = vpack.c.b16 %v287, %v286
  %v325 = vpack.c.b16 %v289, %v288
  %v326 = vpack.c.b16 %v291, %v290
  %v327 = vpack.c.b16 %v293, %v292
  %v328 = vpack.c.b16 %v295, %v294
  %v329 = vpack.c.b16 %v297, %v296
  %362 = vmatprep.subr.bf16.mxu0 0
  %363 = vmatpush1.bf16.msra.mxu0 %v298
  %364 = vmatprep.subr.bf16.mxu0 0
  %365 = vmatpush1.bf16.msra.mxu0 %v299
  %366 = vmatprep.subr.bf16.mxu0 0
  %367 = vmatpush1.bf16.msra.mxu0 %v300
  %368 = vmatprep.subr.bf16.mxu0 0
  %369 = vmatpush1.bf16.msra.mxu0 %v301
  %370 = vmatprep.subr.bf16.mxu0 0
  %371 = vmatpush1.bf16.msra.mxu0 %v302
  %372 = vmatprep.subr.bf16.mxu0 0
  %373 = vmatpush1.bf16.msra.mxu0 %v303
  %374 = vmatprep.subr.bf16.mxu0 0
  %375 = vmatpush1.bf16.msra.mxu0 %v304
  %376 = vmatprep.subr.bf16.mxu0 0
  %377 = vmatpush1.bf16.msra.mxu0 %v305
  %378 = vmatprep.subr.bf16.mxu0 0
  %379 = vmatpush1.bf16.msra.mxu0 %v306
  %380 = vmatprep.subr.bf16.mxu0 0
  %381 = vmatpush1.bf16.msra.mxu0 %v307
  %382 = vmatprep.subr.bf16.mxu0 0
  %383 = vmatpush1.bf16.msra.mxu0 %v308
  %384 = vmatprep.subr.bf16.mxu0 0
  %385 = vmatpush1.bf16.msra.mxu0 %v309
  %386 = vmatprep.subr.bf16.mxu0 0
  %387 = vmatpush1.bf16.msra.mxu0 %v310
  %388 = vmatprep.subr.bf16.mxu0 0
  %389 = vmatpush1.bf16.msra.mxu0 %v311
  %390 = vmatprep.subr.bf16.mxu0 0
  %391 = vmatpush1.bf16.msra.mxu0 %v312
  %392 = vmatprep.subr.bf16.mxu0 0
  %393 = vmatpush1.bf16.msra.mxu0 %v313
  %394 = vmatprep.mubr.bf16.mxu0 %v147
  %395 = vmatmul.mubr.bf16.gmra.mrb[0].mxu0 %v146
  %v396 = vpop.f32.mrb[0].mxu0
  %v397 = vadd.f32 0.0, %v396
  %v398 = vpop.f32.mrb[0].mxu0
  %v399 = vpop.f32.mrb[0].mxu0
  %v400 = vadd.f32 0.0, %v399
  %v401 = vpop.f32.mrb[0].mxu0
  %402 = vmatprep.mubr.bf16.mxu0 %v151
  %403 = vmatmul.mubr.bf16.gmra.mrb[0].mxu0 %v150
  %v404 = vpop.f32.mrb[0].mxu0
  %v405 = vadd.f32 0.0, %v404
  %v406 = vpop.f32.mrb[0].mxu0
  %v407 = vpop.f32.mrb[0].mxu0
  %v408 = vadd.f32 0.0, %v407
  %v409 = vpop.f32.mrb[0].mxu0
  %410 = vmatprep.mubr.bf16.mxu0 %v155
  %411 = vmatmul.mubr.bf16.gmra.mrb[0].mxu0 %v154
  %v412 = vpop.f32.mrb[0].mxu0
  %v413 = vadd.f32 0.0, %v412
  %v414 = vpop.f32.mrb[0].mxu0
  %v415 = vpop.f32.mrb[0].mxu0
  %v416 = vpop.f32.mrb[0].mxu0
  %417 = vdwg.mxu0
  %418 = vmatprep.subr.bf16.mxu0 0
  %419 = vmatpush1.bf16.msra.mxu0 %v314
  %420 = vmatprep.subr.bf16.mxu0 0
  %421 = vmatpush1.bf16.msra.mxu0 %v315
  %422 = vmatprep.subr.bf16.mxu0 0
  %423 = vmatpush1.bf16.msra.mxu0 %v316
  %424 = vmatprep.subr.bf16.mxu0 0
  %425 = vmatpush1.bf16.msra.mxu0 %v317
  %426 = vmatprep.subr.bf16.mxu0 0
  %427 = vmatpush1.bf16.msra.mxu0 %v318
  %428 = vmatprep.subr.bf16.mxu0 0
  %429 = vmatpush1.bf16.msra.mxu0 %v319
  %430 = vmatprep.subr.bf16.mxu0 0
  %431 = vmatpush1.bf16.msra.mxu0 %v320
  %432 = vmatprep.subr.bf16.mxu0 0
  %433 = vmatpush1.bf16.msra.mxu0 %v321
  %434 = vmatprep.subr.bf16.mxu0 0
  %435 = vmatpush1.bf16.msra.mxu0 %v322
  %436 = vmatprep.subr.bf16.mxu0 0
  %437 = vmatpush1.bf16.msra.mxu0 %v323
  %438 = vmatprep.subr.bf16.mxu0 0
  %439 = vmatpush1.bf16.msra.mxu0 %v324
  %440 = vmatprep.subr.bf16.mxu0 0
  %441 = vmatpush1.bf16.msra.mxu0 %v325
  %442 = vmatprep.subr.bf16.mxu0 0
  %443 = vmatpush1.bf16.msra.mxu0 %v326
  %444 = vmatprep.subr.bf16.mxu0 0
  %445 = vmatpush1.bf16.msra.mxu0 %v327
  %446 = vmatprep.subr.bf16.mxu0 0
  %447 = vmatpush1.bf16.msra.mxu0 %v328
  %448 = vmatprep.subr.bf16.mxu0 0
  %449 = vmatpush1.bf16.msra.mxu0 %v329
  %450 = vmatprep.mubr.bf16.mxu0 %v149
  %451 = vmatmul.mubr.bf16.gmra.mrb[0].mxu0 %v148
  %v452 = vpop.f32.mrb[0].mxu0
  %v453 = vadd.f32 %v397, %v452
  %v454 = vpop.f32.mrb[0].mxu0
  %v455 = vpop.f32.mrb[0].mxu0
  %v456 = vadd.f32 %v400, %v455
  %v457 = vpop.f32.mrb[0].mxu0
  %458 = vmatprep.mubr.bf16.mxu0 %v153
  %459 = vmatmul.mubr.bf16.gmra.mrb[0].mxu0 %v152
  %v460 = vpop.f32.mrb[0].mxu0
  %v461 = vadd.f32 %v405, %v460
  %v462 = vpop.f32.mrb[0].mxu0
  %v463 = vpop.f32.mrb[0].mxu0
  %v464 = vadd.f32 %v408, %v463
  %v465 = vpop.f32.mrb[0].mxu0
  %466 = vmatprep.mubr.bf16.mxu0 %v157
  %467 = vmatmul.mubr.bf16.gmra.mrb[0].mxu0 %v156
  %v468 = vpop.f32.mrb[0].mxu0
  %v469 = vadd.f32 %v413, %v468
  %v470 = vpop.f32.mrb[0].mxu0
  %v471 = vpop.f32.mrb[0].mxu0
  %v472 = vpop.f32.mrb[0].mxu0
  %473 = vdwg.mxu0
  %v474 = vadd.f32 %v37, %v453
  %v475 = vadd.f32 %v38, %v456
  %v476 = vadd.f32 %v39, %v461
  %v477 = vadd.f32 %v40, %v464
  %v478 = vadd.f32 %v41, %v469
  %479 = vst [vmem:[#allocation2] sm:$0xff] %v474
  %480 = vst [vmem:[#allocation2 + $0x8] sm:$0xff] %v475
  %481 = vst [vmem:[#allocation2 + $0x10] sm:$0xff] %v476
  %482 = vst [vmem:[#allocation2 + $0x18] sm:$0xff] %v477
  %483 = vst [vmem:[#allocation2 + $0x20] sm:$0xff] %v478
  // Predicated region
  $region22: #{ccot_forward.34} parent=0 // pred_check
    %p484 = pneg %p18
  $region23: #{ccot_forward.34} parent=0 // pred_check_branch
    %486 = sbr.rel (%p484) target = $region25
  $region24: #{ccot_forward.34} parent=0 // pred_region
    %v487 = vld [vmem:[#allocation2] sm:$0xff]
    %v488 = vld [vmem:[#allocation2 + $0x8] sm:$0xff]
    %v489 = vld [vmem:[#allocation2 + $0x10] sm:$0xff]
    %v490 = vld [vmem:[#allocation2 + $0x18] sm:$0xff]
    %v491 = vld [vmem:[#allocation2 + $0x20] sm:$0xff]
    %v492 = vld [vmem:[%s2] sm:$0x1]
    %v494 = vlaneseq
    %v495 = vshrl.u32 %v494, 7
    %v496 = vsub.s32 0, %v495
    %v497 = vrot.slane %v492, %v496
    %v499 = vadd.f32 %v487, %v497
    %v500 = vadd.f32 %v488, %v497
    %v501 = vadd.f32 %v489, %v497
    %v502 = vadd.f32 %v490, %v497
    %v503 = vadd.f32 %v491, %v497
    %v504 = vpack.c.bf16 %v500, %v499
    %v505 = vpack.c.bf16 %v502, %v501
    %v506 = vpack.c.bf16 %v503, %v503
    %v510 = vunpack.c.l.b16 %v504
    %v511 = vunpack.c.h.b16 %v504
    %v512 = vunpack.c.l.b16 %v505
    %v513 = vunpack.c.h.b16 %v505
    %v514 = vunpack.c.l.b16 %v506
    %v515 = vpack.c.b16 %v510, %v510
    %v516 = vpack.c.b16 %v511, %v511
    %v517 = vpack.c.b16 %v512, %v512
    %v518 = vpack.c.b16 %v513, %v513
    %v519 = vpack.c.b16 %v514, %v514
    %525 = vst [vmem:[%s4] sm:$0xf] %v515
    %526 = vst [vmem:[%s4 + $0x4] sm:$0xf] %v516
    %527 = vst [vmem:[%s4 + $0x8] sm:$0xf] %v517
    %528 = vst [vmem:[%s4 + $0xc] sm:$0xf] %v518
    %529 = vst [vmem:[%s4 + $0x10] sm:$0xf] %v519
  $region25: #{ccot_forward.34} parent=0 // pred_fallthru
    _
  // Predicated region
  $region26: #{ccot_forward.34} parent=0 // pred_check
    _
  $region27: #{ccot_forward.34} parent=0 // pred_check_branch
    %531 = sbr.rel (0) target = $region29
  $region28: #{ccot_forward.34} parent=0 // pred_region
    _
  $region29: #{ccot_forward.34} parent=0 // pred_fallthru
    _
  // Predicated region
  $region30: #{ccot_forward.34} parent=0 // pred_check
    _
  $region31: #{ccot_forward.34} parent=0 // pred_check_branch
    %533 = sbr.rel (0) target = $region33
  $region32: #{ccot_forward.34} parent=0 // pred_region
    _
  $region33: #{ccot_forward.34} parent=0 // pred_fallthru
    _

</llo_original>
